<compile_context>
chip_gen: v6e
topology: v6e:2x2x1
jax: 0.10.0
libtpu: 0.0.40
codegen_flags: <defaults>
</compile_context>

<pallas_src>
import functools
import math

import jax
import jax.numpy as jnp
from jax.experimental import pallas as pl
from jax.experimental.pallas import tpu as pltpu


def _round_up(a, b):
    return (a + b - 1) // b * b


def _attn_body(xq_ref, xkv_ref, wq_ref, wk_ref, wv_ref, wp_ref, bp_ref, out_ref,
               *, num_heads, scale, n_tokens):
    """Shared body: one (batch [, query-tile]) grid step, fully resident in VMEM.

    xq_ref  : (1, tq, C)   query-side activation tile
    xkv_ref : (1, Nk, C)   (padded) activations for keys/values (may alias xq_ref)
    wq/wk/wv: (H, C, hd)   per-head projection weight slabs
    wp_ref  : (H, hd, C)   per-head slab of proj.weight.T (head concat folded away)
    bp_ref  : (1, C)       proj bias
    out_ref : (1, tq, C)
    """
    xq = xq_ref[0]                       # (tq, C)   native dtype (bf16 stays bf16)
    xkv = xkv_ref[0]                     # (Nk, C)
    in_dt = xq.dtype
    n_kv = xkv.shape[0]

    # Static key mask, only generated when the sequence was padded.
    if n_kv != n_tokens:
        key_idx = jax.lax.broadcasted_iota(jnp.int32, (1, n_kv), 1)
        kv_mask = key_idx < n_tokens
    else:
        kv_mask = None

    y = None                             # f32 accumulator over heads, (tq, C)
    for h in range(num_heads):           # static unroll; H <= 12 for ViT-Base
        # Per-head projections: contraction dim = C (MXU friendly); fold scale into q.
        # TODO(synk): hd=64 underfills the 256-wide MXU contraction on v6e/v7x for the
        #             q@k^T / p@v matmuls; head pairing would fix it but mixes heads in
        #             the score matmul, so it is not done here.
        q = jnp.dot(xq, wq_ref[h], preferred_element_type=jnp.float32)
        q = (q * scale).astype(in_dt)                                          # (tq, hd)
        k = jnp.dot(xkv, wk_ref[h], preferred_element_type=jnp.float32).astype(in_dt)
        v = jnp.dot(xkv, wv_ref[h], preferred_element_type=jnp.float32).astype(in_dt)

        # Scores + deferred-normalization softmax (statistics in f32).
        s = jnp.dot(q, k.T, preferred_element_type=jnp.float32)                # (tq, Nk)
        if kv_mask is not None:
            s = jnp.where(kv_mask, s, -jnp.inf)
        m = jnp.max(s, axis=-1, keepdims=True)
        p = jnp.exp(s - m)                                                     # unnormalized
        l = jnp.sum(p, axis=-1, keepdims=True)                                 # (tq, 1)

        # attn_drop ratio is 0.0 -> identity.
        o = jnp.dot(p.astype(in_dt), v, preferred_element_type=jnp.float32)    # (tq, hd)
        o = o * pl.reciprocal(l, approx=True)      # tq reciprocals per head, on the EUP

        # Output projection accumulated per head:
        #   concat_h(o_h) @ Wproj^T == sum_h o_h @ wp[h]
        contrib = jnp.dot(o.astype(in_dt), wp_ref[h], preferred_element_type=jnp.float32)
        y = contrib if y is None else y + contrib

    y = y + bp_ref[...].astype(jnp.float32)        # (1, C) broadcast bias
    # proj_drop ratio is 0.0 -> identity.
    out_ref[0] = y.astype(out_ref.dtype)


def _mha_kernel_fused(x_ref, wq_ref, wk_ref, wv_ref, wp_ref, bp_ref, out_ref,
                      *, num_heads, scale, n_tokens):
    # Whole (padded) sequence in one tile: queries and keys/values read the SAME ref,
    # so x is streamed once and K/V projections are computed once per batch element.
    _attn_body(x_ref, x_ref, wq_ref, wk_ref, wv_ref, wp_ref, bp_ref, out_ref,
               num_heads=num_heads, scale=scale, n_tokens=n_tokens)


def _mha_kernel_tiled(xq_ref, xkv_ref, wq_ref, wk_ref, wv_ref, wp_ref, bp_ref, out_ref,
                      *, num_heads, scale, n_tokens):
    _attn_body(xq_ref, xkv_ref, wq_ref, wk_ref, wv_ref, wp_ref, bp_ref, out_ref,
               num_heads=num_heads, scale=scale, n_tokens=n_tokens)


def prepare_attention_params(wqkv, wproj, bproj, *, num_heads):
    """One-time PyTorch-Linear-layout -> kernel-layout conversion (hoisted out of the
    per-call path).

    wqkv : (3C, C)  qkv.weight  (qkv_bias=False in Attention_v2)
    wproj: (C, C)   proj.weight
    bproj: (C,)     proj.bias
    Returns (wq, wk, wv, wp, bp): wq/wk/wv: (H, C, hd), wp: (H, hd, C), bp: (1, C).
    """
    _, C = wqkv.shape
    hd = C // num_heads
    w3 = jnp.transpose(wqkv).reshape(C, 3, num_heads, hd).transpose(1, 2, 0, 3)  # (3,H,C,hd)
    wq, wk, wv = w3[0], w3[1], w3[2]
    wp = jnp.transpose(wproj).reshape(num_heads, hd, C)                          # (H,hd,C)
    bp = bproj.reshape(1, C)
    return wq, wk, wv, wp, bp


def _bytes(shape, dtype):
    return math.prod(shape) * jnp.dtype(dtype).itemsize


def attention_v2_pallas(x, wq, wk, wv, wp, bp, *, num_heads, block_q=256):
    """x: (B, N, C); weights from prepare_attention_params()."""
    B, N, C = x.shape
    head_dim = C // num_heads
    scale = head_dim ** (-0.5)
    assert block_q % 8 == 0

    n_pad8 = _round_up(N, 8)
    fused = n_pad8 <= block_q        # whole (padded) sequence fits one query tile

    if fused:
        tq = n_pad = n_pad8          # minimal padding (197 -> 200, not 256)
    else:
        tq = _round_up(block_q, 128)
        n_pad = _round_up(N, tq)

    x_p = x if n_pad == N else jnp.pad(x, ((0, 0), (0, n_pad - N), (0, 0)))

    # Explicit VMEM budget: double-buffered blocks + intermediate headroom, clamped
    # below v7x's 64 MiB physical VMEM.
    act_bytes = 2 * _bytes((1, tq, C), x.dtype)                 # x tile + out tile
    if not fused:
        act_bytes += _bytes((1, n_pad, C), x.dtype)             # full-seq K/V stream
    w_bytes = (3 * _bytes(wq.shape, wq.dtype) + _bytes(wp.shape, wp.dtype)
               + _bytes(bp.shape, bp.dtype))
    scratch_bytes = 4 * tq * n_pad * 4 + 4 * tq * C * 4         # scores / acc headroom
    vmem_limit = int(min(max(2 * (act_bytes + w_bytes) + scratch_bytes + (8 << 20),
                             32 << 20), 60 << 20))

    if fused:
        kernel = functools.partial(_mha_kernel_fused, num_heads=num_heads,
                                   scale=scale, n_tokens=N)
        grid = (B,)
        in_specs = [
            pl.BlockSpec((1, n_pad, C), lambda b: (b, 0, 0)),          # x (q and k/v)
            pl.BlockSpec(wq.shape, lambda b: (0, 0, 0)),
            pl.BlockSpec(wk.shape, lambda b: (0, 0, 0)),
            pl.BlockSpec(wv.shape, lambda b: (0, 0, 0)),
            pl.BlockSpec(wp.shape, lambda b: (0, 0, 0)),
            pl.BlockSpec(bp.shape, lambda b: (0, 0)),
        ]
        out_spec = pl.BlockSpec((1, n_pad, C), lambda b: (b, 0, 0))
        operands = (x_p, wq, wk, wv, wp, bp)
        dim_sem = ("parallel",)
    else:
        kernel = functools.partial(_mha_kernel_tiled, num_heads=num_heads,
                                   scale=scale, n_tokens=N)
        grid = (B, n_pad // tq)
        in_specs = [
            pl.BlockSpec((1, tq, C), lambda b, qi: (b, qi, 0)),        # x, query tile
            pl.BlockSpec((1, n_pad, C), lambda b, qi: (b, 0, 0)),      # x, full seq K/V
            pl.BlockSpec(wq.shape, lambda b, qi: (0, 0, 0)),
            pl.BlockSpec(wk.shape, lambda b, qi: (0, 0, 0)),
            pl.BlockSpec(wv.shape, lambda b, qi: (0, 0, 0)),
            pl.BlockSpec(wp.shape, lambda b, qi: (0, 0, 0)),
            pl.BlockSpec(bp.shape, lambda b, qi: (0, 0)),
        ]
        out_spec = pl.BlockSpec((1, tq, C), lambda b, qi: (b, qi, 0))
        operands = (x_p, x_p, wq, wk, wv, wp, bp)
        dim_sem = ("parallel", "parallel")

    out = pl.pallas_call(
        kernel,
        out_shape=jax.ShapeDtypeStruct((B, n_pad, C), x.dtype),
        grid_spec=pltpu.PrefetchScalarGridSpec(
            num_scalar_prefetch=0,
            grid=grid,
            in_specs=in_specs,
            out_specs=out_spec,
        ),
        compiler_params=pltpu.CompilerParams(
            dimension_semantics=dim_sem,
            vmem_limit_bytes=vmem_limit),
    )(*operands)

    return out if n_pad == N else out[:, :N, :]


def attention_v2_reference(x, wqkv, wproj, bproj, *, num_heads):
    """Pure-JAX mirror of the PyTorch Attention_v2 forward (correctness check)."""
    B, N, C = x.shape
    hd = C // num_heads
    scale = hd ** (-0.5)
    qkv = jnp.einsum("bnc,oc->bno", x, wqkv)                       # (B, N, 3C)
    qkv = qkv.reshape(B, N, 3, num_heads, hd).transpose(2, 0, 3, 1, 4)
    q, k, v = qkv[0], qkv[1], qkv[2]                               # (B, H, N, hd)
    attn = jax.nn.softmax(jnp.einsum("bhnd,bhmd->bhnm", q, k) * scale, axis=-1)
    o = jnp.einsum("bhnm,bhmd->bhnd", attn, v)                     # (B, H, N, hd)
    o = o.transpose(0, 2, 1, 3).reshape(B, N, C)
    return jnp.einsum("bnc,oc->bno", o, wproj) + bproj


if __name__ == "__main__":
    # Small shapes consistent with the module (ViT-like: hd = 64), lane-aligned C.
    num_heads = 4
    B, C = 2, 256

    key = jax.random.PRNGKey(0)
    kx1, kx2, kw1, kw2, kb2 = jax.random.split(key, 5)

    bound = 1.0 / math.sqrt(C)
    wqkv = jax.random.uniform(kw1, (3 * C, C), jnp.float32, -bound, bound)
    wproj = jax.random.uniform(kw2, (C, C), jnp.float32, -bound, bound)
    bproj = jax.random.uniform(kb2, (C,), jnp.float32, -bound, bound)

    # One-time layout prep (hoisted out of the per-call path).
    params = prepare_attention_params(wqkv, wproj, bproj, num_heads=num_heads)

    # Case 1: aligned sequence -> fused single-tile path, no padding, no masking.
    N1 = 256
    x1 = jax.random.normal(kx1, (B, N1, C), jnp.float32)
    out1 = jax.block_until_ready(
        attention_v2_pallas(x1, *params, num_heads=num_heads, block_q=256))
    ref1 = attention_v2_reference(x1, wqkv, wproj, bproj, num_heads=num_heads)
    assert out1.shape == (B, N1, C)
    # Tolerance allows the approximate (EUP) reciprocal in the softmax denominator.
    assert jnp.allclose(out1, ref1, atol=5e-3, rtol=5e-3), "mismatch (fused aligned)"

    # Case 2: ragged ViT-like sequence (N=197) -> fused path with minimal padding
    # (197 -> 200) and key masking.
    N2 = 197
    x2 = jax.random.normal(kx2, (B, N2, C), jnp.float32)
    out2 = jax.block_until_ready(
        attention_v2_pallas(x2, *params, num_heads=num_heads, block_q=256))
    ref2 = attention_v2_reference(x2, wqkv, wproj, bproj, num_heads=num_heads)
    assert out2.shape == (B, N2, C)
    assert jnp.allclose(out2, ref2, atol=5e-3, rtol=5e-3), "mismatch (fused ragged)"

    # Case 3: force the tiled fallback (long-sequence path): query tiles of 128 with
    # full-sequence K/V, (batch, q-tile) parallel grid.
    out3 = jax.block_until_ready(
        attention_v2_pallas(x1, *params, num_heads=num_heads, block_q=128))
    assert out3.shape == (B, N1, C)
    assert jnp.allclose(out3, ref1, atol=5e-3, rtol=5e-3), "mismatch (tiled path)"

    print("KERNEL_OK")
</pallas_src>

<mosaic_0001>
module attributes {stable_mosaic.version = 11 : i64} {
  func.func @_mha_kernel_fused(%arg0: i32, %arg1: memref<1x256x256xf32, #tpu.memory_space<vmem>>, %arg2: memref<4x256x64xf32, #tpu.memory_space<vmem>>, %arg3: memref<4x256x64xf32, #tpu.memory_space<vmem>>, %arg4: memref<4x256x64xf32, #tpu.memory_space<vmem>>, %arg5: memref<4x64x256xf32, #tpu.memory_space<vmem>>, %arg6: memref<1x256xf32, #tpu.memory_space<vmem>>, %arg7: memref<1x256x256xf32, #tpu.memory_space<vmem>>) attributes {dimension_semantics = [#tpu.dimension_semantics<parallel>], iteration_bounds = array<i64: 2>, scalar_prefetch = 0 : i64, scratch_operands = 0 : i64, tpu.core_type = #tpu.core_type<tc>, window_params = [{transform_indices = @transform_0, window_bounds = array<i64: 1, 256, 256>}, {pipeline_mode = #tpu.pipeline_mode<synchronous>, transform_indices = @transform_1, window_bounds = array<i64: 4, 256, 64>}, {pipeline_mode = #tpu.pipeline_mode<synchronous>, transform_indices = @transform_2, window_bounds = array<i64: 4, 256, 64>}, {pipeline_mode = #tpu.pipeline_mode<synchronous>, transform_indices = @transform_3, window_bounds = array<i64: 4, 256, 64>}, {pipeline_mode = #tpu.pipeline_mode<synchronous>, transform_indices = @transform_4, window_bounds = array<i64: 4, 64, 256>}, {pipeline_mode = #tpu.pipeline_mode<synchronous>, transform_indices = @transform_5, window_bounds = array<i64: 1, 256>}, {transform_indices = @transform_6, window_bounds = array<i64: 1, 256, 256>}]} {
    %c0 = arith.constant 0 : index
    %c0_0 = arith.constant 0 : index
    %c0_1 = arith.constant 0 : index
    %0 = vector.load %arg1[%c0, %c0_0, %c0_1] : memref<1x256x256xf32, #tpu.memory_space<vmem>>, vector<1x256x256xf32>
    %1 = vector.shape_cast %0 : vector<1x256x256xf32> to vector<256x256xf32>
    %c0_2 = arith.constant 0 : index
    %c0_3 = arith.constant 0 : index
    %c0_4 = arith.constant 0 : index
    %2 = vector.load %arg1[%c0_2, %c0_3, %c0_4] : memref<1x256x256xf32, #tpu.memory_space<vmem>>, vector<1x256x256xf32>
    %3 = vector.shape_cast %2 : vector<1x256x256xf32> to vector<256x256xf32>
    %c0_5 = arith.constant 0 : index
    %c0_6 = arith.constant 0 : index
    %c0_7 = arith.constant 0 : index
    %4 = vector.load %arg2[%c0_5, %c0_6, %c0_7] : memref<4x256x64xf32, #tpu.memory_space<vmem>>, vector<1x256x64xf32>
    %5 = vector.shape_cast %4 : vector<1x256x64xf32> to vector<256x64xf32>
    %cst = arith.constant dense<0.000000e+00> : vector<256x64xf32>
    %6 = tpu.matmul %1, %5, %cst {dimension_numbers = #tpu.dot_dimension_numbers<[1], [0], [0], [1], [0, 0, 1, 1], [], []>} : vector<256x256xf32>, vector<256x64xf32>, vector<256x64xf32> -> vector<256x64xf32>
    %cst_8 = arith.constant 1.250000e-01 : f32
    %7 = vector.broadcast %cst_8 : f32 to vector<256x64xf32>
    %8 = arith.mulf %6, %7 : vector<256x64xf32>
    %c0_9 = arith.constant 0 : index
    %c0_10 = arith.constant 0 : index
    %c0_11 = arith.constant 0 : index
    %9 = vector.load %arg3[%c0_9, %c0_10, %c0_11] : memref<4x256x64xf32, #tpu.memory_space<vmem>>, vector<1x256x64xf32>
    %10 = vector.shape_cast %9 : vector<1x256x64xf32> to vector<256x64xf32>
    %cst_12 = arith.constant dense<0.000000e+00> : vector<256x64xf32>
    %11 = tpu.matmul %3, %10, %cst_12 {dimension_numbers = #tpu.dot_dimension_numbers<[1], [0], [0], [1], [0, 0, 1, 1], [], []>} : vector<256x256xf32>, vector<256x64xf32>, vector<256x64xf32> -> vector<256x64xf32>
    %c0_13 = arith.constant 0 : index
    %c0_14 = arith.constant 0 : index
    %c0_15 = arith.constant 0 : index
    %12 = vector.load %arg4[%c0_13, %c0_14, %c0_15] : memref<4x256x64xf32, #tpu.memory_space<vmem>>, vector<1x256x64xf32>
    %13 = vector.shape_cast %12 : vector<1x256x64xf32> to vector<256x64xf32>
    %cst_16 = arith.constant dense<0.000000e+00> : vector<256x64xf32>
    %14 = tpu.matmul %3, %13, %cst_16 {dimension_numbers = #tpu.dot_dimension_numbers<[1], [0], [0], [1], [0, 0, 1, 1], [], []>} : vector<256x256xf32>, vector<256x64xf32>, vector<256x64xf32> -> vector<256x64xf32>
    %15 = tpu.transpose %11, [1, 0] : vector<256x64xf32> -> vector<64x256xf32>
    %cst_17 = arith.constant dense<0.000000e+00> : vector<256x256xf32>
    %16 = tpu.matmul %8, %15, %cst_17 {dimension_numbers = #tpu.dot_dimension_numbers<[1], [0], [0], [1], [0, 0, 1, 1], [], []>} : vector<256x64xf32>, vector<64x256xf32>, vector<256x256xf32> -> vector<256x256xf32>
    %cst_18 = arith.constant dense<0xFF800000> : vector<256xf32>
    %17 = vector.multi_reduction <maximumf>, %16, %cst_18 [1] : vector<256x256xf32> to vector<256xf32>
    %18 = vector.shape_cast %17 : vector<256xf32> to vector<256x1xf32>
    %19 = vector.broadcast %18 : vector<256x1xf32> to vector<256x256xf32>
    %20 = arith.subf %16, %19 : vector<256x256xf32>
    %21 = math.exp %20 : vector<256x256xf32>
    %cst_19 = arith.constant dense<0.000000e+00> : vector<256xf32>
    %22 = vector.multi_reduction <add>, %21, %cst_19 [1] : vector<256x256xf32> to vector<256xf32>
    %23 = vector.shape_cast %22 : vector<256xf32> to vector<256x1xf32>
    %cst_20 = arith.constant dense<0.000000e+00> : vector<256x64xf32>
    %24 = tpu.matmul %21, %14, %cst_20 {dimension_numbers = #tpu.dot_dimension_numbers<[1], [0], [0], [1], [0, 0, 1, 1], [], []>} : vector<256x256xf32>, vector<256x64xf32>, vector<256x64xf32> -> vector<256x64xf32>
    %25 = tpu.reciprocal %23 {approx = true} : vector<256x1xf32> -> vector<256x1xf32>
    %26 = vector.broadcast %25 : vector<256x1xf32> to vector<256x64xf32>
    %27 = arith.mulf %24, %26 : vector<256x64xf32>
    %c0_21 = arith.constant 0 : index
    %c0_22 = arith.constant 0 : index
    %c0_23 = arith.constant 0 : index
    %28 = vector.load %arg5[%c0_21, %c0_22, %c0_23] : memref<4x64x256xf32, #tpu.memory_space<vmem>>, vector<1x64x256xf32>
    %29 = vector.shape_cast %28 : vector<1x64x256xf32> to vector<64x256xf32>
    %cst_24 = arith.constant dense<0.000000e+00> : vector<256x256xf32>
    %30 = tpu.matmul %27, %29, %cst_24 {dimension_numbers = #tpu.dot_dimension_numbers<[1], [0], [0], [1], [0, 0, 1, 1], [], []>} : vector<256x64xf32>, vector<64x256xf32>, vector<256x256xf32> -> vector<256x256xf32>
    %c1 = arith.constant 1 : index
    %c0_25 = arith.constant 0 : index
    %c0_26 = arith.constant 0 : index
    %31 = vector.load %arg2[%c1, %c0_25, %c0_26] : memref<4x256x64xf32, #tpu.memory_space<vmem>>, vector<1x256x64xf32>
    %32 = vector.shape_cast %31 : vector<1x256x64xf32> to vector<256x64xf32>
    %cst_27 = arith.constant dense<0.000000e+00> : vector<256x64xf32>
    %33 = tpu.matmul %1, %32, %cst_27 {dimension_numbers = #tpu.dot_dimension_numbers<[1], [0], [0], [1], [0, 0, 1, 1], [], []>} : vector<256x256xf32>, vector<256x64xf32>, vector<256x64xf32> -> vector<256x64xf32>
    %cst_28 = arith.constant 1.250000e-01 : f32
    %34 = vector.broadcast %cst_28 : f32 to vector<256x64xf32>
    %35 = arith.mulf %33, %34 : vector<256x64xf32>
    %c1_29 = arith.constant 1 : index
    %c0_30 = arith.constant 0 : index
    %c0_31 = arith.constant 0 : index
    %36 = vector.load %arg3[%c1_29, %c0_30, %c0_31] : memref<4x256x64xf32, #tpu.memory_space<vmem>>, vector<1x256x64xf32>
    %37 = vector.shape_cast %36 : vector<1x256x64xf32> to vector<256x64xf32>
    %cst_32 = arith.constant dense<0.000000e+00> : vector<256x64xf32>
    %38 = tpu.matmul %3, %37, %cst_32 {dimension_numbers = #tpu.dot_dimension_numbers<[1], [0], [0], [1], [0, 0, 1, 1], [], []>} : vector<256x256xf32>, vector<256x64xf32>, vector<256x64xf32> -> vector<256x64xf32>
    %c1_33 = arith.constant 1 : index
    %c0_34 = arith.constant 0 : index
    %c0_35 = arith.constant 0 : index
    %39 = vector.load %arg4[%c1_33, %c0_34, %c0_35] : memref<4x256x64xf32, #tpu.memory_space<vmem>>, vector<1x256x64xf32>
    %40 = vector.shape_cast %39 : vector<1x256x64xf32> to vector<256x64xf32>
    %cst_36 = arith.constant dense<0.000000e+00> : vector<256x64xf32>
    %41 = tpu.matmul %3, %40, %cst_36 {dimension_numbers = #tpu.dot_dimension_numbers<[1], [0], [0], [1], [0, 0, 1, 1], [], []>} : vector<256x256xf32>, vector<256x64xf32>, vector<256x64xf32> -> vector<256x64xf32>
    %42 = tpu.transpose %38, [1, 0] : vector<256x64xf32> -> vector<64x256xf32>
    %cst_37 = arith.constant dense<0.000000e+00> : vector<256x256xf32>
    %43 = tpu.matmul %35, %42, %cst_37 {dimension_numbers = #tpu.dot_dimension_numbers<[1], [0], [0], [1], [0, 0, 1, 1], [], []>} : vector<256x64xf32>, vector<64x256xf32>, vector<256x256xf32> -> vector<256x256xf32>
    %cst_38 = arith.constant dense<0xFF800000> : vector<256xf32>
    %44 = vector.multi_reduction <maximumf>, %43, %cst_38 [1] : vector<256x256xf32> to vector<256xf32>
    %45 = vector.shape_cast %44 : vector<256xf32> to vector<256x1xf32>
    %46 = vector.broadcast %45 : vector<256x1xf32> to vector<256x256xf32>
    %47 = arith.subf %43, %46 : vector<256x256xf32>
    %48 = math.exp %47 : vector<256x256xf32>
    %cst_39 = arith.constant dense<0.000000e+00> : vector<256xf32>
    %49 = vector.multi_reduction <add>, %48, %cst_39 [1] : vector<256x256xf32> to vector<256xf32>
    %50 = vector.shape_cast %49 : vector<256xf32> to vector<256x1xf32>
    %cst_40 = arith.constant dense<0.000000e+00> : vector<256x64xf32>
    %51 = tpu.matmul %48, %41, %cst_40 {dimension_numbers = #tpu.dot_dimension_numbers<[1], [0], [0], [1], [0, 0, 1, 1], [], []>} : vector<256x256xf32>, vector<256x64xf32>, vector<256x64xf32> -> vector<256x64xf32>
    %52 = tpu.reciprocal %50 {approx = true} : vector<256x1xf32> -> vector<256x1xf32>
    %53 = vector.broadcast %52 : vector<256x1xf32> to vector<256x64xf32>
    %54 = arith.mulf %51, %53 : vector<256x64xf32>
    %c1_41 = arith.constant 1 : index
    %c0_42 = arith.constant 0 : index
    %c0_43 = arith.constant 0 : index
    %55 = vector.load %arg5[%c1_41, %c0_42, %c0_43] : memref<4x64x256xf32, #tpu.memory_space<vmem>>, vector<1x64x256xf32>
    %56 = vector.shape_cast %55 : vector<1x64x256xf32> to vector<64x256xf32>
    %cst_44 = arith.constant dense<0.000000e+00> : vector<256x256xf32>
    %57 = tpu.matmul %54, %56, %cst_44 {dimension_numbers = #tpu.dot_dimension_numbers<[1], [0], [0], [1], [0, 0, 1, 1], [], []>} : vector<256x64xf32>, vector<64x256xf32>, vector<256x256xf32> -> vector<256x256xf32>
    %58 = arith.addf %30, %57 : vector<256x256xf32>
    %c2 = arith.constant 2 : index
    %c0_45 = arith.constant 0 : index
    %c0_46 = arith.constant 0 : index
    %59 = vector.load %arg2[%c2, %c0_45, %c0_46] : memref<4x256x64xf32, #tpu.memory_space<vmem>>, vector<1x256x64xf32>
    %60 = vector.shape_cast %59 : vector<1x256x64xf32> to vector<256x64xf32>
    %cst_47 = arith.constant dense<0.000000e+00> : vector<256x64xf32>
    %61 = tpu.matmul %1, %60, %cst_47 {dimension_numbers = #tpu.dot_dimension_numbers<[1], [0], [0], [1], [0, 0, 1, 1], [], []>} : vector<256x256xf32>, vector<256x64xf32>, vector<256x64xf32> -> vector<256x64xf32>
    %cst_48 = arith.constant 1.250000e-01 : f32
    %62 = vector.broadcast %cst_48 : f32 to vector<256x64xf32>
    %63 = arith.mulf %61, %62 : vector<256x64xf32>
    %c2_49 = arith.constant 2 : index
    %c0_50 = arith.constant 0 : index
    %c0_51 = arith.constant 0 : index
    %64 = vector.load %arg3[%c2_49, %c0_50, %c0_51] : memref<4x256x64xf32, #tpu.memory_space<vmem>>, vector<1x256x64xf32>
    %65 = vector.shape_cast %64 : vector<1x256x64xf32> to vector<256x64xf32>
    %cst_52 = arith.constant dense<0.000000e+00> : vector<256x64xf32>
    %66 = tpu.matmul %3, %65, %cst_52 {dimension_numbers = #tpu.dot_dimension_numbers<[1], [0], [0], [1], [0, 0, 1, 1], [], []>} : vector<256x256xf32>, vector<256x64xf32>, vector<256x64xf32> -> vector<256x64xf32>
    %c2_53 = arith.constant 2 : index
    %c0_54 = arith.constant 0 : index
    %c0_55 = arith.constant 0 : index
    %67 = vector.load %arg4[%c2_53, %c0_54, %c0_55] : memref<4x256x64xf32, #tpu.memory_space<vmem>>, vector<1x256x64xf32>
    %68 = vector.shape_cast %67 : vector<1x256x64xf32> to vector<256x64xf32>
    %cst_56 = arith.constant dense<0.000000e+00> : vector<256x64xf32>
    %69 = tpu.matmul %3, %68, %cst_56 {dimension_numbers = #tpu.dot_dimension_numbers<[1], [0], [0], [1], [0, 0, 1, 1], [], []>} : vector<256x256xf32>, vector<256x64xf32>, vector<256x64xf32> -> vector<256x64xf32>
    %70 = tpu.transpose %66, [1, 0] : vector<256x64xf32> -> vector<64x256xf32>
    %cst_57 = arith.constant dense<0.000000e+00> : vector<256x256xf32>
    %71 = tpu.matmul %63, %70, %cst_57 {dimension_numbers = #tpu.dot_dimension_numbers<[1], [0], [0], [1], [0, 0, 1, 1], [], []>} : vector<256x64xf32>, vector<64x256xf32>, vector<256x256xf32> -> vector<256x256xf32>
    %cst_58 = arith.constant dense<0xFF800000> : vector<256xf32>
    %72 = vector.multi_reduction <maximumf>, %71, %cst_58 [1] : vector<256x256xf32> to vector<256xf32>
    %73 = vector.shape_cast %72 : vector<256xf32> to vector<256x1xf32>
    %74 = vector.broadcast %73 : vector<256x1xf32> to vector<256x256xf32>
    %75 = arith.subf %71, %74 : vector<256x256xf32>
    %76 = math.exp %75 : vector<256x256xf32>
    %cst_59 = arith.constant dense<0.000000e+00> : vector<256xf32>
    %77 = vector.multi_reduction <add>, %76, %cst_59 [1] : vector<256x256xf32> to vector<256xf32>
    %78 = vector.shape_cast %77 : vector<256xf32> to vector<256x1xf32>
    %cst_60 = arith.constant dense<0.000000e+00> : vector<256x64xf32>
    %79 = tpu.matmul %76, %69, %cst_60 {dimension_numbers = #tpu.dot_dimension_numbers<[1], [0], [0], [1], [0, 0, 1, 1], [], []>} : vector<256x256xf32>, vector<256x64xf32>, vector<256x64xf32> -> vector<256x64xf32>
    %80 = tpu.reciprocal %78 {approx = true} : vector<256x1xf32> -> vector<256x1xf32>
    %81 = vector.broadcast %80 : vector<256x1xf32> to vector<256x64xf32>
    %82 = arith.mulf %79, %81 : vector<256x64xf32>
    %c2_61 = arith.constant 2 : index
    %c0_62 = arith.constant 0 : index
    %c0_63 = arith.constant 0 : index
    %83 = vector.load %arg5[%c2_61, %c0_62, %c0_63] : memref<4x64x256xf32, #tpu.memory_space<vmem>>, vector<1x64x256xf32>
    %84 = vector.shape_cast %83 : vector<1x64x256xf32> to vector<64x256xf32>
    %cst_64 = arith.constant dense<0.000000e+00> : vector<256x256xf32>
    %85 = tpu.matmul %82, %84, %cst_64 {dimension_numbers = #tpu.dot_dimension_numbers<[1], [0], [0], [1], [0, 0, 1, 1], [], []>} : vector<256x64xf32>, vector<64x256xf32>, vector<256x256xf32> -> vector<256x256xf32>
    %86 = arith.addf %58, %85 : vector<256x256xf32>
    %c3 = arith.constant 3 : index
    %c0_65 = arith.constant 0 : index
    %c0_66 = arith.constant 0 : index
    %87 = vector.load %arg2[%c3, %c0_65, %c0_66] : memref<4x256x64xf32, #tpu.memory_space<vmem>>, vector<1x256x64xf32>
    %88 = vector.shape_cast %87 : vector<1x256x64xf32> to vector<256x64xf32>
    %cst_67 = arith.constant dense<0.000000e+00> : vector<256x64xf32>
    %89 = tpu.matmul %1, %88, %cst_67 {dimension_numbers = #tpu.dot_dimension_numbers<[1], [0], [0], [1], [0, 0, 1, 1], [], []>} : vector<256x256xf32>, vector<256x64xf32>, vector<256x64xf32> -> vector<256x64xf32>
    %cst_68 = arith.constant 1.250000e-01 : f32
    %90 = vector.broadcast %cst_68 : f32 to vector<256x64xf32>
    %91 = arith.mulf %89, %90 : vector<256x64xf32>
    %c3_69 = arith.constant 3 : index
    %c0_70 = arith.constant 0 : index
    %c0_71 = arith.constant 0 : index
    %92 = vector.load %arg3[%c3_69, %c0_70, %c0_71] : memref<4x256x64xf32, #tpu.memory_space<vmem>>, vector<1x256x64xf32>
    %93 = vector.shape_cast %92 : vector<1x256x64xf32> to vector<256x64xf32>
    %cst_72 = arith.constant dense<0.000000e+00> : vector<256x64xf32>
    %94 = tpu.matmul %3, %93, %cst_72 {dimension_numbers = #tpu.dot_dimension_numbers<[1], [0], [0], [1], [0, 0, 1, 1], [], []>} : vector<256x256xf32>, vector<256x64xf32>, vector<256x64xf32> -> vector<256x64xf32>
    %c3_73 = arith.constant 3 : index
    %c0_74 = arith.constant 0 : index
    %c0_75 = arith.constant 0 : index
    %95 = vector.load %arg4[%c3_73, %c0_74, %c0_75] : memref<4x256x64xf32, #tpu.memory_space<vmem>>, vector<1x256x64xf32>
    %96 = vector.shape_cast %95 : vector<1x256x64xf32> to vector<256x64xf32>
    %cst_76 = arith.constant dense<0.000000e+00> : vector<256x64xf32>
    %97 = tpu.matmul %3, %96, %cst_76 {dimension_numbers = #tpu.dot_dimension_numbers<[1], [0], [0], [1], [0, 0, 1, 1], [], []>} : vector<256x256xf32>, vector<256x64xf32>, vector<256x64xf32> -> vector<256x64xf32>
    %98 = tpu.transpose %94, [1, 0] : vector<256x64xf32> -> vector<64x256xf32>
    %cst_77 = arith.constant dense<0.000000e+00> : vector<256x256xf32>
    %99 = tpu.matmul %91, %98, %cst_77 {dimension_numbers = #tpu.dot_dimension_numbers<[1], [0], [0], [1], [0, 0, 1, 1], [], []>} : vector<256x64xf32>, vector<64x256xf32>, vector<256x256xf32> -> vector<256x256xf32>
    %cst_78 = arith.constant dense<0xFF800000> : vector<256xf32>
    %100 = vector.multi_reduction <maximumf>, %99, %cst_78 [1] : vector<256x256xf32> to vector<256xf32>
    %101 = vector.shape_cast %100 : vector<256xf32> to vector<256x1xf32>
    %102 = vector.broadcast %101 : vector<256x1xf32> to vector<256x256xf32>
    %103 = arith.subf %99, %102 : vector<256x256xf32>
    %104 = math.exp %103 : vector<256x256xf32>
    %cst_79 = arith.constant dense<0.000000e+00> : vector<256xf32>
    %105 = vector.multi_reduction <add>, %104, %cst_79 [1] : vector<256x256xf32> to vector<256xf32>
    %106 = vector.shape_cast %105 : vector<256xf32> to vector<256x1xf32>
    %cst_80 = arith.constant dense<0.000000e+00> : vector<256x64xf32>
    %107 = tpu.matmul %104, %97, %cst_80 {dimension_numbers = #tpu.dot_dimension_numbers<[1], [0], [0], [1], [0, 0, 1, 1], [], []>} : vector<256x256xf32>, vector<256x64xf32>, vector<256x64xf32> -> vector<256x64xf32>
    %108 = tpu.reciprocal %106 {approx = true} : vector<256x1xf32> -> vector<256x1xf32>
    %109 = vector.broadcast %108 : vector<256x1xf32> to vector<256x64xf32>
    %110 = arith.mulf %107, %109 : vector<256x64xf32>
    %c3_81 = arith.constant 3 : index
    %c0_82 = arith.constant 0 : index
    %c0_83 = arith.constant 0 : index
    %111 = vector.load %arg5[%c3_81, %c0_82, %c0_83] : memref<4x64x256xf32, #tpu.memory_space<vmem>>, vector<1x64x256xf32>
    %112 = vector.shape_cast %111 : vector<1x64x256xf32> to vector<64x256xf32>
    %cst_84 = arith.constant dense<0.000000e+00> : vector<256x256xf32>
    %113 = tpu.matmul %110, %112, %cst_84 {dimension_numbers = #tpu.dot_dimension_numbers<[1], [0], [0], [1], [0, 0, 1, 1], [], []>} : vector<256x64xf32>, vector<64x256xf32>, vector<256x256xf32> -> vector<256x256xf32>
    %114 = arith.addf %86, %113 : vector<256x256xf32>
    %c0_85 = arith.constant 0 : index
    %c0_86 = arith.constant 0 : index
    %115 = vector.load %arg6[%c0_85, %c0_86] : memref<1x256xf32, #tpu.memory_space<vmem>>, vector<1x256xf32>
    %116 = vector.broadcast %115 : vector<1x256xf32> to vector<256x256xf32>
    %117 = arith.addf %114, %116 : vector<256x256xf32>
    %c0_87 = arith.constant 0 : index
    %c0_88 = arith.constant 0 : index
    %c0_89 = arith.constant 0 : index
    %118 = vector.load %arg7[%c0_87, %c0_88, %c0_89] : memref<1x256x256xf32, #tpu.memory_space<vmem>>, vector<1x256x256xf32>
    %119 = vector.shape_cast %118 : vector<1x256x256xf32> to vector<256x256xf32>
    %120 = vector.shape_cast %117 : vector<256x256xf32> to vector<1x256x256xf32>
    tpu.vector_store %arg7[%c0_87, %c0_88, %c0_89], %120 {strides = array<i32>} : memref<1x256x256xf32, #tpu.memory_space<vmem>>, vector<1x256x256xf32>,
    return
  }
  func.func @transform_0(%arg0: i32) -> (i32, i32, i32) {
    %c0_i32 = arith.constant 0 : i32
    %c0_i32_0 = arith.constant 0 : i32
    %c0_i32_1 = arith.constant 0 : i32
    return %arg0, %c0_i32, %c0_i32_0 : i32, i32, i32
  }
  func.func @transform_1(%arg0: i32) -> (i32, i32, i32) {
    %c0_i32 = arith.constant 0 : i32
    %c0_i32_0 = arith.constant 0 : i32
    %c0_i32_1 = arith.constant 0 : i32
    %c0_i32_2 = arith.constant 0 : i32
    return %c0_i32, %c0_i32_0, %c0_i32_1 : i32, i32, i32
  }
  func.func @transform_2(%arg0: i32) -> (i32, i32, i32) {
    %c0_i32 = arith.constant 0 : i32
    %c0_i32_0 = arith.constant 0 : i32
    %c0_i32_1 = arith.constant 0 : i32
    %c0_i32_2 = arith.constant 0 : i32
    return %c0_i32, %c0_i32_0, %c0_i32_1 : i32, i32, i32
  }
  func.func @transform_3(%arg0: i32) -> (i32, i32, i32) {
    %c0_i32 = arith.constant 0 : i32
    %c0_i32_0 = arith.constant 0 : i32
    %c0_i32_1 = arith.constant 0 : i32
    %c0_i32_2 = arith.constant 0 : i32
    return %c0_i32, %c0_i32_0, %c0_i32_1 : i32, i32, i32
  }
  func.func @transform_4(%arg0: i32) -> (i32, i32, i32) {
    %c0_i32 = arith.constant 0 : i32
    %c0_i32_0 = arith.constant 0 : i32
    %c0_i32_1 = arith.constant 0 : i32
    %c0_i32_2 = arith.constant 0 : i32
    return %c0_i32, %c0_i32_0, %c0_i32_1 : i32, i32, i32
  }
  func.func @transform_5(%arg0: i32) -> (i32, i32) {
    %c0_i32 = arith.constant 0 : i32
    %c0_i32_0 = arith.constant 0 : i32
    %c0_i32_1 = arith.constant 0 : i32
    return %c0_i32, %c0_i32_0 : i32, i32
  }
  func.func @transform_6(%arg0: i32) -> (i32, i32, i32) {
    %c0_i32 = arith.constant 0 : i32
    %c0_i32_0 = arith.constant 0 : i32
    %c0_i32_1 = arith.constant 0 : i32
    return %arg0, %c0_i32, %c0_i32_0 : i32, i32, i32
  }
}

</mosaic_0001>

<llo_original>
// kernel: tpu_custom_call.1
$region0: #{tpu_custom_call.1}
  #allocation0 [shape = 'u32[]', space=smem, size = 0x4, offset = 0x4, fixed_abs, tag = 'smem constant byte address 0x4 - core index']
  #allocation1 [shape = 'u32[144,128]{1,0:T(1,128)}', space=vmem, size = 0x12000, scoped, tag = 'internal scratch']
  %s0 = inlined_call_operand.vmem [shape: f32[2,256,256], index: 0, kind: input, shape index: {}]
  %s1 = inlined_call_operand.vmem [shape: f32[4,256,64], index: 1, kind: input, shape index: {}]
  %s2 = inlined_call_operand.vmem [shape: f32[4,256,64], index: 2, kind: input, shape index: {}]
  %s3 = inlined_call_operand.vmem [shape: f32[4,256,64], index: 3, kind: input, shape index: {}]
  %s4 = inlined_call_operand.vmem [shape: f32[4,64,256], index: 4, kind: input, shape index: {}]
  %s5 = inlined_call_operand.vmem [shape: f32[1,256], index: 5, kind: input, shape index: {}]
  %s6 = inlined_call_operand.hbm [shape: f32[2,256,256], index: 6, kind: output, shape index: {}]
  %s7 = sld [smem:[#allocation0]]
  $region57: #{tpu_custom_call.1} parent=0
    _
  %s9 = ssub.s32 1, %s7
  %s10 = scalar_select 0, %s9, %s7
  $region1: #{tpu_custom_call.1} parent=0
    #allocation2 [shape = 'u8[524288]{0}', space=vmem, size = 0x80000, scoped, tag = 'output window, operand 0']
    #allocation3 [shape = 's32[2]{0}', space=sflag, size = 0x8, scoped, tag = 'scoped memory for tpu_custom_call.1']
    %11 = vsyncpa [#allocation3], 0
    %s12 = scalar_lea.sflag [#allocation3], 1
    %13 = vsyncpa %s12, 0
    loop: start=0, step=1, limit=4
    $region2: #{tpu_custom_call.1} parent=1 // loop_pre_header
      _
    $region3: #{tpu_custom_call.1} parent=1 // loop_header
      %s15 = sphi 0, %s19
      %p16 = scmp.ge.s32.totalorder %s15, 4
      %s25 = sphi 0, %s27
      %s28 = sphi 0, %s25
      %s29 = sphi 0, %s28
      %s45 = sphi 0, %s29
      %s49 = sphi 0, %s49
      %s51 = sphi 0, %s49
      %s52 = sphi 0, %s51
      %s66 = sphi 0, %s52
      %s70 = sphi 0, %s70
      %s72 = sphi 0, %s70
      %s73 = sphi 0, %s72
      %s87 = sphi 0, %s73
      %s91 = sphi 0, %s91
      %s93 = sphi 0, %s91
      %s94 = sphi 0, %s93
      %s108 = sphi 0, %s94
      %s112 = sphi 0, %s112
      %s114 = sphi 0, %s112
      %s115 = sphi 0, %s114
      %s129 = sphi 0, %s115
      %s133 = sphi 0, %s133
      %s135 = sphi 0, %s133
      %s136 = sphi 0, %s135
      %s150 = sphi 0, %s136
      %s156 = sphi 0, %s158
      %s159 = sphi 0, %s156
      %s160 = sphi 0, %s159
      %s176 = sphi 0, %s160
    $region4: #{tpu_custom_call.1} parent=1 // loop_header_branch
      %18 = sbr.rel (%p16) target = $region8
    $region5: #{tpu_custom_call.1} parent=1 // loop_body
      %s20 = ssub.s32 %s15, 1
      %s21 = ssub.s32 %s15, 2
      %s22 = sadd.s32 %s15, 1
      %s23 = ssub.s32 %s15, %s22
      %p24 = scmp.eq.s32.totalorder %s23, 0
      %s26 = sadd.s32 %s25, 1
      %s27 = scalar_select %p24, %s25, %s26
      %p30 = pneg %p24
      %p31 = scmp.eq.s32.totalorder %s15, 1
      %p32 = por %p30, %p31
      %p33 = scmp.ne.s32.totalorder %s25, %s28
      %p34 = scmp.eq.s32.totalorder %s15, 0
      %p35 = por %p33, %p34
      %p36 = scmp.ne.s32.totalorder %s25, %s28
      %p37 = scmp.eq.s32.totalorder %s20, 1
      %p38 = por %p36, %p37
      %p39 = scmp.ne.s32.totalorder %s28, %s29
      %p40 = scmp.eq.s32.totalorder %s20, 0
      %p41 = por %p39, %p40
      %p42 = scmp.ne.s32.totalorder %s28, %s29
      %p43 = scmp.eq.s32.totalorder %s21, 1
      %p44 = por %p42, %p43
      %p46 = scmp.ne.s32.totalorder %s29, %s45
      %p47 = scmp.eq.s32.totalorder %s21, 0
      %p48 = por %p46, %p47
      %s50 = sadd.s32 %s49, 1
      %p53 = scmp.eq.s32.totalorder %s15, 1
      %p54 = scmp.ne.s32.totalorder %s49, %s51
      %p55 = scmp.eq.s32.totalorder %s15, 0
      %p56 = por %p54, %p55
      %p57 = scmp.ne.s32.totalorder %s49, %s51
      %p58 = scmp.eq.s32.totalorder %s20, 1
      %p59 = por %p57, %p58
      %p60 = scmp.ne.s32.totalorder %s51, %s52
      %p61 = scmp.eq.s32.totalorder %s20, 0
      %p62 = por %p60, %p61
      %p63 = scmp.ne.s32.totalorder %s51, %s52
      %p64 = scmp.eq.s32.totalorder %s21, 1
      %p65 = por %p63, %p64
      %p67 = scmp.ne.s32.totalorder %s52, %s66
      %p68 = scmp.eq.s32.totalorder %s21, 0
      %p69 = por %p67, %p68
      %s71 = sadd.s32 %s70, 1
      %p74 = scmp.eq.s32.totalorder %s15, 1
      %p75 = scmp.ne.s32.totalorder %s70, %s72
      %p76 = scmp.eq.s32.totalorder %s15, 0
      %p77 = por %p75, %p76
      %p78 = scmp.ne.s32.totalorder %s70, %s72
      %p79 = scmp.eq.s32.totalorder %s20, 1
      %p80 = por %p78, %p79
      %p81 = scmp.ne.s32.totalorder %s72, %s73
      %p82 = scmp.eq.s32.totalorder %s20, 0
      %p83 = por %p81, %p82
      %p84 = scmp.ne.s32.totalorder %s72, %s73
      %p85 = scmp.eq.s32.totalorder %s21, 1
      %p86 = por %p84, %p85
      %p88 = scmp.ne.s32.totalorder %s73, %s87
      %p89 = scmp.eq.s32.totalorder %s21, 0
      %p90 = por %p88, %p89
      %s92 = sadd.s32 %s91, 1
      %p95 = scmp.eq.s32.totalorder %s15, 1
      %p96 = scmp.ne.s32.totalorder %s91, %s93
      %p97 = scmp.eq.s32.totalorder %s15, 0
      %p98 = por %p96, %p97
      %p99 = scmp.ne.s32.totalorder %s91, %s93
      %p100 = scmp.eq.s32.totalorder %s20, 1
      %p101 = por %p99, %p100
      %p102 = scmp.ne.s32.totalorder %s93, %s94
      %p103 = scmp.eq.s32.totalorder %s20, 0
      %p104 = por %p102, %p103
      %p105 = scmp.ne.s32.totalorder %s93, %s94
      %p106 = scmp.eq.s32.totalorder %s21, 1
      %p107 = por %p105, %p106
      %p109 = scmp.ne.s32.totalorder %s94, %s108
      %p110 = scmp.eq.s32.totalorder %s21, 0
      %p111 = por %p109, %p110
      %s113 = sadd.s32 %s112, 1
      %p116 = scmp.eq.s32.totalorder %s15, 1
      %p117 = scmp.ne.s32.totalorder %s112, %s114
      %p118 = scmp.eq.s32.totalorder %s15, 0
      %p119 = por %p117, %p118
      %p120 = scmp.ne.s32.totalorder %s112, %s114
      %p121 = scmp.eq.s32.totalorder %s20, 1
      %p122 = por %p120, %p121
      %p123 = scmp.ne.s32.totalorder %s114, %s115
      %p124 = scmp.eq.s32.totalorder %s20, 0
      %p125 = por %p123, %p124
      %p126 = scmp.ne.s32.totalorder %s114, %s115
      %p127 = scmp.eq.s32.totalorder %s21, 1
      %p128 = por %p126, %p127
      %p130 = scmp.ne.s32.totalorder %s115, %s129
      %p131 = scmp.eq.s32.totalorder %s21, 0
      %p132 = por %p130, %p131
      %s134 = sadd.s32 %s133, 1
      %p137 = scmp.eq.s32.totalorder %s15, 1
      %p138 = scmp.ne.s32.totalorder %s133, %s135
      %p139 = scmp.eq.s32.totalorder %s15, 0
      %p140 = por %p138, %p139
      %p141 = scmp.ne.s32.totalorder %s133, %s135
      %p142 = scmp.eq.s32.totalorder %s20, 1
      %p143 = por %p141, %p142
      %p144 = scmp.ne.s32.totalorder %s135, %s136
      %p145 = scmp.eq.s32.totalorder %s20, 0
      %p146 = por %p144, %p145
      %p147 = scmp.ne.s32.totalorder %s135, %s136
      %p148 = scmp.eq.s32.totalorder %s21, 1
      %p149 = por %p147, %p148
      %p151 = scmp.ne.s32.totalorder %s136, %s150
      %p152 = scmp.eq.s32.totalorder %s21, 0
      %p153 = por %p151, %p152
      %s154 = ssub.s32 %s15, %s22
      %p155 = scmp.eq.s32.totalorder %s154, 0
      %s157 = sadd.s32 %s156, 1
      %s158 = scalar_select %p155, %s156, %s157
      %p161 = pneg %p155
      %p162 = scmp.eq.s32.totalorder %s15, 1
      %p163 = por %p161, %p162
      %p164 = scmp.ne.s32.totalorder %s156, %s159
      %p165 = scmp.eq.s32.totalorder %s15, 0
      %p166 = por %p164, %p165
      %p167 = scmp.ne.s32.totalorder %s156, %s159
      %p168 = scmp.eq.s32.totalorder %s20, 1
      %p169 = por %p167, %p168
      %p170 = scmp.ne.s32.totalorder %s159, %s160
      %p171 = scmp.eq.s32.totalorder %s20, 0
      %p172 = por %p170, %p171
      %p173 = scmp.ne.s32.totalorder %s159, %s160
      %p174 = scmp.eq.s32.totalorder %s21, 1
      %p175 = por %p173, %p174
      %p177 = scmp.ne.s32.totalorder %s160, %s176
      %p178 = scmp.eq.s32.totalorder %s21, 0
      %p179 = por %p177, %p178
      %p180 = scmp.le.s32.totalorder 1, %s15
      %p181 = scmp.lt.s32.totalorder %s15, 3
      %p182 = pnand %p180, %p181
      %p183 = pneg %p182
      // Predicated region
      $region9: #{tpu_custom_call.1} parent=5 // pred_check
        _
      $region10: #{tpu_custom_call.1} parent=5 // pred_check_branch
        %185 = sbr.rel (%p182) target = $region12
      $region11: #{tpu_custom_call.1} parent=5 // pred_region
        %s186 = ssub.s32 %s15, 1
        // Predicated region
        $region13: #{tpu_custom_call.1} parent=11 // pred_check
          %p187 = pneg %p62
        $region14: #{tpu_custom_call.1} parent=11 // pred_check_branch
          %189 = sbr.rel (%p187) target = $region16
        $region15: #{tpu_custom_call.1} parent=11 // pred_region
          _
        $region16: #{tpu_custom_call.1} parent=11 // pred_fallthru
          _
        // Predicated region
        $region17: #{tpu_custom_call.1} parent=11 // pred_check
          %p190 = pneg %p83
        $region18: #{tpu_custom_call.1} parent=11 // pred_check_branch
          %192 = sbr.rel (%p190) target = $region20
        $region19: #{tpu_custom_call.1} parent=11 // pred_region
          _
        $region20: #{tpu_custom_call.1} parent=11 // pred_fallthru
          _
        // Predicated region
        $region21: #{tpu_custom_call.1} parent=11 // pred_check
          %p193 = pneg %p104
        $region22: #{tpu_custom_call.1} parent=11 // pred_check_branch
          %195 = sbr.rel (%p193) target = $region24
        $region23: #{tpu_custom_call.1} parent=11 // pred_region
          _
        $region24: #{tpu_custom_call.1} parent=11 // pred_fallthru
          _
        // Predicated region
        $region25: #{tpu_custom_call.1} parent=11 // pred_check
          %p196 = pneg %p125
        $region26: #{tpu_custom_call.1} parent=11 // pred_check_branch
          %198 = sbr.rel (%p196) target = $region28
        $region27: #{tpu_custom_call.1} parent=11 // pred_region
          _
        $region28: #{tpu_custom_call.1} parent=11 // pred_fallthru
          _
        // Predicated region
        $region29: #{tpu_custom_call.1} parent=11 // pred_check
          %p199 = pneg %p146
        $region30: #{tpu_custom_call.1} parent=11 // pred_check_branch
          %201 = sbr.rel (%p199) target = $region32
        $region31: #{tpu_custom_call.1} parent=11 // pred_region
          _
        $region32: #{tpu_custom_call.1} parent=11 // pred_fallthru
          _
      $region12: #{tpu_custom_call.1} parent=5 // pred_fallthru
        _
      %p202 = scmp.lt.s32.totalorder %s15, 2
      // Predicated region
      $region33: #{tpu_custom_call.1} parent=5 // pred_check
        %p203 = pneg %p202
      $region34: #{tpu_custom_call.1} parent=5 // pred_check_branch
        %205 = sbr.rel (%p203) target = $region36
      $region35: #{tpu_custom_call.1} parent=5 // pred_region
        // Predicated region
        $region37: #{tpu_custom_call.1} parent=35 // pred_check
          %p206 = pneg %p35
        $region38: #{tpu_custom_call.1} parent=35 // pred_check_branch
          %208 = sbr.rel (%p206) target = $region40
        $region39: #{tpu_custom_call.1} parent=35 // pred_region
          %p209 = scmp.lt.s32.totalorder %s15, 1
          %s210 = scalar_select %p209, %s15, 1
          %s211 = smul.addr %s210, 64
          %s212 = smul.addr %s211, 8
          %s213 = scalar_lea.vmem %s0, %s212
        $region40: #{tpu_custom_call.1} parent=35 // pred_fallthru
          _
      $region36: #{tpu_custom_call.1} parent=5 // pred_fallthru
        _
      %p214 = scmp.le.s32.totalorder 1, %s15
      %p215 = scmp.lt.s32.totalorder %s15, 3
      %p216 = pnand %p214, %p215
      %p217 = pneg %p216
      // Predicated region
      $region41: #{tpu_custom_call.1} parent=5 // pred_check
        _
      $region42: #{tpu_custom_call.1} parent=5 // pred_check_branch
        %219 = sbr.rel (%p216) target = $region44
      $region43: #{tpu_custom_call.1} parent=5 // pred_region
        %s220 = ssub.s32 %s15, 1
        %p221 = scmp.lt.s32.totalorder %s20, 1
        %s222 = scalar_select %p221, %s20, 1
        %s223 = smul.addr %s222, 64
        %s224 = smul.addr %s223, 8
        %s225 = scalar_lea.vmem %s0, %s224
        %p226 = pneg %p41
        %p227 = pneg %p38
        %p228 = pneg %p62
        %p229 = pneg %p59
        %p230 = pneg %p83
        %p231 = pneg %p80
        %p232 = pneg %p104
        %p233 = pneg %p101
        %p234 = pneg %p125
        %p235 = pneg %p122
        %p236 = pneg %p146
        %p237 = pneg %p143
        %p238 = pneg %p172
        %p239 = pneg %p169
        %s240 = sand.u32 %s159, 1
        %s241 = scalar_lea.sflag [#allocation3], %s240
        %s242 = sand.u32 %s159, 1
        %s243 = smul.addr %s242, 512
        %s244 = scalar_lea.vmem [#allocation2], %s243
        %p245 = scmp.lt.s32.totalorder %s20, 1
        %s246 = scalar_select %p245, %s20, 1
        %s247 = smul.addr %s246, 64
        %s248 = smul.addr %s247, 8
        %s249 = scalar_lea.vmem %s0, %s248
        %v250 = vld [vmem:[%s249] sm:$0xff]
        %v251 = vld [vmem:[%s249 + $0x8] sm:$0xff]
        %v252 = vld [vmem:[%s249 + $0x10] sm:$0xff]
        %v253 = vld [vmem:[%s249 + $0x18] sm:$0xff]
        %v254 = vld [vmem:[%s249 + $0x20] sm:$0xff]
        %v255 = vld [vmem:[%s249 + $0x28] sm:$0xff]
        %v256 = vld [vmem:[%s249 + $0x30] sm:$0xff]
        %v257 = vld [vmem:[%s249 + $0x38] sm:$0xff]
        %v258 = vld [vmem:[%s249 + $0x40] sm:$0xff]
        %v259 = vld [vmem:[%s249 + $0x48] sm:$0xff]
        %v260 = vld [vmem:[%s249 + $0x50] sm:$0xff]
        %v261 = vld [vmem:[%s249 + $0x58] sm:$0xff]
        %v262 = vld [vmem:[%s249 + $0x60] sm:$0xff]
        %v263 = vld [vmem:[%s249 + $0x68] sm:$0xff]
        %v264 = vld [vmem:[%s249 + $0x70] sm:$0xff]
        %v265 = vld [vmem:[%s249 + $0x78] sm:$0xff]
        %v266 = vld [vmem:[%s249 + $0x80] sm:$0xff]
        %v267 = vld [vmem:[%s249 + $0x88] sm:$0xff]
        %v268 = vld [vmem:[%s249 + $0x90] sm:$0xff]
        %v269 = vld [vmem:[%s249 + $0x98] sm:$0xff]
        %v270 = vld [vmem:[%s249 + $0xa0] sm:$0xff]
        %v271 = vld [vmem:[%s249 + $0xa8] sm:$0xff]
        %v272 = vld [vmem:[%s249 + $0xb0] sm:$0xff]
        %v273 = vld [vmem:[%s249 + $0xb8] sm:$0xff]
        %v274 = vld [vmem:[%s249 + $0xc0] sm:$0xff]
        %v275 = vld [vmem:[%s249 + $0xc8] sm:$0xff]
        %v276 = vld [vmem:[%s249 + $0xd0] sm:$0xff]
        %v277 = vld [vmem:[%s249 + $0xd8] sm:$0xff]
        %v278 = vld [vmem:[%s249 + $0xe0] sm:$0xff]
        %v279 = vld [vmem:[%s249 + $0xe8] sm:$0xff]
        %v280 = vld [vmem:[%s249 + $0xf0] sm:$0xff]
        %v281 = vld [vmem:[%s249 + $0xf8] sm:$0xff]
        %v282 = vld [vmem:[%s249 + $0x100] sm:$0xff]
        %v283 = vld [vmem:[%s249 + $0x108] sm:$0xff]
        %v284 = vld [vmem:[%s249 + $0x110] sm:$0xff]
        %v285 = vld [vmem:[%s249 + $0x118] sm:$0xff]
        %v286 = vld [vmem:[%s249 + $0x120] sm:$0xff]
        %v287 = vld [vmem:[%s249 + $0x128] sm:$0xff]
        %v288 = vld [vmem:[%s249 + $0x130] sm:$0xff]
        %v289 = vld [vmem:[%s249 + $0x138] sm:$0xff]
        %v290 = vld [vmem:[%s249 + $0x140] sm:$0xff]
        %v291 = vld [vmem:[%s249 + $0x148] sm:$0xff]
        %v292 = vld [vmem:[%s249 + $0x150] sm:$0xff]
        %v293 = vld [vmem:[%s249 + $0x158] sm:$0xff]
        %v294 = vld [vmem:[%s249 + $0x160] sm:$0xff]
        %v295 = vld [vmem:[%s249 + $0x168] sm:$0xff]
        %v296 = vld [vmem:[%s249 + $0x170] sm:$0xff]
        %v297 = vld [vmem:[%s249 + $0x178] sm:$0xff]
        %v298 = vld [vmem:[%s249 + $0x180] sm:$0xff]
        %v299 = vld [vmem:[%s249 + $0x188] sm:$0xff]
        %v300 = vld [vmem:[%s249 + $0x190] sm:$0xff]
        %v301 = vld [vmem:[%s249 + $0x198] sm:$0xff]
        %v302 = vld [vmem:[%s249 + $0x1a0] sm:$0xff]
        %v303 = vld [vmem:[%s249 + $0x1a8] sm:$0xff]
        %v304 = vld [vmem:[%s249 + $0x1b0] sm:$0xff]
        %v305 = vld [vmem:[%s249 + $0x1b8] sm:$0xff]
        %v306 = vld [vmem:[%s249 + $0x1c0] sm:$0xff]
        %v307 = vld [vmem:[%s249 + $0x1c8] sm:$0xff]
        %v308 = vld [vmem:[%s249 + $0x1d0] sm:$0xff]
        %v309 = vld [vmem:[%s249 + $0x1d8] sm:$0xff]
        %v310 = vld [vmem:[%s249 + $0x1e0] sm:$0xff]
        %v311 = vld [vmem:[%s249 + $0x1e8] sm:$0xff]
        %v312 = vld [vmem:[%s249 + $0x1f0] sm:$0xff]
        %v313 = vld [vmem:[%s249 + $0x1f8] sm:$0xff]
        %v314 = vld [vmem:[%s1] sm:$0xff]
        %v315 = vld [vmem:[%s1 + $0x8] sm:$0xff]
        %v316 = vld [vmem:[%s1 + $0x10] sm:$0xff]
        %v317 = vld [vmem:[%s1 + $0x18] sm:$0xff]
        %v318 = vld [vmem:[%s1 + $0x20] sm:$0xff]
        %v319 = vld [vmem:[%s1 + $0x28] sm:$0xff]
        %v320 = vld [vmem:[%s1 + $0x30] sm:$0xff]
        %v321 = vld [vmem:[%s1 + $0x38] sm:$0xff]
        %v322 = vld [vmem:[%s1 + $0x40] sm:$0xff]
        %v323 = vld [vmem:[%s1 + $0x48] sm:$0xff]
        %v324 = vld [vmem:[%s1 + $0x50] sm:$0xff]
        %v325 = vld [vmem:[%s1 + $0x58] sm:$0xff]
        %v326 = vld [vmem:[%s1 + $0x60] sm:$0xff]
        %v327 = vld [vmem:[%s1 + $0x68] sm:$0xff]
        %v328 = vld [vmem:[%s1 + $0x70] sm:$0xff]
        %v329 = vld [vmem:[%s1 + $0x78] sm:$0xff]
        %v330 = vld [vmem:[%s1 + $0x80] sm:$0xff]
        %v331 = vld [vmem:[%s1 + $0x88] sm:$0xff]
        %v332 = vld [vmem:[%s1 + $0x90] sm:$0xff]
        %v333 = vld [vmem:[%s1 + $0x98] sm:$0xff]
        %v334 = vld [vmem:[%s1 + $0xa0] sm:$0xff]
        %v335 = vld [vmem:[%s1 + $0xa8] sm:$0xff]
        %v336 = vld [vmem:[%s1 + $0xb0] sm:$0xff]
        %v337 = vld [vmem:[%s1 + $0xb8] sm:$0xff]
        %v338 = vld [vmem:[%s1 + $0xc0] sm:$0xff]
        %v339 = vld [vmem:[%s1 + $0xc8] sm:$0xff]
        %v340 = vld [vmem:[%s1 + $0xd0] sm:$0xff]
        %v341 = vld [vmem:[%s1 + $0xd8] sm:$0xff]
        %v342 = vld [vmem:[%s1 + $0xe0] sm:$0xff]
        %v343 = vld [vmem:[%s1 + $0xe8] sm:$0xff]
        %v344 = vld [vmem:[%s1 + $0xf0] sm:$0xff]
        %v345 = vld [vmem:[%s1 + $0xf8] sm:$0xff]
        %346 = vmatprep.subr.mxu0 0.0
        %347 = vmatpush1.msra.mxu0 %v329
        %348 = vmatprep.subr.mxu0 0.0
        %349 = vmatpush1.msra.mxu0 %v328
        %350 = vmatprep.subr.mxu0 0.0
        %351 = vmatpush1.msra.mxu0 %v327
        %352 = vmatprep.subr.mxu0 0.0
        %353 = vmatpush1.msra.mxu0 %v326
        %354 = vmatprep.subr.mxu0 0.0
        %355 = vmatpush1.msra.mxu0 %v325
        %356 = vmatprep.subr.mxu0 0.0
        %357 = vmatpush1.msra.mxu0 %v324
        %358 = vmatprep.subr.mxu0 0.0
        %359 = vmatpush1.msra.mxu0 %v323
        %360 = vmatprep.subr.mxu0 0.0
        %361 = vmatpush1.msra.mxu0 %v322
        %362 = vmatprep.subr.mxu0 0.0
        %363 = vmatpush1.msra.mxu0 %v321
        %364 = vmatprep.subr.mxu0 0.0
        %365 = vmatpush1.msra.mxu0 %v320
        %366 = vmatprep.subr.mxu0 0.0
        %367 = vmatpush1.msra.mxu0 %v319
        %368 = vmatprep.subr.mxu0 0.0
        %369 = vmatpush1.msra.mxu0 %v318
        %370 = vmatprep.subr.mxu0 0.0
        %371 = vmatpush1.msra.mxu0 %v317
        %372 = vmatprep.subr.mxu0 0.0
        %373 = vmatpush1.msra.mxu0 %v316
        %374 = vmatprep.subr.mxu0 0.0
        %375 = vmatpush1.msra.mxu0 %v315
        %376 = vmatprep.subr.mxu0 0.0
        %377 = vmatpush1.msra.mxu0 %v314
        %378 = vmatprep.subr.mxu0 0.0
        %379 = vmatpush2.msra.mxu0 %v345
        %380 = vmatprep.subr.mxu0 0.0
        %381 = vmatpush2.msra.mxu0 %v344
        %382 = vmatprep.subr.mxu0 0.0
        %383 = vmatpush2.msra.mxu0 %v343
        %384 = vmatprep.subr.mxu0 0.0
        %385 = vmatpush2.msra.mxu0 %v342
        %386 = vmatprep.subr.mxu0 0.0
        %387 = vmatpush2.msra.mxu0 %v341
        %388 = vmatprep.subr.mxu0 0.0
        %389 = vmatpush2.msra.mxu0 %v340
        %390 = vmatprep.subr.mxu0 0.0
        %391 = vmatpush2.msra.mxu0 %v339
        %392 = vmatprep.subr.mxu0 0.0
        %393 = vmatpush2.msra.mxu0 %v338
        %394 = vmatprep.subr.mxu0 0.0
        %395 = vmatpush2.msra.mxu0 %v337
        %396 = vmatprep.subr.mxu0 0.0
        %397 = vmatpush2.msra.mxu0 %v336
        %398 = vmatprep.subr.mxu0 0.0
        %399 = vmatpush2.msra.mxu0 %v335
        %400 = vmatprep.subr.mxu0 0.0
        %401 = vmatpush2.msra.mxu0 %v334
        %402 = vmatprep.subr.mxu0 0.0
        %403 = vmatpush2.msra.mxu0 %v333
        %404 = vmatprep.subr.mxu0 0.0
        %405 = vmatpush2.msra.mxu0 %v332
        %406 = vmatprep.subr.mxu0 0.0
        %407 = vmatpush2.msra.mxu0 %v331
        %408 = vmatprep.subr.mxu0 0.0
        %409 = vmatpush2.msra.mxu0 %v330
        %410 = vmatprep.mubr.f32.mxu0 %v251
        %411 = vmatmul.mubr.f32.gmra.mxu0 %v250
        %v412 = vpop.f32.mrf.mxu0
        %v413 = vadd.f32 0.0, %v412
        %v414 = vpop.f32.mrf.mxu0
        %415 = vmatprep.mubr.f32.mxu0 %v253
        %416 = vmatmul.mubr.f32.gmra.mxu0 %v252
        %v417 = vpop.f32.mrf.mxu0
        %v418 = vadd.f32 0.0, %v417
        %v419 = vpop.f32.mrf.mxu0
        %420 = vmatprep.mubr.f32.mxu0 %v255
        %421 = vmatmul.mubr.f32.gmra.mxu0 %v254
        %v422 = vpop.f32.mrf.mxu0
        %v423 = vadd.f32 0.0, %v422
        %v424 = vpop.f32.mrf.mxu0
        %425 = vmatprep.mubr.f32.mxu0 %v257
        %426 = vmatmul.mubr.f32.gmra.mxu0 %v256
        %v427 = vpop.f32.mrf.mxu0
        %v428 = vadd.f32 0.0, %v427
        %v429 = vpop.f32.mrf.mxu0
        %430 = vmatprep.mubr.f32.mxu0 %v259
        %431 = vmatmul.mubr.f32.gmra.mxu0 %v258
        %v432 = vpop.f32.mrf.mxu0
        %v433 = vadd.f32 0.0, %v432
        %v434 = vpop.f32.mrf.mxu0
        %435 = vmatprep.mubr.f32.mxu0 %v261
        %436 = vmatmul.mubr.f32.gmra.mxu0 %v260
        %v437 = vpop.f32.mrf.mxu0
        %v438 = vadd.f32 0.0, %v437
        %v439 = vpop.f32.mrf.mxu0
        %440 = vmatprep.mubr.f32.mxu0 %v263
        %441 = vmatmul.mubr.f32.gmra.mxu0 %v262
        %v442 = vpop.f32.mrf.mxu0
        %v443 = vadd.f32 0.0, %v442
        %v444 = vpop.f32.mrf.mxu0
        %445 = vmatprep.mubr.f32.mxu0 %v265
        %446 = vmatmul.mubr.f32.gmra.mxu0 %v264
        %v447 = vpop.f32.mrf.mxu0
        %v448 = vadd.f32 0.0, %v447
        %v449 = vpop.f32.mrf.mxu0
        %450 = vmatprep.mubr.f32.mxu0 %v267
        %451 = vmatmul.mubr.f32.gmra.mxu0 %v266
        %v452 = vpop.f32.mrf.mxu0
        %v453 = vadd.f32 0.0, %v452
        %v454 = vpop.f32.mrf.mxu0
        %455 = vmatprep.mubr.f32.mxu0 %v269
        %456 = vmatmul.mubr.f32.gmra.mxu0 %v268
        %v457 = vpop.f32.mrf.mxu0
        %v458 = vadd.f32 0.0, %v457
        %v459 = vpop.f32.mrf.mxu0
        %460 = vmatprep.mubr.f32.mxu0 %v271
        %461 = vmatmul.mubr.f32.gmra.mxu0 %v270
        %v462 = vpop.f32.mrf.mxu0
        %v463 = vadd.f32 0.0, %v462
        %v464 = vpop.f32.mrf.mxu0
        %465 = vmatprep.mubr.f32.mxu0 %v273
        %466 = vmatmul.mubr.f32.gmra.mxu0 %v272
        %v467 = vpop.f32.mrf.mxu0
        %v468 = vadd.f32 0.0, %v467
        %v469 = vpop.f32.mrf.mxu0
        %470 = vmatprep.mubr.f32.mxu0 %v275
        %471 = vmatmul.mubr.f32.gmra.mxu0 %v274
        %v472 = vpop.f32.mrf.mxu0
        %v473 = vadd.f32 0.0, %v472
        %v474 = vpop.f32.mrf.mxu0
        %475 = vmatprep.mubr.f32.mxu0 %v277
        %476 = vmatmul.mubr.f32.gmra.mxu0 %v276
        %v477 = vpop.f32.mrf.mxu0
        %v478 = vadd.f32 0.0, %v477
        %v479 = vpop.f32.mrf.mxu0
        %480 = vmatprep.mubr.f32.mxu0 %v279
        %481 = vmatmul.mubr.f32.gmra.mxu0 %v278
        %v482 = vpop.f32.mrf.mxu0
        %v483 = vadd.f32 0.0, %v482
        %v484 = vpop.f32.mrf.mxu0
        %485 = vmatprep.mubr.f32.mxu0 %v281
        %486 = vmatmul.mubr.f32.gmra.mxu0 %v280
        %v487 = vpop.f32.mrf.mxu0
        %v488 = vadd.f32 0.0, %v487
        %v489 = vpop.f32.mrf.mxu0
        %490 = vmatprep.mubr.f32.mxu0 %v283
        %491 = vmatmul.mubr.f32.gmra.mxu0 %v282
        %v492 = vpop.f32.mrf.mxu0
        %v493 = vadd.f32 0.0, %v492
        %v494 = vpop.f32.mrf.mxu0
        %495 = vmatprep.mubr.f32.mxu0 %v285
        %496 = vmatmul.mubr.f32.gmra.mxu0 %v284
        %v497 = vpop.f32.mrf.mxu0
        %v498 = vadd.f32 0.0, %v497
        %v499 = vpop.f32.mrf.mxu0
        %500 = vmatprep.mubr.f32.mxu0 %v287
        %501 = vmatmul.mubr.f32.gmra.mxu0 %v286
        %v502 = vpop.f32.mrf.mxu0
        %v503 = vadd.f32 0.0, %v502
        %v504 = vpop.f32.mrf.mxu0
        %505 = vmatprep.mubr.f32.mxu0 %v289
        %506 = vmatmul.mubr.f32.gmra.mxu0 %v288
        %v507 = vpop.f32.mrf.mxu0
        %v508 = vadd.f32 0.0, %v507
        %v509 = vpop.f32.mrf.mxu0
        %510 = vmatprep.mubr.f32.mxu0 %v291
        %511 = vmatmul.mubr.f32.gmra.mxu0 %v290
        %v512 = vpop.f32.mrf.mxu0
        %v513 = vadd.f32 0.0, %v512
        %v514 = vpop.f32.mrf.mxu0
        %515 = vmatprep.mubr.f32.mxu0 %v293
        %516 = vmatmul.mubr.f32.gmra.mxu0 %v292
        %v517 = vpop.f32.mrf.mxu0
        %v518 = vadd.f32 0.0, %v517
        %v519 = vpop.f32.mrf.mxu0
        %520 = vmatprep.mubr.f32.mxu0 %v295
        %521 = vmatmul.mubr.f32.gmra.mxu0 %v294
        %v522 = vpop.f32.mrf.mxu0
        %v523 = vadd.f32 0.0, %v522
        %v524 = vpop.f32.mrf.mxu0
        %525 = vmatprep.mubr.f32.mxu0 %v297
        %526 = vmatmul.mubr.f32.gmra.mxu0 %v296
        %v527 = vpop.f32.mrf.mxu0
        %v528 = vadd.f32 0.0, %v527
        %v529 = vpop.f32.mrf.mxu0
        %530 = vmatprep.mubr.f32.mxu0 %v299
        %531 = vmatmul.mubr.f32.gmra.mxu0 %v298
        %v532 = vpop.f32.mrf.mxu0
        %v533 = vadd.f32 0.0, %v532
        %v534 = vpop.f32.mrf.mxu0
        %535 = vmatprep.mubr.f32.mxu0 %v301
        %536 = vmatmul.mubr.f32.gmra.mxu0 %v300
        %v537 = vpop.f32.mrf.mxu0
        %v538 = vadd.f32 0.0, %v537
        %v539 = vpop.f32.mrf.mxu0
        %540 = vmatprep.mubr.f32.mxu0 %v303
        %541 = vmatmul.mubr.f32.gmra.mxu0 %v302
        %v542 = vpop.f32.mrf.mxu0
        %v543 = vadd.f32 0.0, %v542
        %v544 = vpop.f32.mrf.mxu0
        %545 = vmatprep.mubr.f32.mxu0 %v305
        %546 = vmatmul.mubr.f32.gmra.mxu0 %v304
        %v547 = vpop.f32.mrf.mxu0
        %v548 = vadd.f32 0.0, %v547
        %v549 = vpop.f32.mrf.mxu0
        %550 = vmatprep.mubr.f32.mxu0 %v307
        %551 = vmatmul.mubr.f32.gmra.mxu0 %v306
        %v552 = vpop.f32.mrf.mxu0
        %v553 = vadd.f32 0.0, %v552
        %v554 = vpop.f32.mrf.mxu0
        %555 = vmatprep.mubr.f32.mxu0 %v309
        %556 = vmatmul.mubr.f32.gmra.mxu0 %v308
        %v557 = vpop.f32.mrf.mxu0
        %v558 = vadd.f32 0.0, %v557
        %v559 = vpop.f32.mrf.mxu0
        %560 = vmatprep.mubr.f32.mxu0 %v311
        %561 = vmatmul.mubr.f32.gmra.mxu0 %v310
        %v562 = vpop.f32.mrf.mxu0
        %v563 = vadd.f32 0.0, %v562
        %v564 = vpop.f32.mrf.mxu0
        %565 = vmatprep.mubr.f32.mxu0 %v313
        %566 = vmatmul.mubr.f32.gmra.mxu0 %v312
        %v567 = vpop.f32.mrf.mxu0
        %v568 = vadd.f32 0.0, %v567
        %v569 = vpop.f32.mrf.mxu0
        %570 = vdwg.mxu0
        %v571 = vmul.f32 %v413, 0.125
        %v572 = vmul.f32 %v418, 0.125
        %v573 = vmul.f32 %v423, 0.125
        %v574 = vmul.f32 %v428, 0.125
        %v575 = vmul.f32 %v433, 0.125
        %v576 = vmul.f32 %v438, 0.125
        %v577 = vmul.f32 %v443, 0.125
        %v578 = vmul.f32 %v448, 0.125
        %v579 = vmul.f32 %v453, 0.125
        %v580 = vmul.f32 %v458, 0.125
        %v581 = vmul.f32 %v463, 0.125
        %v582 = vmul.f32 %v468, 0.125
        %v583 = vmul.f32 %v473, 0.125
        %v584 = vmul.f32 %v478, 0.125
        %v585 = vmul.f32 %v483, 0.125
        %v586 = vmul.f32 %v488, 0.125
        %v587 = vmul.f32 %v493, 0.125
        %v588 = vmul.f32 %v498, 0.125
        %v589 = vmul.f32 %v503, 0.125
        %v590 = vmul.f32 %v508, 0.125
        %v591 = vmul.f32 %v513, 0.125
        %v592 = vmul.f32 %v518, 0.125
        %v593 = vmul.f32 %v523, 0.125
        %v594 = vmul.f32 %v528, 0.125
        %v595 = vmul.f32 %v533, 0.125
        %v596 = vmul.f32 %v538, 0.125
        %v597 = vmul.f32 %v543, 0.125
        %v598 = vmul.f32 %v548, 0.125
        %v599 = vmul.f32 %v553, 0.125
        %v600 = vmul.f32 %v558, 0.125
        %v601 = vmul.f32 %v563, 0.125
        %v602 = vmul.f32 %v568, 0.125
        %v603 = vld [vmem:[%s2] sm:$0xff]
        %v604 = vld [vmem:[%s2 + $0x8] sm:$0xff]
        %v605 = vld [vmem:[%s2 + $0x10] sm:$0xff]
        %v606 = vld [vmem:[%s2 + $0x18] sm:$0xff]
        %v607 = vld [vmem:[%s2 + $0x20] sm:$0xff]
        %v608 = vld [vmem:[%s2 + $0x28] sm:$0xff]
        %v609 = vld [vmem:[%s2 + $0x30] sm:$0xff]
        %v610 = vld [vmem:[%s2 + $0x38] sm:$0xff]
        %v611 = vld [vmem:[%s2 + $0x40] sm:$0xff]
        %v612 = vld [vmem:[%s2 + $0x48] sm:$0xff]
        %v613 = vld [vmem:[%s2 + $0x50] sm:$0xff]
        %v614 = vld [vmem:[%s2 + $0x58] sm:$0xff]
        %v615 = vld [vmem:[%s2 + $0x60] sm:$0xff]
        %v616 = vld [vmem:[%s2 + $0x68] sm:$0xff]
        %v617 = vld [vmem:[%s2 + $0x70] sm:$0xff]
        %v618 = vld [vmem:[%s2 + $0x78] sm:$0xff]
        %v619 = vld [vmem:[%s2 + $0x80] sm:$0xff]
        %v620 = vld [vmem:[%s2 + $0x88] sm:$0xff]
        %v621 = vld [vmem:[%s2 + $0x90] sm:$0xff]
        %v622 = vld [vmem:[%s2 + $0x98] sm:$0xff]
        %v623 = vld [vmem:[%s2 + $0xa0] sm:$0xff]
        %v624 = vld [vmem:[%s2 + $0xa8] sm:$0xff]
        %v625 = vld [vmem:[%s2 + $0xb0] sm:$0xff]
        %v626 = vld [vmem:[%s2 + $0xb8] sm:$0xff]
        %v627 = vld [vmem:[%s2 + $0xc0] sm:$0xff]
        %v628 = vld [vmem:[%s2 + $0xc8] sm:$0xff]
        %v629 = vld [vmem:[%s2 + $0xd0] sm:$0xff]
        %v630 = vld [vmem:[%s2 + $0xd8] sm:$0xff]
        %v631 = vld [vmem:[%s2 + $0xe0] sm:$0xff]
        %v632 = vld [vmem:[%s2 + $0xe8] sm:$0xff]
        %v633 = vld [vmem:[%s2 + $0xf0] sm:$0xff]
        %v634 = vld [vmem:[%s2 + $0xf8] sm:$0xff]
        %635 = vmatprep.subr.mxu0 0.0
        %636 = vmatpush1.msra.mxu0 %v618
        %637 = vmatprep.subr.mxu0 0.0
        %638 = vmatpush1.msra.mxu0 %v617
        %639 = vmatprep.subr.mxu0 0.0
        %640 = vmatpush1.msra.mxu0 %v616
        %641 = vmatprep.subr.mxu0 0.0
        %642 = vmatpush1.msra.mxu0 %v615
        %643 = vmatprep.subr.mxu0 0.0
        %644 = vmatpush1.msra.mxu0 %v614
        %645 = vmatprep.subr.mxu0 0.0
        %646 = vmatpush1.msra.mxu0 %v613
        %647 = vmatprep.subr.mxu0 0.0
        %648 = vmatpush1.msra.mxu0 %v612
        %649 = vmatprep.subr.mxu0 0.0
        %650 = vmatpush1.msra.mxu0 %v611
        %651 = vmatprep.subr.mxu0 0.0
        %652 = vmatpush1.msra.mxu0 %v610
        %653 = vmatprep.subr.mxu0 0.0
        %654 = vmatpush1.msra.mxu0 %v609
        %655 = vmatprep.subr.mxu0 0.0
        %656 = vmatpush1.msra.mxu0 %v608
        %657 = vmatprep.subr.mxu0 0.0
        %658 = vmatpush1.msra.mxu0 %v607
        %659 = vmatprep.subr.mxu0 0.0
        %660 = vmatpush1.msra.mxu0 %v606
        %661 = vmatprep.subr.mxu0 0.0
        %662 = vmatpush1.msra.mxu0 %v605
        %663 = vmatprep.subr.mxu0 0.0
        %664 = vmatpush1.msra.mxu0 %v604
        %665 = vmatprep.subr.mxu0 0.0
        %666 = vmatpush1.msra.mxu0 %v603
        %667 = vmatprep.subr.mxu0 0.0
        %668 = vmatpush2.msra.mxu0 %v634
        %669 = vmatprep.subr.mxu0 0.0
        %670 = vmatpush2.msra.mxu0 %v633
        %671 = vmatprep.subr.mxu0 0.0
        %672 = vmatpush2.msra.mxu0 %v632
        %673 = vmatprep.subr.mxu0 0.0
        %674 = vmatpush2.msra.mxu0 %v631
        %675 = vmatprep.subr.mxu0 0.0
        %676 = vmatpush2.msra.mxu0 %v630
        %677 = vmatprep.subr.mxu0 0.0
        %678 = vmatpush2.msra.mxu0 %v629
        %679 = vmatprep.subr.mxu0 0.0
        %680 = vmatpush2.msra.mxu0 %v628
        %681 = vmatprep.subr.mxu0 0.0
        %682 = vmatpush2.msra.mxu0 %v627
        %683 = vmatprep.subr.mxu0 0.0
        %684 = vmatpush2.msra.mxu0 %v626
        %685 = vmatprep.subr.mxu0 0.0
        %686 = vmatpush2.msra.mxu0 %v625
        %687 = vmatprep.subr.mxu0 0.0
        %688 = vmatpush2.msra.mxu0 %v624
        %689 = vmatprep.subr.mxu0 0.0
        %690 = vmatpush2.msra.mxu0 %v623
        %691 = vmatprep.subr.mxu0 0.0
        %692 = vmatpush2.msra.mxu0 %v622
        %693 = vmatprep.subr.mxu0 0.0
        %694 = vmatpush2.msra.mxu0 %v621
        %695 = vmatprep.subr.mxu0 0.0
        %696 = vmatpush2.msra.mxu0 %v620
        %697 = vmatprep.subr.mxu0 0.0
        %698 = vmatpush2.msra.mxu0 %v619
        %699 = vmatprep.mubr.f32.mxu0 %v251
        %700 = vmatmul.mubr.f32.gmra.mxu0 %v250
        %v701 = vpop.f32.mrf.mxu0
        %v702 = vadd.f32 0.0, %v701
        %v703 = vpop.f32.mrf.mxu0
        %704 = vmatprep.mubr.f32.mxu0 %v253
        %705 = vmatmul.mubr.f32.gmra.mxu0 %v252
        %v706 = vpop.f32.mrf.mxu0
        %v707 = vadd.f32 0.0, %v706
        %v708 = vpop.f32.mrf.mxu0
        %709 = vmatprep.mubr.f32.mxu0 %v255
        %710 = vmatmul.mubr.f32.gmra.mxu0 %v254
        %v711 = vpop.f32.mrf.mxu0
        %v712 = vadd.f32 0.0, %v711
        %v713 = vpop.f32.mrf.mxu0
        %714 = vmatprep.mubr.f32.mxu0 %v257
        %715 = vmatmul.mubr.f32.gmra.mxu0 %v256
        %v716 = vpop.f32.mrf.mxu0
        %v717 = vadd.f32 0.0, %v716
        %v718 = vpop.f32.mrf.mxu0
        %719 = vmatprep.mubr.f32.mxu0 %v259
        %720 = vmatmul.mubr.f32.gmra.mxu0 %v258
        %v721 = vpop.f32.mrf.mxu0
        %v722 = vadd.f32 0.0, %v721
        %v723 = vpop.f32.mrf.mxu0
        %724 = vmatprep.mubr.f32.mxu0 %v261
        %725 = vmatmul.mubr.f32.gmra.mxu0 %v260
        %v726 = vpop.f32.mrf.mxu0
        %v727 = vadd.f32 0.0, %v726
        %v728 = vpop.f32.mrf.mxu0
        %729 = vmatprep.mubr.f32.mxu0 %v263
        %730 = vmatmul.mubr.f32.gmra.mxu0 %v262
        %v731 = vpop.f32.mrf.mxu0
        %v732 = vadd.f32 0.0, %v731
        %v733 = vpop.f32.mrf.mxu0
        %734 = vmatprep.mubr.f32.mxu0 %v265
        %735 = vmatmul.mubr.f32.gmra.mxu0 %v264
        %v736 = vpop.f32.mrf.mxu0
        %v737 = vadd.f32 0.0, %v736
        %v738 = vpop.f32.mrf.mxu0
        %739 = vmatprep.mubr.f32.mxu0 %v267
        %740 = vmatmul.mubr.f32.gmra.mxu0 %v266
        %v741 = vpop.f32.mrf.mxu0
        %v742 = vadd.f32 0.0, %v741
        %v743 = vpop.f32.mrf.mxu0
        %744 = vmatprep.mubr.f32.mxu0 %v269
        %745 = vmatmul.mubr.f32.gmra.mxu0 %v268
        %v746 = vpop.f32.mrf.mxu0
        %v747 = vadd.f32 0.0, %v746
        %v748 = vpop.f32.mrf.mxu0
        %749 = vmatprep.mubr.f32.mxu0 %v271
        %750 = vmatmul.mubr.f32.gmra.mxu0 %v270
        %v751 = vpop.f32.mrf.mxu0
        %v752 = vadd.f32 0.0, %v751
        %v753 = vpop.f32.mrf.mxu0
        %754 = vmatprep.mubr.f32.mxu0 %v273
        %755 = vmatmul.mubr.f32.gmra.mxu0 %v272
        %v756 = vpop.f32.mrf.mxu0
        %v757 = vadd.f32 0.0, %v756
        %v758 = vpop.f32.mrf.mxu0
        %759 = vmatprep.mubr.f32.mxu0 %v275
        %760 = vmatmul.mubr.f32.gmra.mxu0 %v274
        %v761 = vpop.f32.mrf.mxu0
        %v762 = vadd.f32 0.0, %v761
        %v763 = vpop.f32.mrf.mxu0
        %764 = vmatprep.mubr.f32.mxu0 %v277
        %765 = vmatmul.mubr.f32.gmra.mxu0 %v276
        %v766 = vpop.f32.mrf.mxu0
        %v767 = vadd.f32 0.0, %v766
        %v768 = vpop.f32.mrf.mxu0
        %769 = vmatprep.mubr.f32.mxu0 %v279
        %770 = vmatmul.mubr.f32.gmra.mxu0 %v278
        %v771 = vpop.f32.mrf.mxu0
        %v772 = vadd.f32 0.0, %v771
        %v773 = vpop.f32.mrf.mxu0
        %774 = vmatprep.mubr.f32.mxu0 %v281
        %775 = vmatmul.mubr.f32.gmra.mxu0 %v280
        %v776 = vpop.f32.mrf.mxu0
        %v777 = vadd.f32 0.0, %v776
        %v778 = vpop.f32.mrf.mxu0
        %779 = vmatprep.mubr.f32.mxu0 %v283
        %780 = vmatmul.mubr.f32.gmra.mxu0 %v282
        %v781 = vpop.f32.mrf.mxu0
        %v782 = vadd.f32 0.0, %v781
        %v783 = vpop.f32.mrf.mxu0
        %784 = vmatprep.mubr.f32.mxu0 %v285
        %785 = vmatmul.mubr.f32.gmra.mxu0 %v284
        %v786 = vpop.f32.mrf.mxu0
        %v787 = vadd.f32 0.0, %v786
        %v788 = vpop.f32.mrf.mxu0
        %789 = vmatprep.mubr.f32.mxu0 %v287
        %790 = vmatmul.mubr.f32.gmra.mxu0 %v286
        %v791 = vpop.f32.mrf.mxu0
        %v792 = vadd.f32 0.0, %v791
        %v793 = vpop.f32.mrf.mxu0
        %794 = vmatprep.mubr.f32.mxu0 %v289
        %795 = vmatmul.mubr.f32.gmra.mxu0 %v288
        %v796 = vpop.f32.mrf.mxu0
        %v797 = vadd.f32 0.0, %v796
        %v798 = vpop.f32.mrf.mxu0
        %799 = vmatprep.mubr.f32.mxu0 %v291
        %800 = vmatmul.mubr.f32.gmra.mxu0 %v290
        %v801 = vpop.f32.mrf.mxu0
        %v802 = vadd.f32 0.0, %v801
        %v803 = vpop.f32.mrf.mxu0
        %804 = vmatprep.mubr.f32.mxu0 %v293
        %805 = vmatmul.mubr.f32.gmra.mxu0 %v292
        %v806 = vpop.f32.mrf.mxu0
        %v807 = vadd.f32 0.0, %v806
        %v808 = vpop.f32.mrf.mxu0
        %809 = vmatprep.mubr.f32.mxu0 %v295
        %810 = vmatmul.mubr.f32.gmra.mxu0 %v294
        %v811 = vpop.f32.mrf.mxu0
        %v812 = vadd.f32 0.0, %v811
        %v813 = vpop.f32.mrf.mxu0
        %814 = vmatprep.mubr.f32.mxu0 %v297
        %815 = vmatmul.mubr.f32.gmra.mxu0 %v296
        %v816 = vpop.f32.mrf.mxu0
        %v817 = vadd.f32 0.0, %v816
        %v818 = vpop.f32.mrf.mxu0
        %819 = vmatprep.mubr.f32.mxu0 %v299
        %820 = vmatmul.mubr.f32.gmra.mxu0 %v298
        %v821 = vpop.f32.mrf.mxu0
        %v822 = vadd.f32 0.0, %v821
        %v823 = vpop.f32.mrf.mxu0
        %824 = vmatprep.mubr.f32.mxu0 %v301
        %825 = vmatmul.mubr.f32.gmra.mxu0 %v300
        %v826 = vpop.f32.mrf.mxu0
        %v827 = vadd.f32 0.0, %v826
        %v828 = vpop.f32.mrf.mxu0
        %829 = vmatprep.mubr.f32.mxu0 %v303
        %830 = vmatmul.mubr.f32.gmra.mxu0 %v302
        %v831 = vpop.f32.mrf.mxu0
        %v832 = vadd.f32 0.0, %v831
        %v833 = vpop.f32.mrf.mxu0
        %834 = vmatprep.mubr.f32.mxu0 %v305
        %835 = vmatmul.mubr.f32.gmra.mxu0 %v304
        %v836 = vpop.f32.mrf.mxu0
        %v837 = vadd.f32 0.0, %v836
        %v838 = vpop.f32.mrf.mxu0
        %839 = vmatprep.mubr.f32.mxu0 %v307
        %840 = vmatmul.mubr.f32.gmra.mxu0 %v306
        %v841 = vpop.f32.mrf.mxu0
        %v842 = vadd.f32 0.0, %v841
        %v843 = vpop.f32.mrf.mxu0
        %844 = vmatprep.mubr.f32.mxu0 %v309
        %845 = vmatmul.mubr.f32.gmra.mxu0 %v308
        %v846 = vpop.f32.mrf.mxu0
        %v847 = vadd.f32 0.0, %v846
        %v848 = vpop.f32.mrf.mxu0
        %849 = vmatprep.mubr.f32.mxu0 %v311
        %850 = vmatmul.mubr.f32.gmra.mxu0 %v310
        %v851 = vpop.f32.mrf.mxu0
        %v852 = vadd.f32 0.0, %v851
        %v853 = vpop.f32.mrf.mxu0
        %854 = vmatprep.mubr.f32.mxu0 %v313
        %855 = vmatmul.mubr.f32.gmra.mxu0 %v312
        %v856 = vpop.f32.mrf.mxu0
        %v857 = vadd.f32 0.0, %v856
        %v858 = vpop.f32.mrf.mxu0
        %859 = vdwg.mxu0
        %v860 = vld [vmem:[%s3] sm:$0xff]
        %v861 = vld [vmem:[%s3 + $0x8] sm:$0xff]
        %v862 = vld [vmem:[%s3 + $0x10] sm:$0xff]
        %v863 = vld [vmem:[%s3 + $0x18] sm:$0xff]
        %v864 = vld [vmem:[%s3 + $0x20] sm:$0xff]
        %v865 = vld [vmem:[%s3 + $0x28] sm:$0xff]
        %v866 = vld [vmem:[%s3 + $0x30] sm:$0xff]
        %v867 = vld [vmem:[%s3 + $0x38] sm:$0xff]
        %v868 = vld [vmem:[%s3 + $0x40] sm:$0xff]
        %v869 = vld [vmem:[%s3 + $0x48] sm:$0xff]
        %v870 = vld [vmem:[%s3 + $0x50] sm:$0xff]
        %v871 = vld [vmem:[%s3 + $0x58] sm:$0xff]
        %v872 = vld [vmem:[%s3 + $0x60] sm:$0xff]
        %v873 = vld [vmem:[%s3 + $0x68] sm:$0xff]
        %v874 = vld [vmem:[%s3 + $0x70] sm:$0xff]
        %v875 = vld [vmem:[%s3 + $0x78] sm:$0xff]
        %v876 = vld [vmem:[%s3 + $0x80] sm:$0xff]
        %v877 = vld [vmem:[%s3 + $0x88] sm:$0xff]
        %v878 = vld [vmem:[%s3 + $0x90] sm:$0xff]
        %v879 = vld [vmem:[%s3 + $0x98] sm:$0xff]
        %v880 = vld [vmem:[%s3 + $0xa0] sm:$0xff]
        %v881 = vld [vmem:[%s3 + $0xa8] sm:$0xff]
        %v882 = vld [vmem:[%s3 + $0xb0] sm:$0xff]
        %v883 = vld [vmem:[%s3 + $0xb8] sm:$0xff]
        %v884 = vld [vmem:[%s3 + $0xc0] sm:$0xff]
        %v885 = vld [vmem:[%s3 + $0xc8] sm:$0xff]
        %v886 = vld [vmem:[%s3 + $0xd0] sm:$0xff]
        %v887 = vld [vmem:[%s3 + $0xd8] sm:$0xff]
        %v888 = vld [vmem:[%s3 + $0xe0] sm:$0xff]
        %v889 = vld [vmem:[%s3 + $0xe8] sm:$0xff]
        %v890 = vld [vmem:[%s3 + $0xf0] sm:$0xff]
        %v891 = vld [vmem:[%s3 + $0xf8] sm:$0xff]
        %892 = vmatprep.subr.mxu0 0.0
        %893 = vmatpush1.msra.mxu0 %v875
        %894 = vmatprep.subr.mxu0 0.0
        %895 = vmatpush1.msra.mxu0 %v874
        %896 = vmatprep.subr.mxu0 0.0
        %897 = vmatpush1.msra.mxu0 %v873
        %898 = vmatprep.subr.mxu0 0.0
        %899 = vmatpush1.msra.mxu0 %v872
        %900 = vmatprep.subr.mxu0 0.0
        %901 = vmatpush1.msra.mxu0 %v871
        %902 = vmatprep.subr.mxu0 0.0
        %903 = vmatpush1.msra.mxu0 %v870
        %904 = vmatprep.subr.mxu0 0.0
        %905 = vmatpush1.msra.mxu0 %v869
        %906 = vmatprep.subr.mxu0 0.0
        %907 = vmatpush1.msra.mxu0 %v868
        %908 = vmatprep.subr.mxu0 0.0
        %909 = vmatpush1.msra.mxu0 %v867
        %910 = vmatprep.subr.mxu0 0.0
        %911 = vmatpush1.msra.mxu0 %v866
        %912 = vmatprep.subr.mxu0 0.0
        %913 = vmatpush1.msra.mxu0 %v865
        %914 = vmatprep.subr.mxu0 0.0
        %915 = vmatpush1.msra.mxu0 %v864
        %916 = vmatprep.subr.mxu0 0.0
        %917 = vmatpush1.msra.mxu0 %v863
        %918 = vmatprep.subr.mxu0 0.0
        %919 = vmatpush1.msra.mxu0 %v862
        %920 = vmatprep.subr.mxu0 0.0
        %921 = vmatpush1.msra.mxu0 %v861
        %922 = vmatprep.subr.mxu0 0.0
        %923 = vmatpush1.msra.mxu0 %v860
        %924 = vmatprep.subr.mxu0 0.0
        %925 = vmatpush2.msra.mxu0 %v891
        %926 = vmatprep.subr.mxu0 0.0
        %927 = vmatpush2.msra.mxu0 %v890
        %928 = vmatprep.subr.mxu0 0.0
        %929 = vmatpush2.msra.mxu0 %v889
        %930 = vmatprep.subr.mxu0 0.0
        %931 = vmatpush2.msra.mxu0 %v888
        %932 = vmatprep.subr.mxu0 0.0
        %933 = vmatpush2.msra.mxu0 %v887
        %934 = vmatprep.subr.mxu0 0.0
        %935 = vmatpush2.msra.mxu0 %v886
        %936 = vmatprep.subr.mxu0 0.0
        %937 = vmatpush2.msra.mxu0 %v885
        %938 = vmatprep.subr.mxu0 0.0
        %939 = vmatpush2.msra.mxu0 %v884
        %940 = vmatprep.subr.mxu0 0.0
        %941 = vmatpush2.msra.mxu0 %v883
        %942 = vmatprep.subr.mxu0 0.0
        %943 = vmatpush2.msra.mxu0 %v882
        %944 = vmatprep.subr.mxu0 0.0
        %945 = vmatpush2.msra.mxu0 %v881
        %946 = vmatprep.subr.mxu0 0.0
        %947 = vmatpush2.msra.mxu0 %v880
        %948 = vmatprep.subr.mxu0 0.0
        %949 = vmatpush2.msra.mxu0 %v879
        %950 = vmatprep.subr.mxu0 0.0
        %951 = vmatpush2.msra.mxu0 %v878
        %952 = vmatprep.subr.mxu0 0.0
        %953 = vmatpush2.msra.mxu0 %v877
        %954 = vmatprep.subr.mxu0 0.0
        %955 = vmatpush2.msra.mxu0 %v876
        %956 = vmatprep.mubr.f32.mxu0 %v251
        %957 = vmatmul.mubr.f32.gmra.mxu0 %v250
        %v958 = vpop.f32.mrf.mxu0
        %v959 = vadd.f32 0.0, %v958
        %v960 = vpop.f32.mrf.mxu0
        %961 = vmatprep.mubr.f32.mxu0 %v253
        %962 = vmatmul.mubr.f32.gmra.mxu0 %v252
        %v963 = vpop.f32.mrf.mxu0
        %v964 = vadd.f32 0.0, %v963
        %v965 = vpop.f32.mrf.mxu0
        %966 = vmatprep.mubr.f32.mxu0 %v255
        %967 = vmatmul.mubr.f32.gmra.mxu0 %v254
        %v968 = vpop.f32.mrf.mxu0
        %v969 = vadd.f32 0.0, %v968
        %v970 = vpop.f32.mrf.mxu0
        %971 = vmatprep.mubr.f32.mxu0 %v257
        %972 = vmatmul.mubr.f32.gmra.mxu0 %v256
        %v973 = vpop.f32.mrf.mxu0
        %v974 = vadd.f32 0.0, %v973
        %v975 = vpop.f32.mrf.mxu0
        %976 = vmatprep.mubr.f32.mxu0 %v259
        %977 = vmatmul.mubr.f32.gmra.mxu0 %v258
        %v978 = vpop.f32.mrf.mxu0
        %v979 = vadd.f32 0.0, %v978
        %v980 = vpop.f32.mrf.mxu0
        %981 = vmatprep.mubr.f32.mxu0 %v261
        %982 = vmatmul.mubr.f32.gmra.mxu0 %v260
        %v983 = vpop.f32.mrf.mxu0
        %v984 = vadd.f32 0.0, %v983
        %v985 = vpop.f32.mrf.mxu0
        %986 = vmatprep.mubr.f32.mxu0 %v263
        %987 = vmatmul.mubr.f32.gmra.mxu0 %v262
        %v988 = vpop.f32.mrf.mxu0
        %v989 = vadd.f32 0.0, %v988
        %v990 = vpop.f32.mrf.mxu0
        %991 = vmatprep.mubr.f32.mxu0 %v265
        %992 = vmatmul.mubr.f32.gmra.mxu0 %v264
        %v993 = vpop.f32.mrf.mxu0
        %v994 = vadd.f32 0.0, %v993
        %v995 = vpop.f32.mrf.mxu0
        %996 = vmatprep.mubr.f32.mxu0 %v267
        %997 = vmatmul.mubr.f32.gmra.mxu0 %v266
        %v998 = vpop.f32.mrf.mxu0
        %v999 = vadd.f32 0.0, %v998
        %v1000 = vpop.f32.mrf.mxu0
        %1001 = vmatprep.mubr.f32.mxu0 %v269
        %1002 = vmatmul.mubr.f32.gmra.mxu0 %v268
        %v1003 = vpop.f32.mrf.mxu0
        %v1004 = vadd.f32 0.0, %v1003
        %v1005 = vpop.f32.mrf.mxu0
        %1006 = vmatprep.mubr.f32.mxu0 %v271
        %1007 = vmatmul.mubr.f32.gmra.mxu0 %v270
        %v1008 = vpop.f32.mrf.mxu0
        %v1009 = vadd.f32 0.0, %v1008
        %v1010 = vpop.f32.mrf.mxu0
        %1011 = vmatprep.mubr.f32.mxu0 %v273
        %1012 = vmatmul.mubr.f32.gmra.mxu0 %v272
        %v1013 = vpop.f32.mrf.mxu0
        %v1014 = vadd.f32 0.0, %v1013
        %v1015 = vpop.f32.mrf.mxu0
        %1016 = vmatprep.mubr.f32.mxu0 %v275
        %1017 = vmatmul.mubr.f32.gmra.mxu0 %v274
        %v1018 = vpop.f32.mrf.mxu0
        %v1019 = vadd.f32 0.0, %v1018
        %v1020 = vpop.f32.mrf.mxu0
        %1021 = vmatprep.mubr.f32.mxu0 %v277
        %1022 = vmatmul.mubr.f32.gmra.mxu0 %v276
        %v1023 = vpop.f32.mrf.mxu0
        %v1024 = vadd.f32 0.0, %v1023
        %v1025 = vpop.f32.mrf.mxu0
        %1026 = vmatprep.mubr.f32.mxu0 %v279
        %1027 = vmatmul.mubr.f32.gmra.mxu0 %v278
        %v1028 = vpop.f32.mrf.mxu0
        %v1029 = vadd.f32 0.0, %v1028
        %v1030 = vpop.f32.mrf.mxu0
        %1031 = vmatprep.mubr.f32.mxu0 %v281
        %1032 = vmatmul.mubr.f32.gmra.mxu0 %v280
        %v1033 = vpop.f32.mrf.mxu0
        %v1034 = vadd.f32 0.0, %v1033
        %v1035 = vpop.f32.mrf.mxu0
        %1036 = vmatprep.mubr.f32.mxu0 %v283
        %1037 = vmatmul.mubr.f32.gmra.mxu0 %v282
        %v1038 = vpop.f32.mrf.mxu0
        %v1039 = vadd.f32 0.0, %v1038
        %v1040 = vpop.f32.mrf.mxu0
        %1041 = vmatprep.mubr.f32.mxu0 %v285
        %1042 = vmatmul.mubr.f32.gmra.mxu0 %v284
        %v1043 = vpop.f32.mrf.mxu0
        %v1044 = vadd.f32 0.0, %v1043
        %v1045 = vpop.f32.mrf.mxu0
        %1046 = vmatprep.mubr.f32.mxu0 %v287
        %1047 = vmatmul.mubr.f32.gmra.mxu0 %v286
        %v1048 = vpop.f32.mrf.mxu0
        %v1049 = vadd.f32 0.0, %v1048
        %v1050 = vpop.f32.mrf.mxu0
        %1051 = vmatprep.mubr.f32.mxu0 %v289
        %1052 = vmatmul.mubr.f32.gmra.mxu0 %v288
        %v1053 = vpop.f32.mrf.mxu0
        %v1054 = vadd.f32 0.0, %v1053
        %v1055 = vpop.f32.mrf.mxu0
        %1056 = vmatprep.mubr.f32.mxu0 %v291
        %1057 = vmatmul.mubr.f32.gmra.mxu0 %v290
        %v1058 = vpop.f32.mrf.mxu0
        %v1059 = vadd.f32 0.0, %v1058
        %v1060 = vpop.f32.mrf.mxu0
        %1061 = vmatprep.mubr.f32.mxu0 %v293
        %1062 = vmatmul.mubr.f32.gmra.mxu0 %v292
        %v1063 = vpop.f32.mrf.mxu0
        %v1064 = vadd.f32 0.0, %v1063
        %v1065 = vpop.f32.mrf.mxu0
        %1066 = vmatprep.mubr.f32.mxu0 %v295
        %1067 = vmatmul.mubr.f32.gmra.mxu0 %v294
        %v1068 = vpop.f32.mrf.mxu0
        %v1069 = vadd.f32 0.0, %v1068
        %v1070 = vpop.f32.mrf.mxu0
        %1071 = vmatprep.mubr.f32.mxu0 %v297
        %1072 = vmatmul.mubr.f32.gmra.mxu0 %v296
        %v1073 = vpop.f32.mrf.mxu0
        %v1074 = vadd.f32 0.0, %v1073
        %v1075 = vpop.f32.mrf.mxu0
        %1076 = vmatprep.mubr.f32.mxu0 %v299
        %1077 = vmatmul.mubr.f32.gmra.mxu0 %v298
        %v1078 = vpop.f32.mrf.mxu0
        %v1079 = vadd.f32 0.0, %v1078
        %v1080 = vpop.f32.mrf.mxu0
        %1081 = vmatprep.mubr.f32.mxu0 %v301
        %1082 = vmatmul.mubr.f32.gmra.mxu0 %v300
        %v1083 = vpop.f32.mrf.mxu0
        %v1084 = vadd.f32 0.0, %v1083
        %v1085 = vpop.f32.mrf.mxu0
        %1086 = vmatprep.mubr.f32.mxu0 %v303
        %1087 = vmatmul.mubr.f32.gmra.mxu0 %v302
        %v1088 = vpop.f32.mrf.mxu0
        %v1089 = vadd.f32 0.0, %v1088
        %v1090 = vpop.f32.mrf.mxu0
        %1091 = vmatprep.mubr.f32.mxu0 %v305
        %1092 = vmatmul.mubr.f32.gmra.mxu0 %v304
        %v1093 = vpop.f32.mrf.mxu0
        %v1094 = vadd.f32 0.0, %v1093
        %v1095 = vpop.f32.mrf.mxu0
        %1096 = vmatprep.mubr.f32.mxu0 %v307
        %1097 = vmatmul.mubr.f32.gmra.mxu0 %v306
        %v1098 = vpop.f32.mrf.mxu0
        %v1099 = vadd.f32 0.0, %v1098
        %v1100 = vpop.f32.mrf.mxu0
        %1101 = vmatprep.mubr.f32.mxu0 %v309
        %1102 = vmatmul.mubr.f32.gmra.mxu0 %v308
        %v1103 = vpop.f32.mrf.mxu0
        %v1104 = vadd.f32 0.0, %v1103
        %v1105 = vpop.f32.mrf.mxu0
        %1106 = vmatprep.mubr.f32.mxu0 %v311
        %1107 = vmatmul.mubr.f32.gmra.mxu0 %v310
        %v1108 = vpop.f32.mrf.mxu0
        %v1109 = vadd.f32 0.0, %v1108
        %v1110 = vpop.f32.mrf.mxu0
        %1111 = vmatprep.mubr.f32.mxu0 %v313
        %1112 = vmatmul.mubr.f32.gmra.mxu0 %v312
        %v1113 = vpop.f32.mrf.mxu0
        %v1114 = vadd.f32 0.0, %v1113
        %v1115 = vpop.f32.mrf.mxu0
        %1116 = vdwg.mxu0
        %vm1117 = vcmask 523264
        %v1119 = vsel %vm1117, %v571, 0
        %v1122 = vsel %vm1117, %v572, 0
        %v1125 = vsel %vm1117, %v573, 0
        %v1128 = vsel %vm1117, %v574, 0
        %v1131 = vsel %vm1117, %v575, 0
        %v1134 = vsel %vm1117, %v576, 0
        %v1137 = vsel %vm1117, %v577, 0
        %v1140 = vsel %vm1117, %v578, 0
        %v1143 = vsel %vm1117, %v579, 0
        %v1146 = vsel %vm1117, %v580, 0
        %v1149 = vsel %vm1117, %v581, 0
        %v1152 = vsel %vm1117, %v582, 0
        %v1155 = vsel %vm1117, %v583, 0
        %v1158 = vsel %vm1117, %v584, 0
        %v1161 = vsel %vm1117, %v585, 0
        %v1164 = vsel %vm1117, %v586, 0
        %v1167 = vsel %vm1117, %v587, 0
        %v1170 = vsel %vm1117, %v588, 0
        %v1173 = vsel %vm1117, %v589, 0
        %v1176 = vsel %vm1117, %v590, 0
        %v1179 = vsel %vm1117, %v591, 0
        %v1182 = vsel %vm1117, %v592, 0
        %v1185 = vsel %vm1117, %v593, 0
        %v1188 = vsel %vm1117, %v594, 0
        %v1191 = vsel %vm1117, %v595, 0
        %v1194 = vsel %vm1117, %v596, 0
        %v1197 = vsel %vm1117, %v597, 0
        %v1200 = vsel %vm1117, %v598, 0
        %v1203 = vsel %vm1117, %v599, 0
        %v1206 = vsel %vm1117, %v600, 0
        %v1209 = vsel %vm1117, %v601, 0
        %v1212 = vsel %vm1117, %v602, 0
        %v1215 = vsel %vm1117, %v702, 0
        %v1218 = vsel %vm1117, %v707, 0
        %v1221 = vsel %vm1117, %v712, 0
        %v1224 = vsel %vm1117, %v717, 0
        %v1227 = vsel %vm1117, %v722, 0
        %v1230 = vsel %vm1117, %v727, 0
        %v1233 = vsel %vm1117, %v732, 0
        %v1236 = vsel %vm1117, %v737, 0
        %v1239 = vsel %vm1117, %v742, 0
        %v1242 = vsel %vm1117, %v747, 0
        %v1245 = vsel %vm1117, %v752, 0
        %v1248 = vsel %vm1117, %v757, 0
        %v1251 = vsel %vm1117, %v762, 0
        %v1254 = vsel %vm1117, %v767, 0
        %v1257 = vsel %vm1117, %v772, 0
        %v1260 = vsel %vm1117, %v777, 0
        %v1263 = vsel %vm1117, %v782, 0
        %v1266 = vsel %vm1117, %v787, 0
        %v1269 = vsel %vm1117, %v792, 0
        %v1272 = vsel %vm1117, %v797, 0
        %v1275 = vsel %vm1117, %v802, 0
        %v1278 = vsel %vm1117, %v807, 0
        %v1281 = vsel %vm1117, %v812, 0
        %v1284 = vsel %vm1117, %v817, 0
        %v1287 = vsel %vm1117, %v822, 0
        %v1290 = vsel %vm1117, %v827, 0
        %v1293 = vsel %vm1117, %v832, 0
        %v1296 = vsel %vm1117, %v837, 0
        %v1299 = vsel %vm1117, %v842, 0
        %v1302 = vsel %vm1117, %v847, 0
        %v1305 = vsel %vm1117, %v852, 0
        %v1308 = vsel %vm1117, %v857, 0
        %1310 = vmatprep.subr.mxu0 0.0
        %1311 = vmatpush1.xpose.msra.mxu0 %v1260
        %1312 = vmatprep.subr.mxu0 0.0
        %1313 = vmatpush1.xpose.msra.mxu0 %v1257
        %1314 = vmatprep.subr.mxu0 0.0
        %1315 = vmatpush1.xpose.msra.mxu0 %v1254
        %1316 = vmatprep.subr.mxu0 0.0
        %1317 = vmatpush1.xpose.msra.mxu0 %v1251
        %1318 = vmatprep.subr.mxu0 0.0
        %1319 = vmatpush1.xpose.msra.mxu0 %v1248
        %1320 = vmatprep.subr.mxu0 0.0
        %1321 = vmatpush1.xpose.msra.mxu0 %v1245
        %1322 = vmatprep.subr.mxu0 0.0
        %1323 = vmatpush1.xpose.msra.mxu0 %v1242
        %1324 = vmatprep.subr.mxu0 0.0
        %1325 = vmatpush1.xpose.msra.mxu0 %v1239
        %1326 = vmatprep.subr.mxu0 0.0
        %1327 = vmatpush1.xpose.msra.mxu0 %v1236
        %1328 = vmatprep.subr.mxu0 0.0
        %1329 = vmatpush1.xpose.msra.mxu0 %v1233
        %1330 = vmatprep.subr.mxu0 0.0
        %1331 = vmatpush1.xpose.msra.mxu0 %v1230
        %1332 = vmatprep.subr.mxu0 0.0
        %1333 = vmatpush1.xpose.msra.mxu0 %v1227
        %1334 = vmatprep.subr.mxu0 0.0
        %1335 = vmatpush1.xpose.msra.mxu0 %v1224
        %1336 = vmatprep.subr.mxu0 0.0
        %1337 = vmatpush1.xpose.msra.mxu0 %v1221
        %1338 = vmatprep.subr.mxu0 0.0
        %1339 = vmatpush1.xpose.msra.mxu0 %v1218
        %1340 = vmatprep.subr.mxu0 0.0
        %1341 = vmatpush1.xpose.msra.mxu0 %v1215
        %1342 = vmatprep.subr.mxu0 0.0
        %1343 = vmatpush2.xpose.msra.mxu0 %v1308
        %1344 = vmatprep.subr.mxu0 0.0
        %1345 = vmatpush2.xpose.msra.mxu0 %v1305
        %1346 = vmatprep.subr.mxu0 0.0
        %1347 = vmatpush2.xpose.msra.mxu0 %v1302
        %1348 = vmatprep.subr.mxu0 0.0
        %1349 = vmatpush2.xpose.msra.mxu0 %v1299
        %1350 = vmatprep.subr.mxu0 0.0
        %1351 = vmatpush2.xpose.msra.mxu0 %v1296
        %1352 = vmatprep.subr.mxu0 0.0
        %1353 = vmatpush2.xpose.msra.mxu0 %v1293
        %1354 = vmatprep.subr.mxu0 0.0
        %1355 = vmatpush2.xpose.msra.mxu0 %v1290
        %1356 = vmatprep.subr.mxu0 0.0
        %1357 = vmatpush2.xpose.msra.mxu0 %v1287
        %1358 = vmatprep.subr.mxu0 0.0
        %1359 = vmatpush2.xpose.msra.mxu0 %v1284
        %1360 = vmatprep.subr.mxu0 0.0
        %1361 = vmatpush2.xpose.msra.mxu0 %v1281
        %1362 = vmatprep.subr.mxu0 0.0
        %1363 = vmatpush2.xpose.msra.mxu0 %v1278
        %1364 = vmatprep.subr.mxu0 0.0
        %1365 = vmatpush2.xpose.msra.mxu0 %v1275
        %1366 = vmatprep.subr.mxu0 0.0
        %1367 = vmatpush2.xpose.msra.mxu0 %v1272
        %1368 = vmatprep.subr.mxu0 0.0
        %1369 = vmatpush2.xpose.msra.mxu0 %v1269
        %1370 = vmatprep.subr.mxu0 0.0
        %1371 = vmatpush2.xpose.msra.mxu0 %v1266
        %1372 = vmatprep.subr.mxu0 0.0
        %1373 = vmatpush2.xpose.msra.mxu0 %v1263
        %1374 = vmatprep.mubr.f32.mxu0 0.0
        %1375 = vmatmul.mubr.f32.gmra.mxu0 %v1119
        %v1376 = vpop.f32.mrf.mxu0
        %v1377 = vadd.f32 0.0, %v1376
        %v1378 = vpop.f32.mrf.mxu0
        %v1379 = vadd.f32 0.0, %v1378
        %1380 = vmatprep.mubr.f32.mxu0 0.0
        %1381 = vmatmul.mubr.f32.gmra.mxu0 %v1122
        %v1382 = vpop.f32.mrf.mxu0
        %v1383 = vadd.f32 0.0, %v1382
        %v1384 = vpop.f32.mrf.mxu0
        %v1385 = vadd.f32 0.0, %v1384
        %1386 = vmatprep.mubr.f32.mxu0 0.0
        %1387 = vmatmul.mubr.f32.gmra.mxu0 %v1125
        %v1388 = vpop.f32.mrf.mxu0
        %v1389 = vadd.f32 0.0, %v1388
        %v1390 = vpop.f32.mrf.mxu0
        %v1391 = vadd.f32 0.0, %v1390
        %1392 = vmatprep.mubr.f32.mxu0 0.0
        %1393 = vmatmul.mubr.f32.gmra.mxu0 %v1128
        %v1394 = vpop.f32.mrf.mxu0
        %v1395 = vadd.f32 0.0, %v1394
        %v1396 = vpop.f32.mrf.mxu0
        %v1397 = vadd.f32 0.0, %v1396
        %1398 = vmatprep.mubr.f32.mxu0 0.0
        %1399 = vmatmul.mubr.f32.gmra.mxu0 %v1131
        %v1400 = vpop.f32.mrf.mxu0
        %v1401 = vadd.f32 0.0, %v1400
        %v1402 = vpop.f32.mrf.mxu0
        %v1403 = vadd.f32 0.0, %v1402
        %1404 = vmatprep.mubr.f32.mxu0 0.0
        %1405 = vmatmul.mubr.f32.gmra.mxu0 %v1134
        %v1406 = vpop.f32.mrf.mxu0
        %v1407 = vadd.f32 0.0, %v1406
        %v1408 = vpop.f32.mrf.mxu0
        %v1409 = vadd.f32 0.0, %v1408
        %1410 = vmatprep.mubr.f32.mxu0 0.0
        %1411 = vmatmul.mubr.f32.gmra.mxu0 %v1137
        %v1412 = vpop.f32.mrf.mxu0
        %v1413 = vadd.f32 0.0, %v1412
        %v1414 = vpop.f32.mrf.mxu0
        %v1415 = vadd.f32 0.0, %v1414
        %1416 = vmatprep.mubr.f32.mxu0 0.0
        %1417 = vmatmul.mubr.f32.gmra.mxu0 %v1140
        %v1418 = vpop.f32.mrf.mxu0
        %v1419 = vadd.f32 0.0, %v1418
        %v1420 = vpop.f32.mrf.mxu0
        %v1421 = vadd.f32 0.0, %v1420
        %1422 = vmatprep.mubr.f32.mxu0 0.0
        %1423 = vmatmul.mubr.f32.gmra.mxu0 %v1143
        %v1424 = vpop.f32.mrf.mxu0
        %v1425 = vadd.f32 0.0, %v1424
        %v1426 = vpop.f32.mrf.mxu0
        %v1427 = vadd.f32 0.0, %v1426
        %1428 = vmatprep.mubr.f32.mxu0 0.0
        %1429 = vmatmul.mubr.f32.gmra.mxu0 %v1146
        %v1430 = vpop.f32.mrf.mxu0
        %v1431 = vadd.f32 0.0, %v1430
        %v1432 = vpop.f32.mrf.mxu0
        %v1433 = vadd.f32 0.0, %v1432
        %1434 = vmatprep.mubr.f32.mxu0 0.0
        %1435 = vmatmul.mubr.f32.gmra.mxu0 %v1149
        %v1436 = vpop.f32.mrf.mxu0
        %v1437 = vadd.f32 0.0, %v1436
        %v1438 = vpop.f32.mrf.mxu0
        %v1439 = vadd.f32 0.0, %v1438
        %1440 = vmatprep.mubr.f32.mxu0 0.0
        %1441 = vmatmul.mubr.f32.gmra.mxu0 %v1152
        %v1442 = vpop.f32.mrf.mxu0
        %v1443 = vadd.f32 0.0, %v1442
        %v1444 = vpop.f32.mrf.mxu0
        %v1445 = vadd.f32 0.0, %v1444
        %1446 = vmatprep.mubr.f32.mxu0 0.0
        %1447 = vmatmul.mubr.f32.gmra.mxu0 %v1155
        %v1448 = vpop.f32.mrf.mxu0
        %v1449 = vadd.f32 0.0, %v1448
        %v1450 = vpop.f32.mrf.mxu0
        %v1451 = vadd.f32 0.0, %v1450
        %1452 = vmatprep.mubr.f32.mxu0 0.0
        %1453 = vmatmul.mubr.f32.gmra.mxu0 %v1158
        %v1454 = vpop.f32.mrf.mxu0
        %v1455 = vadd.f32 0.0, %v1454
        %v1456 = vpop.f32.mrf.mxu0
        %v1457 = vadd.f32 0.0, %v1456
        %1458 = vmatprep.mubr.f32.mxu0 0.0
        %1459 = vmatmul.mubr.f32.gmra.mxu0 %v1161
        %v1460 = vpop.f32.mrf.mxu0
        %v1461 = vadd.f32 0.0, %v1460
        %v1462 = vpop.f32.mrf.mxu0
        %v1463 = vadd.f32 0.0, %v1462
        %1464 = vmatprep.mubr.f32.mxu0 0.0
        %1465 = vmatmul.mubr.f32.gmra.mxu0 %v1164
        %v1466 = vpop.f32.mrf.mxu0
        %v1467 = vadd.f32 0.0, %v1466
        %v1468 = vpop.f32.mrf.mxu0
        %v1469 = vadd.f32 0.0, %v1468
        %1470 = vmatprep.mubr.f32.mxu0 0.0
        %1471 = vmatmul.mubr.f32.gmra.mxu0 %v1167
        %v1472 = vpop.f32.mrf.mxu0
        %v1473 = vadd.f32 0.0, %v1472
        %v1474 = vpop.f32.mrf.mxu0
        %v1475 = vadd.f32 0.0, %v1474
        %1476 = vmatprep.mubr.f32.mxu0 0.0
        %1477 = vmatmul.mubr.f32.gmra.mxu0 %v1170
        %v1478 = vpop.f32.mrf.mxu0
        %v1479 = vadd.f32 0.0, %v1478
        %v1480 = vpop.f32.mrf.mxu0
        %v1481 = vadd.f32 0.0, %v1480
        %1482 = vmatprep.mubr.f32.mxu0 0.0
        %1483 = vmatmul.mubr.f32.gmra.mxu0 %v1173
        %v1484 = vpop.f32.mrf.mxu0
        %v1485 = vadd.f32 0.0, %v1484
        %v1486 = vpop.f32.mrf.mxu0
        %v1487 = vadd.f32 0.0, %v1486
        %1488 = vmatprep.mubr.f32.mxu0 0.0
        %1489 = vmatmul.mubr.f32.gmra.mxu0 %v1176
        %v1490 = vpop.f32.mrf.mxu0
        %v1491 = vadd.f32 0.0, %v1490
        %v1492 = vpop.f32.mrf.mxu0
        %v1493 = vadd.f32 0.0, %v1492
        %1494 = vmatprep.mubr.f32.mxu0 0.0
        %1495 = vmatmul.mubr.f32.gmra.mxu0 %v1179
        %v1496 = vpop.f32.mrf.mxu0
        %v1497 = vadd.f32 0.0, %v1496
        %v1498 = vpop.f32.mrf.mxu0
        %v1499 = vadd.f32 0.0, %v1498
        %1500 = vmatprep.mubr.f32.mxu0 0.0
        %1501 = vmatmul.mubr.f32.gmra.mxu0 %v1182
        %v1502 = vpop.f32.mrf.mxu0
        %v1503 = vadd.f32 0.0, %v1502
        %v1504 = vpop.f32.mrf.mxu0
        %v1505 = vadd.f32 0.0, %v1504
        %1506 = vmatprep.mubr.f32.mxu0 0.0
        %1507 = vmatmul.mubr.f32.gmra.mxu0 %v1185
        %v1508 = vpop.f32.mrf.mxu0
        %v1509 = vadd.f32 0.0, %v1508
        %v1510 = vpop.f32.mrf.mxu0
        %v1511 = vadd.f32 0.0, %v1510
        %1512 = vmatprep.mubr.f32.mxu0 0.0
        %1513 = vmatmul.mubr.f32.gmra.mxu0 %v1188
        %v1514 = vpop.f32.mrf.mxu0
        %v1515 = vadd.f32 0.0, %v1514
        %v1516 = vpop.f32.mrf.mxu0
        %v1517 = vadd.f32 0.0, %v1516
        %1518 = vmatprep.mubr.f32.mxu0 0.0
        %1519 = vmatmul.mubr.f32.gmra.mxu0 %v1191
        %v1520 = vpop.f32.mrf.mxu0
        %v1521 = vadd.f32 0.0, %v1520
        %v1522 = vpop.f32.mrf.mxu0
        %v1523 = vadd.f32 0.0, %v1522
        %1524 = vmatprep.mubr.f32.mxu0 0.0
        %1525 = vmatmul.mubr.f32.gmra.mxu0 %v1194
        %v1526 = vpop.f32.mrf.mxu0
        %v1527 = vadd.f32 0.0, %v1526
        %v1528 = vpop.f32.mrf.mxu0
        %v1529 = vadd.f32 0.0, %v1528
        %1530 = vmatprep.mubr.f32.mxu0 0.0
        %1531 = vmatmul.mubr.f32.gmra.mxu0 %v1197
        %v1532 = vpop.f32.mrf.mxu0
        %v1533 = vadd.f32 0.0, %v1532
        %v1534 = vpop.f32.mrf.mxu0
        %v1535 = vadd.f32 0.0, %v1534
        %1536 = vmatprep.mubr.f32.mxu0 0.0
        %1537 = vmatmul.mubr.f32.gmra.mxu0 %v1200
        %v1538 = vpop.f32.mrf.mxu0
        %v1539 = vadd.f32 0.0, %v1538
        %v1540 = vpop.f32.mrf.mxu0
        %v1541 = vadd.f32 0.0, %v1540
        %1542 = vmatprep.mubr.f32.mxu0 0.0
        %1543 = vmatmul.mubr.f32.gmra.mxu0 %v1203
        %v1544 = vpop.f32.mrf.mxu0
        %v1545 = vadd.f32 0.0, %v1544
        %v1546 = vpop.f32.mrf.mxu0
        %v1547 = vadd.f32 0.0, %v1546
        %1548 = vmatprep.mubr.f32.mxu0 0.0
        %1549 = vmatmul.mubr.f32.gmra.mxu0 %v1206
        %v1550 = vpop.f32.mrf.mxu0
        %v1551 = vadd.f32 0.0, %v1550
        %v1552 = vpop.f32.mrf.mxu0
        %v1553 = vadd.f32 0.0, %v1552
        %1554 = vmatprep.mubr.f32.mxu0 0.0
        %1555 = vmatmul.mubr.f32.gmra.mxu0 %v1209
        %v1556 = vpop.f32.mrf.mxu0
        %v1557 = vadd.f32 0.0, %v1556
        %v1558 = vpop.f32.mrf.mxu0
        %v1559 = vadd.f32 0.0, %v1558
        %1560 = vmatprep.mubr.f32.mxu0 0.0
        %1561 = vmatmul.mubr.f32.gmra.mxu0 %v1212
        %v1562 = vpop.f32.mrf.mxu0
        %v1563 = vadd.f32 0.0, %v1562
        %v1564 = vpop.f32.mrf.mxu0
        %v1565 = vadd.f32 0.0, %v1564
        %1566 = vdwg.mxu0
        %v1567 = vmax.f32 %v1377, %v1379
        %1568 = vmax.xlane.f32.xlu0 %v1567
        %v1569 = vpop.xlane.xlu0 %1568
        %v1570 = vmax.f32 %v1383, %v1385
        %1571 = vmax.xlane.f32.xlu0 %v1570
        %v1572 = vpop.xlane.xlu0 %1571
        %v1573 = vmax.f32 %v1389, %v1391
        %1574 = vmax.xlane.f32.xlu0 %v1573
        %v1575 = vpop.xlane.xlu0 %1574
        %v1576 = vmax.f32 %v1395, %v1397
        %1577 = vmax.xlane.f32.xlu0 %v1576
        %v1578 = vpop.xlane.xlu0 %1577
        %v1579 = vmax.f32 %v1401, %v1403
        %1580 = vmax.xlane.f32.xlu0 %v1579
        %v1581 = vpop.xlane.xlu0 %1580
        %v1582 = vmax.f32 %v1407, %v1409
        %1583 = vmax.xlane.f32.xlu0 %v1582
        %v1584 = vpop.xlane.xlu0 %1583
        %v1585 = vmax.f32 %v1413, %v1415
        %1586 = vmax.xlane.f32.xlu0 %v1585
        %v1587 = vpop.xlane.xlu0 %1586
        %v1588 = vmax.f32 %v1419, %v1421
        %1589 = vmax.xlane.f32.xlu0 %v1588
        %v1590 = vpop.xlane.xlu0 %1589
        %v1591 = vmax.f32 %v1425, %v1427
        %1592 = vmax.xlane.f32.xlu0 %v1591
        %v1593 = vpop.xlane.xlu0 %1592
        %v1594 = vmax.f32 %v1431, %v1433
        %1595 = vmax.xlane.f32.xlu0 %v1594
        %v1596 = vpop.xlane.xlu0 %1595
        %v1597 = vmax.f32 %v1437, %v1439
        %1598 = vmax.xlane.f32.xlu0 %v1597
        %v1599 = vpop.xlane.xlu0 %1598
        %v1600 = vmax.f32 %v1443, %v1445
        %1601 = vmax.xlane.f32.xlu0 %v1600
        %v1602 = vpop.xlane.xlu0 %1601
        %v1603 = vmax.f32 %v1449, %v1451
        %1604 = vmax.xlane.f32.xlu0 %v1603
        %v1605 = vpop.xlane.xlu0 %1604
        %v1606 = vmax.f32 %v1455, %v1457
        %1607 = vmax.xlane.f32.xlu0 %v1606
        %v1608 = vpop.xlane.xlu0 %1607
        %v1609 = vmax.f32 %v1461, %v1463
        %1610 = vmax.xlane.f32.xlu0 %v1609
        %v1611 = vpop.xlane.xlu0 %1610
        %v1612 = vmax.f32 %v1467, %v1469
        %1613 = vmax.xlane.f32.xlu0 %v1612
        %v1614 = vpop.xlane.xlu0 %1613
        %v1615 = vmax.f32 %v1473, %v1475
        %1616 = vmax.xlane.f32.xlu0 %v1615
        %v1617 = vpop.xlane.xlu0 %1616
        %v1618 = vmax.f32 %v1479, %v1481
        %1619 = vmax.xlane.f32.xlu0 %v1618
        %v1620 = vpop.xlane.xlu0 %1619
        %v1621 = vmax.f32 %v1485, %v1487
        %1622 = vmax.xlane.f32.xlu0 %v1621
        %v1623 = vpop.xlane.xlu0 %1622
        %v1624 = vmax.f32 %v1491, %v1493
        %1625 = vmax.xlane.f32.xlu0 %v1624
        %v1626 = vpop.xlane.xlu0 %1625
        %v1627 = vmax.f32 %v1497, %v1499
        %1628 = vmax.xlane.f32.xlu0 %v1627
        %v1629 = vpop.xlane.xlu0 %1628
        %v1630 = vmax.f32 %v1503, %v1505
        %1631 = vmax.xlane.f32.xlu0 %v1630
        %v1632 = vpop.xlane.xlu0 %1631
        %v1633 = vmax.f32 %v1509, %v1511
        %1634 = vmax.xlane.f32.xlu0 %v1633
        %v1635 = vpop.xlane.xlu0 %1634
        %v1636 = vmax.f32 %v1515, %v1517
        %1637 = vmax.xlane.f32.xlu0 %v1636
        %v1638 = vpop.xlane.xlu0 %1637
        %v1639 = vmax.f32 %v1521, %v1523
        %1640 = vmax.xlane.f32.xlu0 %v1639
        %v1641 = vpop.xlane.xlu0 %1640
        %v1642 = vmax.f32 %v1527, %v1529
        %1643 = vmax.xlane.f32.xlu0 %v1642
        %v1644 = vpop.xlane.xlu0 %1643
        %v1645 = vmax.f32 %v1533, %v1535
        %1646 = vmax.xlane.f32.xlu0 %v1645
        %v1647 = vpop.xlane.xlu0 %1646
        %v1648 = vmax.f32 %v1539, %v1541
        %1649 = vmax.xlane.f32.xlu0 %v1648
        %v1650 = vpop.xlane.xlu0 %1649
        %v1651 = vmax.f32 %v1545, %v1547
        %1652 = vmax.xlane.f32.xlu0 %v1651
        %v1653 = vpop.xlane.xlu0 %1652
        %v1654 = vmax.f32 %v1551, %v1553
        %1655 = vmax.xlane.f32.xlu0 %v1654
        %v1656 = vpop.xlane.xlu0 %1655
        %v1657 = vmax.f32 %v1557, %v1559
        %1658 = vmax.xlane.f32.xlu0 %v1657
        %v1659 = vpop.xlane.xlu0 %1658
        %v1660 = vmax.f32 %v1563, %v1565
        %1661 = vmax.xlane.f32.xlu0 %v1660
        %v1662 = vpop.xlane.xlu0 %1661
        %v1663 = vsub.f32 %v1377, %v1569
        %v1664 = vsub.f32 %v1379, %v1569
        %v1665 = vsub.f32 %v1383, %v1572
        %v1666 = vsub.f32 %v1385, %v1572
        %v1667 = vsub.f32 %v1389, %v1575
        %v1668 = vsub.f32 %v1391, %v1575
        %v1669 = vsub.f32 %v1395, %v1578
        %v1670 = vsub.f32 %v1397, %v1578
        %v1671 = vsub.f32 %v1401, %v1581
        %v1672 = vsub.f32 %v1403, %v1581
        %v1673 = vsub.f32 %v1407, %v1584
        %v1674 = vsub.f32 %v1409, %v1584
        %v1675 = vsub.f32 %v1413, %v1587
        %v1676 = vsub.f32 %v1415, %v1587
        %v1677 = vsub.f32 %v1419, %v1590
        %v1678 = vsub.f32 %v1421, %v1590
        %v1679 = vsub.f32 %v1425, %v1593
        %v1680 = vsub.f32 %v1427, %v1593
        %v1681 = vsub.f32 %v1431, %v1596
        %v1682 = vsub.f32 %v1433, %v1596
        %v1683 = vsub.f32 %v1437, %v1599
        %v1684 = vsub.f32 %v1439, %v1599
        %v1685 = vsub.f32 %v1443, %v1602
        %v1686 = vsub.f32 %v1445, %v1602
        %v1687 = vsub.f32 %v1449, %v1605
        %v1688 = vsub.f32 %v1451, %v1605
        %v1689 = vsub.f32 %v1455, %v1608
        %v1690 = vsub.f32 %v1457, %v1608
        %v1691 = vsub.f32 %v1461, %v1611
        %v1692 = vsub.f32 %v1463, %v1611
        %v1693 = vsub.f32 %v1467, %v1614
        %v1694 = vsub.f32 %v1469, %v1614
        %v1695 = vsub.f32 %v1473, %v1617
        %v1696 = vsub.f32 %v1475, %v1617
        %v1697 = vsub.f32 %v1479, %v1620
        %v1698 = vsub.f32 %v1481, %v1620
        %v1699 = vsub.f32 %v1485, %v1623
        %v1700 = vsub.f32 %v1487, %v1623
        %v1701 = vsub.f32 %v1491, %v1626
        %v1702 = vsub.f32 %v1493, %v1626
        %v1703 = vsub.f32 %v1497, %v1629
        %v1704 = vsub.f32 %v1499, %v1629
        %v1705 = vsub.f32 %v1503, %v1632
        %v1706 = vsub.f32 %v1505, %v1632
        %v1707 = vsub.f32 %v1509, %v1635
        %v1708 = vsub.f32 %v1511, %v1635
        %v1709 = vsub.f32 %v1515, %v1638
        %v1710 = vsub.f32 %v1517, %v1638
        %v1711 = vsub.f32 %v1521, %v1641
        %v1712 = vsub.f32 %v1523, %v1641
        %v1713 = vsub.f32 %v1527, %v1644
        %v1714 = vsub.f32 %v1529, %v1644
        %v1715 = vsub.f32 %v1533, %v1647
        %v1716 = vsub.f32 %v1535, %v1647
        %v1717 = vsub.f32 %v1539, %v1650
        %v1718 = vsub.f32 %v1541, %v1650
        %v1719 = vsub.f32 %v1545, %v1653
        %v1720 = vsub.f32 %v1547, %v1653
        %v1721 = vsub.f32 %v1551, %v1656
        %v1722 = vsub.f32 %v1553, %v1656
        %v1723 = vsub.f32 %v1557, %v1659
        %v1724 = vsub.f32 %v1559, %v1659
        %v1725 = vsub.f32 %v1563, %v1662
        %v1726 = vsub.f32 %v1565, %v1662
        %v1727 = vmul.f32 %v1663, 1.442695
        %v1728 = vpow.pop %v1727
        %v1729 = vmul.f32 %v1664, 1.442695
        %v1730 = vpow.pop %v1729
        %v1731 = vmul.f32 %v1665, 1.442695
        %v1732 = vpow.pop %v1731
        %v1733 = vmul.f32 %v1666, 1.442695
        %v1734 = vpow.pop %v1733
        %v1735 = vmul.f32 %v1667, 1.442695
        %v1736 = vpow.pop %v1735
        %v1737 = vmul.f32 %v1668, 1.442695
        %v1738 = vpow.pop %v1737
        %v1739 = vmul.f32 %v1669, 1.442695
        %v1740 = vpow.pop %v1739
        %v1741 = vmul.f32 %v1670, 1.442695
        %v1742 = vpow.pop %v1741
        %v1743 = vmul.f32 %v1671, 1.442695
        %v1744 = vpow.pop %v1743
        %v1745 = vmul.f32 %v1672, 1.442695
        %v1746 = vpow.pop %v1745
        %v1747 = vmul.f32 %v1673, 1.442695
        %v1748 = vpow.pop %v1747
        %v1749 = vmul.f32 %v1674, 1.442695
        %v1750 = vpow.pop %v1749
        %v1751 = vmul.f32 %v1675, 1.442695
        %v1752 = vpow.pop %v1751
        %v1753 = vmul.f32 %v1676, 1.442695
        %v1754 = vpow.pop %v1753
        %v1755 = vmul.f32 %v1677, 1.442695
        %v1756 = vpow.pop %v1755
        %v1757 = vmul.f32 %v1678, 1.442695
        %v1758 = vpow.pop %v1757
        %v1759 = vmul.f32 %v1679, 1.442695
        %v1760 = vpow.pop %v1759
        %v1761 = vmul.f32 %v1680, 1.442695
        %v1762 = vpow.pop %v1761
        %v1763 = vmul.f32 %v1681, 1.442695
        %v1764 = vpow.pop %v1763
        %v1765 = vmul.f32 %v1682, 1.442695
        %v1766 = vpow.pop %v1765
        %v1767 = vmul.f32 %v1683, 1.442695
        %v1768 = vpow.pop %v1767
        %v1769 = vmul.f32 %v1684, 1.442695
        %v1770 = vpow.pop %v1769
        %v1771 = vmul.f32 %v1685, 1.442695
        %v1772 = vpow.pop %v1771
        %v1773 = vmul.f32 %v1686, 1.442695
        %v1774 = vpow.pop %v1773
        %v1775 = vmul.f32 %v1687, 1.442695
        %v1776 = vpow.pop %v1775
        %v1777 = vmul.f32 %v1688, 1.442695
        %v1778 = vpow.pop %v1777
        %v1779 = vmul.f32 %v1689, 1.442695
        %v1780 = vpow.pop %v1779
        %v1781 = vmul.f32 %v1690, 1.442695
        %v1782 = vpow.pop %v1781
        %v1783 = vmul.f32 %v1691, 1.442695
        %v1784 = vpow.pop %v1783
        %v1785 = vmul.f32 %v1692, 1.442695
        %v1786 = vpow.pop %v1785
        %v1787 = vmul.f32 %v1693, 1.442695
        %v1788 = vpow.pop %v1787
        %v1789 = vmul.f32 %v1694, 1.442695
        %v1790 = vpow.pop %v1789
        %v1791 = vmul.f32 %v1695, 1.442695
        %v1792 = vpow.pop %v1791
        %v1793 = vmul.f32 %v1696, 1.442695
        %v1794 = vpow.pop %v1793
        %v1795 = vmul.f32 %v1697, 1.442695
        %v1796 = vpow.pop %v1795
        %v1797 = vmul.f32 %v1698, 1.442695
        %v1798 = vpow.pop %v1797
        %v1799 = vmul.f32 %v1699, 1.442695
        %v1800 = vpow.pop %v1799
        %v1801 = vmul.f32 %v1700, 1.442695
        %v1802 = vpow.pop %v1801
        %v1803 = vmul.f32 %v1701, 1.442695
        %v1804 = vpow.pop %v1803
        %v1805 = vmul.f32 %v1702, 1.442695
        %v1806 = vpow.pop %v1805
        %v1807 = vmul.f32 %v1703, 1.442695
        %v1808 = vpow.pop %v1807
        %v1809 = vmul.f32 %v1704, 1.442695
        %v1810 = vpow.pop %v1809
        %v1811 = vmul.f32 %v1705, 1.442695
        %v1812 = vpow.pop %v1811
        %v1813 = vmul.f32 %v1706, 1.442695
        %v1814 = vpow.pop %v1813
        %v1815 = vmul.f32 %v1707, 1.442695
        %v1816 = vpow.pop %v1815
        %v1817 = vmul.f32 %v1708, 1.442695
        %v1818 = vpow.pop %v1817
        %v1819 = vmul.f32 %v1709, 1.442695
        %v1820 = vpow.pop %v1819
        %v1821 = vmul.f32 %v1710, 1.442695
        %v1822 = vpow.pop %v1821
        %v1823 = vmul.f32 %v1711, 1.442695
        %v1824 = vpow.pop %v1823
        %v1825 = vmul.f32 %v1712, 1.442695
        %v1826 = vpow.pop %v1825
        %v1827 = vmul.f32 %v1713, 1.442695
        %v1828 = vpow.pop %v1827
        %v1829 = vmul.f32 %v1714, 1.442695
        %v1830 = vpow.pop %v1829
        %v1831 = vmul.f32 %v1715, 1.442695
        %v1832 = vpow.pop %v1831
        %v1833 = vmul.f32 %v1716, 1.442695
        %v1834 = vpow.pop %v1833
        %v1835 = vmul.f32 %v1717, 1.442695
        %v1836 = vpow.pop %v1835
        %v1837 = vmul.f32 %v1718, 1.442695
        %v1838 = vpow.pop %v1837
        %v1839 = vmul.f32 %v1719, 1.442695
        %v1840 = vpow.pop %v1839
        %v1841 = vmul.f32 %v1720, 1.442695
        %v1842 = vpow.pop %v1841
        %v1843 = vmul.f32 %v1721, 1.442695
        %v1844 = vpow.pop %v1843
        %v1845 = vmul.f32 %v1722, 1.442695
        %v1846 = vpow.pop %v1845
        %v1847 = vmul.f32 %v1723, 1.442695
        %v1848 = vpow.pop %v1847
        %v1849 = vmul.f32 %v1724, 1.442695
        %v1850 = vpow.pop %v1849
        %v1851 = vmul.f32 %v1725, 1.442695
        %v1852 = vpow.pop %v1851
        %v1853 = vmul.f32 %v1726, 1.442695
        %v1854 = vpow.pop %v1853
        %v1855 = vadd.f32 %v1728, %v1730
        %1856 = vadd.xlane.f32.xlu0 %v1855
        %v1857 = vpop.xlane.xlu0 %1856
        %v1858 = vadd.f32 %v1732, %v1734
        %1859 = vadd.xlane.f32.xlu0 %v1858
        %v1860 = vpop.xlane.xlu0 %1859
        %v1861 = vadd.f32 %v1736, %v1738
        %1862 = vadd.xlane.f32.xlu0 %v1861
        %v1863 = vpop.xlane.xlu0 %1862
        %v1864 = vadd.f32 %v1740, %v1742
        %1865 = vadd.xlane.f32.xlu0 %v1864
        %v1866 = vpop.xlane.xlu0 %1865
        %v1867 = vadd.f32 %v1744, %v1746
        %1868 = vadd.xlane.f32.xlu0 %v1867
        %v1869 = vpop.xlane.xlu0 %1868
        %v1870 = vadd.f32 %v1748, %v1750
        %1871 = vadd.xlane.f32.xlu0 %v1870
        %v1872 = vpop.xlane.xlu0 %1871
        %v1873 = vadd.f32 %v1752, %v1754
        %1874 = vadd.xlane.f32.xlu0 %v1873
        %v1875 = vpop.xlane.xlu0 %1874
        %v1876 = vadd.f32 %v1756, %v1758
        %1877 = vadd.xlane.f32.xlu0 %v1876
        %v1878 = vpop.xlane.xlu0 %1877
        %v1879 = vadd.f32 %v1760, %v1762
        %1880 = vadd.xlane.f32.xlu0 %v1879
        %v1881 = vpop.xlane.xlu0 %1880
        %v1882 = vadd.f32 %v1764, %v1766
        %1883 = vadd.xlane.f32.xlu0 %v1882
        %v1884 = vpop.xlane.xlu0 %1883
        %v1885 = vadd.f32 %v1768, %v1770
        %1886 = vadd.xlane.f32.xlu0 %v1885
        %v1887 = vpop.xlane.xlu0 %1886
        %v1888 = vadd.f32 %v1772, %v1774
        %1889 = vadd.xlane.f32.xlu0 %v1888
        %v1890 = vpop.xlane.xlu0 %1889
        %v1891 = vadd.f32 %v1776, %v1778
        %1892 = vadd.xlane.f32.xlu0 %v1891
        %v1893 = vpop.xlane.xlu0 %1892
        %v1894 = vadd.f32 %v1780, %v1782
        %1895 = vadd.xlane.f32.xlu0 %v1894
        %v1896 = vpop.xlane.xlu0 %1895
        %v1897 = vadd.f32 %v1784, %v1786
        %1898 = vadd.xlane.f32.xlu0 %v1897
        %v1899 = vpop.xlane.xlu0 %1898
        %v1900 = vadd.f32 %v1788, %v1790
        %1901 = vadd.xlane.f32.xlu0 %v1900
        %v1902 = vpop.xlane.xlu0 %1901
        %v1903 = vadd.f32 %v1792, %v1794
        %1904 = vadd.xlane.f32.xlu0 %v1903
        %v1905 = vpop.xlane.xlu0 %1904
        %v1906 = vadd.f32 %v1796, %v1798
        %1907 = vadd.xlane.f32.xlu0 %v1906
        %v1908 = vpop.xlane.xlu0 %1907
        %v1909 = vadd.f32 %v1800, %v1802
        %1910 = vadd.xlane.f32.xlu0 %v1909
        %v1911 = vpop.xlane.xlu0 %1910
        %v1912 = vadd.f32 %v1804, %v1806
        %1913 = vadd.xlane.f32.xlu0 %v1912
        %v1914 = vpop.xlane.xlu0 %1913
        %v1915 = vadd.f32 %v1808, %v1810
        %1916 = vadd.xlane.f32.xlu0 %v1915
        %v1917 = vpop.xlane.xlu0 %1916
        %v1918 = vadd.f32 %v1812, %v1814
        %1919 = vadd.xlane.f32.xlu0 %v1918
        %v1920 = vpop.xlane.xlu0 %1919
        %v1921 = vadd.f32 %v1816, %v1818
        %1922 = vadd.xlane.f32.xlu0 %v1921
        %v1923 = vpop.xlane.xlu0 %1922
        %v1924 = vadd.f32 %v1820, %v1822
        %1925 = vadd.xlane.f32.xlu0 %v1924
        %v1926 = vpop.xlane.xlu0 %1925
        %v1927 = vadd.f32 %v1824, %v1826
        %1928 = vadd.xlane.f32.xlu0 %v1927
        %v1929 = vpop.xlane.xlu0 %1928
        %v1930 = vadd.f32 %v1828, %v1830
        %1931 = vadd.xlane.f32.xlu0 %v1930
        %v1932 = vpop.xlane.xlu0 %1931
        %v1933 = vadd.f32 %v1832, %v1834
        %1934 = vadd.xlane.f32.xlu0 %v1933
        %v1935 = vpop.xlane.xlu0 %1934
        %v1936 = vadd.f32 %v1836, %v1838
        %1937 = vadd.xlane.f32.xlu0 %v1936
        %v1938 = vpop.xlane.xlu0 %1937
        %v1939 = vadd.f32 %v1840, %v1842
        %1940 = vadd.xlane.f32.xlu0 %v1939
        %v1941 = vpop.xlane.xlu0 %1940
        %v1942 = vadd.f32 %v1844, %v1846
        %1943 = vadd.xlane.f32.xlu0 %v1942
        %v1944 = vpop.xlane.xlu0 %1943
        %v1945 = vadd.f32 %v1848, %v1850
        %1946 = vadd.xlane.f32.xlu0 %v1945
        %v1947 = vpop.xlane.xlu0 %1946
        %v1948 = vadd.f32 %v1852, %v1854
        %1949 = vadd.xlane.f32.xlu0 %v1948
        %v1950 = vpop.xlane.xlu0 %1949
        %1951 = vmatprep.subr.mxu0 0.0
        %1952 = vmatpush1.msra.mxu0 %v1034
        %1953 = vmatprep.subr.mxu0 0.0
        %1954 = vmatpush1.msra.mxu0 %v1029
        %1955 = vmatprep.subr.mxu0 0.0
        %1956 = vmatpush1.msra.mxu0 %v1024
        %1957 = vmatprep.subr.mxu0 0.0
        %1958 = vmatpush1.msra.mxu0 %v1019
        %1959 = vmatprep.subr.mxu0 0.0
        %1960 = vmatpush1.msra.mxu0 %v1014
        %1961 = vmatprep.subr.mxu0 0.0
        %1962 = vmatpush1.msra.mxu0 %v1009
        %1963 = vmatprep.subr.mxu0 0.0
        %1964 = vmatpush1.msra.mxu0 %v1004
        %1965 = vmatprep.subr.mxu0 0.0
        %1966 = vmatpush1.msra.mxu0 %v999
        %1967 = vmatprep.subr.mxu0 0.0
        %1968 = vmatpush1.msra.mxu0 %v994
        %1969 = vmatprep.subr.mxu0 0.0
        %1970 = vmatpush1.msra.mxu0 %v989
        %1971 = vmatprep.subr.mxu0 0.0
        %1972 = vmatpush1.msra.mxu0 %v984
        %1973 = vmatprep.subr.mxu0 0.0
        %1974 = vmatpush1.msra.mxu0 %v979
        %1975 = vmatprep.subr.mxu0 0.0
        %1976 = vmatpush1.msra.mxu0 %v974
        %1977 = vmatprep.subr.mxu0 0.0
        %1978 = vmatpush1.msra.mxu0 %v969
        %1979 = vmatprep.subr.mxu0 0.0
        %1980 = vmatpush1.msra.mxu0 %v964
        %1981 = vmatprep.subr.mxu0 0.0
        %1982 = vmatpush1.msra.mxu0 %v959
        %1983 = vmatprep.subr.mxu0 0.0
        %1984 = vmatpush2.msra.mxu0 %v1114
        %1985 = vmatprep.subr.mxu0 0.0
        %1986 = vmatpush2.msra.mxu0 %v1109
        %1987 = vmatprep.subr.mxu0 0.0
        %1988 = vmatpush2.msra.mxu0 %v1104
        %1989 = vmatprep.subr.mxu0 0.0
        %1990 = vmatpush2.msra.mxu0 %v1099
        %1991 = vmatprep.subr.mxu0 0.0
        %1992 = vmatpush2.msra.mxu0 %v1094
        %1993 = vmatprep.subr.mxu0 0.0
        %1994 = vmatpush2.msra.mxu0 %v1089
        %1995 = vmatprep.subr.mxu0 0.0
        %1996 = vmatpush2.msra.mxu0 %v1084
        %1997 = vmatprep.subr.mxu0 0.0
        %1998 = vmatpush2.msra.mxu0 %v1079
        %1999 = vmatprep.subr.mxu0 0.0
        %2000 = vmatpush2.msra.mxu0 %v1074
        %2001 = vmatprep.subr.mxu0 0.0
        %2002 = vmatpush2.msra.mxu0 %v1069
        %2003 = vmatprep.subr.mxu0 0.0
        %2004 = vmatpush2.msra.mxu0 %v1064
        %2005 = vmatprep.subr.mxu0 0.0
        %2006 = vmatpush2.msra.mxu0 %v1059
        %2007 = vmatprep.subr.mxu0 0.0
        %2008 = vmatpush2.msra.mxu0 %v1054
        %2009 = vmatprep.subr.mxu0 0.0
        %2010 = vmatpush2.msra.mxu0 %v1049
        %2011 = vmatprep.subr.mxu0 0.0
        %2012 = vmatpush2.msra.mxu0 %v1044
        %2013 = vmatprep.subr.mxu0 0.0
        %2014 = vmatpush2.msra.mxu0 %v1039
        %2015 = vmatprep.mubr.f32.mxu0 %v1730
        %2016 = vmatmul.mubr.f32.gmra.mxu0 %v1728
        %v2017 = vpop.f32.mrf.mxu0
        %v2018 = vadd.f32 0.0, %v2017
        %v2019 = vpop.f32.mrf.mxu0
        %2020 = vmatprep.mubr.f32.mxu0 %v1734
        %2021 = vmatmul.mubr.f32.gmra.mxu0 %v1732
        %v2022 = vpop.f32.mrf.mxu0
        %v2023 = vadd.f32 0.0, %v2022
        %v2024 = vpop.f32.mrf.mxu0
        %2025 = vmatprep.mubr.f32.mxu0 %v1738
        %2026 = vmatmul.mubr.f32.gmra.mxu0 %v1736
        %v2027 = vpop.f32.mrf.mxu0
        %v2028 = vadd.f32 0.0, %v2027
        %v2029 = vpop.f32.mrf.mxu0
        %2030 = vmatprep.mubr.f32.mxu0 %v1742
        %2031 = vmatmul.mubr.f32.gmra.mxu0 %v1740
        %v2032 = vpop.f32.mrf.mxu0
        %v2033 = vadd.f32 0.0, %v2032
        %v2034 = vpop.f32.mrf.mxu0
        %2035 = vmatprep.mubr.f32.mxu0 %v1746
        %2036 = vmatmul.mubr.f32.gmra.mxu0 %v1744
        %v2037 = vpop.f32.mrf.mxu0
        %v2038 = vadd.f32 0.0, %v2037
        %v2039 = vpop.f32.mrf.mxu0
        %2040 = vmatprep.mubr.f32.mxu0 %v1750
        %2041 = vmatmul.mubr.f32.gmra.mxu0 %v1748
        %v2042 = vpop.f32.mrf.mxu0
        %v2043 = vadd.f32 0.0, %v2042
        %v2044 = vpop.f32.mrf.mxu0
        %2045 = vmatprep.mubr.f32.mxu0 %v1754
        %2046 = vmatmul.mubr.f32.gmra.mxu0 %v1752
        %v2047 = vpop.f32.mrf.mxu0
        %v2048 = vadd.f32 0.0, %v2047
        %v2049 = vpop.f32.mrf.mxu0
        %2050 = vmatprep.mubr.f32.mxu0 %v1758
        %2051 = vmatmul.mubr.f32.gmra.mxu0 %v1756
        %v2052 = vpop.f32.mrf.mxu0
        %v2053 = vadd.f32 0.0, %v2052
        %v2054 = vpop.f32.mrf.mxu0
        %2055 = vmatprep.mubr.f32.mxu0 %v1762
        %2056 = vmatmul.mubr.f32.gmra.mxu0 %v1760
        %v2057 = vpop.f32.mrf.mxu0
        %v2058 = vadd.f32 0.0, %v2057
        %v2059 = vpop.f32.mrf.mxu0
        %2060 = vmatprep.mubr.f32.mxu0 %v1766
        %2061 = vmatmul.mubr.f32.gmra.mxu0 %v1764
        %v2062 = vpop.f32.mrf.mxu0
        %v2063 = vadd.f32 0.0, %v2062
        %v2064 = vpop.f32.mrf.mxu0
        %2065 = vmatprep.mubr.f32.mxu0 %v1770
        %2066 = vmatmul.mubr.f32.gmra.mxu0 %v1768
        %v2067 = vpop.f32.mrf.mxu0
        %v2068 = vadd.f32 0.0, %v2067
        %v2069 = vpop.f32.mrf.mxu0
        %2070 = vmatprep.mubr.f32.mxu0 %v1774
        %2071 = vmatmul.mubr.f32.gmra.mxu0 %v1772
        %v2072 = vpop.f32.mrf.mxu0
        %v2073 = vadd.f32 0.0, %v2072
        %v2074 = vpop.f32.mrf.mxu0
        %2075 = vmatprep.mubr.f32.mxu0 %v1778
        %2076 = vmatmul.mubr.f32.gmra.mxu0 %v1776
        %v2077 = vpop.f32.mrf.mxu0
        %v2078 = vadd.f32 0.0, %v2077
        %v2079 = vpop.f32.mrf.mxu0
        %2080 = vmatprep.mubr.f32.mxu0 %v1782
        %2081 = vmatmul.mubr.f32.gmra.mxu0 %v1780
        %v2082 = vpop.f32.mrf.mxu0
        %v2083 = vadd.f32 0.0, %v2082
        %v2084 = vpop.f32.mrf.mxu0
        %2085 = vmatprep.mubr.f32.mxu0 %v1786
        %2086 = vmatmul.mubr.f32.gmra.mxu0 %v1784
        %v2087 = vpop.f32.mrf.mxu0
        %v2088 = vadd.f32 0.0, %v2087
        %v2089 = vpop.f32.mrf.mxu0
        %2090 = vmatprep.mubr.f32.mxu0 %v1790
        %2091 = vmatmul.mubr.f32.gmra.mxu0 %v1788
        %v2092 = vpop.f32.mrf.mxu0
        %v2093 = vadd.f32 0.0, %v2092
        %v2094 = vpop.f32.mrf.mxu0
        %2095 = vmatprep.mubr.f32.mxu0 %v1794
        %2096 = vmatmul.mubr.f32.gmra.mxu0 %v1792
        %v2097 = vpop.f32.mrf.mxu0
        %v2098 = vadd.f32 0.0, %v2097
        %v2099 = vpop.f32.mrf.mxu0
        %2100 = vmatprep.mubr.f32.mxu0 %v1798
        %2101 = vmatmul.mubr.f32.gmra.mxu0 %v1796
        %v2102 = vpop.f32.mrf.mxu0
        %v2103 = vadd.f32 0.0, %v2102
        %v2104 = vpop.f32.mrf.mxu0
        %2105 = vmatprep.mubr.f32.mxu0 %v1802
        %2106 = vmatmul.mubr.f32.gmra.mxu0 %v1800
        %v2107 = vpop.f32.mrf.mxu0
        %v2108 = vadd.f32 0.0, %v2107
        %v2109 = vpop.f32.mrf.mxu0
        %2110 = vmatprep.mubr.f32.mxu0 %v1806
        %2111 = vmatmul.mubr.f32.gmra.mxu0 %v1804
        %v2112 = vpop.f32.mrf.mxu0
        %v2113 = vadd.f32 0.0, %v2112
        %v2114 = vpop.f32.mrf.mxu0
        %2115 = vmatprep.mubr.f32.mxu0 %v1810
        %2116 = vmatmul.mubr.f32.gmra.mxu0 %v1808
        %v2117 = vpop.f32.mrf.mxu0
        %v2118 = vadd.f32 0.0, %v2117
        %v2119 = vpop.f32.mrf.mxu0
        %2120 = vmatprep.mubr.f32.mxu0 %v1814
        %2121 = vmatmul.mubr.f32.gmra.mxu0 %v1812
        %v2122 = vpop.f32.mrf.mxu0
        %v2123 = vadd.f32 0.0, %v2122
        %v2124 = vpop.f32.mrf.mxu0
        %2125 = vmatprep.mubr.f32.mxu0 %v1818
        %2126 = vmatmul.mubr.f32.gmra.mxu0 %v1816
        %v2127 = vpop.f32.mrf.mxu0
        %v2128 = vadd.f32 0.0, %v2127
        %v2129 = vpop.f32.mrf.mxu0
        %2130 = vmatprep.mubr.f32.mxu0 %v1822
        %2131 = vmatmul.mubr.f32.gmra.mxu0 %v1820
        %v2132 = vpop.f32.mrf.mxu0
        %v2133 = vadd.f32 0.0, %v2132
        %v2134 = vpop.f32.mrf.mxu0
        %2135 = vmatprep.mubr.f32.mxu0 %v1826
        %2136 = vmatmul.mubr.f32.gmra.mxu0 %v1824
        %v2137 = vpop.f32.mrf.mxu0
        %v2138 = vadd.f32 0.0, %v2137
        %v2139 = vpop.f32.mrf.mxu0
        %2140 = vmatprep.mubr.f32.mxu0 %v1830
        %2141 = vmatmul.mubr.f32.gmra.mxu0 %v1828
        %v2142 = vpop.f32.mrf.mxu0
        %v2143 = vadd.f32 0.0, %v2142
        %v2144 = vpop.f32.mrf.mxu0
        %2145 = vmatprep.mubr.f32.mxu0 %v1834
        %2146 = vmatmul.mubr.f32.gmra.mxu0 %v1832
        %v2147 = vpop.f32.mrf.mxu0
        %v2148 = vadd.f32 0.0, %v2147
        %v2149 = vpop.f32.mrf.mxu0
        %2150 = vmatprep.mubr.f32.mxu0 %v1838
        %2151 = vmatmul.mubr.f32.gmra.mxu0 %v1836
        %v2152 = vpop.f32.mrf.mxu0
        %v2153 = vadd.f32 0.0, %v2152
        %v2154 = vpop.f32.mrf.mxu0
        %2155 = vmatprep.mubr.f32.mxu0 %v1842
        %2156 = vmatmul.mubr.f32.gmra.mxu0 %v1840
        %v2157 = vpop.f32.mrf.mxu0
        %v2158 = vadd.f32 0.0, %v2157
        %v2159 = vpop.f32.mrf.mxu0
        %2160 = vmatprep.mubr.f32.mxu0 %v1846
        %2161 = vmatmul.mubr.f32.gmra.mxu0 %v1844
        %v2162 = vpop.f32.mrf.mxu0
        %v2163 = vadd.f32 0.0, %v2162
        %v2164 = vpop.f32.mrf.mxu0
        %2165 = vmatprep.mubr.f32.mxu0 %v1850
        %2166 = vmatmul.mubr.f32.gmra.mxu0 %v1848
        %v2167 = vpop.f32.mrf.mxu0
        %v2168 = vadd.f32 0.0, %v2167
        %v2169 = vpop.f32.mrf.mxu0
        %2170 = vmatprep.mubr.f32.mxu0 %v1854
        %2171 = vmatmul.mubr.f32.gmra.mxu0 %v1852
        %v2172 = vpop.f32.mrf.mxu0
        %v2173 = vadd.f32 0.0, %v2172
        %v2174 = vpop.f32.mrf.mxu0
        %2175 = vdwg.mxu0
        %v2176 = vrcp.pop %v1857
        %v2177 = vrcp.pop %v1860
        %v2178 = vrcp.pop %v1863
        %v2179 = vrcp.pop %v1866
        %v2180 = vrcp.pop %v1869
        %v2181 = vrcp.pop %v1872
        %v2182 = vrcp.pop %v1875
        %v2183 = vrcp.pop %v1878
        %v2184 = vrcp.pop %v1881
        %v2185 = vrcp.pop %v1884
        %v2186 = vrcp.pop %v1887
        %v2187 = vrcp.pop %v1890
        %v2188 = vrcp.pop %v1893
        %v2189 = vrcp.pop %v1896
        %v2190 = vrcp.pop %v1899
        %v2191 = vrcp.pop %v1902
        %v2192 = vrcp.pop %v1905
        %v2193 = vrcp.pop %v1908
        %v2194 = vrcp.pop %v1911
        %v2195 = vrcp.pop %v1914
        %v2196 = vrcp.pop %v1917
        %v2197 = vrcp.pop %v1920
        %v2198 = vrcp.pop %v1923
        %v2199 = vrcp.pop %v1926
        %v2200 = vrcp.pop %v1929
        %v2201 = vrcp.pop %v1932
        %v2202 = vrcp.pop %v1935
        %v2203 = vrcp.pop %v1938
        %v2204 = vrcp.pop %v1941
        %v2205 = vrcp.pop %v1944
        %v2206 = vrcp.pop %v1947
        %v2207 = vrcp.pop %v1950
        %v2208 = vmul.f32 %v2018, %v2176
        %v2209 = vmul.f32 %v2023, %v2177
        %v2210 = vmul.f32 %v2028, %v2178
        %v2211 = vmul.f32 %v2033, %v2179
        %v2212 = vmul.f32 %v2038, %v2180
        %v2213 = vmul.f32 %v2043, %v2181
        %v2214 = vmul.f32 %v2048, %v2182
        %v2215 = vmul.f32 %v2053, %v2183
        %v2216 = vmul.f32 %v2058, %v2184
        %v2217 = vmul.f32 %v2063, %v2185
        %v2218 = vmul.f32 %v2068, %v2186
        %v2219 = vmul.f32 %v2073, %v2187
        %v2220 = vmul.f32 %v2078, %v2188
        %v2221 = vmul.f32 %v2083, %v2189
        %v2222 = vmul.f32 %v2088, %v2190
        %v2223 = vmul.f32 %v2093, %v2191
        %v2224 = vmul.f32 %v2098, %v2192
        %v2225 = vmul.f32 %v2103, %v2193
        %v2226 = vmul.f32 %v2108, %v2194
        %v2227 = vmul.f32 %v2113, %v2195
        %v2228 = vmul.f32 %v2118, %v2196
        %v2229 = vmul.f32 %v2123, %v2197
        %v2230 = vmul.f32 %v2128, %v2198
        %v2231 = vmul.f32 %v2133, %v2199
        %v2232 = vmul.f32 %v2138, %v2200
        %v2233 = vmul.f32 %v2143, %v2201
        %v2234 = vmul.f32 %v2148, %v2202
        %v2235 = vmul.f32 %v2153, %v2203
        %v2236 = vmul.f32 %v2158, %v2204
        %v2237 = vmul.f32 %v2163, %v2205
        %v2238 = vmul.f32 %v2168, %v2206
        %v2239 = vmul.f32 %v2173, %v2207
        %v2240 = vld [vmem:[%s4] sm:$0xff]
        %v2241 = vld [vmem:[%s4 + $0x8] sm:$0xff]
        %v2242 = vld [vmem:[%s4 + $0x10] sm:$0xff]
        %v2243 = vld [vmem:[%s4 + $0x18] sm:$0xff]
        %v2244 = vld [vmem:[%s4 + $0x20] sm:$0xff]
        %v2245 = vld [vmem:[%s4 + $0x28] sm:$0xff]
        %v2246 = vld [vmem:[%s4 + $0x30] sm:$0xff]
        %v2247 = vld [vmem:[%s4 + $0x38] sm:$0xff]
        %v2248 = vld [vmem:[%s4 + $0x40] sm:$0xff]
        %v2249 = vld [vmem:[%s4 + $0x48] sm:$0xff]
        %v2250 = vld [vmem:[%s4 + $0x50] sm:$0xff]
        %v2251 = vld [vmem:[%s4 + $0x58] sm:$0xff]
        %v2252 = vld [vmem:[%s4 + $0x60] sm:$0xff]
        %v2253 = vld [vmem:[%s4 + $0x68] sm:$0xff]
        %v2254 = vld [vmem:[%s4 + $0x70] sm:$0xff]
        %v2255 = vld [vmem:[%s4 + $0x78] sm:$0xff]
        %s2256 = scalar_lea.vmem %s1, 256
        %v2257 = vld [vmem:[%s2256] sm:$0xff]
        %v2258 = vld [vmem:[%s2256 + $0x8] sm:$0xff]
        %v2259 = vld [vmem:[%s2256 + $0x10] sm:$0xff]
        %v2260 = vld [vmem:[%s2256 + $0x18] sm:$0xff]
        %v2261 = vld [vmem:[%s2256 + $0x20] sm:$0xff]
        %v2262 = vld [vmem:[%s2256 + $0x28] sm:$0xff]
        %v2263 = vld [vmem:[%s2256 + $0x30] sm:$0xff]
        %v2264 = vld [vmem:[%s2256 + $0x38] sm:$0xff]
        %v2265 = vld [vmem:[%s2256 + $0x40] sm:$0xff]
        %v2266 = vld [vmem:[%s2256 + $0x48] sm:$0xff]
        %v2267 = vld [vmem:[%s2256 + $0x50] sm:$0xff]
        %v2268 = vld [vmem:[%s2256 + $0x58] sm:$0xff]
        %v2269 = vld [vmem:[%s2256 + $0x60] sm:$0xff]
        %v2270 = vld [vmem:[%s2256 + $0x68] sm:$0xff]
        %v2271 = vld [vmem:[%s2256 + $0x70] sm:$0xff]
        %v2272 = vld [vmem:[%s2256 + $0x78] sm:$0xff]
        %v2273 = vld [vmem:[%s2256 + $0x80] sm:$0xff]
        %v2274 = vld [vmem:[%s2256 + $0x88] sm:$0xff]
        %v2275 = vld [vmem:[%s2256 + $0x90] sm:$0xff]
        %v2276 = vld [vmem:[%s2256 + $0x98] sm:$0xff]
        %v2277 = vld [vmem:[%s2256 + $0xa0] sm:$0xff]
        %v2278 = vld [vmem:[%s2256 + $0xa8] sm:$0xff]
        %v2279 = vld [vmem:[%s2256 + $0xb0] sm:$0xff]
        %v2280 = vld [vmem:[%s2256 + $0xb8] sm:$0xff]
        %v2281 = vld [vmem:[%s2256 + $0xc0] sm:$0xff]
        %v2282 = vld [vmem:[%s2256 + $0xc8] sm:$0xff]
        %v2283 = vld [vmem:[%s2256 + $0xd0] sm:$0xff]
        %v2284 = vld [vmem:[%s2256 + $0xd8] sm:$0xff]
        %v2285 = vld [vmem:[%s2256 + $0xe0] sm:$0xff]
        %v2286 = vld [vmem:[%s2256 + $0xe8] sm:$0xff]
        %v2287 = vld [vmem:[%s2256 + $0xf0] sm:$0xff]
        %v2288 = vld [vmem:[%s2256 + $0xf8] sm:$0xff]
        %2289 = vmatprep.subr.mxu0 0.0
        %2290 = vmatpush1.msra.mxu0 %v2272
        %2291 = vmatprep.subr.mxu0 0.0
        %2292 = vmatpush1.msra.mxu0 %v2271
        %2293 = vmatprep.subr.mxu0 0.0
        %2294 = vmatpush1.msra.mxu0 %v2270
        %2295 = vmatprep.subr.mxu0 0.0
        %2296 = vmatpush1.msra.mxu0 %v2269
        %2297 = vmatprep.subr.mxu0 0.0
        %2298 = vmatpush1.msra.mxu0 %v2268
        %2299 = vmatprep.subr.mxu0 0.0
        %2300 = vmatpush1.msra.mxu0 %v2267
        %2301 = vmatprep.subr.mxu0 0.0
        %2302 = vmatpush1.msra.mxu0 %v2266
        %2303 = vmatprep.subr.mxu0 0.0
        %2304 = vmatpush1.msra.mxu0 %v2265
        %2305 = vmatprep.subr.mxu0 0.0
        %2306 = vmatpush1.msra.mxu0 %v2264
        %2307 = vmatprep.subr.mxu0 0.0
        %2308 = vmatpush1.msra.mxu0 %v2263
        %2309 = vmatprep.subr.mxu0 0.0
        %2310 = vmatpush1.msra.mxu0 %v2262
        %2311 = vmatprep.subr.mxu0 0.0
        %2312 = vmatpush1.msra.mxu0 %v2261
        %2313 = vmatprep.subr.mxu0 0.0
        %2314 = vmatpush1.msra.mxu0 %v2260
        %2315 = vmatprep.subr.mxu0 0.0
        %2316 = vmatpush1.msra.mxu0 %v2259
        %2317 = vmatprep.subr.mxu0 0.0
        %2318 = vmatpush1.msra.mxu0 %v2258
        %2319 = vmatprep.subr.mxu0 0.0
        %2320 = vmatpush1.msra.mxu0 %v2257
        %2321 = vmatprep.subr.mxu0 0.0
        %2322 = vmatpush2.msra.mxu0 %v2288
        %2323 = vmatprep.subr.mxu0 0.0
        %2324 = vmatpush2.msra.mxu0 %v2287
        %2325 = vmatprep.subr.mxu0 0.0
        %2326 = vmatpush2.msra.mxu0 %v2286
        %2327 = vmatprep.subr.mxu0 0.0
        %2328 = vmatpush2.msra.mxu0 %v2285
        %2329 = vmatprep.subr.mxu0 0.0
        %2330 = vmatpush2.msra.mxu0 %v2284
        %2331 = vmatprep.subr.mxu0 0.0
        %2332 = vmatpush2.msra.mxu0 %v2283
        %2333 = vmatprep.subr.mxu0 0.0
        %2334 = vmatpush2.msra.mxu0 %v2282
        %2335 = vmatprep.subr.mxu0 0.0
        %2336 = vmatpush2.msra.mxu0 %v2281
        %2337 = vmatprep.subr.mxu0 0.0
        %2338 = vmatpush2.msra.mxu0 %v2280
        %2339 = vmatprep.subr.mxu0 0.0
        %2340 = vmatpush2.msra.mxu0 %v2279
        %2341 = vmatprep.subr.mxu0 0.0
        %2342 = vmatpush2.msra.mxu0 %v2278
        %2343 = vmatprep.subr.mxu0 0.0
        %2344 = vmatpush2.msra.mxu0 %v2277
        %2345 = vmatprep.subr.mxu0 0.0
        %2346 = vmatpush2.msra.mxu0 %v2276
        %2347 = vmatprep.subr.mxu0 0.0
        %2348 = vmatpush2.msra.mxu0 %v2275
        %2349 = vmatprep.subr.mxu0 0.0
        %2350 = vmatpush2.msra.mxu0 %v2274
        %2351 = vmatprep.subr.mxu0 0.0
        %2352 = vmatpush2.msra.mxu0 %v2273
        %2353 = vmatprep.mubr.f32.mxu0 %v251
        %2354 = vmatmul.mubr.f32.gmra.mxu0 %v250
        %v2355 = vpop.f32.mrf.mxu0
        %v2356 = vadd.f32 0.0, %v2355
        %v2357 = vpop.f32.mrf.mxu0
        %2358 = vmatprep.mubr.f32.mxu0 %v253
        %2359 = vmatmul.mubr.f32.gmra.mxu0 %v252
        %v2360 = vpop.f32.mrf.mxu0
        %v2361 = vadd.f32 0.0, %v2360
        %v2362 = vpop.f32.mrf.mxu0
        %2363 = vmatprep.mubr.f32.mxu0 %v255
        %2364 = vmatmul.mubr.f32.gmra.mxu0 %v254
        %v2365 = vpop.f32.mrf.mxu0
        %v2366 = vadd.f32 0.0, %v2365
        %v2367 = vpop.f32.mrf.mxu0
        %2368 = vmatprep.mubr.f32.mxu0 %v257
        %2369 = vmatmul.mubr.f32.gmra.mxu0 %v256
        %v2370 = vpop.f32.mrf.mxu0
        %v2371 = vadd.f32 0.0, %v2370
        %v2372 = vpop.f32.mrf.mxu0
        %2373 = vmatprep.mubr.f32.mxu0 %v259
        %2374 = vmatmul.mubr.f32.gmra.mxu0 %v258
        %v2375 = vpop.f32.mrf.mxu0
        %v2376 = vadd.f32 0.0, %v2375
        %v2377 = vpop.f32.mrf.mxu0
        %2378 = vmatprep.mubr.f32.mxu0 %v261
        %2379 = vmatmul.mubr.f32.gmra.mxu0 %v260
        %v2380 = vpop.f32.mrf.mxu0
        %v2381 = vadd.f32 0.0, %v2380
        %v2382 = vpop.f32.mrf.mxu0
        %2383 = vmatprep.mubr.f32.mxu0 %v263
        %2384 = vmatmul.mubr.f32.gmra.mxu0 %v262
        %v2385 = vpop.f32.mrf.mxu0
        %v2386 = vadd.f32 0.0, %v2385
        %v2387 = vpop.f32.mrf.mxu0
        %2388 = vmatprep.mubr.f32.mxu0 %v265
        %2389 = vmatmul.mubr.f32.gmra.mxu0 %v264
        %v2390 = vpop.f32.mrf.mxu0
        %v2391 = vadd.f32 0.0, %v2390
        %v2392 = vpop.f32.mrf.mxu0
        %2393 = vmatprep.mubr.f32.mxu0 %v267
        %2394 = vmatmul.mubr.f32.gmra.mxu0 %v266
        %v2395 = vpop.f32.mrf.mxu0
        %v2396 = vadd.f32 0.0, %v2395
        %v2397 = vpop.f32.mrf.mxu0
        %2398 = vmatprep.mubr.f32.mxu0 %v269
        %2399 = vmatmul.mubr.f32.gmra.mxu0 %v268
        %v2400 = vpop.f32.mrf.mxu0
        %v2401 = vadd.f32 0.0, %v2400
        %v2402 = vpop.f32.mrf.mxu0
        %2403 = vmatprep.mubr.f32.mxu0 %v271
        %2404 = vmatmul.mubr.f32.gmra.mxu0 %v270
        %v2405 = vpop.f32.mrf.mxu0
        %v2406 = vadd.f32 0.0, %v2405
        %v2407 = vpop.f32.mrf.mxu0
        %2408 = vmatprep.mubr.f32.mxu0 %v273
        %2409 = vmatmul.mubr.f32.gmra.mxu0 %v272
        %v2410 = vpop.f32.mrf.mxu0
        %v2411 = vadd.f32 0.0, %v2410
        %v2412 = vpop.f32.mrf.mxu0
        %2413 = vmatprep.mubr.f32.mxu0 %v275
        %2414 = vmatmul.mubr.f32.gmra.mxu0 %v274
        %v2415 = vpop.f32.mrf.mxu0
        %v2416 = vadd.f32 0.0, %v2415
        %v2417 = vpop.f32.mrf.mxu0
        %2418 = vmatprep.mubr.f32.mxu0 %v277
        %2419 = vmatmul.mubr.f32.gmra.mxu0 %v276
        %v2420 = vpop.f32.mrf.mxu0
        %v2421 = vadd.f32 0.0, %v2420
        %v2422 = vpop.f32.mrf.mxu0
        %2423 = vmatprep.mubr.f32.mxu0 %v279
        %2424 = vmatmul.mubr.f32.gmra.mxu0 %v278
        %v2425 = vpop.f32.mrf.mxu0
        %v2426 = vadd.f32 0.0, %v2425
        %v2427 = vpop.f32.mrf.mxu0
        %2428 = vmatprep.mubr.f32.mxu0 %v281
        %2429 = vmatmul.mubr.f32.gmra.mxu0 %v280
        %v2430 = vpop.f32.mrf.mxu0
        %v2431 = vadd.f32 0.0, %v2430
        %v2432 = vpop.f32.mrf.mxu0
        %2433 = vmatprep.mubr.f32.mxu0 %v283
        %2434 = vmatmul.mubr.f32.gmra.mxu0 %v282
        %v2435 = vpop.f32.mrf.mxu0
        %v2436 = vadd.f32 0.0, %v2435
        %v2437 = vpop.f32.mrf.mxu0
        %2438 = vmatprep.mubr.f32.mxu0 %v285
        %2439 = vmatmul.mubr.f32.gmra.mxu0 %v284
        %v2440 = vpop.f32.mrf.mxu0
        %v2441 = vadd.f32 0.0, %v2440
        %v2442 = vpop.f32.mrf.mxu0
        %2443 = vmatprep.mubr.f32.mxu0 %v287
        %2444 = vmatmul.mubr.f32.gmra.mxu0 %v286
        %v2445 = vpop.f32.mrf.mxu0
        %v2446 = vadd.f32 0.0, %v2445
        %v2447 = vpop.f32.mrf.mxu0
        %2448 = vmatprep.mubr.f32.mxu0 %v289
        %2449 = vmatmul.mubr.f32.gmra.mxu0 %v288
        %v2450 = vpop.f32.mrf.mxu0
        %v2451 = vadd.f32 0.0, %v2450
        %v2452 = vpop.f32.mrf.mxu0
        %2453 = vmatprep.mubr.f32.mxu0 %v291
        %2454 = vmatmul.mubr.f32.gmra.mxu0 %v290
        %v2455 = vpop.f32.mrf.mxu0
        %v2456 = vadd.f32 0.0, %v2455
        %v2457 = vpop.f32.mrf.mxu0
        %2458 = vmatprep.mubr.f32.mxu0 %v293
        %2459 = vmatmul.mubr.f32.gmra.mxu0 %v292
        %v2460 = vpop.f32.mrf.mxu0
        %v2461 = vadd.f32 0.0, %v2460
        %v2462 = vpop.f32.mrf.mxu0
        %2463 = vmatprep.mubr.f32.mxu0 %v295
        %2464 = vmatmul.mubr.f32.gmra.mxu0 %v294
        %v2465 = vpop.f32.mrf.mxu0
        %v2466 = vadd.f32 0.0, %v2465
        %v2467 = vpop.f32.mrf.mxu0
        %2468 = vmatprep.mubr.f32.mxu0 %v297
        %2469 = vmatmul.mubr.f32.gmra.mxu0 %v296
        %v2470 = vpop.f32.mrf.mxu0
        %v2471 = vadd.f32 0.0, %v2470
        %v2472 = vpop.f32.mrf.mxu0
        %2473 = vmatprep.mubr.f32.mxu0 %v299
        %2474 = vmatmul.mubr.f32.gmra.mxu0 %v298
        %v2475 = vpop.f32.mrf.mxu0
        %v2476 = vadd.f32 0.0, %v2475
        %v2477 = vpop.f32.mrf.mxu0
        %2478 = vmatprep.mubr.f32.mxu0 %v301
        %2479 = vmatmul.mubr.f32.gmra.mxu0 %v300
        %v2480 = vpop.f32.mrf.mxu0
        %v2481 = vadd.f32 0.0, %v2480
        %v2482 = vpop.f32.mrf.mxu0
        %2483 = vmatprep.mubr.f32.mxu0 %v303
        %2484 = vmatmul.mubr.f32.gmra.mxu0 %v302
        %v2485 = vpop.f32.mrf.mxu0
        %v2486 = vadd.f32 0.0, %v2485
        %v2487 = vpop.f32.mrf.mxu0
        %2488 = vmatprep.mubr.f32.mxu0 %v305
        %2489 = vmatmul.mubr.f32.gmra.mxu0 %v304
        %v2490 = vpop.f32.mrf.mxu0
        %v2491 = vadd.f32 0.0, %v2490
        %v2492 = vpop.f32.mrf.mxu0
        %2493 = vmatprep.mubr.f32.mxu0 %v307
        %2494 = vmatmul.mubr.f32.gmra.mxu0 %v306
        %v2495 = vpop.f32.mrf.mxu0
        %v2496 = vadd.f32 0.0, %v2495
        %v2497 = vpop.f32.mrf.mxu0
        %2498 = vmatprep.mubr.f32.mxu0 %v309
        %2499 = vmatmul.mubr.f32.gmra.mxu0 %v308
        %v2500 = vpop.f32.mrf.mxu0
        %v2501 = vadd.f32 0.0, %v2500
        %v2502 = vpop.f32.mrf.mxu0
        %2503 = vmatprep.mubr.f32.mxu0 %v311
        %2504 = vmatmul.mubr.f32.gmra.mxu0 %v310
        %v2505 = vpop.f32.mrf.mxu0
        %v2506 = vadd.f32 0.0, %v2505
        %v2507 = vpop.f32.mrf.mxu0
        %2508 = vmatprep.mubr.f32.mxu0 %v313
        %2509 = vmatmul.mubr.f32.gmra.mxu0 %v312
        %v2510 = vpop.f32.mrf.mxu0
        %v2511 = vadd.f32 0.0, %v2510
        %v2512 = vpop.f32.mrf.mxu0
        %2513 = vdwg.mxu0
        %v2514 = vmul.f32 %v2356, 0.125
        %v2515 = vmul.f32 %v2361, 0.125
        %v2516 = vmul.f32 %v2366, 0.125
        %v2517 = vmul.f32 %v2371, 0.125
        %v2518 = vmul.f32 %v2376, 0.125
        %v2519 = vmul.f32 %v2381, 0.125
        %v2520 = vmul.f32 %v2386, 0.125
        %v2521 = vmul.f32 %v2391, 0.125
        %v2522 = vmul.f32 %v2396, 0.125
        %v2523 = vmul.f32 %v2401, 0.125
        %v2524 = vmul.f32 %v2406, 0.125
        %v2525 = vmul.f32 %v2411, 0.125
        %v2526 = vmul.f32 %v2416, 0.125
        %v2527 = vmul.f32 %v2421, 0.125
        %v2528 = vmul.f32 %v2426, 0.125
        %v2529 = vmul.f32 %v2431, 0.125
        %v2530 = vmul.f32 %v2436, 0.125
        %v2531 = vmul.f32 %v2441, 0.125
        %v2532 = vmul.f32 %v2446, 0.125
        %v2533 = vmul.f32 %v2451, 0.125
        %v2534 = vmul.f32 %v2456, 0.125
        %v2535 = vmul.f32 %v2461, 0.125
        %v2536 = vmul.f32 %v2466, 0.125
        %v2537 = vmul.f32 %v2471, 0.125
        %v2538 = vmul.f32 %v2476, 0.125
        %v2539 = vmul.f32 %v2481, 0.125
        %v2540 = vmul.f32 %v2486, 0.125
        %v2541 = vmul.f32 %v2491, 0.125
        %v2542 = vmul.f32 %v2496, 0.125
        %v2543 = vmul.f32 %v2501, 0.125
        %v2544 = vmul.f32 %v2506, 0.125
        %v2545 = vmul.f32 %v2511, 0.125
        %s2546 = scalar_lea.vmem %s2, 256
        %v2547 = vld [vmem:[%s2546] sm:$0xff]
        %v2548 = vld [vmem:[%s2546 + $0x8] sm:$0xff]
        %v2549 = vld [vmem:[%s2546 + $0x10] sm:$0xff]
        %v2550 = vld [vmem:[%s2546 + $0x18] sm:$0xff]
        %v2551 = vld [vmem:[%s2546 + $0x20] sm:$0xff]
        %v2552 = vld [vmem:[%s2546 + $0x28] sm:$0xff]
        %v2553 = vld [vmem:[%s2546 + $0x30] sm:$0xff]
        %v2554 = vld [vmem:[%s2546 + $0x38] sm:$0xff]
        %v2555 = vld [vmem:[%s2546 + $0x40] sm:$0xff]
        %v2556 = vld [vmem:[%s2546 + $0x48] sm:$0xff]
        %v2557 = vld [vmem:[%s2546 + $0x50] sm:$0xff]
        %v2558 = vld [vmem:[%s2546 + $0x58] sm:$0xff]
        %v2559 = vld [vmem:[%s2546 + $0x60] sm:$0xff]
        %v2560 = vld [vmem:[%s2546 + $0x68] sm:$0xff]
        %v2561 = vld [vmem:[%s2546 + $0x70] sm:$0xff]
        %v2562 = vld [vmem:[%s2546 + $0x78] sm:$0xff]
        %v2563 = vld [vmem:[%s2546 + $0x80] sm:$0xff]
        %v2564 = vld [vmem:[%s2546 + $0x88] sm:$0xff]
        %v2565 = vld [vmem:[%s2546 + $0x90] sm:$0xff]
        %v2566 = vld [vmem:[%s2546 + $0x98] sm:$0xff]
        %v2567 = vld [vmem:[%s2546 + $0xa0] sm:$0xff]
        %v2568 = vld [vmem:[%s2546 + $0xa8] sm:$0xff]
        %v2569 = vld [vmem:[%s2546 + $0xb0] sm:$0xff]
        %v2570 = vld [vmem:[%s2546 + $0xb8] sm:$0xff]
        %v2571 = vld [vmem:[%s2546 + $0xc0] sm:$0xff]
        %v2572 = vld [vmem:[%s2546 + $0xc8] sm:$0xff]
        %v2573 = vld [vmem:[%s2546 + $0xd0] sm:$0xff]
        %v2574 = vld [vmem:[%s2546 + $0xd8] sm:$0xff]
        %v2575 = vld [vmem:[%s2546 + $0xe0] sm:$0xff]
        %v2576 = vld [vmem:[%s2546 + $0xe8] sm:$0xff]
        %v2577 = vld [vmem:[%s2546 + $0xf0] sm:$0xff]
        %v2578 = vld [vmem:[%s2546 + $0xf8] sm:$0xff]
        %2579 = vmatprep.subr.mxu0 0.0
        %2580 = vmatpush1.msra.mxu0 %v2562
        %2581 = vmatprep.subr.mxu0 0.0
        %2582 = vmatpush1.msra.mxu0 %v2561
        %2583 = vmatprep.subr.mxu0 0.0
        %2584 = vmatpush1.msra.mxu0 %v2560
        %2585 = vmatprep.subr.mxu0 0.0
        %2586 = vmatpush1.msra.mxu0 %v2559
        %2587 = vmatprep.subr.mxu0 0.0
        %2588 = vmatpush1.msra.mxu0 %v2558
        %2589 = vmatprep.subr.mxu0 0.0
        %2590 = vmatpush1.msra.mxu0 %v2557
        %2591 = vmatprep.subr.mxu0 0.0
        %2592 = vmatpush1.msra.mxu0 %v2556
        %2593 = vmatprep.subr.mxu0 0.0
        %2594 = vmatpush1.msra.mxu0 %v2555
        %2595 = vmatprep.subr.mxu0 0.0
        %2596 = vmatpush1.msra.mxu0 %v2554
        %2597 = vmatprep.subr.mxu0 0.0
        %2598 = vmatpush1.msra.mxu0 %v2553
        %2599 = vmatprep.subr.mxu0 0.0
        %2600 = vmatpush1.msra.mxu0 %v2552
        %2601 = vmatprep.subr.mxu0 0.0
        %2602 = vmatpush1.msra.mxu0 %v2551
        %2603 = vmatprep.subr.mxu0 0.0
        %2604 = vmatpush1.msra.mxu0 %v2550
        %2605 = vmatprep.subr.mxu0 0.0
        %2606 = vmatpush1.msra.mxu0 %v2549
        %2607 = vmatprep.subr.mxu0 0.0
        %2608 = vmatpush1.msra.mxu0 %v2548
        %2609 = vmatprep.subr.mxu0 0.0
        %2610 = vmatpush1.msra.mxu0 %v2547
        %2611 = vmatprep.subr.mxu0 0.0
        %2612 = vmatpush2.msra.mxu0 %v2578
        %2613 = vmatprep.subr.mxu0 0.0
        %2614 = vmatpush2.msra.mxu0 %v2577
        %2615 = vmatprep.subr.mxu0 0.0
        %2616 = vmatpush2.msra.mxu0 %v2576
        %2617 = vmatprep.subr.mxu0 0.0
        %2618 = vmatpush2.msra.mxu0 %v2575
        %2619 = vmatprep.subr.mxu0 0.0
        %2620 = vmatpush2.msra.mxu0 %v2574
        %2621 = vmatprep.subr.mxu0 0.0
        %2622 = vmatpush2.msra.mxu0 %v2573
        %2623 = vmatprep.subr.mxu0 0.0
        %2624 = vmatpush2.msra.mxu0 %v2572
        %2625 = vmatprep.subr.mxu0 0.0
        %2626 = vmatpush2.msra.mxu0 %v2571
        %2627 = vmatprep.subr.mxu0 0.0
        %2628 = vmatpush2.msra.mxu0 %v2570
        %2629 = vmatprep.subr.mxu0 0.0
        %2630 = vmatpush2.msra.mxu0 %v2569
        %2631 = vmatprep.subr.mxu0 0.0
        %2632 = vmatpush2.msra.mxu0 %v2568
        %2633 = vmatprep.subr.mxu0 0.0
        %2634 = vmatpush2.msra.mxu0 %v2567
        %2635 = vmatprep.subr.mxu0 0.0
        %2636 = vmatpush2.msra.mxu0 %v2566
        %2637 = vmatprep.subr.mxu0 0.0
        %2638 = vmatpush2.msra.mxu0 %v2565
        %2639 = vmatprep.subr.mxu0 0.0
        %2640 = vmatpush2.msra.mxu0 %v2564
        %2641 = vmatprep.subr.mxu0 0.0
        %2642 = vmatpush2.msra.mxu0 %v2563
        %2643 = vmatprep.mubr.f32.mxu0 %v251
        %2644 = vmatmul.mubr.f32.gmra.mxu0 %v250
        %v2645 = vpop.f32.mrf.mxu0
        %v2646 = vadd.f32 0.0, %v2645
        %v2647 = vpop.f32.mrf.mxu0
        %2648 = vmatprep.mubr.f32.mxu0 %v253
        %2649 = vmatmul.mubr.f32.gmra.mxu0 %v252
        %v2650 = vpop.f32.mrf.mxu0
        %v2651 = vadd.f32 0.0, %v2650
        %v2652 = vpop.f32.mrf.mxu0
        %2653 = vmatprep.mubr.f32.mxu0 %v255
        %2654 = vmatmul.mubr.f32.gmra.mxu0 %v254
        %v2655 = vpop.f32.mrf.mxu0
        %v2656 = vadd.f32 0.0, %v2655
        %v2657 = vpop.f32.mrf.mxu0
        %2658 = vmatprep.mubr.f32.mxu0 %v257
        %2659 = vmatmul.mubr.f32.gmra.mxu0 %v256
        %v2660 = vpop.f32.mrf.mxu0
        %v2661 = vadd.f32 0.0, %v2660
        %v2662 = vpop.f32.mrf.mxu0
        %2663 = vmatprep.mubr.f32.mxu0 %v259
        %2664 = vmatmul.mubr.f32.gmra.mxu0 %v258
        %v2665 = vpop.f32.mrf.mxu0
        %v2666 = vadd.f32 0.0, %v2665
        %v2667 = vpop.f32.mrf.mxu0
        %2668 = vmatprep.mubr.f32.mxu0 %v261
        %2669 = vmatmul.mubr.f32.gmra.mxu0 %v260
        %v2670 = vpop.f32.mrf.mxu0
        %v2671 = vadd.f32 0.0, %v2670
        %v2672 = vpop.f32.mrf.mxu0
        %2673 = vmatprep.mubr.f32.mxu0 %v263
        %2674 = vmatmul.mubr.f32.gmra.mxu0 %v262
        %v2675 = vpop.f32.mrf.mxu0
        %v2676 = vadd.f32 0.0, %v2675
        %v2677 = vpop.f32.mrf.mxu0
        %2678 = vmatprep.mubr.f32.mxu0 %v265
        %2679 = vmatmul.mubr.f32.gmra.mxu0 %v264
        %v2680 = vpop.f32.mrf.mxu0
        %v2681 = vadd.f32 0.0, %v2680
        %v2682 = vpop.f32.mrf.mxu0
        %2683 = vmatprep.mubr.f32.mxu0 %v267
        %2684 = vmatmul.mubr.f32.gmra.mxu0 %v266
        %v2685 = vpop.f32.mrf.mxu0
        %v2686 = vadd.f32 0.0, %v2685
        %v2687 = vpop.f32.mrf.mxu0
        %2688 = vmatprep.mubr.f32.mxu0 %v269
        %2689 = vmatmul.mubr.f32.gmra.mxu0 %v268
        %v2690 = vpop.f32.mrf.mxu0
        %v2691 = vadd.f32 0.0, %v2690
        %v2692 = vpop.f32.mrf.mxu0
        %2693 = vmatprep.mubr.f32.mxu0 %v271
        %2694 = vmatmul.mubr.f32.gmra.mxu0 %v270
        %v2695 = vpop.f32.mrf.mxu0
        %v2696 = vadd.f32 0.0, %v2695
        %v2697 = vpop.f32.mrf.mxu0
        %2698 = vmatprep.mubr.f32.mxu0 %v273
        %2699 = vmatmul.mubr.f32.gmra.mxu0 %v272
        %v2700 = vpop.f32.mrf.mxu0
        %v2701 = vadd.f32 0.0, %v2700
        %v2702 = vpop.f32.mrf.mxu0
        %2703 = vmatprep.mubr.f32.mxu0 %v275
        %2704 = vmatmul.mubr.f32.gmra.mxu0 %v274
        %v2705 = vpop.f32.mrf.mxu0
        %v2706 = vadd.f32 0.0, %v2705
        %v2707 = vpop.f32.mrf.mxu0
        %2708 = vmatprep.mubr.f32.mxu0 %v277
        %2709 = vmatmul.mubr.f32.gmra.mxu0 %v276
        %v2710 = vpop.f32.mrf.mxu0
        %v2711 = vadd.f32 0.0, %v2710
        %v2712 = vpop.f32.mrf.mxu0
        %2713 = vmatprep.mubr.f32.mxu0 %v279
        %2714 = vmatmul.mubr.f32.gmra.mxu0 %v278
        %v2715 = vpop.f32.mrf.mxu0
        %v2716 = vadd.f32 0.0, %v2715
        %v2717 = vpop.f32.mrf.mxu0
        %2718 = vmatprep.mubr.f32.mxu0 %v281
        %2719 = vmatmul.mubr.f32.gmra.mxu0 %v280
        %v2720 = vpop.f32.mrf.mxu0
        %v2721 = vadd.f32 0.0, %v2720
        %v2722 = vpop.f32.mrf.mxu0
        %2723 = vmatprep.mubr.f32.mxu0 %v283
        %2724 = vmatmul.mubr.f32.gmra.mxu0 %v282
        %v2725 = vpop.f32.mrf.mxu0
        %v2726 = vadd.f32 0.0, %v2725
        %v2727 = vpop.f32.mrf.mxu0
        %2728 = vmatprep.mubr.f32.mxu0 %v285
        %2729 = vmatmul.mubr.f32.gmra.mxu0 %v284
        %v2730 = vpop.f32.mrf.mxu0
        %v2731 = vadd.f32 0.0, %v2730
        %v2732 = vpop.f32.mrf.mxu0
        %2733 = vmatprep.mubr.f32.mxu0 %v287
        %2734 = vmatmul.mubr.f32.gmra.mxu0 %v286
        %v2735 = vpop.f32.mrf.mxu0
        %v2736 = vadd.f32 0.0, %v2735
        %v2737 = vpop.f32.mrf.mxu0
        %2738 = vmatprep.mubr.f32.mxu0 %v289
        %2739 = vmatmul.mubr.f32.gmra.mxu0 %v288
        %v2740 = vpop.f32.mrf.mxu0
        %v2741 = vadd.f32 0.0, %v2740
        %v2742 = vpop.f32.mrf.mxu0
        %2743 = vmatprep.mubr.f32.mxu0 %v291
        %2744 = vmatmul.mubr.f32.gmra.mxu0 %v290
        %v2745 = vpop.f32.mrf.mxu0
        %v2746 = vadd.f32 0.0, %v2745
        %v2747 = vpop.f32.mrf.mxu0
        %2748 = vmatprep.mubr.f32.mxu0 %v293
        %2749 = vmatmul.mubr.f32.gmra.mxu0 %v292
        %v2750 = vpop.f32.mrf.mxu0
        %v2751 = vadd.f32 0.0, %v2750
        %v2752 = vpop.f32.mrf.mxu0
        %2753 = vmatprep.mubr.f32.mxu0 %v295
        %2754 = vmatmul.mubr.f32.gmra.mxu0 %v294
        %v2755 = vpop.f32.mrf.mxu0
        %v2756 = vadd.f32 0.0, %v2755
        %v2757 = vpop.f32.mrf.mxu0
        %2758 = vmatprep.mubr.f32.mxu0 %v297
        %2759 = vmatmul.mubr.f32.gmra.mxu0 %v296
        %v2760 = vpop.f32.mrf.mxu0
        %v2761 = vadd.f32 0.0, %v2760
        %v2762 = vpop.f32.mrf.mxu0
        %2763 = vmatprep.mubr.f32.mxu0 %v299
        %2764 = vmatmul.mubr.f32.gmra.mxu0 %v298
        %v2765 = vpop.f32.mrf.mxu0
        %v2766 = vadd.f32 0.0, %v2765
        %v2767 = vpop.f32.mrf.mxu0
        %2768 = vmatprep.mubr.f32.mxu0 %v301
        %2769 = vmatmul.mubr.f32.gmra.mxu0 %v300
        %v2770 = vpop.f32.mrf.mxu0
        %v2771 = vadd.f32 0.0, %v2770
        %v2772 = vpop.f32.mrf.mxu0
        %2773 = vmatprep.mubr.f32.mxu0 %v303
        %2774 = vmatmul.mubr.f32.gmra.mxu0 %v302
        %v2775 = vpop.f32.mrf.mxu0
        %v2776 = vadd.f32 0.0, %v2775
        %v2777 = vpop.f32.mrf.mxu0
        %2778 = vmatprep.mubr.f32.mxu0 %v305
        %2779 = vmatmul.mubr.f32.gmra.mxu0 %v304
        %v2780 = vpop.f32.mrf.mxu0
        %v2781 = vadd.f32 0.0, %v2780
        %v2782 = vpop.f32.mrf.mxu0
        %2783 = vmatprep.mubr.f32.mxu0 %v307
        %2784 = vmatmul.mubr.f32.gmra.mxu0 %v306
        %v2785 = vpop.f32.mrf.mxu0
        %v2786 = vadd.f32 0.0, %v2785
        %v2787 = vpop.f32.mrf.mxu0
        %2788 = vmatprep.mubr.f32.mxu0 %v309
        %2789 = vmatmul.mubr.f32.gmra.mxu0 %v308
        %v2790 = vpop.f32.mrf.mxu0
        %v2791 = vadd.f32 0.0, %v2790
        %v2792 = vpop.f32.mrf.mxu0
        %2793 = vmatprep.mubr.f32.mxu0 %v311
        %2794 = vmatmul.mubr.f32.gmra.mxu0 %v310
        %v2795 = vpop.f32.mrf.mxu0
        %v2796 = vadd.f32 0.0, %v2795
        %v2797 = vpop.f32.mrf.mxu0
        %2798 = vmatprep.mubr.f32.mxu0 %v313
        %2799 = vmatmul.mubr.f32.gmra.mxu0 %v312
        %v2800 = vpop.f32.mrf.mxu0
        %v2801 = vadd.f32 0.0, %v2800
        %v2802 = vpop.f32.mrf.mxu0
        %2803 = vdwg.mxu0
        %s2804 = scalar_lea.vmem %s3, 256
        %v2805 = vld [vmem:[%s2804] sm:$0xff]
        %v2806 = vld [vmem:[%s2804 + $0x8] sm:$0xff]
        %v2807 = vld [vmem:[%s2804 + $0x10] sm:$0xff]
        %v2808 = vld [vmem:[%s2804 + $0x18] sm:$0xff]
        %v2809 = vld [vmem:[%s2804 + $0x20] sm:$0xff]
        %v2810 = vld [vmem:[%s2804 + $0x28] sm:$0xff]
        %v2811 = vld [vmem:[%s2804 + $0x30] sm:$0xff]
        %v2812 = vld [vmem:[%s2804 + $0x38] sm:$0xff]
        %v2813 = vld [vmem:[%s2804 + $0x40] sm:$0xff]
        %v2814 = vld [vmem:[%s2804 + $0x48] sm:$0xff]
        %v2815 = vld [vmem:[%s2804 + $0x50] sm:$0xff]
        %v2816 = vld [vmem:[%s2804 + $0x58] sm:$0xff]
        %v2817 = vld [vmem:[%s2804 + $0x60] sm:$0xff]
        %v2818 = vld [vmem:[%s2804 + $0x68] sm:$0xff]
        %v2819 = vld [vmem:[%s2804 + $0x70] sm:$0xff]
        %v2820 = vld [vmem:[%s2804 + $0x78] sm:$0xff]
        %v2821 = vld [vmem:[%s2804 + $0x80] sm:$0xff]
        %v2822 = vld [vmem:[%s2804 + $0x88] sm:$0xff]
        %v2823 = vld [vmem:[%s2804 + $0x90] sm:$0xff]
        %v2824 = vld [vmem:[%s2804 + $0x98] sm:$0xff]
        %v2825 = vld [vmem:[%s2804 + $0xa0] sm:$0xff]
        %v2826 = vld [vmem:[%s2804 + $0xa8] sm:$0xff]
        %v2827 = vld [vmem:[%s2804 + $0xb0] sm:$0xff]
        %v2828 = vld [vmem:[%s2804 + $0xb8] sm:$0xff]
        %v2829 = vld [vmem:[%s2804 + $0xc0] sm:$0xff]
        %v2830 = vld [vmem:[%s2804 + $0xc8] sm:$0xff]
        %v2831 = vld [vmem:[%s2804 + $0xd0] sm:$0xff]
        %v2832 = vld [vmem:[%s2804 + $0xd8] sm:$0xff]
        %v2833 = vld [vmem:[%s2804 + $0xe0] sm:$0xff]
        %v2834 = vld [vmem:[%s2804 + $0xe8] sm:$0xff]
        %v2835 = vld [vmem:[%s2804 + $0xf0] sm:$0xff]
        %v2836 = vld [vmem:[%s2804 + $0xf8] sm:$0xff]
        %2837 = vmatprep.subr.mxu0 0.0
        %2838 = vmatpush1.msra.mxu0 %v2820
        %2839 = vmatprep.subr.mxu0 0.0
        %2840 = vmatpush1.msra.mxu0 %v2819
        %2841 = vmatprep.subr.mxu0 0.0
        %2842 = vmatpush1.msra.mxu0 %v2818
        %2843 = vmatprep.subr.mxu0 0.0
        %2844 = vmatpush1.msra.mxu0 %v2817
        %2845 = vmatprep.subr.mxu0 0.0
        %2846 = vmatpush1.msra.mxu0 %v2816
        %2847 = vmatprep.subr.mxu0 0.0
        %2848 = vmatpush1.msra.mxu0 %v2815
        %2849 = vmatprep.subr.mxu0 0.0
        %2850 = vmatpush1.msra.mxu0 %v2814
        %2851 = vmatprep.subr.mxu0 0.0
        %2852 = vmatpush1.msra.mxu0 %v2813
        %2853 = vmatprep.subr.mxu0 0.0
        %2854 = vmatpush1.msra.mxu0 %v2812
        %2855 = vmatprep.subr.mxu0 0.0
        %2856 = vmatpush1.msra.mxu0 %v2811
        %2857 = vmatprep.subr.mxu0 0.0
        %2858 = vmatpush1.msra.mxu0 %v2810
        %2859 = vmatprep.subr.mxu0 0.0
        %2860 = vmatpush1.msra.mxu0 %v2809
        %2861 = vmatprep.subr.mxu0 0.0
        %2862 = vmatpush1.msra.mxu0 %v2808
        %2863 = vmatprep.subr.mxu0 0.0
        %2864 = vmatpush1.msra.mxu0 %v2807
        %2865 = vmatprep.subr.mxu0 0.0
        %2866 = vmatpush1.msra.mxu0 %v2806
        %2867 = vmatprep.subr.mxu0 0.0
        %2868 = vmatpush1.msra.mxu0 %v2805
        %2869 = vmatprep.subr.mxu0 0.0
        %2870 = vmatpush2.msra.mxu0 %v2836
        %2871 = vmatprep.subr.mxu0 0.0
        %2872 = vmatpush2.msra.mxu0 %v2835
        %2873 = vmatprep.subr.mxu0 0.0
        %2874 = vmatpush2.msra.mxu0 %v2834
        %2875 = vmatprep.subr.mxu0 0.0
        %2876 = vmatpush2.msra.mxu0 %v2833
        %2877 = vmatprep.subr.mxu0 0.0
        %2878 = vmatpush2.msra.mxu0 %v2832
        %2879 = vmatprep.subr.mxu0 0.0
        %2880 = vmatpush2.msra.mxu0 %v2831
        %2881 = vmatprep.subr.mxu0 0.0
        %2882 = vmatpush2.msra.mxu0 %v2830
        %2883 = vmatprep.subr.mxu0 0.0
        %2884 = vmatpush2.msra.mxu0 %v2829
        %2885 = vmatprep.subr.mxu0 0.0
        %2886 = vmatpush2.msra.mxu0 %v2828
        %2887 = vmatprep.subr.mxu0 0.0
        %2888 = vmatpush2.msra.mxu0 %v2827
        %2889 = vmatprep.subr.mxu0 0.0
        %2890 = vmatpush2.msra.mxu0 %v2826
        %2891 = vmatprep.subr.mxu0 0.0
        %2892 = vmatpush2.msra.mxu0 %v2825
        %2893 = vmatprep.subr.mxu0 0.0
        %2894 = vmatpush2.msra.mxu0 %v2824
        %2895 = vmatprep.subr.mxu0 0.0
        %2896 = vmatpush2.msra.mxu0 %v2823
        %2897 = vmatprep.subr.mxu0 0.0
        %2898 = vmatpush2.msra.mxu0 %v2822
        %2899 = vmatprep.subr.mxu0 0.0
        %2900 = vmatpush2.msra.mxu0 %v2821
        %2901 = vmatprep.mubr.f32.mxu0 %v251
        %2902 = vmatmul.mubr.f32.gmra.mxu0 %v250
        %v2903 = vpop.f32.mrf.mxu0
        %v2904 = vadd.f32 0.0, %v2903
        %v2905 = vpop.f32.mrf.mxu0
        %2906 = vmatprep.mubr.f32.mxu0 %v253
        %2907 = vmatmul.mubr.f32.gmra.mxu0 %v252
        %v2908 = vpop.f32.mrf.mxu0
        %v2909 = vadd.f32 0.0, %v2908
        %v2910 = vpop.f32.mrf.mxu0
        %2911 = vmatprep.mubr.f32.mxu0 %v255
        %2912 = vmatmul.mubr.f32.gmra.mxu0 %v254
        %v2913 = vpop.f32.mrf.mxu0
        %v2914 = vadd.f32 0.0, %v2913
        %v2915 = vpop.f32.mrf.mxu0
        %2916 = vmatprep.mubr.f32.mxu0 %v257
        %2917 = vmatmul.mubr.f32.gmra.mxu0 %v256
        %v2918 = vpop.f32.mrf.mxu0
        %v2919 = vadd.f32 0.0, %v2918
        %v2920 = vpop.f32.mrf.mxu0
        %2921 = vmatprep.mubr.f32.mxu0 %v259
        %2922 = vmatmul.mubr.f32.gmra.mxu0 %v258
        %v2923 = vpop.f32.mrf.mxu0
        %v2924 = vadd.f32 0.0, %v2923
        %v2925 = vpop.f32.mrf.mxu0
        %2926 = vmatprep.mubr.f32.mxu0 %v261
        %2927 = vmatmul.mubr.f32.gmra.mxu0 %v260
        %v2928 = vpop.f32.mrf.mxu0
        %v2929 = vadd.f32 0.0, %v2928
        %v2930 = vpop.f32.mrf.mxu0
        %2931 = vmatprep.mubr.f32.mxu0 %v263
        %2932 = vmatmul.mubr.f32.gmra.mxu0 %v262
        %v2933 = vpop.f32.mrf.mxu0
        %v2934 = vadd.f32 0.0, %v2933
        %v2935 = vpop.f32.mrf.mxu0
        %2936 = vmatprep.mubr.f32.mxu0 %v265
        %2937 = vmatmul.mubr.f32.gmra.mxu0 %v264
        %v2938 = vpop.f32.mrf.mxu0
        %v2939 = vadd.f32 0.0, %v2938
        %v2940 = vpop.f32.mrf.mxu0
        %2941 = vmatprep.mubr.f32.mxu0 %v267
        %2942 = vmatmul.mubr.f32.gmra.mxu0 %v266
        %v2943 = vpop.f32.mrf.mxu0
        %v2944 = vadd.f32 0.0, %v2943
        %v2945 = vpop.f32.mrf.mxu0
        %2946 = vmatprep.mubr.f32.mxu0 %v269
        %2947 = vmatmul.mubr.f32.gmra.mxu0 %v268
        %v2948 = vpop.f32.mrf.mxu0
        %v2949 = vadd.f32 0.0, %v2948
        %v2950 = vpop.f32.mrf.mxu0
        %2951 = vmatprep.mubr.f32.mxu0 %v271
        %2952 = vmatmul.mubr.f32.gmra.mxu0 %v270
        %v2953 = vpop.f32.mrf.mxu0
        %v2954 = vadd.f32 0.0, %v2953
        %v2955 = vpop.f32.mrf.mxu0
        %2956 = vmatprep.mubr.f32.mxu0 %v273
        %2957 = vmatmul.mubr.f32.gmra.mxu0 %v272
        %v2958 = vpop.f32.mrf.mxu0
        %v2959 = vadd.f32 0.0, %v2958
        %v2960 = vpop.f32.mrf.mxu0
        %2961 = vmatprep.mubr.f32.mxu0 %v275
        %2962 = vmatmul.mubr.f32.gmra.mxu0 %v274
        %v2963 = vpop.f32.mrf.mxu0
        %v2964 = vadd.f32 0.0, %v2963
        %v2965 = vpop.f32.mrf.mxu0
        %2966 = vmatprep.mubr.f32.mxu0 %v277
        %2967 = vmatmul.mubr.f32.gmra.mxu0 %v276
        %v2968 = vpop.f32.mrf.mxu0
        %v2969 = vadd.f32 0.0, %v2968
        %v2970 = vpop.f32.mrf.mxu0
        %2971 = vmatprep.mubr.f32.mxu0 %v279
        %2972 = vmatmul.mubr.f32.gmra.mxu0 %v278
        %v2973 = vpop.f32.mrf.mxu0
        %v2974 = vadd.f32 0.0, %v2973
        %v2975 = vpop.f32.mrf.mxu0
        %2976 = vmatprep.mubr.f32.mxu0 %v281
        %2977 = vmatmul.mubr.f32.gmra.mxu0 %v280
        %v2978 = vpop.f32.mrf.mxu0
        %v2979 = vadd.f32 0.0, %v2978
        %v2980 = vpop.f32.mrf.mxu0
        %2981 = vmatprep.mubr.f32.mxu0 %v283
        %2982 = vmatmul.mubr.f32.gmra.mxu0 %v282
        %v2983 = vpop.f32.mrf.mxu0
        %v2984 = vadd.f32 0.0, %v2983
        %v2985 = vpop.f32.mrf.mxu0
        %2986 = vmatprep.mubr.f32.mxu0 %v285
        %2987 = vmatmul.mubr.f32.gmra.mxu0 %v284
        %v2988 = vpop.f32.mrf.mxu0
        %v2989 = vadd.f32 0.0, %v2988
        %v2990 = vpop.f32.mrf.mxu0
        %2991 = vmatprep.mubr.f32.mxu0 %v287
        %2992 = vmatmul.mubr.f32.gmra.mxu0 %v286
        %v2993 = vpop.f32.mrf.mxu0
        %v2994 = vadd.f32 0.0, %v2993
        %v2995 = vpop.f32.mrf.mxu0
        %2996 = vmatprep.mubr.f32.mxu0 %v289
        %2997 = vmatmul.mubr.f32.gmra.mxu0 %v288
        %v2998 = vpop.f32.mrf.mxu0
        %v2999 = vadd.f32 0.0, %v2998
        %v3000 = vpop.f32.mrf.mxu0
        %3001 = vmatprep.mubr.f32.mxu0 %v291
        %3002 = vmatmul.mubr.f32.gmra.mxu0 %v290
        %v3003 = vpop.f32.mrf.mxu0
        %v3004 = vadd.f32 0.0, %v3003
        %v3005 = vpop.f32.mrf.mxu0
        %3006 = vmatprep.mubr.f32.mxu0 %v293
        %3007 = vmatmul.mubr.f32.gmra.mxu0 %v292
        %v3008 = vpop.f32.mrf.mxu0
        %v3009 = vadd.f32 0.0, %v3008
        %v3010 = vpop.f32.mrf.mxu0
        %3011 = vmatprep.mubr.f32.mxu0 %v295
        %3012 = vmatmul.mubr.f32.gmra.mxu0 %v294
        %v3013 = vpop.f32.mrf.mxu0
        %v3014 = vadd.f32 0.0, %v3013
        %v3015 = vpop.f32.mrf.mxu0
        %3016 = vmatprep.mubr.f32.mxu0 %v297
        %3017 = vmatmul.mubr.f32.gmra.mxu0 %v296
        %v3018 = vpop.f32.mrf.mxu0
        %v3019 = vadd.f32 0.0, %v3018
        %v3020 = vpop.f32.mrf.mxu0
        %3021 = vmatprep.mubr.f32.mxu0 %v299
        %3022 = vmatmul.mubr.f32.gmra.mxu0 %v298
        %v3023 = vpop.f32.mrf.mxu0
        %v3024 = vadd.f32 0.0, %v3023
        %v3025 = vpop.f32.mrf.mxu0
        %3026 = vmatprep.mubr.f32.mxu0 %v301
        %3027 = vmatmul.mubr.f32.gmra.mxu0 %v300
        %v3028 = vpop.f32.mrf.mxu0
        %v3029 = vadd.f32 0.0, %v3028
        %v3030 = vpop.f32.mrf.mxu0
        %3031 = vmatprep.mubr.f32.mxu0 %v303
        %3032 = vmatmul.mubr.f32.gmra.mxu0 %v302
        %v3033 = vpop.f32.mrf.mxu0
        %v3034 = vadd.f32 0.0, %v3033
        %v3035 = vpop.f32.mrf.mxu0
        %3036 = vmatprep.mubr.f32.mxu0 %v305
        %3037 = vmatmul.mubr.f32.gmra.mxu0 %v304
        %v3038 = vpop.f32.mrf.mxu0
        %v3039 = vadd.f32 0.0, %v3038
        %v3040 = vpop.f32.mrf.mxu0
        %3041 = vmatprep.mubr.f32.mxu0 %v307
        %3042 = vmatmul.mubr.f32.gmra.mxu0 %v306
        %v3043 = vpop.f32.mrf.mxu0
        %v3044 = vadd.f32 0.0, %v3043
        %v3045 = vpop.f32.mrf.mxu0
        %3046 = vmatprep.mubr.f32.mxu0 %v309
        %3047 = vmatmul.mubr.f32.gmra.mxu0 %v308
        %v3048 = vpop.f32.mrf.mxu0
        %v3049 = vadd.f32 0.0, %v3048
        %v3050 = vpop.f32.mrf.mxu0
        %3051 = vmatprep.mubr.f32.mxu0 %v311
        %3052 = vmatmul.mubr.f32.gmra.mxu0 %v310
        %v3053 = vpop.f32.mrf.mxu0
        %v3054 = vadd.f32 0.0, %v3053
        %v3055 = vpop.f32.mrf.mxu0
        %3056 = vmatprep.mubr.f32.mxu0 %v313
        %3057 = vmatmul.mubr.f32.gmra.mxu0 %v312
        %v3058 = vpop.f32.mrf.mxu0
        %v3059 = vadd.f32 0.0, %v3058
        %v3060 = vpop.f32.mrf.mxu0
        %3061 = vdwg.mxu0
        %v3063 = vsel %vm1117, %v2514, 0
        %v3066 = vsel %vm1117, %v2515, 0
        %v3069 = vsel %vm1117, %v2516, 0
        %v3072 = vsel %vm1117, %v2517, 0
        %v3075 = vsel %vm1117, %v2518, 0
        %v3078 = vsel %vm1117, %v2519, 0
        %v3081 = vsel %vm1117, %v2520, 0
        %v3084 = vsel %vm1117, %v2521, 0
        %v3087 = vsel %vm1117, %v2522, 0
        %v3090 = vsel %vm1117, %v2523, 0
        %v3093 = vsel %vm1117, %v2524, 0
        %v3096 = vsel %vm1117, %v2525, 0
        %v3099 = vsel %vm1117, %v2526, 0
        %v3102 = vsel %vm1117, %v2527, 0
        %v3105 = vsel %vm1117, %v2528, 0
        %v3108 = vsel %vm1117, %v2529, 0
        %v3111 = vsel %vm1117, %v2530, 0
        %v3114 = vsel %vm1117, %v2531, 0
        %v3117 = vsel %vm1117, %v2532, 0
        %v3120 = vsel %vm1117, %v2533, 0
        %v3123 = vsel %vm1117, %v2534, 0
        %v3126 = vsel %vm1117, %v2535, 0
        %v3129 = vsel %vm1117, %v2536, 0
        %v3132 = vsel %vm1117, %v2537, 0
        %v3135 = vsel %vm1117, %v2538, 0
        %v3138 = vsel %vm1117, %v2539, 0
        %v3141 = vsel %vm1117, %v2540, 0
        %v3144 = vsel %vm1117, %v2541, 0
        %v3147 = vsel %vm1117, %v2542, 0
        %v3150 = vsel %vm1117, %v2543, 0
        %v3153 = vsel %vm1117, %v2544, 0
        %v3156 = vsel %vm1117, %v2545, 0
        %v3159 = vsel %vm1117, %v2646, 0
        %v3162 = vsel %vm1117, %v2651, 0
        %v3165 = vsel %vm1117, %v2656, 0
        %v3168 = vsel %vm1117, %v2661, 0
        %v3171 = vsel %vm1117, %v2666, 0
        %v3174 = vsel %vm1117, %v2671, 0
        %v3177 = vsel %vm1117, %v2676, 0
        %v3180 = vsel %vm1117, %v2681, 0
        %v3183 = vsel %vm1117, %v2686, 0
        %v3186 = vsel %vm1117, %v2691, 0
        %v3189 = vsel %vm1117, %v2696, 0
        %v3192 = vsel %vm1117, %v2701, 0
        %v3195 = vsel %vm1117, %v2706, 0
        %v3198 = vsel %vm1117, %v2711, 0
        %v3201 = vsel %vm1117, %v2716, 0
        %v3204 = vsel %vm1117, %v2721, 0
        %v3207 = vsel %vm1117, %v2726, 0
        %v3210 = vsel %vm1117, %v2731, 0
        %v3213 = vsel %vm1117, %v2736, 0
        %v3216 = vsel %vm1117, %v2741, 0
        %v3219 = vsel %vm1117, %v2746, 0
        %v3222 = vsel %vm1117, %v2751, 0
        %v3225 = vsel %vm1117, %v2756, 0
        %v3228 = vsel %vm1117, %v2761, 0
        %v3231 = vsel %vm1117, %v2766, 0
        %v3234 = vsel %vm1117, %v2771, 0
        %v3237 = vsel %vm1117, %v2776, 0
        %v3240 = vsel %vm1117, %v2781, 0
        %v3243 = vsel %vm1117, %v2786, 0
        %v3246 = vsel %vm1117, %v2791, 0
        %v3249 = vsel %vm1117, %v2796, 0
        %v3252 = vsel %vm1117, %v2801, 0
        %3254 = vmatprep.subr.mxu0 0.0
        %3255 = vmatpush1.xpose.msra.mxu0 %v3204
        %3256 = vmatprep.subr.mxu0 0.0
        %3257 = vmatpush1.xpose.msra.mxu0 %v3201
        %3258 = vmatprep.subr.mxu0 0.0
        %3259 = vmatpush1.xpose.msra.mxu0 %v3198
        %3260 = vmatprep.subr.mxu0 0.0
        %3261 = vmatpush1.xpose.msra.mxu0 %v3195
        %3262 = vmatprep.subr.mxu0 0.0
        %3263 = vmatpush1.xpose.msra.mxu0 %v3192
        %3264 = vmatprep.subr.mxu0 0.0
        %3265 = vmatpush1.xpose.msra.mxu0 %v3189
        %3266 = vmatprep.subr.mxu0 0.0
        %3267 = vmatpush1.xpose.msra.mxu0 %v3186
        %3268 = vmatprep.subr.mxu0 0.0
        %3269 = vmatpush1.xpose.msra.mxu0 %v3183
        %3270 = vmatprep.subr.mxu0 0.0
        %3271 = vmatpush1.xpose.msra.mxu0 %v3180
        %3272 = vmatprep.subr.mxu0 0.0
        %3273 = vmatpush1.xpose.msra.mxu0 %v3177
        %3274 = vmatprep.subr.mxu0 0.0
        %3275 = vmatpush1.xpose.msra.mxu0 %v3174
        %3276 = vmatprep.subr.mxu0 0.0
        %3277 = vmatpush1.xpose.msra.mxu0 %v3171
        %3278 = vmatprep.subr.mxu0 0.0
        %3279 = vmatpush1.xpose.msra.mxu0 %v3168
        %3280 = vmatprep.subr.mxu0 0.0
        %3281 = vmatpush1.xpose.msra.mxu0 %v3165
        %3282 = vmatprep.subr.mxu0 0.0
        %3283 = vmatpush1.xpose.msra.mxu0 %v3162
        %3284 = vmatprep.subr.mxu0 0.0
        %3285 = vmatpush1.xpose.msra.mxu0 %v3159
        %3286 = vmatprep.subr.mxu0 0.0
        %3287 = vmatpush2.xpose.msra.mxu0 %v3252
        %3288 = vmatprep.subr.mxu0 0.0
        %3289 = vmatpush2.xpose.msra.mxu0 %v3249
        %3290 = vmatprep.subr.mxu0 0.0
        %3291 = vmatpush2.xpose.msra.mxu0 %v3246
        %3292 = vmatprep.subr.mxu0 0.0
        %3293 = vmatpush2.xpose.msra.mxu0 %v3243
        %3294 = vmatprep.subr.mxu0 0.0
        %3295 = vmatpush2.xpose.msra.mxu0 %v3240
        %3296 = vmatprep.subr.mxu0 0.0
        %3297 = vmatpush2.xpose.msra.mxu0 %v3237
        %3298 = vmatprep.subr.mxu0 0.0
        %3299 = vmatpush2.xpose.msra.mxu0 %v3234
        %3300 = vmatprep.subr.mxu0 0.0
        %3301 = vmatpush2.xpose.msra.mxu0 %v3231
        %3302 = vmatprep.subr.mxu0 0.0
        %3303 = vmatpush2.xpose.msra.mxu0 %v3228
        %3304 = vmatprep.subr.mxu0 0.0
        %3305 = vmatpush2.xpose.msra.mxu0 %v3225
        %3306 = vmatprep.subr.mxu0 0.0
        %3307 = vmatpush2.xpose.msra.mxu0 %v3222
        %3308 = vmatprep.subr.mxu0 0.0
        %3309 = vmatpush2.xpose.msra.mxu0 %v3219
        %3310 = vmatprep.subr.mxu0 0.0
        %3311 = vmatpush2.xpose.msra.mxu0 %v3216
        %3312 = vmatprep.subr.mxu0 0.0
        %3313 = vmatpush2.xpose.msra.mxu0 %v3213
        %3314 = vmatprep.subr.mxu0 0.0
        %3315 = vmatpush2.xpose.msra.mxu0 %v3210
        %3316 = vmatprep.subr.mxu0 0.0
        %3317 = vmatpush2.xpose.msra.mxu0 %v3207
        %3318 = vmatprep.mubr.f32.mxu0 0.0
        %3319 = vmatmul.mubr.f32.gmra.mxu0 %v3063
        %v3320 = vpop.f32.mrf.mxu0
        %v3321 = vadd.f32 0.0, %v3320
        %v3322 = vpop.f32.mrf.mxu0
        %v3323 = vadd.f32 0.0, %v3322
        %3324 = vmatprep.mubr.f32.mxu0 0.0
        %3325 = vmatmul.mubr.f32.gmra.mxu0 %v3066
        %v3326 = vpop.f32.mrf.mxu0
        %v3327 = vadd.f32 0.0, %v3326
        %v3328 = vpop.f32.mrf.mxu0
        %v3329 = vadd.f32 0.0, %v3328
        %3330 = vmatprep.mubr.f32.mxu0 0.0
        %3331 = vmatmul.mubr.f32.gmra.mxu0 %v3069
        %v3332 = vpop.f32.mrf.mxu0
        %v3333 = vadd.f32 0.0, %v3332
        %v3334 = vpop.f32.mrf.mxu0
        %v3335 = vadd.f32 0.0, %v3334
        %3336 = vmatprep.mubr.f32.mxu0 0.0
        %3337 = vmatmul.mubr.f32.gmra.mxu0 %v3072
        %v3338 = vpop.f32.mrf.mxu0
        %v3339 = vadd.f32 0.0, %v3338
        %v3340 = vpop.f32.mrf.mxu0
        %v3341 = vadd.f32 0.0, %v3340
        %3342 = vmatprep.mubr.f32.mxu0 0.0
        %3343 = vmatmul.mubr.f32.gmra.mxu0 %v3075
        %v3344 = vpop.f32.mrf.mxu0
        %v3345 = vadd.f32 0.0, %v3344
        %v3346 = vpop.f32.mrf.mxu0
        %v3347 = vadd.f32 0.0, %v3346
        %3348 = vmatprep.mubr.f32.mxu0 0.0
        %3349 = vmatmul.mubr.f32.gmra.mxu0 %v3078
        %v3350 = vpop.f32.mrf.mxu0
        %v3351 = vadd.f32 0.0, %v3350
        %v3352 = vpop.f32.mrf.mxu0
        %v3353 = vadd.f32 0.0, %v3352
        %3354 = vmatprep.mubr.f32.mxu0 0.0
        %3355 = vmatmul.mubr.f32.gmra.mxu0 %v3081
        %v3356 = vpop.f32.mrf.mxu0
        %v3357 = vadd.f32 0.0, %v3356
        %v3358 = vpop.f32.mrf.mxu0
        %v3359 = vadd.f32 0.0, %v3358
        %3360 = vmatprep.mubr.f32.mxu0 0.0
        %3361 = vmatmul.mubr.f32.gmra.mxu0 %v3084
        %v3362 = vpop.f32.mrf.mxu0
        %v3363 = vadd.f32 0.0, %v3362
        %v3364 = vpop.f32.mrf.mxu0
        %v3365 = vadd.f32 0.0, %v3364
        %3366 = vmatprep.mubr.f32.mxu0 0.0
        %3367 = vmatmul.mubr.f32.gmra.mxu0 %v3087
        %v3368 = vpop.f32.mrf.mxu0
        %v3369 = vadd.f32 0.0, %v3368
        %v3370 = vpop.f32.mrf.mxu0
        %v3371 = vadd.f32 0.0, %v3370
        %3372 = vmatprep.mubr.f32.mxu0 0.0
        %3373 = vmatmul.mubr.f32.gmra.mxu0 %v3090
        %v3374 = vpop.f32.mrf.mxu0
        %v3375 = vadd.f32 0.0, %v3374
        %v3376 = vpop.f32.mrf.mxu0
        %v3377 = vadd.f32 0.0, %v3376
        %3378 = vmatprep.mubr.f32.mxu0 0.0
        %3379 = vmatmul.mubr.f32.gmra.mxu0 %v3093
        %v3380 = vpop.f32.mrf.mxu0
        %v3381 = vadd.f32 0.0, %v3380
        %v3382 = vpop.f32.mrf.mxu0
        %v3383 = vadd.f32 0.0, %v3382
        %3384 = vmatprep.mubr.f32.mxu0 0.0
        %3385 = vmatmul.mubr.f32.gmra.mxu0 %v3096
        %v3386 = vpop.f32.mrf.mxu0
        %v3387 = vadd.f32 0.0, %v3386
        %v3388 = vpop.f32.mrf.mxu0
        %v3389 = vadd.f32 0.0, %v3388
        %3390 = vmatprep.mubr.f32.mxu0 0.0
        %3391 = vmatmul.mubr.f32.gmra.mxu0 %v3099
        %v3392 = vpop.f32.mrf.mxu0
        %v3393 = vadd.f32 0.0, %v3392
        %v3394 = vpop.f32.mrf.mxu0
        %v3395 = vadd.f32 0.0, %v3394
        %3396 = vmatprep.mubr.f32.mxu0 0.0
        %3397 = vmatmul.mubr.f32.gmra.mxu0 %v3102
        %v3398 = vpop.f32.mrf.mxu0
        %v3399 = vadd.f32 0.0, %v3398
        %v3400 = vpop.f32.mrf.mxu0
        %v3401 = vadd.f32 0.0, %v3400
        %3402 = vmatprep.mubr.f32.mxu0 0.0
        %3403 = vmatmul.mubr.f32.gmra.mxu0 %v3105
        %v3404 = vpop.f32.mrf.mxu0
        %v3405 = vadd.f32 0.0, %v3404
        %v3406 = vpop.f32.mrf.mxu0
        %v3407 = vadd.f32 0.0, %v3406
        %3408 = vmatprep.mubr.f32.mxu0 0.0
        %3409 = vmatmul.mubr.f32.gmra.mxu0 %v3108
        %v3410 = vpop.f32.mrf.mxu0
        %v3411 = vadd.f32 0.0, %v3410
        %v3412 = vpop.f32.mrf.mxu0
        %v3413 = vadd.f32 0.0, %v3412
        %3414 = vmatprep.mubr.f32.mxu0 0.0
        %3415 = vmatmul.mubr.f32.gmra.mxu0 %v3111
        %v3416 = vpop.f32.mrf.mxu0
        %v3417 = vadd.f32 0.0, %v3416
        %v3418 = vpop.f32.mrf.mxu0
        %v3419 = vadd.f32 0.0, %v3418
        %3420 = vmatprep.mubr.f32.mxu0 0.0
        %3421 = vmatmul.mubr.f32.gmra.mxu0 %v3114
        %v3422 = vpop.f32.mrf.mxu0
        %v3423 = vadd.f32 0.0, %v3422
        %v3424 = vpop.f32.mrf.mxu0
        %v3425 = vadd.f32 0.0, %v3424
        %3426 = vmatprep.mubr.f32.mxu0 0.0
        %3427 = vmatmul.mubr.f32.gmra.mxu0 %v3117
        %v3428 = vpop.f32.mrf.mxu0
        %v3429 = vadd.f32 0.0, %v3428
        %v3430 = vpop.f32.mrf.mxu0
        %v3431 = vadd.f32 0.0, %v3430
        %3432 = vmatprep.mubr.f32.mxu0 0.0
        %3433 = vmatmul.mubr.f32.gmra.mxu0 %v3120
        %v3434 = vpop.f32.mrf.mxu0
        %v3435 = vadd.f32 0.0, %v3434
        %v3436 = vpop.f32.mrf.mxu0
        %v3437 = vadd.f32 0.0, %v3436
        %3438 = vmatprep.mubr.f32.mxu0 0.0
        %3439 = vmatmul.mubr.f32.gmra.mxu0 %v3123
        %v3440 = vpop.f32.mrf.mxu0
        %v3441 = vadd.f32 0.0, %v3440
        %v3442 = vpop.f32.mrf.mxu0
        %v3443 = vadd.f32 0.0, %v3442
        %3444 = vmatprep.mubr.f32.mxu0 0.0
        %3445 = vmatmul.mubr.f32.gmra.mxu0 %v3126
        %v3446 = vpop.f32.mrf.mxu0
        %v3447 = vadd.f32 0.0, %v3446
        %v3448 = vpop.f32.mrf.mxu0
        %v3449 = vadd.f32 0.0, %v3448
        %3450 = vmatprep.mubr.f32.mxu0 0.0
        %3451 = vmatmul.mubr.f32.gmra.mxu0 %v3129
        %v3452 = vpop.f32.mrf.mxu0
        %v3453 = vadd.f32 0.0, %v3452
        %v3454 = vpop.f32.mrf.mxu0
        %v3455 = vadd.f32 0.0, %v3454
        %3456 = vmatprep.mubr.f32.mxu0 0.0
        %3457 = vmatmul.mubr.f32.gmra.mxu0 %v3132
        %v3458 = vpop.f32.mrf.mxu0
        %v3459 = vadd.f32 0.0, %v3458
        %v3460 = vpop.f32.mrf.mxu0
        %v3461 = vadd.f32 0.0, %v3460
        %3462 = vmatprep.mubr.f32.mxu0 0.0
        %3463 = vmatmul.mubr.f32.gmra.mxu0 %v3135
        %v3464 = vpop.f32.mrf.mxu0
        %v3465 = vadd.f32 0.0, %v3464
        %v3466 = vpop.f32.mrf.mxu0
        %v3467 = vadd.f32 0.0, %v3466
        %3468 = vmatprep.mubr.f32.mxu0 0.0
        %3469 = vmatmul.mubr.f32.gmra.mxu0 %v3138
        %v3470 = vpop.f32.mrf.mxu0
        %v3471 = vadd.f32 0.0, %v3470
        %v3472 = vpop.f32.mrf.mxu0
        %v3473 = vadd.f32 0.0, %v3472
        %3474 = vmatprep.mubr.f32.mxu0 0.0
        %3475 = vmatmul.mubr.f32.gmra.mxu0 %v3141
        %v3476 = vpop.f32.mrf.mxu0
        %v3477 = vadd.f32 0.0, %v3476
        %v3478 = vpop.f32.mrf.mxu0
        %v3479 = vadd.f32 0.0, %v3478
        %3480 = vmatprep.mubr.f32.mxu0 0.0
        %3481 = vmatmul.mubr.f32.gmra.mxu0 %v3144
        %v3482 = vpop.f32.mrf.mxu0
        %v3483 = vadd.f32 0.0, %v3482
        %v3484 = vpop.f32.mrf.mxu0
        %v3485 = vadd.f32 0.0, %v3484
        %3486 = vmatprep.mubr.f32.mxu0 0.0
        %3487 = vmatmul.mubr.f32.gmra.mxu0 %v3147
        %v3488 = vpop.f32.mrf.mxu0
        %v3489 = vadd.f32 0.0, %v3488
        %v3490 = vpop.f32.mrf.mxu0
        %v3491 = vadd.f32 0.0, %v3490
        %3492 = vmatprep.mubr.f32.mxu0 0.0
        %3493 = vmatmul.mubr.f32.gmra.mxu0 %v3150
        %v3494 = vpop.f32.mrf.mxu0
        %v3495 = vadd.f32 0.0, %v3494
        %v3496 = vpop.f32.mrf.mxu0
        %v3497 = vadd.f32 0.0, %v3496
        %3498 = vmatprep.mubr.f32.mxu0 0.0
        %3499 = vmatmul.mubr.f32.gmra.mxu0 %v3153
        %v3500 = vpop.f32.mrf.mxu0
        %v3501 = vadd.f32 0.0, %v3500
        %v3502 = vpop.f32.mrf.mxu0
        %v3503 = vadd.f32 0.0, %v3502
        %3504 = vmatprep.mubr.f32.mxu0 0.0
        %3505 = vmatmul.mubr.f32.gmra.mxu0 %v3156
        %v3506 = vpop.f32.mrf.mxu0
        %v3507 = vadd.f32 0.0, %v3506
        %v3508 = vpop.f32.mrf.mxu0
        %v3509 = vadd.f32 0.0, %v3508
        %3510 = vdwg.mxu0
        %v3511 = vmax.f32 %v3321, %v3323
        %3512 = vmax.xlane.f32.xlu0 %v3511
        %v3513 = vpop.xlane.xlu0 %3512
        %v3514 = vmax.f32 %v3327, %v3329
        %3515 = vmax.xlane.f32.xlu0 %v3514
        %v3516 = vpop.xlane.xlu0 %3515
        %v3517 = vmax.f32 %v3333, %v3335
        %3518 = vmax.xlane.f32.xlu0 %v3517
        %v3519 = vpop.xlane.xlu0 %3518
        %v3520 = vmax.f32 %v3339, %v3341
        %3521 = vmax.xlane.f32.xlu0 %v3520
        %v3522 = vpop.xlane.xlu0 %3521
        %v3523 = vmax.f32 %v3345, %v3347
        %3524 = vmax.xlane.f32.xlu0 %v3523
        %v3525 = vpop.xlane.xlu0 %3524
        %v3526 = vmax.f32 %v3351, %v3353
        %3527 = vmax.xlane.f32.xlu0 %v3526
        %v3528 = vpop.xlane.xlu0 %3527
        %v3529 = vmax.f32 %v3357, %v3359
        %3530 = vmax.xlane.f32.xlu0 %v3529
        %v3531 = vpop.xlane.xlu0 %3530
        %v3532 = vmax.f32 %v3363, %v3365
        %3533 = vmax.xlane.f32.xlu0 %v3532
        %v3534 = vpop.xlane.xlu0 %3533
        %v3535 = vmax.f32 %v3369, %v3371
        %3536 = vmax.xlane.f32.xlu0 %v3535
        %v3537 = vpop.xlane.xlu0 %3536
        %v3538 = vmax.f32 %v3375, %v3377
        %3539 = vmax.xlane.f32.xlu0 %v3538
        %v3540 = vpop.xlane.xlu0 %3539
        %v3541 = vmax.f32 %v3381, %v3383
        %3542 = vmax.xlane.f32.xlu0 %v3541
        %v3543 = vpop.xlane.xlu0 %3542
        %v3544 = vmax.f32 %v3387, %v3389
        %3545 = vmax.xlane.f32.xlu0 %v3544
        %v3546 = vpop.xlane.xlu0 %3545
        %v3547 = vmax.f32 %v3393, %v3395
        %3548 = vmax.xlane.f32.xlu0 %v3547
        %v3549 = vpop.xlane.xlu0 %3548
        %v3550 = vmax.f32 %v3399, %v3401
        %3551 = vmax.xlane.f32.xlu0 %v3550
        %v3552 = vpop.xlane.xlu0 %3551
        %v3553 = vmax.f32 %v3405, %v3407
        %3554 = vmax.xlane.f32.xlu0 %v3553
        %v3555 = vpop.xlane.xlu0 %3554
        %v3556 = vmax.f32 %v3411, %v3413
        %3557 = vmax.xlane.f32.xlu0 %v3556
        %v3558 = vpop.xlane.xlu0 %3557
        %v3559 = vmax.f32 %v3417, %v3419
        %3560 = vmax.xlane.f32.xlu0 %v3559
        %v3561 = vpop.xlane.xlu0 %3560
        %v3562 = vmax.f32 %v3423, %v3425
        %3563 = vmax.xlane.f32.xlu0 %v3562
        %v3564 = vpop.xlane.xlu0 %3563
        %v3565 = vmax.f32 %v3429, %v3431
        %3566 = vmax.xlane.f32.xlu0 %v3565
        %v3567 = vpop.xlane.xlu0 %3566
        %v3568 = vmax.f32 %v3435, %v3437
        %3569 = vmax.xlane.f32.xlu0 %v3568
        %v3570 = vpop.xlane.xlu0 %3569
        %v3571 = vmax.f32 %v3441, %v3443
        %3572 = vmax.xlane.f32.xlu0 %v3571
        %v3573 = vpop.xlane.xlu0 %3572
        %v3574 = vmax.f32 %v3447, %v3449
        %3575 = vmax.xlane.f32.xlu0 %v3574
        %v3576 = vpop.xlane.xlu0 %3575
        %v3577 = vmax.f32 %v3453, %v3455
        %3578 = vmax.xlane.f32.xlu0 %v3577
        %v3579 = vpop.xlane.xlu0 %3578
        %v3580 = vmax.f32 %v3459, %v3461
        %3581 = vmax.xlane.f32.xlu0 %v3580
        %v3582 = vpop.xlane.xlu0 %3581
        %v3583 = vmax.f32 %v3465, %v3467
        %3584 = vmax.xlane.f32.xlu0 %v3583
        %v3585 = vpop.xlane.xlu0 %3584
        %v3586 = vmax.f32 %v3471, %v3473
        %3587 = vmax.xlane.f32.xlu0 %v3586
        %v3588 = vpop.xlane.xlu0 %3587
        %v3589 = vmax.f32 %v3477, %v3479
        %3590 = vmax.xlane.f32.xlu0 %v3589
        %v3591 = vpop.xlane.xlu0 %3590
        %v3592 = vmax.f32 %v3483, %v3485
        %3593 = vmax.xlane.f32.xlu0 %v3592
        %v3594 = vpop.xlane.xlu0 %3593
        %v3595 = vmax.f32 %v3489, %v3491
        %3596 = vmax.xlane.f32.xlu0 %v3595
        %v3597 = vpop.xlane.xlu0 %3596
        %v3598 = vmax.f32 %v3495, %v3497
        %3599 = vmax.xlane.f32.xlu0 %v3598
        %v3600 = vpop.xlane.xlu0 %3599
        %v3601 = vmax.f32 %v3501, %v3503
        %3602 = vmax.xlane.f32.xlu0 %v3601
        %v3603 = vpop.xlane.xlu0 %3602
        %v3604 = vmax.f32 %v3507, %v3509
        %3605 = vmax.xlane.f32.xlu0 %v3604
        %v3606 = vpop.xlane.xlu0 %3605
        %v3607 = vsub.f32 %v3321, %v3513
        %v3608 = vsub.f32 %v3323, %v3513
        %v3609 = vsub.f32 %v3327, %v3516
        %v3610 = vsub.f32 %v3329, %v3516
        %v3611 = vsub.f32 %v3333, %v3519
        %v3612 = vsub.f32 %v3335, %v3519
        %v3613 = vsub.f32 %v3339, %v3522
        %v3614 = vsub.f32 %v3341, %v3522
        %v3615 = vsub.f32 %v3345, %v3525
        %v3616 = vsub.f32 %v3347, %v3525
        %v3617 = vsub.f32 %v3351, %v3528
        %v3618 = vsub.f32 %v3353, %v3528
        %v3619 = vsub.f32 %v3357, %v3531
        %v3620 = vsub.f32 %v3359, %v3531
        %v3621 = vsub.f32 %v3363, %v3534
        %v3622 = vsub.f32 %v3365, %v3534
        %v3623 = vsub.f32 %v3369, %v3537
        %v3624 = vsub.f32 %v3371, %v3537
        %v3625 = vsub.f32 %v3375, %v3540
        %v3626 = vsub.f32 %v3377, %v3540
        %v3627 = vsub.f32 %v3381, %v3543
        %v3628 = vsub.f32 %v3383, %v3543
        %v3629 = vsub.f32 %v3387, %v3546
        %v3630 = vsub.f32 %v3389, %v3546
        %v3631 = vsub.f32 %v3393, %v3549
        %v3632 = vsub.f32 %v3395, %v3549
        %v3633 = vsub.f32 %v3399, %v3552
        %v3634 = vsub.f32 %v3401, %v3552
        %v3635 = vsub.f32 %v3405, %v3555
        %v3636 = vsub.f32 %v3407, %v3555
        %v3637 = vsub.f32 %v3411, %v3558
        %v3638 = vsub.f32 %v3413, %v3558
        %v3639 = vsub.f32 %v3417, %v3561
        %v3640 = vsub.f32 %v3419, %v3561
        %v3641 = vsub.f32 %v3423, %v3564
        %v3642 = vsub.f32 %v3425, %v3564
        %v3643 = vsub.f32 %v3429, %v3567
        %v3644 = vsub.f32 %v3431, %v3567
        %v3645 = vsub.f32 %v3435, %v3570
        %v3646 = vsub.f32 %v3437, %v3570
        %v3647 = vsub.f32 %v3441, %v3573
        %v3648 = vsub.f32 %v3443, %v3573
        %v3649 = vsub.f32 %v3447, %v3576
        %v3650 = vsub.f32 %v3449, %v3576
        %v3651 = vsub.f32 %v3453, %v3579
        %v3652 = vsub.f32 %v3455, %v3579
        %v3653 = vsub.f32 %v3459, %v3582
        %v3654 = vsub.f32 %v3461, %v3582
        %v3655 = vsub.f32 %v3465, %v3585
        %v3656 = vsub.f32 %v3467, %v3585
        %v3657 = vsub.f32 %v3471, %v3588
        %v3658 = vsub.f32 %v3473, %v3588
        %v3659 = vsub.f32 %v3477, %v3591
        %v3660 = vsub.f32 %v3479, %v3591
        %v3661 = vsub.f32 %v3483, %v3594
        %v3662 = vsub.f32 %v3485, %v3594
        %v3663 = vsub.f32 %v3489, %v3597
        %v3664 = vsub.f32 %v3491, %v3597
        %v3665 = vsub.f32 %v3495, %v3600
        %v3666 = vsub.f32 %v3497, %v3600
        %v3667 = vsub.f32 %v3501, %v3603
        %v3668 = vsub.f32 %v3503, %v3603
        %v3669 = vsub.f32 %v3507, %v3606
        %v3670 = vsub.f32 %v3509, %v3606
        %v3671 = vmul.f32 %v3607, 1.442695
        %v3672 = vpow.pop %v3671
        %v3673 = vmul.f32 %v3608, 1.442695
        %v3674 = vpow.pop %v3673
        %v3675 = vmul.f32 %v3609, 1.442695
        %v3676 = vpow.pop %v3675
        %v3677 = vmul.f32 %v3610, 1.442695
        %v3678 = vpow.pop %v3677
        %v3679 = vmul.f32 %v3611, 1.442695
        %v3680 = vpow.pop %v3679
        %v3681 = vmul.f32 %v3612, 1.442695
        %v3682 = vpow.pop %v3681
        %v3683 = vmul.f32 %v3613, 1.442695
        %v3684 = vpow.pop %v3683
        %v3685 = vmul.f32 %v3614, 1.442695
        %v3686 = vpow.pop %v3685
        %v3687 = vmul.f32 %v3615, 1.442695
        %v3688 = vpow.pop %v3687
        %v3689 = vmul.f32 %v3616, 1.442695
        %v3690 = vpow.pop %v3689
        %v3691 = vmul.f32 %v3617, 1.442695
        %v3692 = vpow.pop %v3691
        %v3693 = vmul.f32 %v3618, 1.442695
        %v3694 = vpow.pop %v3693
        %v3695 = vmul.f32 %v3619, 1.442695
        %v3696 = vpow.pop %v3695
        %v3697 = vmul.f32 %v3620, 1.442695
        %v3698 = vpow.pop %v3697
        %v3699 = vmul.f32 %v3621, 1.442695
        %v3700 = vpow.pop %v3699
        %v3701 = vmul.f32 %v3622, 1.442695
        %v3702 = vpow.pop %v3701
        %v3703 = vmul.f32 %v3623, 1.442695
        %v3704 = vpow.pop %v3703
        %v3705 = vmul.f32 %v3624, 1.442695
        %v3706 = vpow.pop %v3705
        %v3707 = vmul.f32 %v3625, 1.442695
        %v3708 = vpow.pop %v3707
        %v3709 = vmul.f32 %v3626, 1.442695
        %v3710 = vpow.pop %v3709
        %v3711 = vmul.f32 %v3627, 1.442695
        %v3712 = vpow.pop %v3711
        %v3713 = vmul.f32 %v3628, 1.442695
        %v3714 = vpow.pop %v3713
        %v3715 = vmul.f32 %v3629, 1.442695
        %v3716 = vpow.pop %v3715
        %v3717 = vmul.f32 %v3630, 1.442695
        %v3718 = vpow.pop %v3717
        %v3719 = vmul.f32 %v3631, 1.442695
        %v3720 = vpow.pop %v3719
        %v3721 = vmul.f32 %v3632, 1.442695
        %v3722 = vpow.pop %v3721
        %v3723 = vmul.f32 %v3633, 1.442695
        %v3724 = vpow.pop %v3723
        %v3725 = vmul.f32 %v3634, 1.442695
        %v3726 = vpow.pop %v3725
        %v3727 = vmul.f32 %v3635, 1.442695
        %v3728 = vpow.pop %v3727
        %v3729 = vmul.f32 %v3636, 1.442695
        %v3730 = vpow.pop %v3729
        %v3731 = vmul.f32 %v3637, 1.442695
        %v3732 = vpow.pop %v3731
        %v3733 = vmul.f32 %v3638, 1.442695
        %v3734 = vpow.pop %v3733
        %v3735 = vmul.f32 %v3639, 1.442695
        %v3736 = vpow.pop %v3735
        %v3737 = vmul.f32 %v3640, 1.442695
        %v3738 = vpow.pop %v3737
        %v3739 = vmul.f32 %v3641, 1.442695
        %v3740 = vpow.pop %v3739
        %v3741 = vmul.f32 %v3642, 1.442695
        %v3742 = vpow.pop %v3741
        %v3743 = vmul.f32 %v3643, 1.442695
        %v3744 = vpow.pop %v3743
        %v3745 = vmul.f32 %v3644, 1.442695
        %v3746 = vpow.pop %v3745
        %v3747 = vmul.f32 %v3645, 1.442695
        %v3748 = vpow.pop %v3747
        %v3749 = vmul.f32 %v3646, 1.442695
        %v3750 = vpow.pop %v3749
        %v3751 = vmul.f32 %v3647, 1.442695
        %v3752 = vpow.pop %v3751
        %v3753 = vmul.f32 %v3648, 1.442695
        %v3754 = vpow.pop %v3753
        %v3755 = vmul.f32 %v3649, 1.442695
        %v3756 = vpow.pop %v3755
        %v3757 = vmul.f32 %v3650, 1.442695
        %v3758 = vpow.pop %v3757
        %v3759 = vmul.f32 %v3651, 1.442695
        %v3760 = vpow.pop %v3759
        %v3761 = vmul.f32 %v3652, 1.442695
        %v3762 = vpow.pop %v3761
        %v3763 = vmul.f32 %v3653, 1.442695
        %v3764 = vpow.pop %v3763
        %v3765 = vmul.f32 %v3654, 1.442695
        %v3766 = vpow.pop %v3765
        %v3767 = vmul.f32 %v3655, 1.442695
        %v3768 = vpow.pop %v3767
        %v3769 = vmul.f32 %v3656, 1.442695
        %v3770 = vpow.pop %v3769
        %v3771 = vmul.f32 %v3657, 1.442695
        %v3772 = vpow.pop %v3771
        %v3773 = vmul.f32 %v3658, 1.442695
        %v3774 = vpow.pop %v3773
        %v3775 = vmul.f32 %v3659, 1.442695
        %v3776 = vpow.pop %v3775
        %v3777 = vmul.f32 %v3660, 1.442695
        %v3778 = vpow.pop %v3777
        %v3779 = vmul.f32 %v3661, 1.442695
        %v3780 = vpow.pop %v3779
        %v3781 = vmul.f32 %v3662, 1.442695
        %v3782 = vpow.pop %v3781
        %v3783 = vmul.f32 %v3663, 1.442695
        %v3784 = vpow.pop %v3783
        %v3785 = vmul.f32 %v3664, 1.442695
        %v3786 = vpow.pop %v3785
        %v3787 = vmul.f32 %v3665, 1.442695
        %v3788 = vpow.pop %v3787
        %v3789 = vmul.f32 %v3666, 1.442695
        %v3790 = vpow.pop %v3789
        %v3791 = vmul.f32 %v3667, 1.442695
        %v3792 = vpow.pop %v3791
        %v3793 = vmul.f32 %v3668, 1.442695
        %v3794 = vpow.pop %v3793
        %v3795 = vmul.f32 %v3669, 1.442695
        %v3796 = vpow.pop %v3795
        %v3797 = vmul.f32 %v3670, 1.442695
        %v3798 = vpow.pop %v3797
        %v3799 = vadd.f32 %v3672, %v3674
        %3800 = vadd.xlane.f32.xlu0 %v3799
        %v3801 = vpop.xlane.xlu0 %3800
        %v3802 = vadd.f32 %v3676, %v3678
        %3803 = vadd.xlane.f32.xlu0 %v3802
        %v3804 = vpop.xlane.xlu0 %3803
        %v3805 = vadd.f32 %v3680, %v3682
        %3806 = vadd.xlane.f32.xlu0 %v3805
        %v3807 = vpop.xlane.xlu0 %3806
        %v3808 = vadd.f32 %v3684, %v3686
        %3809 = vadd.xlane.f32.xlu0 %v3808
        %v3810 = vpop.xlane.xlu0 %3809
        %v3811 = vadd.f32 %v3688, %v3690
        %3812 = vadd.xlane.f32.xlu0 %v3811
        %v3813 = vpop.xlane.xlu0 %3812
        %v3814 = vadd.f32 %v3692, %v3694
        %3815 = vadd.xlane.f32.xlu0 %v3814
        %v3816 = vpop.xlane.xlu0 %3815
        %v3817 = vadd.f32 %v3696, %v3698
        %3818 = vadd.xlane.f32.xlu0 %v3817
        %v3819 = vpop.xlane.xlu0 %3818
        %v3820 = vadd.f32 %v3700, %v3702
        %3821 = vadd.xlane.f32.xlu0 %v3820
        %v3822 = vpop.xlane.xlu0 %3821
        %v3823 = vadd.f32 %v3704, %v3706
        %3824 = vadd.xlane.f32.xlu0 %v3823
        %v3825 = vpop.xlane.xlu0 %3824
        %v3826 = vadd.f32 %v3708, %v3710
        %3827 = vadd.xlane.f32.xlu0 %v3826
        %v3828 = vpop.xlane.xlu0 %3827
        %v3829 = vadd.f32 %v3712, %v3714
        %3830 = vadd.xlane.f32.xlu0 %v3829
        %v3831 = vpop.xlane.xlu0 %3830
        %v3832 = vadd.f32 %v3716, %v3718
        %3833 = vadd.xlane.f32.xlu0 %v3832
        %v3834 = vpop.xlane.xlu0 %3833
        %v3835 = vadd.f32 %v3720, %v3722
        %3836 = vadd.xlane.f32.xlu0 %v3835
        %v3837 = vpop.xlane.xlu0 %3836
        %v3838 = vadd.f32 %v3724, %v3726
        %3839 = vadd.xlane.f32.xlu0 %v3838
        %v3840 = vpop.xlane.xlu0 %3839
        %v3841 = vadd.f32 %v3728, %v3730
        %3842 = vadd.xlane.f32.xlu0 %v3841
        %v3843 = vpop.xlane.xlu0 %3842
        %v3844 = vadd.f32 %v3732, %v3734
        %3845 = vadd.xlane.f32.xlu0 %v3844
        %v3846 = vpop.xlane.xlu0 %3845
        %v3847 = vadd.f32 %v3736, %v3738
        %3848 = vadd.xlane.f32.xlu0 %v3847
        %v3849 = vpop.xlane.xlu0 %3848
        %v3850 = vadd.f32 %v3740, %v3742
        %3851 = vadd.xlane.f32.xlu0 %v3850
        %v3852 = vpop.xlane.xlu0 %3851
        %v3853 = vadd.f32 %v3744, %v3746
        %3854 = vadd.xlane.f32.xlu0 %v3853
        %v3855 = vpop.xlane.xlu0 %3854
        %v3856 = vadd.f32 %v3748, %v3750
        %3857 = vadd.xlane.f32.xlu0 %v3856
        %v3858 = vpop.xlane.xlu0 %3857
        %v3859 = vadd.f32 %v3752, %v3754
        %3860 = vadd.xlane.f32.xlu0 %v3859
        %v3861 = vpop.xlane.xlu0 %3860
        %v3862 = vadd.f32 %v3756, %v3758
        %3863 = vadd.xlane.f32.xlu0 %v3862
        %v3864 = vpop.xlane.xlu0 %3863
        %v3865 = vadd.f32 %v3760, %v3762
        %3866 = vadd.xlane.f32.xlu0 %v3865
        %v3867 = vpop.xlane.xlu0 %3866
        %v3868 = vadd.f32 %v3764, %v3766
        %3869 = vadd.xlane.f32.xlu0 %v3868
        %v3870 = vpop.xlane.xlu0 %3869
        %v3871 = vadd.f32 %v3768, %v3770
        %3872 = vadd.xlane.f32.xlu0 %v3871
        %v3873 = vpop.xlane.xlu0 %3872
        %v3874 = vadd.f32 %v3772, %v3774
        %3875 = vadd.xlane.f32.xlu0 %v3874
        %v3876 = vpop.xlane.xlu0 %3875
        %v3877 = vadd.f32 %v3776, %v3778
        %3878 = vadd.xlane.f32.xlu0 %v3877
        %v3879 = vpop.xlane.xlu0 %3878
        %v3880 = vadd.f32 %v3780, %v3782
        %3881 = vadd.xlane.f32.xlu0 %v3880
        %v3882 = vpop.xlane.xlu0 %3881
        %v3883 = vadd.f32 %v3784, %v3786
        %3884 = vadd.xlane.f32.xlu0 %v3883
        %v3885 = vpop.xlane.xlu0 %3884
        %v3886 = vadd.f32 %v3788, %v3790
        %3887 = vadd.xlane.f32.xlu0 %v3886
        %v3888 = vpop.xlane.xlu0 %3887
        %v3889 = vadd.f32 %v3792, %v3794
        %3890 = vadd.xlane.f32.xlu0 %v3889
        %v3891 = vpop.xlane.xlu0 %3890
        %v3892 = vadd.f32 %v3796, %v3798
        %3893 = vadd.xlane.f32.xlu0 %v3892
        %v3894 = vpop.xlane.xlu0 %3893
        %3895 = vmatprep.subr.mxu0 0.0
        %3896 = vmatpush1.msra.mxu0 %v2979
        %3897 = vmatprep.subr.mxu0 0.0
        %3898 = vmatpush1.msra.mxu0 %v2974
        %3899 = vmatprep.subr.mxu0 0.0
        %3900 = vmatpush1.msra.mxu0 %v2969
        %3901 = vmatprep.subr.mxu0 0.0
        %3902 = vmatpush1.msra.mxu0 %v2964
        %3903 = vmatprep.subr.mxu0 0.0
        %3904 = vmatpush1.msra.mxu0 %v2959
        %3905 = vmatprep.subr.mxu0 0.0
        %3906 = vmatpush1.msra.mxu0 %v2954
        %3907 = vmatprep.subr.mxu0 0.0
        %3908 = vmatpush1.msra.mxu0 %v2949
        %3909 = vmatprep.subr.mxu0 0.0
        %3910 = vmatpush1.msra.mxu0 %v2944
        %3911 = vmatprep.subr.mxu0 0.0
        %3912 = vmatpush1.msra.mxu0 %v2939
        %3913 = vmatprep.subr.mxu0 0.0
        %3914 = vmatpush1.msra.mxu0 %v2934
        %3915 = vmatprep.subr.mxu0 0.0
        %3916 = vmatpush1.msra.mxu0 %v2929
        %3917 = vmatprep.subr.mxu0 0.0
        %3918 = vmatpush1.msra.mxu0 %v2924
        %3919 = vmatprep.subr.mxu0 0.0
        %3920 = vmatpush1.msra.mxu0 %v2919
        %3921 = vmatprep.subr.mxu0 0.0
        %3922 = vmatpush1.msra.mxu0 %v2914
        %3923 = vmatprep.subr.mxu0 0.0
        %3924 = vmatpush1.msra.mxu0 %v2909
        %3925 = vmatprep.subr.mxu0 0.0
        %3926 = vmatpush1.msra.mxu0 %v2904
        %3927 = vmatprep.subr.mxu0 0.0
        %3928 = vmatpush2.msra.mxu0 %v3059
        %3929 = vmatprep.subr.mxu0 0.0
        %3930 = vmatpush2.msra.mxu0 %v3054
        %3931 = vmatprep.subr.mxu0 0.0
        %3932 = vmatpush2.msra.mxu0 %v3049
        %3933 = vmatprep.subr.mxu0 0.0
        %3934 = vmatpush2.msra.mxu0 %v3044
        %3935 = vmatprep.subr.mxu0 0.0
        %3936 = vmatpush2.msra.mxu0 %v3039
        %3937 = vmatprep.subr.mxu0 0.0
        %3938 = vmatpush2.msra.mxu0 %v3034
        %3939 = vmatprep.subr.mxu0 0.0
        %3940 = vmatpush2.msra.mxu0 %v3029
        %3941 = vmatprep.subr.mxu0 0.0
        %3942 = vmatpush2.msra.mxu0 %v3024
        %3943 = vmatprep.subr.mxu0 0.0
        %3944 = vmatpush2.msra.mxu0 %v3019
        %3945 = vmatprep.subr.mxu0 0.0
        %3946 = vmatpush2.msra.mxu0 %v3014
        %3947 = vmatprep.subr.mxu0 0.0
        %3948 = vmatpush2.msra.mxu0 %v3009
        %3949 = vmatprep.subr.mxu0 0.0
        %3950 = vmatpush2.msra.mxu0 %v3004
        %3951 = vmatprep.subr.mxu0 0.0
        %3952 = vmatpush2.msra.mxu0 %v2999
        %3953 = vmatprep.subr.mxu0 0.0
        %3954 = vmatpush2.msra.mxu0 %v2994
        %3955 = vmatprep.subr.mxu0 0.0
        %3956 = vmatpush2.msra.mxu0 %v2989
        %3957 = vmatprep.subr.mxu0 0.0
        %3958 = vmatpush2.msra.mxu0 %v2984
        %3959 = vmatprep.mubr.f32.mxu0 %v3674
        %3960 = vmatmul.mubr.f32.gmra.mxu0 %v3672
        %v3961 = vpop.f32.mrf.mxu0
        %v3962 = vadd.f32 0.0, %v3961
        %v3963 = vpop.f32.mrf.mxu0
        %3964 = vmatprep.mubr.f32.mxu0 %v3678
        %3965 = vmatmul.mubr.f32.gmra.mxu0 %v3676
        %v3966 = vpop.f32.mrf.mxu0
        %v3967 = vadd.f32 0.0, %v3966
        %v3968 = vpop.f32.mrf.mxu0
        %3969 = vmatprep.mubr.f32.mxu0 %v3682
        %3970 = vmatmul.mubr.f32.gmra.mxu0 %v3680
        %v3971 = vpop.f32.mrf.mxu0
        %v3972 = vadd.f32 0.0, %v3971
        %v3973 = vpop.f32.mrf.mxu0
        %3974 = vmatprep.mubr.f32.mxu0 %v3686
        %3975 = vmatmul.mubr.f32.gmra.mxu0 %v3684
        %v3976 = vpop.f32.mrf.mxu0
        %v3977 = vadd.f32 0.0, %v3976
        %v3978 = vpop.f32.mrf.mxu0
        %3979 = vmatprep.mubr.f32.mxu0 %v3690
        %3980 = vmatmul.mubr.f32.gmra.mxu0 %v3688
        %v3981 = vpop.f32.mrf.mxu0
        %v3982 = vadd.f32 0.0, %v3981
        %v3983 = vpop.f32.mrf.mxu0
        %3984 = vmatprep.mubr.f32.mxu0 %v3694
        %3985 = vmatmul.mubr.f32.gmra.mxu0 %v3692
        %v3986 = vpop.f32.mrf.mxu0
        %v3987 = vadd.f32 0.0, %v3986
        %v3988 = vpop.f32.mrf.mxu0
        %3989 = vmatprep.mubr.f32.mxu0 %v3698
        %3990 = vmatmul.mubr.f32.gmra.mxu0 %v3696
        %v3991 = vpop.f32.mrf.mxu0
        %v3992 = vadd.f32 0.0, %v3991
        %v3993 = vpop.f32.mrf.mxu0
        %3994 = vmatprep.mubr.f32.mxu0 %v3702
        %3995 = vmatmul.mubr.f32.gmra.mxu0 %v3700
        %v3996 = vpop.f32.mrf.mxu0
        %v3997 = vadd.f32 0.0, %v3996
        %v3998 = vpop.f32.mrf.mxu0
        %3999 = vmatprep.mubr.f32.mxu0 %v3706
        %4000 = vmatmul.mubr.f32.gmra.mxu0 %v3704
        %v4001 = vpop.f32.mrf.mxu0
        %v4002 = vadd.f32 0.0, %v4001
        %v4003 = vpop.f32.mrf.mxu0
        %4004 = vmatprep.mubr.f32.mxu0 %v3710
        %4005 = vmatmul.mubr.f32.gmra.mxu0 %v3708
        %v4006 = vpop.f32.mrf.mxu0
        %v4007 = vadd.f32 0.0, %v4006
        %v4008 = vpop.f32.mrf.mxu0
        %4009 = vmatprep.mubr.f32.mxu0 %v3714
        %4010 = vmatmul.mubr.f32.gmra.mxu0 %v3712
        %v4011 = vpop.f32.mrf.mxu0
        %v4012 = vadd.f32 0.0, %v4011
        %v4013 = vpop.f32.mrf.mxu0
        %4014 = vmatprep.mubr.f32.mxu0 %v3718
        %4015 = vmatmul.mubr.f32.gmra.mxu0 %v3716
        %v4016 = vpop.f32.mrf.mxu0
        %v4017 = vadd.f32 0.0, %v4016
        %v4018 = vpop.f32.mrf.mxu0
        %4019 = vmatprep.mubr.f32.mxu0 %v3722
        %4020 = vmatmul.mubr.f32.gmra.mxu0 %v3720
        %v4021 = vpop.f32.mrf.mxu0
        %v4022 = vadd.f32 0.0, %v4021
        %v4023 = vpop.f32.mrf.mxu0
        %4024 = vmatprep.mubr.f32.mxu0 %v3726
        %4025 = vmatmul.mubr.f32.gmra.mxu0 %v3724
        %v4026 = vpop.f32.mrf.mxu0
        %v4027 = vadd.f32 0.0, %v4026
        %v4028 = vpop.f32.mrf.mxu0
        %4029 = vmatprep.mubr.f32.mxu0 %v3730
        %4030 = vmatmul.mubr.f32.gmra.mxu0 %v3728
        %v4031 = vpop.f32.mrf.mxu0
        %v4032 = vadd.f32 0.0, %v4031
        %v4033 = vpop.f32.mrf.mxu0
        %4034 = vmatprep.mubr.f32.mxu0 %v3734
        %4035 = vmatmul.mubr.f32.gmra.mxu0 %v3732
        %v4036 = vpop.f32.mrf.mxu0
        %v4037 = vadd.f32 0.0, %v4036
        %v4038 = vpop.f32.mrf.mxu0
        %4039 = vmatprep.mubr.f32.mxu0 %v3738
        %4040 = vmatmul.mubr.f32.gmra.mxu0 %v3736
        %v4041 = vpop.f32.mrf.mxu0
        %v4042 = vadd.f32 0.0, %v4041
        %v4043 = vpop.f32.mrf.mxu0
        %4044 = vmatprep.mubr.f32.mxu0 %v3742
        %4045 = vmatmul.mubr.f32.gmra.mxu0 %v3740
        %v4046 = vpop.f32.mrf.mxu0
        %v4047 = vadd.f32 0.0, %v4046
        %v4048 = vpop.f32.mrf.mxu0
        %4049 = vmatprep.mubr.f32.mxu0 %v3746
        %4050 = vmatmul.mubr.f32.gmra.mxu0 %v3744
        %v4051 = vpop.f32.mrf.mxu0
        %v4052 = vadd.f32 0.0, %v4051
        %v4053 = vpop.f32.mrf.mxu0
        %4054 = vmatprep.mubr.f32.mxu0 %v3750
        %4055 = vmatmul.mubr.f32.gmra.mxu0 %v3748
        %v4056 = vpop.f32.mrf.mxu0
        %v4057 = vadd.f32 0.0, %v4056
        %v4058 = vpop.f32.mrf.mxu0
        %4059 = vmatprep.mubr.f32.mxu0 %v3754
        %4060 = vmatmul.mubr.f32.gmra.mxu0 %v3752
        %v4061 = vpop.f32.mrf.mxu0
        %v4062 = vadd.f32 0.0, %v4061
        %v4063 = vpop.f32.mrf.mxu0
        %4064 = vmatprep.mubr.f32.mxu0 %v3758
        %4065 = vmatmul.mubr.f32.gmra.mxu0 %v3756
        %v4066 = vpop.f32.mrf.mxu0
        %v4067 = vadd.f32 0.0, %v4066
        %v4068 = vpop.f32.mrf.mxu0
        %4069 = vmatprep.mubr.f32.mxu0 %v3762
        %4070 = vmatmul.mubr.f32.gmra.mxu0 %v3760
        %v4071 = vpop.f32.mrf.mxu0
        %v4072 = vadd.f32 0.0, %v4071
        %v4073 = vpop.f32.mrf.mxu0
        %4074 = vmatprep.mubr.f32.mxu0 %v3766
        %4075 = vmatmul.mubr.f32.gmra.mxu0 %v3764
        %v4076 = vpop.f32.mrf.mxu0
        %v4077 = vadd.f32 0.0, %v4076
        %v4078 = vpop.f32.mrf.mxu0
        %4079 = vmatprep.mubr.f32.mxu0 %v3770
        %4080 = vmatmul.mubr.f32.gmra.mxu0 %v3768
        %v4081 = vpop.f32.mrf.mxu0
        %v4082 = vadd.f32 0.0, %v4081
        %v4083 = vpop.f32.mrf.mxu0
        %4084 = vmatprep.mubr.f32.mxu0 %v3774
        %4085 = vmatmul.mubr.f32.gmra.mxu0 %v3772
        %v4086 = vpop.f32.mrf.mxu0
        %v4087 = vadd.f32 0.0, %v4086
        %v4088 = vpop.f32.mrf.mxu0
        %4089 = vmatprep.mubr.f32.mxu0 %v3778
        %4090 = vmatmul.mubr.f32.gmra.mxu0 %v3776
        %v4091 = vpop.f32.mrf.mxu0
        %v4092 = vadd.f32 0.0, %v4091
        %v4093 = vpop.f32.mrf.mxu0
        %4094 = vmatprep.mubr.f32.mxu0 %v3782
        %4095 = vmatmul.mubr.f32.gmra.mxu0 %v3780
        %v4096 = vpop.f32.mrf.mxu0
        %v4097 = vadd.f32 0.0, %v4096
        %v4098 = vpop.f32.mrf.mxu0
        %4099 = vmatprep.mubr.f32.mxu0 %v3786
        %4100 = vmatmul.mubr.f32.gmra.mxu0 %v3784
        %v4101 = vpop.f32.mrf.mxu0
        %v4102 = vadd.f32 0.0, %v4101
        %v4103 = vpop.f32.mrf.mxu0
        %4104 = vmatprep.mubr.f32.mxu0 %v3790
        %4105 = vmatmul.mubr.f32.gmra.mxu0 %v3788
        %v4106 = vpop.f32.mrf.mxu0
        %v4107 = vadd.f32 0.0, %v4106
        %v4108 = vpop.f32.mrf.mxu0
        %4109 = vmatprep.mubr.f32.mxu0 %v3794
        %4110 = vmatmul.mubr.f32.gmra.mxu0 %v3792
        %v4111 = vpop.f32.mrf.mxu0
        %v4112 = vadd.f32 0.0, %v4111
        %v4113 = vpop.f32.mrf.mxu0
        %4114 = vmatprep.mubr.f32.mxu0 %v3798
        %4115 = vmatmul.mubr.f32.gmra.mxu0 %v3796
        %v4116 = vpop.f32.mrf.mxu0
        %v4117 = vadd.f32 0.0, %v4116
        %v4118 = vpop.f32.mrf.mxu0
        %4119 = vdwg.mxu0
        %v4120 = vrcp.pop %v3801
        %v4121 = vrcp.pop %v3804
        %v4122 = vrcp.pop %v3807
        %v4123 = vrcp.pop %v3810
        %v4124 = vrcp.pop %v3813
        %v4125 = vrcp.pop %v3816
        %v4126 = vrcp.pop %v3819
        %v4127 = vrcp.pop %v3822
        %v4128 = vrcp.pop %v3825
        %v4129 = vrcp.pop %v3828
        %v4130 = vrcp.pop %v3831
        %v4131 = vrcp.pop %v3834
        %v4132 = vrcp.pop %v3837
        %v4133 = vrcp.pop %v3840
        %v4134 = vrcp.pop %v3843
        %v4135 = vrcp.pop %v3846
        %v4136 = vrcp.pop %v3849
        %v4137 = vrcp.pop %v3852
        %v4138 = vrcp.pop %v3855
        %v4139 = vrcp.pop %v3858
        %v4140 = vrcp.pop %v3861
        %v4141 = vrcp.pop %v3864
        %v4142 = vrcp.pop %v3867
        %v4143 = vrcp.pop %v3870
        %v4144 = vrcp.pop %v3873
        %v4145 = vrcp.pop %v3876
        %v4146 = vrcp.pop %v3879
        %v4147 = vrcp.pop %v3882
        %v4148 = vrcp.pop %v3885
        %v4149 = vrcp.pop %v3888
        %v4150 = vrcp.pop %v3891
        %v4151 = vrcp.pop %v3894
        %v4152 = vmul.f32 %v3962, %v4120
        %v4153 = vmul.f32 %v3967, %v4121
        %v4154 = vmul.f32 %v3972, %v4122
        %v4155 = vmul.f32 %v3977, %v4123
        %v4156 = vmul.f32 %v3982, %v4124
        %v4157 = vmul.f32 %v3987, %v4125
        %v4158 = vmul.f32 %v3992, %v4126
        %v4159 = vmul.f32 %v3997, %v4127
        %v4160 = vmul.f32 %v4002, %v4128
        %v4161 = vmul.f32 %v4007, %v4129
        %v4162 = vmul.f32 %v4012, %v4130
        %v4163 = vmul.f32 %v4017, %v4131
        %v4164 = vmul.f32 %v4022, %v4132
        %v4165 = vmul.f32 %v4027, %v4133
        %v4166 = vmul.f32 %v4032, %v4134
        %v4167 = vmul.f32 %v4037, %v4135
        %v4168 = vmul.f32 %v4042, %v4136
        %v4169 = vmul.f32 %v4047, %v4137
        %v4170 = vmul.f32 %v4052, %v4138
        %v4171 = vmul.f32 %v4057, %v4139
        %v4172 = vmul.f32 %v4062, %v4140
        %v4173 = vmul.f32 %v4067, %v4141
        %v4174 = vmul.f32 %v4072, %v4142
        %v4175 = vmul.f32 %v4077, %v4143
        %v4176 = vmul.f32 %v4082, %v4144
        %v4177 = vmul.f32 %v4087, %v4145
        %v4178 = vmul.f32 %v4092, %v4146
        %v4179 = vmul.f32 %v4097, %v4147
        %v4180 = vmul.f32 %v4102, %v4148
        %v4181 = vmul.f32 %v4107, %v4149
        %v4182 = vmul.f32 %v4112, %v4150
        %v4183 = vmul.f32 %v4117, %v4151
        %s4184 = scalar_lea.vmem %s4, 128
        %v4185 = vld [vmem:[%s4184] sm:$0xff]
        %v4186 = vld [vmem:[%s4184 + $0x8] sm:$0xff]
        %v4187 = vld [vmem:[%s4184 + $0x10] sm:$0xff]
        %v4188 = vld [vmem:[%s4184 + $0x18] sm:$0xff]
        %v4189 = vld [vmem:[%s4184 + $0x20] sm:$0xff]
        %v4190 = vld [vmem:[%s4184 + $0x28] sm:$0xff]
        %v4191 = vld [vmem:[%s4184 + $0x30] sm:$0xff]
        %v4192 = vld [vmem:[%s4184 + $0x38] sm:$0xff]
        %v4193 = vld [vmem:[%s4184 + $0x40] sm:$0xff]
        %v4194 = vld [vmem:[%s4184 + $0x48] sm:$0xff]
        %v4195 = vld [vmem:[%s4184 + $0x50] sm:$0xff]
        %v4196 = vld [vmem:[%s4184 + $0x58] sm:$0xff]
        %v4197 = vld [vmem:[%s4184 + $0x60] sm:$0xff]
        %v4198 = vld [vmem:[%s4184 + $0x68] sm:$0xff]
        %v4199 = vld [vmem:[%s4184 + $0x70] sm:$0xff]
        %v4200 = vld [vmem:[%s4184 + $0x78] sm:$0xff]
        %v4202 = vsel %vm1117, %v4152, 0
        %v4205 = vsel %vm1117, %v4153, 0
        %v4208 = vsel %vm1117, %v4154, 0
        %v4211 = vsel %vm1117, %v4155, 0
        %v4214 = vsel %vm1117, %v4156, 0
        %v4217 = vsel %vm1117, %v4157, 0
        %v4220 = vsel %vm1117, %v4158, 0
        %v4223 = vsel %vm1117, %v4159, 0
        %v4226 = vsel %vm1117, %v4160, 0
        %v4229 = vsel %vm1117, %v4161, 0
        %v4232 = vsel %vm1117, %v4162, 0
        %v4235 = vsel %vm1117, %v4163, 0
        %v4238 = vsel %vm1117, %v4164, 0
        %v4241 = vsel %vm1117, %v4165, 0
        %v4244 = vsel %vm1117, %v4166, 0
        %v4247 = vsel %vm1117, %v4167, 0
        %v4250 = vsel %vm1117, %v4168, 0
        %v4253 = vsel %vm1117, %v4169, 0
        %v4256 = vsel %vm1117, %v4170, 0
        %v4259 = vsel %vm1117, %v4171, 0
        %v4262 = vsel %vm1117, %v4172, 0
        %v4265 = vsel %vm1117, %v4173, 0
        %v4268 = vsel %vm1117, %v4174, 0
        %v4271 = vsel %vm1117, %v4175, 0
        %v4274 = vsel %vm1117, %v4176, 0
        %v4277 = vsel %vm1117, %v4177, 0
        %v4280 = vsel %vm1117, %v4178, 0
        %v4283 = vsel %vm1117, %v4179, 0
        %v4286 = vsel %vm1117, %v4180, 0
        %v4289 = vsel %vm1117, %v4181, 0
        %v4292 = vsel %vm1117, %v4182, 0
        %v4295 = vsel %vm1117, %v4183, 0
        %4297 = vmatprep.subr.mxu0 0.0
        %4298 = vmatpush1.msra.mxu0 0.0
        %4299 = vmatprep.subr.mxu0 0.0
        %4300 = vmatpush1.msra.mxu0 0.0
        %4301 = vmatprep.subr.mxu0 0.0
        %4302 = vmatpush1.msra.mxu0 0.0
        %4303 = vmatprep.subr.mxu0 0.0
        %4304 = vmatpush1.msra.mxu0 0.0
        %4305 = vmatprep.subr.mxu0 0.0
        %4306 = vmatpush1.msra.mxu0 0.0
        %4307 = vmatprep.subr.mxu0 0.0
        %4308 = vmatpush1.msra.mxu0 0.0
        %4309 = vmatprep.subr.mxu0 0.0
        %4310 = vmatpush1.msra.mxu0 0.0
        %4311 = vmatprep.subr.mxu0 0.0
        %4312 = vmatpush1.msra.mxu0 0.0
        %4313 = vmatprep.subr.mxu0 %v4200
        %4314 = vmatpush1.msra.mxu0 %v4199
        %4315 = vmatprep.subr.mxu0 %v4198
        %4316 = vmatpush1.msra.mxu0 %v4197
        %4317 = vmatprep.subr.mxu0 %v4196
        %4318 = vmatpush1.msra.mxu0 %v4195
        %4319 = vmatprep.subr.mxu0 %v4194
        %4320 = vmatpush1.msra.mxu0 %v4193
        %4321 = vmatprep.subr.mxu0 %v4192
        %4322 = vmatpush1.msra.mxu0 %v4191
        %4323 = vmatprep.subr.mxu0 %v4190
        %4324 = vmatpush1.msra.mxu0 %v4189
        %4325 = vmatprep.subr.mxu0 %v4188
        %4326 = vmatpush1.msra.mxu0 %v4187
        %4327 = vmatprep.subr.mxu0 %v4186
        %4328 = vmatpush1.msra.mxu0 %v4185
        %4329 = vmatprep.subr.mxu0 0.0
        %4330 = vmatpush2.msra.mxu0 0.0
        %4331 = vmatprep.subr.mxu0 0.0
        %4332 = vmatpush2.msra.mxu0 0.0
        %4333 = vmatprep.subr.mxu0 0.0
        %4334 = vmatpush2.msra.mxu0 0.0
        %4335 = vmatprep.subr.mxu0 0.0
        %4336 = vmatpush2.msra.mxu0 0.0
        %4337 = vmatprep.subr.mxu0 0.0
        %4338 = vmatpush2.msra.mxu0 0.0
        %4339 = vmatprep.subr.mxu0 0.0
        %4340 = vmatpush2.msra.mxu0 0.0
        %4341 = vmatprep.subr.mxu0 0.0
        %4342 = vmatpush2.msra.mxu0 0.0
        %4343 = vmatprep.subr.mxu0 0.0
        %4344 = vmatpush2.msra.mxu0 0.0
        %4345 = vmatprep.subr.mxu0 0.0
        %4346 = vmatpush2.msra.mxu0 0.0
        %4347 = vmatprep.subr.mxu0 0.0
        %4348 = vmatpush2.msra.mxu0 0.0
        %4349 = vmatprep.subr.mxu0 0.0
        %4350 = vmatpush2.msra.mxu0 0.0
        %4351 = vmatprep.subr.mxu0 0.0
        %4352 = vmatpush2.msra.mxu0 0.0
        %4353 = vmatprep.subr.mxu0 0.0
        %4354 = vmatpush2.msra.mxu0 0.0
        %4355 = vmatprep.subr.mxu0 0.0
        %4356 = vmatpush2.msra.mxu0 0.0
        %4357 = vmatprep.subr.mxu0 0.0
        %4358 = vmatpush2.msra.mxu0 0.0
        %4359 = vmatprep.subr.mxu0 0.0
        %4360 = vmatpush2.msra.mxu0 0.0
        %4361 = vmatprep.mubr.f32.mxu0 0.0
        %4362 = vmatmul.mubr.f32.gmra.mxu0 %v4202
        %v4363 = vpop.f32.mrf.mxu0
        %v4364 = vadd.f32 0.0, %v4363
        %v4365 = vpop.f32.mrf.mxu0
        %v4366 = vadd.f32 0.0, %v4365
        %4367 = vmatprep.mubr.f32.mxu0 0.0
        %4368 = vmatmul.mubr.f32.gmra.mxu0 %v4205
        %v4369 = vpop.f32.mrf.mxu0
        %v4370 = vadd.f32 0.0, %v4369
        %v4371 = vpop.f32.mrf.mxu0
        %v4372 = vadd.f32 0.0, %v4371
        %4373 = vmatprep.mubr.f32.mxu0 0.0
        %4374 = vmatmul.mubr.f32.gmra.mxu0 %v4208
        %v4375 = vpop.f32.mrf.mxu0
        %v4376 = vadd.f32 0.0, %v4375
        %v4377 = vpop.f32.mrf.mxu0
        %v4378 = vadd.f32 0.0, %v4377
        %4379 = vmatprep.mubr.f32.mxu0 0.0
        %4380 = vmatmul.mubr.f32.gmra.mxu0 %v4211
        %v4381 = vpop.f32.mrf.mxu0
        %v4382 = vadd.f32 0.0, %v4381
        %v4383 = vpop.f32.mrf.mxu0
        %v4384 = vadd.f32 0.0, %v4383
        %4385 = vmatprep.mubr.f32.mxu0 0.0
        %4386 = vmatmul.mubr.f32.gmra.mxu0 %v4214
        %v4387 = vpop.f32.mrf.mxu0
        %v4388 = vadd.f32 0.0, %v4387
        %v4389 = vpop.f32.mrf.mxu0
        %v4390 = vadd.f32 0.0, %v4389
        %4391 = vmatprep.mubr.f32.mxu0 0.0
        %4392 = vmatmul.mubr.f32.gmra.mxu0 %v4217
        %v4393 = vpop.f32.mrf.mxu0
        %v4394 = vadd.f32 0.0, %v4393
        %v4395 = vpop.f32.mrf.mxu0
        %v4396 = vadd.f32 0.0, %v4395
        %4397 = vmatprep.mubr.f32.mxu0 0.0
        %4398 = vmatmul.mubr.f32.gmra.mxu0 %v4220
        %v4399 = vpop.f32.mrf.mxu0
        %v4400 = vadd.f32 0.0, %v4399
        %v4401 = vpop.f32.mrf.mxu0
        %v4402 = vadd.f32 0.0, %v4401
        %4403 = vmatprep.mubr.f32.mxu0 0.0
        %4404 = vmatmul.mubr.f32.gmra.mxu0 %v4223
        %v4405 = vpop.f32.mrf.mxu0
        %v4406 = vadd.f32 0.0, %v4405
        %v4407 = vpop.f32.mrf.mxu0
        %v4408 = vadd.f32 0.0, %v4407
        %4409 = vmatprep.mubr.f32.mxu0 0.0
        %4410 = vmatmul.mubr.f32.gmra.mxu0 %v4226
        %v4411 = vpop.f32.mrf.mxu0
        %v4412 = vadd.f32 0.0, %v4411
        %v4413 = vpop.f32.mrf.mxu0
        %v4414 = vadd.f32 0.0, %v4413
        %4415 = vmatprep.mubr.f32.mxu0 0.0
        %4416 = vmatmul.mubr.f32.gmra.mxu0 %v4229
        %v4417 = vpop.f32.mrf.mxu0
        %v4418 = vadd.f32 0.0, %v4417
        %v4419 = vpop.f32.mrf.mxu0
        %v4420 = vadd.f32 0.0, %v4419
        %4421 = vmatprep.mubr.f32.mxu0 0.0
        %4422 = vmatmul.mubr.f32.gmra.mxu0 %v4232
        %v4423 = vpop.f32.mrf.mxu0
        %v4424 = vadd.f32 0.0, %v4423
        %v4425 = vpop.f32.mrf.mxu0
        %v4426 = vadd.f32 0.0, %v4425
        %4427 = vmatprep.mubr.f32.mxu0 0.0
        %4428 = vmatmul.mubr.f32.gmra.mxu0 %v4235
        %v4429 = vpop.f32.mrf.mxu0
        %v4430 = vadd.f32 0.0, %v4429
        %v4431 = vpop.f32.mrf.mxu0
        %v4432 = vadd.f32 0.0, %v4431
        %4433 = vmatprep.mubr.f32.mxu0 0.0
        %4434 = vmatmul.mubr.f32.gmra.mxu0 %v4238
        %v4435 = vpop.f32.mrf.mxu0
        %v4436 = vadd.f32 0.0, %v4435
        %v4437 = vpop.f32.mrf.mxu0
        %v4438 = vadd.f32 0.0, %v4437
        %4439 = vmatprep.mubr.f32.mxu0 0.0
        %4440 = vmatmul.mubr.f32.gmra.mxu0 %v4241
        %v4441 = vpop.f32.mrf.mxu0
        %v4442 = vadd.f32 0.0, %v4441
        %v4443 = vpop.f32.mrf.mxu0
        %v4444 = vadd.f32 0.0, %v4443
        %4445 = vmatprep.mubr.f32.mxu0 0.0
        %4446 = vmatmul.mubr.f32.gmra.mxu0 %v4244
        %v4447 = vpop.f32.mrf.mxu0
        %v4448 = vadd.f32 0.0, %v4447
        %v4449 = vpop.f32.mrf.mxu0
        %v4450 = vadd.f32 0.0, %v4449
        %4451 = vmatprep.mubr.f32.mxu0 0.0
        %4452 = vmatmul.mubr.f32.gmra.mxu0 %v4247
        %v4453 = vpop.f32.mrf.mxu0
        %v4454 = vadd.f32 0.0, %v4453
        %v4455 = vpop.f32.mrf.mxu0
        %v4456 = vadd.f32 0.0, %v4455
        %4457 = vmatprep.mubr.f32.mxu0 0.0
        %4458 = vmatmul.mubr.f32.gmra.mxu0 %v4250
        %v4459 = vpop.f32.mrf.mxu0
        %v4460 = vadd.f32 0.0, %v4459
        %v4461 = vpop.f32.mrf.mxu0
        %v4462 = vadd.f32 0.0, %v4461
        %4463 = vmatprep.mubr.f32.mxu0 0.0
        %4464 = vmatmul.mubr.f32.gmra.mxu0 %v4253
        %v4465 = vpop.f32.mrf.mxu0
        %v4466 = vadd.f32 0.0, %v4465
        %v4467 = vpop.f32.mrf.mxu0
        %v4468 = vadd.f32 0.0, %v4467
        %4469 = vmatprep.mubr.f32.mxu0 0.0
        %4470 = vmatmul.mubr.f32.gmra.mxu0 %v4256
        %v4471 = vpop.f32.mrf.mxu0
        %v4472 = vadd.f32 0.0, %v4471
        %v4473 = vpop.f32.mrf.mxu0
        %v4474 = vadd.f32 0.0, %v4473
        %4475 = vmatprep.mubr.f32.mxu0 0.0
        %4476 = vmatmul.mubr.f32.gmra.mxu0 %v4259
        %v4477 = vpop.f32.mrf.mxu0
        %v4478 = vadd.f32 0.0, %v4477
        %v4479 = vpop.f32.mrf.mxu0
        %v4480 = vadd.f32 0.0, %v4479
        %4481 = vmatprep.mubr.f32.mxu0 0.0
        %4482 = vmatmul.mubr.f32.gmra.mxu0 %v4262
        %v4483 = vpop.f32.mrf.mxu0
        %v4484 = vadd.f32 0.0, %v4483
        %v4485 = vpop.f32.mrf.mxu0
        %v4486 = vadd.f32 0.0, %v4485
        %4487 = vmatprep.mubr.f32.mxu0 0.0
        %4488 = vmatmul.mubr.f32.gmra.mxu0 %v4265
        %v4489 = vpop.f32.mrf.mxu0
        %v4490 = vadd.f32 0.0, %v4489
        %v4491 = vpop.f32.mrf.mxu0
        %v4492 = vadd.f32 0.0, %v4491
        %4493 = vmatprep.mubr.f32.mxu0 0.0
        %4494 = vmatmul.mubr.f32.gmra.mxu0 %v4268
        %v4495 = vpop.f32.mrf.mxu0
        %v4496 = vadd.f32 0.0, %v4495
        %v4497 = vpop.f32.mrf.mxu0
        %v4498 = vadd.f32 0.0, %v4497
        %4499 = vmatprep.mubr.f32.mxu0 0.0
        %4500 = vmatmul.mubr.f32.gmra.mxu0 %v4271
        %v4501 = vpop.f32.mrf.mxu0
        %v4502 = vadd.f32 0.0, %v4501
        %v4503 = vpop.f32.mrf.mxu0
        %v4504 = vadd.f32 0.0, %v4503
        %4505 = vmatprep.mubr.f32.mxu0 0.0
        %4506 = vmatmul.mubr.f32.gmra.mxu0 %v4274
        %v4507 = vpop.f32.mrf.mxu0
        %v4508 = vadd.f32 0.0, %v4507
        %v4509 = vpop.f32.mrf.mxu0
        %v4510 = vadd.f32 0.0, %v4509
        %4511 = vmatprep.mubr.f32.mxu0 0.0
        %4512 = vmatmul.mubr.f32.gmra.mxu0 %v4277
        %v4513 = vpop.f32.mrf.mxu0
        %v4514 = vadd.f32 0.0, %v4513
        %v4515 = vpop.f32.mrf.mxu0
        %v4516 = vadd.f32 0.0, %v4515
        %4517 = vmatprep.mubr.f32.mxu0 0.0
        %4518 = vmatmul.mubr.f32.gmra.mxu0 %v4280
        %v4519 = vpop.f32.mrf.mxu0
        %v4520 = vadd.f32 0.0, %v4519
        %v4521 = vpop.f32.mrf.mxu0
        %v4522 = vadd.f32 0.0, %v4521
        %4523 = vmatprep.mubr.f32.mxu0 0.0
        %4524 = vmatmul.mubr.f32.gmra.mxu0 %v4283
        %v4525 = vpop.f32.mrf.mxu0
        %v4526 = vadd.f32 0.0, %v4525
        %v4527 = vpop.f32.mrf.mxu0
        %v4528 = vadd.f32 0.0, %v4527
        %4529 = vmatprep.mubr.f32.mxu0 0.0
        %4530 = vmatmul.mubr.f32.gmra.mxu0 %v4286
        %v4531 = vpop.f32.mrf.mxu0
        %v4532 = vadd.f32 0.0, %v4531
        %v4533 = vpop.f32.mrf.mxu0
        %v4534 = vadd.f32 0.0, %v4533
        %4535 = vmatprep.mubr.f32.mxu0 0.0
        %4536 = vmatmul.mubr.f32.gmra.mxu0 %v4289
        %v4537 = vpop.f32.mrf.mxu0
        %v4538 = vadd.f32 0.0, %v4537
        %v4539 = vpop.f32.mrf.mxu0
        %v4540 = vadd.f32 0.0, %v4539
        %4541 = vmatprep.mubr.f32.mxu0 0.0
        %4542 = vmatmul.mubr.f32.gmra.mxu0 %v4292
        %v4543 = vpop.f32.mrf.mxu0
        %v4544 = vadd.f32 0.0, %v4543
        %v4545 = vpop.f32.mrf.mxu0
        %v4546 = vadd.f32 0.0, %v4545
        %4547 = vmatprep.mubr.f32.mxu0 0.0
        %4548 = vmatmul.mubr.f32.gmra.mxu0 %v4295
        %v4549 = vpop.f32.mrf.mxu0
        %v4550 = vadd.f32 0.0, %v4549
        %v4551 = vpop.f32.mrf.mxu0
        %v4552 = vadd.f32 0.0, %v4551
        %4553 = vdwg.mxu0
        %v4555 = vsel %vm1117, %v2208, 0
        %v4558 = vsel %vm1117, %v2209, 0
        %v4561 = vsel %vm1117, %v2210, 0
        %v4564 = vsel %vm1117, %v2211, 0
        %v4567 = vsel %vm1117, %v2212, 0
        %v4570 = vsel %vm1117, %v2213, 0
        %v4573 = vsel %vm1117, %v2214, 0
        %v4576 = vsel %vm1117, %v2215, 0
        %v4579 = vsel %vm1117, %v2216, 0
        %v4582 = vsel %vm1117, %v2217, 0
        %v4585 = vsel %vm1117, %v2218, 0
        %v4588 = vsel %vm1117, %v2219, 0
        %v4591 = vsel %vm1117, %v2220, 0
        %v4594 = vsel %vm1117, %v2221, 0
        %v4597 = vsel %vm1117, %v2222, 0
        %v4600 = vsel %vm1117, %v2223, 0
        %v4603 = vsel %vm1117, %v2224, 0
        %v4606 = vsel %vm1117, %v2225, 0
        %v4609 = vsel %vm1117, %v2226, 0
        %v4612 = vsel %vm1117, %v2227, 0
        %v4615 = vsel %vm1117, %v2228, 0
        %v4618 = vsel %vm1117, %v2229, 0
        %v4621 = vsel %vm1117, %v2230, 0
        %v4624 = vsel %vm1117, %v2231, 0
        %v4627 = vsel %vm1117, %v2232, 0
        %v4630 = vsel %vm1117, %v2233, 0
        %v4633 = vsel %vm1117, %v2234, 0
        %v4636 = vsel %vm1117, %v2235, 0
        %v4639 = vsel %vm1117, %v2236, 0
        %v4642 = vsel %vm1117, %v2237, 0
        %v4645 = vsel %vm1117, %v2238, 0
        %v4648 = vsel %vm1117, %v2239, 0
        %4650 = vmatprep.subr.mxu0 0.0
        %4651 = vmatpush1.msra.mxu0 0.0
        %4652 = vmatprep.subr.mxu0 0.0
        %4653 = vmatpush1.msra.mxu0 0.0
        %4654 = vmatprep.subr.mxu0 0.0
        %4655 = vmatpush1.msra.mxu0 0.0
        %4656 = vmatprep.subr.mxu0 0.0
        %4657 = vmatpush1.msra.mxu0 0.0
        %4658 = vmatprep.subr.mxu0 0.0
        %4659 = vmatpush1.msra.mxu0 0.0
        %4660 = vmatprep.subr.mxu0 0.0
        %4661 = vmatpush1.msra.mxu0 0.0
        %4662 = vmatprep.subr.mxu0 0.0
        %4663 = vmatpush1.msra.mxu0 0.0
        %4664 = vmatprep.subr.mxu0 0.0
        %4665 = vmatpush1.msra.mxu0 0.0
        %4666 = vmatprep.subr.mxu0 %v2255
        %4667 = vmatpush1.msra.mxu0 %v2254
        %4668 = vmatprep.subr.mxu0 %v2253
        %4669 = vmatpush1.msra.mxu0 %v2252
        %4670 = vmatprep.subr.mxu0 %v2251
        %4671 = vmatpush1.msra.mxu0 %v2250
        %4672 = vmatprep.subr.mxu0 %v2249
        %4673 = vmatpush1.msra.mxu0 %v2248
        %4674 = vmatprep.subr.mxu0 %v2247
        %4675 = vmatpush1.msra.mxu0 %v2246
        %4676 = vmatprep.subr.mxu0 %v2245
        %4677 = vmatpush1.msra.mxu0 %v2244
        %4678 = vmatprep.subr.mxu0 %v2243
        %4679 = vmatpush1.msra.mxu0 %v2242
        %4680 = vmatprep.subr.mxu0 %v2241
        %4681 = vmatpush1.msra.mxu0 %v2240
        %4682 = vmatprep.subr.mxu0 0.0
        %4683 = vmatpush2.msra.mxu0 0.0
        %4684 = vmatprep.subr.mxu0 0.0
        %4685 = vmatpush2.msra.mxu0 0.0
        %4686 = vmatprep.subr.mxu0 0.0
        %4687 = vmatpush2.msra.mxu0 0.0
        %4688 = vmatprep.subr.mxu0 0.0
        %4689 = vmatpush2.msra.mxu0 0.0
        %4690 = vmatprep.subr.mxu0 0.0
        %4691 = vmatpush2.msra.mxu0 0.0
        %4692 = vmatprep.subr.mxu0 0.0
        %4693 = vmatpush2.msra.mxu0 0.0
        %4694 = vmatprep.subr.mxu0 0.0
        %4695 = vmatpush2.msra.mxu0 0.0
        %4696 = vmatprep.subr.mxu0 0.0
        %4697 = vmatpush2.msra.mxu0 0.0
        %4698 = vmatprep.subr.mxu0 0.0
        %4699 = vmatpush2.msra.mxu0 0.0
        %4700 = vmatprep.subr.mxu0 0.0
        %4701 = vmatpush2.msra.mxu0 0.0
        %4702 = vmatprep.subr.mxu0 0.0
        %4703 = vmatpush2.msra.mxu0 0.0
        %4704 = vmatprep.subr.mxu0 0.0
        %4705 = vmatpush2.msra.mxu0 0.0
        %4706 = vmatprep.subr.mxu0 0.0
        %4707 = vmatpush2.msra.mxu0 0.0
        %4708 = vmatprep.subr.mxu0 0.0
        %4709 = vmatpush2.msra.mxu0 0.0
        %4710 = vmatprep.subr.mxu0 0.0
        %4711 = vmatpush2.msra.mxu0 0.0
        %4712 = vmatprep.subr.mxu0 0.0
        %4713 = vmatpush2.msra.mxu0 0.0
        %4714 = vmatprep.mubr.f32.mxu0 0.0
        %4715 = vmatmul.mubr.f32.gmra.mxu0 %v4555
        %v4716 = vpop.f32.mrf.mxu0
        %v4717 = vadd.f32 %v4364, %v4716
        %v4718 = vpop.f32.mrf.mxu0
        %v4719 = vadd.f32 %v4366, %v4718
        %4720 = vmatprep.mubr.f32.mxu0 0.0
        %4721 = vmatmul.mubr.f32.gmra.mxu0 %v4558
        %v4722 = vpop.f32.mrf.mxu0
        %v4723 = vadd.f32 %v4370, %v4722
        %v4724 = vpop.f32.mrf.mxu0
        %v4725 = vadd.f32 %v4372, %v4724
        %4726 = vmatprep.mubr.f32.mxu0 0.0
        %4727 = vmatmul.mubr.f32.gmra.mxu0 %v4561
        %v4728 = vpop.f32.mrf.mxu0
        %v4729 = vadd.f32 %v4376, %v4728
        %v4730 = vpop.f32.mrf.mxu0
        %v4731 = vadd.f32 %v4378, %v4730
        %4732 = vmatprep.mubr.f32.mxu0 0.0
        %4733 = vmatmul.mubr.f32.gmra.mxu0 %v4564
        %v4734 = vpop.f32.mrf.mxu0
        %v4735 = vadd.f32 %v4382, %v4734
        %v4736 = vpop.f32.mrf.mxu0
        %v4737 = vadd.f32 %v4384, %v4736
        %4738 = vmatprep.mubr.f32.mxu0 0.0
        %4739 = vmatmul.mubr.f32.gmra.mxu0 %v4567
        %v4740 = vpop.f32.mrf.mxu0
        %v4741 = vadd.f32 %v4388, %v4740
        %v4742 = vpop.f32.mrf.mxu0
        %v4743 = vadd.f32 %v4390, %v4742
        %4744 = vmatprep.mubr.f32.mxu0 0.0
        %4745 = vmatmul.mubr.f32.gmra.mxu0 %v4570
        %v4746 = vpop.f32.mrf.mxu0
        %v4747 = vadd.f32 %v4394, %v4746
        %v4748 = vpop.f32.mrf.mxu0
        %v4749 = vadd.f32 %v4396, %v4748
        %4750 = vmatprep.mubr.f32.mxu0 0.0
        %4751 = vmatmul.mubr.f32.gmra.mxu0 %v4573
        %v4752 = vpop.f32.mrf.mxu0
        %v4753 = vadd.f32 %v4400, %v4752
        %v4754 = vpop.f32.mrf.mxu0
        %v4755 = vadd.f32 %v4402, %v4754
        %4756 = vmatprep.mubr.f32.mxu0 0.0
        %4757 = vmatmul.mubr.f32.gmra.mxu0 %v4576
        %v4758 = vpop.f32.mrf.mxu0
        %v4759 = vadd.f32 %v4406, %v4758
        %v4760 = vpop.f32.mrf.mxu0
        %v4761 = vadd.f32 %v4408, %v4760
        %4762 = vmatprep.mubr.f32.mxu0 0.0
        %4763 = vmatmul.mubr.f32.gmra.mxu0 %v4579
        %v4764 = vpop.f32.mrf.mxu0
        %v4765 = vadd.f32 %v4412, %v4764
        %v4766 = vpop.f32.mrf.mxu0
        %v4767 = vadd.f32 %v4414, %v4766
        %4768 = vmatprep.mubr.f32.mxu0 0.0
        %4769 = vmatmul.mubr.f32.gmra.mxu0 %v4582
        %v4770 = vpop.f32.mrf.mxu0
        %v4771 = vadd.f32 %v4418, %v4770
        %v4772 = vpop.f32.mrf.mxu0
        %v4773 = vadd.f32 %v4420, %v4772
        %4774 = vmatprep.mubr.f32.mxu0 0.0
        %4775 = vmatmul.mubr.f32.gmra.mxu0 %v4585
        %v4776 = vpop.f32.mrf.mxu0
        %v4777 = vadd.f32 %v4424, %v4776
        %v4778 = vpop.f32.mrf.mxu0
        %v4779 = vadd.f32 %v4426, %v4778
        %4780 = vmatprep.mubr.f32.mxu0 0.0
        %4781 = vmatmul.mubr.f32.gmra.mxu0 %v4588
        %v4782 = vpop.f32.mrf.mxu0
        %v4783 = vadd.f32 %v4430, %v4782
        %v4784 = vpop.f32.mrf.mxu0
        %v4785 = vadd.f32 %v4432, %v4784
        %4786 = vmatprep.mubr.f32.mxu0 0.0
        %4787 = vmatmul.mubr.f32.gmra.mxu0 %v4591
        %v4788 = vpop.f32.mrf.mxu0
        %v4789 = vadd.f32 %v4436, %v4788
        %v4790 = vpop.f32.mrf.mxu0
        %v4791 = vadd.f32 %v4438, %v4790
        %4792 = vmatprep.mubr.f32.mxu0 0.0
        %4793 = vmatmul.mubr.f32.gmra.mxu0 %v4594
        %v4794 = vpop.f32.mrf.mxu0
        %v4795 = vadd.f32 %v4442, %v4794
        %v4796 = vpop.f32.mrf.mxu0
        %v4797 = vadd.f32 %v4444, %v4796
        %4798 = vmatprep.mubr.f32.mxu0 0.0
        %4799 = vmatmul.mubr.f32.gmra.mxu0 %v4597
        %v4800 = vpop.f32.mrf.mxu0
        %v4801 = vadd.f32 %v4448, %v4800
        %v4802 = vpop.f32.mrf.mxu0
        %v4803 = vadd.f32 %v4450, %v4802
        %4804 = vmatprep.mubr.f32.mxu0 0.0
        %4805 = vmatmul.mubr.f32.gmra.mxu0 %v4600
        %v4806 = vpop.f32.mrf.mxu0
        %v4807 = vadd.f32 %v4454, %v4806
        %v4808 = vpop.f32.mrf.mxu0
        %v4809 = vadd.f32 %v4456, %v4808
        %4810 = vmatprep.mubr.f32.mxu0 0.0
        %4811 = vmatmul.mubr.f32.gmra.mxu0 %v4603
        %v4812 = vpop.f32.mrf.mxu0
        %v4813 = vadd.f32 %v4460, %v4812
        %v4814 = vpop.f32.mrf.mxu0
        %v4815 = vadd.f32 %v4462, %v4814
        %4816 = vmatprep.mubr.f32.mxu0 0.0
        %4817 = vmatmul.mubr.f32.gmra.mxu0 %v4606
        %v4818 = vpop.f32.mrf.mxu0
        %v4819 = vadd.f32 %v4466, %v4818
        %v4820 = vpop.f32.mrf.mxu0
        %v4821 = vadd.f32 %v4468, %v4820
        %4822 = vmatprep.mubr.f32.mxu0 0.0
        %4823 = vmatmul.mubr.f32.gmra.mxu0 %v4609
        %v4824 = vpop.f32.mrf.mxu0
        %v4825 = vadd.f32 %v4472, %v4824
        %v4826 = vpop.f32.mrf.mxu0
        %v4827 = vadd.f32 %v4474, %v4826
        %4828 = vmatprep.mubr.f32.mxu0 0.0
        %4829 = vmatmul.mubr.f32.gmra.mxu0 %v4612
        %v4830 = vpop.f32.mrf.mxu0
        %v4831 = vadd.f32 %v4478, %v4830
        %v4832 = vpop.f32.mrf.mxu0
        %v4833 = vadd.f32 %v4480, %v4832
        %4834 = vmatprep.mubr.f32.mxu0 0.0
        %4835 = vmatmul.mubr.f32.gmra.mxu0 %v4615
        %v4836 = vpop.f32.mrf.mxu0
        %v4837 = vadd.f32 %v4484, %v4836
        %v4838 = vpop.f32.mrf.mxu0
        %v4839 = vadd.f32 %v4486, %v4838
        %4840 = vmatprep.mubr.f32.mxu0 0.0
        %4841 = vmatmul.mubr.f32.gmra.mxu0 %v4618
        %v4842 = vpop.f32.mrf.mxu0
        %v4843 = vadd.f32 %v4490, %v4842
        %v4844 = vpop.f32.mrf.mxu0
        %v4845 = vadd.f32 %v4492, %v4844
        %4846 = vmatprep.mubr.f32.mxu0 0.0
        %4847 = vmatmul.mubr.f32.gmra.mxu0 %v4621
        %v4848 = vpop.f32.mrf.mxu0
        %v4849 = vadd.f32 %v4496, %v4848
        %v4850 = vpop.f32.mrf.mxu0
        %v4851 = vadd.f32 %v4498, %v4850
        %4852 = vmatprep.mubr.f32.mxu0 0.0
        %4853 = vmatmul.mubr.f32.gmra.mxu0 %v4624
        %v4854 = vpop.f32.mrf.mxu0
        %v4855 = vadd.f32 %v4502, %v4854
        %v4856 = vpop.f32.mrf.mxu0
        %v4857 = vadd.f32 %v4504, %v4856
        %4858 = vmatprep.mubr.f32.mxu0 0.0
        %4859 = vmatmul.mubr.f32.gmra.mxu0 %v4627
        %v4860 = vpop.f32.mrf.mxu0
        %v4861 = vadd.f32 %v4508, %v4860
        %v4862 = vpop.f32.mrf.mxu0
        %v4863 = vadd.f32 %v4510, %v4862
        %4864 = vmatprep.mubr.f32.mxu0 0.0
        %4865 = vmatmul.mubr.f32.gmra.mxu0 %v4630
        %v4866 = vpop.f32.mrf.mxu0
        %v4867 = vadd.f32 %v4514, %v4866
        %v4868 = vpop.f32.mrf.mxu0
        %v4869 = vadd.f32 %v4516, %v4868
        %4870 = vmatprep.mubr.f32.mxu0 0.0
        %4871 = vmatmul.mubr.f32.gmra.mxu0 %v4633
        %v4872 = vpop.f32.mrf.mxu0
        %v4873 = vadd.f32 %v4520, %v4872
        %v4874 = vpop.f32.mrf.mxu0
        %v4875 = vadd.f32 %v4522, %v4874
        %4876 = vmatprep.mubr.f32.mxu0 0.0
        %4877 = vmatmul.mubr.f32.gmra.mxu0 %v4636
        %v4878 = vpop.f32.mrf.mxu0
        %v4879 = vadd.f32 %v4526, %v4878
        %v4880 = vpop.f32.mrf.mxu0
        %v4881 = vadd.f32 %v4528, %v4880
        %4882 = vmatprep.mubr.f32.mxu0 0.0
        %4883 = vmatmul.mubr.f32.gmra.mxu0 %v4639
        %v4884 = vpop.f32.mrf.mxu0
        %v4885 = vadd.f32 %v4532, %v4884
        %v4886 = vpop.f32.mrf.mxu0
        %v4887 = vadd.f32 %v4534, %v4886
        %4888 = vmatprep.mubr.f32.mxu0 0.0
        %4889 = vmatmul.mubr.f32.gmra.mxu0 %v4642
        %v4890 = vpop.f32.mrf.mxu0
        %v4891 = vadd.f32 %v4538, %v4890
        %v4892 = vpop.f32.mrf.mxu0
        %v4893 = vadd.f32 %v4540, %v4892
        %4894 = vmatprep.mubr.f32.mxu0 0.0
        %4895 = vmatmul.mubr.f32.gmra.mxu0 %v4645
        %v4896 = vpop.f32.mrf.mxu0
        %v4897 = vadd.f32 %v4544, %v4896
        %v4898 = vpop.f32.mrf.mxu0
        %v4899 = vadd.f32 %v4546, %v4898
        %4900 = vmatprep.mubr.f32.mxu0 0.0
        %4901 = vmatmul.mubr.f32.gmra.mxu0 %v4648
        %v4902 = vpop.f32.mrf.mxu0
        %v4903 = vadd.f32 %v4550, %v4902
        %v4904 = vpop.f32.mrf.mxu0
        %v4905 = vadd.f32 %v4552, %v4904
        %4906 = vdwg.mxu0
        %s4907 = scalar_lea.vmem %s1, 512
        %v4908 = vld [vmem:[%s4907] sm:$0xff]
        %v4909 = vld [vmem:[%s4907 + $0x8] sm:$0xff]
        %v4910 = vld [vmem:[%s4907 + $0x10] sm:$0xff]
        %v4911 = vld [vmem:[%s4907 + $0x18] sm:$0xff]
        %v4912 = vld [vmem:[%s4907 + $0x20] sm:$0xff]
        %v4913 = vld [vmem:[%s4907 + $0x28] sm:$0xff]
        %v4914 = vld [vmem:[%s4907 + $0x30] sm:$0xff]
        %v4915 = vld [vmem:[%s4907 + $0x38] sm:$0xff]
        %v4916 = vld [vmem:[%s4907 + $0x40] sm:$0xff]
        %v4917 = vld [vmem:[%s4907 + $0x48] sm:$0xff]
        %v4918 = vld [vmem:[%s4907 + $0x50] sm:$0xff]
        %v4919 = vld [vmem:[%s4907 + $0x58] sm:$0xff]
        %v4920 = vld [vmem:[%s4907 + $0x60] sm:$0xff]
        %v4921 = vld [vmem:[%s4907 + $0x68] sm:$0xff]
        %v4922 = vld [vmem:[%s4907 + $0x70] sm:$0xff]
        %v4923 = vld [vmem:[%s4907 + $0x78] sm:$0xff]
        %v4924 = vld [vmem:[%s4907 + $0x80] sm:$0xff]
        %v4925 = vld [vmem:[%s4907 + $0x88] sm:$0xff]
        %v4926 = vld [vmem:[%s4907 + $0x90] sm:$0xff]
        %v4927 = vld [vmem:[%s4907 + $0x98] sm:$0xff]
        %v4928 = vld [vmem:[%s4907 + $0xa0] sm:$0xff]
        %v4929 = vld [vmem:[%s4907 + $0xa8] sm:$0xff]
        %v4930 = vld [vmem:[%s4907 + $0xb0] sm:$0xff]
        %v4931 = vld [vmem:[%s4907 + $0xb8] sm:$0xff]
        %v4932 = vld [vmem:[%s4907 + $0xc0] sm:$0xff]
        %v4933 = vld [vmem:[%s4907 + $0xc8] sm:$0xff]
        %v4934 = vld [vmem:[%s4907 + $0xd0] sm:$0xff]
        %v4935 = vld [vmem:[%s4907 + $0xd8] sm:$0xff]
        %v4936 = vld [vmem:[%s4907 + $0xe0] sm:$0xff]
        %v4937 = vld [vmem:[%s4907 + $0xe8] sm:$0xff]
        %v4938 = vld [vmem:[%s4907 + $0xf0] sm:$0xff]
        %v4939 = vld [vmem:[%s4907 + $0xf8] sm:$0xff]
        %4940 = vmatprep.subr.mxu0 0.0
        %4941 = vmatpush1.msra.mxu0 %v4923
        %4942 = vmatprep.subr.mxu0 0.0
        %4943 = vmatpush1.msra.mxu0 %v4922
        %4944 = vmatprep.subr.mxu0 0.0
        %4945 = vmatpush1.msra.mxu0 %v4921
        %4946 = vmatprep.subr.mxu0 0.0
        %4947 = vmatpush1.msra.mxu0 %v4920
        %4948 = vmatprep.subr.mxu0 0.0
        %4949 = vmatpush1.msra.mxu0 %v4919
        %4950 = vmatprep.subr.mxu0 0.0
        %4951 = vmatpush1.msra.mxu0 %v4918
        %4952 = vmatprep.subr.mxu0 0.0
        %4953 = vmatpush1.msra.mxu0 %v4917
        %4954 = vmatprep.subr.mxu0 0.0
        %4955 = vmatpush1.msra.mxu0 %v4916
        %4956 = vmatprep.subr.mxu0 0.0
        %4957 = vmatpush1.msra.mxu0 %v4915
        %4958 = vmatprep.subr.mxu0 0.0
        %4959 = vmatpush1.msra.mxu0 %v4914
        %4960 = vmatprep.subr.mxu0 0.0
        %4961 = vmatpush1.msra.mxu0 %v4913
        %4962 = vmatprep.subr.mxu0 0.0
        %4963 = vmatpush1.msra.mxu0 %v4912
        %4964 = vmatprep.subr.mxu0 0.0
        %4965 = vmatpush1.msra.mxu0 %v4911
        %4966 = vmatprep.subr.mxu0 0.0
        %4967 = vmatpush1.msra.mxu0 %v4910
        %4968 = vmatprep.subr.mxu0 0.0
        %4969 = vmatpush1.msra.mxu0 %v4909
        %4970 = vmatprep.subr.mxu0 0.0
        %4971 = vmatpush1.msra.mxu0 %v4908
        %4972 = vmatprep.subr.mxu0 0.0
        %4973 = vmatpush2.msra.mxu0 %v4939
        %4974 = vmatprep.subr.mxu0 0.0
        %4975 = vmatpush2.msra.mxu0 %v4938
        %4976 = vmatprep.subr.mxu0 0.0
        %4977 = vmatpush2.msra.mxu0 %v4937
        %4978 = vmatprep.subr.mxu0 0.0
        %4979 = vmatpush2.msra.mxu0 %v4936
        %4980 = vmatprep.subr.mxu0 0.0
        %4981 = vmatpush2.msra.mxu0 %v4935
        %4982 = vmatprep.subr.mxu0 0.0
        %4983 = vmatpush2.msra.mxu0 %v4934
        %4984 = vmatprep.subr.mxu0 0.0
        %4985 = vmatpush2.msra.mxu0 %v4933
        %4986 = vmatprep.subr.mxu0 0.0
        %4987 = vmatpush2.msra.mxu0 %v4932
        %4988 = vmatprep.subr.mxu0 0.0
        %4989 = vmatpush2.msra.mxu0 %v4931
        %4990 = vmatprep.subr.mxu0 0.0
        %4991 = vmatpush2.msra.mxu0 %v4930
        %4992 = vmatprep.subr.mxu0 0.0
        %4993 = vmatpush2.msra.mxu0 %v4929
        %4994 = vmatprep.subr.mxu0 0.0
        %4995 = vmatpush2.msra.mxu0 %v4928
        %4996 = vmatprep.subr.mxu0 0.0
        %4997 = vmatpush2.msra.mxu0 %v4927
        %4998 = vmatprep.subr.mxu0 0.0
        %4999 = vmatpush2.msra.mxu0 %v4926
        %5000 = vmatprep.subr.mxu0 0.0
        %5001 = vmatpush2.msra.mxu0 %v4925
        %5002 = vmatprep.subr.mxu0 0.0
        %5003 = vmatpush2.msra.mxu0 %v4924
        %5004 = vmatprep.mubr.f32.mxu0 %v251
        %5005 = vmatmul.mubr.f32.gmra.mxu0 %v250
        %v5006 = vpop.f32.mrf.mxu0
        %v5007 = vadd.f32 0.0, %v5006
        %v5008 = vpop.f32.mrf.mxu0
        %5009 = vmatprep.mubr.f32.mxu0 %v253
        %5010 = vmatmul.mubr.f32.gmra.mxu0 %v252
        %v5011 = vpop.f32.mrf.mxu0
        %v5012 = vadd.f32 0.0, %v5011
        %v5013 = vpop.f32.mrf.mxu0
        %5014 = vmatprep.mubr.f32.mxu0 %v255
        %5015 = vmatmul.mubr.f32.gmra.mxu0 %v254
        %v5016 = vpop.f32.mrf.mxu0
        %v5017 = vadd.f32 0.0, %v5016
        %v5018 = vpop.f32.mrf.mxu0
        %5019 = vmatprep.mubr.f32.mxu0 %v257
        %5020 = vmatmul.mubr.f32.gmra.mxu0 %v256
        %v5021 = vpop.f32.mrf.mxu0
        %v5022 = vadd.f32 0.0, %v5021
        %v5023 = vpop.f32.mrf.mxu0
        %5024 = vmatprep.mubr.f32.mxu0 %v259
        %5025 = vmatmul.mubr.f32.gmra.mxu0 %v258
        %v5026 = vpop.f32.mrf.mxu0
        %v5027 = vadd.f32 0.0, %v5026
        %v5028 = vpop.f32.mrf.mxu0
        %5029 = vmatprep.mubr.f32.mxu0 %v261
        %5030 = vmatmul.mubr.f32.gmra.mxu0 %v260
        %v5031 = vpop.f32.mrf.mxu0
        %v5032 = vadd.f32 0.0, %v5031
        %v5033 = vpop.f32.mrf.mxu0
        %5034 = vmatprep.mubr.f32.mxu0 %v263
        %5035 = vmatmul.mubr.f32.gmra.mxu0 %v262
        %v5036 = vpop.f32.mrf.mxu0
        %v5037 = vadd.f32 0.0, %v5036
        %v5038 = vpop.f32.mrf.mxu0
        %5039 = vmatprep.mubr.f32.mxu0 %v265
        %5040 = vmatmul.mubr.f32.gmra.mxu0 %v264
        %v5041 = vpop.f32.mrf.mxu0
        %v5042 = vadd.f32 0.0, %v5041
        %v5043 = vpop.f32.mrf.mxu0
        %5044 = vmatprep.mubr.f32.mxu0 %v267
        %5045 = vmatmul.mubr.f32.gmra.mxu0 %v266
        %v5046 = vpop.f32.mrf.mxu0
        %v5047 = vadd.f32 0.0, %v5046
        %v5048 = vpop.f32.mrf.mxu0
        %5049 = vmatprep.mubr.f32.mxu0 %v269
        %5050 = vmatmul.mubr.f32.gmra.mxu0 %v268
        %v5051 = vpop.f32.mrf.mxu0
        %v5052 = vadd.f32 0.0, %v5051
        %v5053 = vpop.f32.mrf.mxu0
        %5054 = vmatprep.mubr.f32.mxu0 %v271
        %5055 = vmatmul.mubr.f32.gmra.mxu0 %v270
        %v5056 = vpop.f32.mrf.mxu0
        %v5057 = vadd.f32 0.0, %v5056
        %v5058 = vpop.f32.mrf.mxu0
        %5059 = vmatprep.mubr.f32.mxu0 %v273
        %5060 = vmatmul.mubr.f32.gmra.mxu0 %v272
        %v5061 = vpop.f32.mrf.mxu0
        %v5062 = vadd.f32 0.0, %v5061
        %v5063 = vpop.f32.mrf.mxu0
        %5064 = vmatprep.mubr.f32.mxu0 %v275
        %5065 = vmatmul.mubr.f32.gmra.mxu0 %v274
        %v5066 = vpop.f32.mrf.mxu0
        %v5067 = vadd.f32 0.0, %v5066
        %v5068 = vpop.f32.mrf.mxu0
        %5069 = vmatprep.mubr.f32.mxu0 %v277
        %5070 = vmatmul.mubr.f32.gmra.mxu0 %v276
        %v5071 = vpop.f32.mrf.mxu0
        %v5072 = vadd.f32 0.0, %v5071
        %v5073 = vpop.f32.mrf.mxu0
        %5074 = vmatprep.mubr.f32.mxu0 %v279
        %5075 = vmatmul.mubr.f32.gmra.mxu0 %v278
        %v5076 = vpop.f32.mrf.mxu0
        %v5077 = vadd.f32 0.0, %v5076
        %v5078 = vpop.f32.mrf.mxu0
        %5079 = vmatprep.mubr.f32.mxu0 %v281
        %5080 = vmatmul.mubr.f32.gmra.mxu0 %v280
        %v5081 = vpop.f32.mrf.mxu0
        %v5082 = vadd.f32 0.0, %v5081
        %v5083 = vpop.f32.mrf.mxu0
        %5084 = vmatprep.mubr.f32.mxu0 %v283
        %5085 = vmatmul.mubr.f32.gmra.mxu0 %v282
        %v5086 = vpop.f32.mrf.mxu0
        %v5087 = vadd.f32 0.0, %v5086
        %v5088 = vpop.f32.mrf.mxu0
        %5089 = vmatprep.mubr.f32.mxu0 %v285
        %5090 = vmatmul.mubr.f32.gmra.mxu0 %v284
        %v5091 = vpop.f32.mrf.mxu0
        %v5092 = vadd.f32 0.0, %v5091
        %v5093 = vpop.f32.mrf.mxu0
        %5094 = vmatprep.mubr.f32.mxu0 %v287
        %5095 = vmatmul.mubr.f32.gmra.mxu0 %v286
        %v5096 = vpop.f32.mrf.mxu0
        %v5097 = vadd.f32 0.0, %v5096
        %v5098 = vpop.f32.mrf.mxu0
        %5099 = vmatprep.mubr.f32.mxu0 %v289
        %5100 = vmatmul.mubr.f32.gmra.mxu0 %v288
        %v5101 = vpop.f32.mrf.mxu0
        %v5102 = vadd.f32 0.0, %v5101
        %v5103 = vpop.f32.mrf.mxu0
        %5104 = vmatprep.mubr.f32.mxu0 %v291
        %5105 = vmatmul.mubr.f32.gmra.mxu0 %v290
        %v5106 = vpop.f32.mrf.mxu0
        %v5107 = vadd.f32 0.0, %v5106
        %v5108 = vpop.f32.mrf.mxu0
        %5109 = vmatprep.mubr.f32.mxu0 %v293
        %5110 = vmatmul.mubr.f32.gmra.mxu0 %v292
        %v5111 = vpop.f32.mrf.mxu0
        %v5112 = vadd.f32 0.0, %v5111
        %v5113 = vpop.f32.mrf.mxu0
        %5114 = vmatprep.mubr.f32.mxu0 %v295
        %5115 = vmatmul.mubr.f32.gmra.mxu0 %v294
        %v5116 = vpop.f32.mrf.mxu0
        %v5117 = vadd.f32 0.0, %v5116
        %v5118 = vpop.f32.mrf.mxu0
        %5119 = vmatprep.mubr.f32.mxu0 %v297
        %5120 = vmatmul.mubr.f32.gmra.mxu0 %v296
        %v5121 = vpop.f32.mrf.mxu0
        %v5122 = vadd.f32 0.0, %v5121
        %v5123 = vpop.f32.mrf.mxu0
        %5124 = vmatprep.mubr.f32.mxu0 %v299
        %5125 = vmatmul.mubr.f32.gmra.mxu0 %v298
        %v5126 = vpop.f32.mrf.mxu0
        %v5127 = vadd.f32 0.0, %v5126
        %v5128 = vpop.f32.mrf.mxu0
        %5129 = vmatprep.mubr.f32.mxu0 %v301
        %5130 = vmatmul.mubr.f32.gmra.mxu0 %v300
        %v5131 = vpop.f32.mrf.mxu0
        %v5132 = vadd.f32 0.0, %v5131
        %v5133 = vpop.f32.mrf.mxu0
        %5134 = vmatprep.mubr.f32.mxu0 %v303
        %5135 = vmatmul.mubr.f32.gmra.mxu0 %v302
        %v5136 = vpop.f32.mrf.mxu0
        %v5137 = vadd.f32 0.0, %v5136
        %v5138 = vpop.f32.mrf.mxu0
        %5139 = vmatprep.mubr.f32.mxu0 %v305
        %5140 = vmatmul.mubr.f32.gmra.mxu0 %v304
        %v5141 = vpop.f32.mrf.mxu0
        %v5142 = vadd.f32 0.0, %v5141
        %v5143 = vpop.f32.mrf.mxu0
        %5144 = vmatprep.mubr.f32.mxu0 %v307
        %5145 = vmatmul.mubr.f32.gmra.mxu0 %v306
        %v5146 = vpop.f32.mrf.mxu0
        %v5147 = vadd.f32 0.0, %v5146
        %v5148 = vpop.f32.mrf.mxu0
        %5149 = vmatprep.mubr.f32.mxu0 %v309
        %5150 = vmatmul.mubr.f32.gmra.mxu0 %v308
        %v5151 = vpop.f32.mrf.mxu0
        %v5152 = vadd.f32 0.0, %v5151
        %v5153 = vpop.f32.mrf.mxu0
        %5154 = vmatprep.mubr.f32.mxu0 %v311
        %5155 = vmatmul.mubr.f32.gmra.mxu0 %v310
        %v5156 = vpop.f32.mrf.mxu0
        %v5157 = vadd.f32 0.0, %v5156
        %v5158 = vpop.f32.mrf.mxu0
        %5159 = vmatprep.mubr.f32.mxu0 %v313
        %5160 = vmatmul.mubr.f32.gmra.mxu0 %v312
        %v5161 = vpop.f32.mrf.mxu0
        %v5162 = vadd.f32 0.0, %v5161
        %v5163 = vpop.f32.mrf.mxu0
        %5164 = vdwg.mxu0
        %v5165 = vmul.f32 %v5007, 0.125
        %v5166 = vmul.f32 %v5012, 0.125
        %v5167 = vmul.f32 %v5017, 0.125
        %v5168 = vmul.f32 %v5022, 0.125
        %v5169 = vmul.f32 %v5027, 0.125
        %v5170 = vmul.f32 %v5032, 0.125
        %v5171 = vmul.f32 %v5037, 0.125
        %v5172 = vmul.f32 %v5042, 0.125
        %v5173 = vmul.f32 %v5047, 0.125
        %v5174 = vmul.f32 %v5052, 0.125
        %v5175 = vmul.f32 %v5057, 0.125
        %v5176 = vmul.f32 %v5062, 0.125
        %v5177 = vmul.f32 %v5067, 0.125
        %v5178 = vmul.f32 %v5072, 0.125
        %v5179 = vmul.f32 %v5077, 0.125
        %v5180 = vmul.f32 %v5082, 0.125
        %v5181 = vmul.f32 %v5087, 0.125
        %v5182 = vmul.f32 %v5092, 0.125
        %v5183 = vmul.f32 %v5097, 0.125
        %v5184 = vmul.f32 %v5102, 0.125
        %v5185 = vmul.f32 %v5107, 0.125
        %v5186 = vmul.f32 %v5112, 0.125
        %v5187 = vmul.f32 %v5117, 0.125
        %v5188 = vmul.f32 %v5122, 0.125
        %v5189 = vmul.f32 %v5127, 0.125
        %v5190 = vmul.f32 %v5132, 0.125
        %v5191 = vmul.f32 %v5137, 0.125
        %v5192 = vmul.f32 %v5142, 0.125
        %v5193 = vmul.f32 %v5147, 0.125
        %v5194 = vmul.f32 %v5152, 0.125
        %v5195 = vmul.f32 %v5157, 0.125
        %v5196 = vmul.f32 %v5162, 0.125
        %s5197 = scalar_lea.vmem %s2, 512
        %v5198 = vld [vmem:[%s5197] sm:$0xff]
        %v5199 = vld [vmem:[%s5197 + $0x8] sm:$0xff]
        %v5200 = vld [vmem:[%s5197 + $0x10] sm:$0xff]
        %v5201 = vld [vmem:[%s5197 + $0x18] sm:$0xff]
        %v5202 = vld [vmem:[%s5197 + $0x20] sm:$0xff]
        %v5203 = vld [vmem:[%s5197 + $0x28] sm:$0xff]
        %v5204 = vld [vmem:[%s5197 + $0x30] sm:$0xff]
        %v5205 = vld [vmem:[%s5197 + $0x38] sm:$0xff]
        %v5206 = vld [vmem:[%s5197 + $0x40] sm:$0xff]
        %v5207 = vld [vmem:[%s5197 + $0x48] sm:$0xff]
        %v5208 = vld [vmem:[%s5197 + $0x50] sm:$0xff]
        %v5209 = vld [vmem:[%s5197 + $0x58] sm:$0xff]
        %v5210 = vld [vmem:[%s5197 + $0x60] sm:$0xff]
        %v5211 = vld [vmem:[%s5197 + $0x68] sm:$0xff]
        %v5212 = vld [vmem:[%s5197 + $0x70] sm:$0xff]
        %v5213 = vld [vmem:[%s5197 + $0x78] sm:$0xff]
        %v5214 = vld [vmem:[%s5197 + $0x80] sm:$0xff]
        %v5215 = vld [vmem:[%s5197 + $0x88] sm:$0xff]
        %v5216 = vld [vmem:[%s5197 + $0x90] sm:$0xff]
        %v5217 = vld [vmem:[%s5197 + $0x98] sm:$0xff]
        %v5218 = vld [vmem:[%s5197 + $0xa0] sm:$0xff]
        %v5219 = vld [vmem:[%s5197 + $0xa8] sm:$0xff]
        %v5220 = vld [vmem:[%s5197 + $0xb0] sm:$0xff]
        %v5221 = vld [vmem:[%s5197 + $0xb8] sm:$0xff]
        %v5222 = vld [vmem:[%s5197 + $0xc0] sm:$0xff]
        %v5223 = vld [vmem:[%s5197 + $0xc8] sm:$0xff]
        %v5224 = vld [vmem:[%s5197 + $0xd0] sm:$0xff]
        %v5225 = vld [vmem:[%s5197 + $0xd8] sm:$0xff]
        %v5226 = vld [vmem:[%s5197 + $0xe0] sm:$0xff]
        %v5227 = vld [vmem:[%s5197 + $0xe8] sm:$0xff]
        %v5228 = vld [vmem:[%s5197 + $0xf0] sm:$0xff]
        %v5229 = vld [vmem:[%s5197 + $0xf8] sm:$0xff]
        %5230 = vmatprep.subr.mxu0 0.0
        %5231 = vmatpush1.msra.mxu0 %v5213
        %5232 = vmatprep.subr.mxu0 0.0
        %5233 = vmatpush1.msra.mxu0 %v5212
        %5234 = vmatprep.subr.mxu0 0.0
        %5235 = vmatpush1.msra.mxu0 %v5211
        %5236 = vmatprep.subr.mxu0 0.0
        %5237 = vmatpush1.msra.mxu0 %v5210
        %5238 = vmatprep.subr.mxu0 0.0
        %5239 = vmatpush1.msra.mxu0 %v5209
        %5240 = vmatprep.subr.mxu0 0.0
        %5241 = vmatpush1.msra.mxu0 %v5208
        %5242 = vmatprep.subr.mxu0 0.0
        %5243 = vmatpush1.msra.mxu0 %v5207
        %5244 = vmatprep.subr.mxu0 0.0
        %5245 = vmatpush1.msra.mxu0 %v5206
        %5246 = vmatprep.subr.mxu0 0.0
        %5247 = vmatpush1.msra.mxu0 %v5205
        %5248 = vmatprep.subr.mxu0 0.0
        %5249 = vmatpush1.msra.mxu0 %v5204
        %5250 = vmatprep.subr.mxu0 0.0
        %5251 = vmatpush1.msra.mxu0 %v5203
        %5252 = vmatprep.subr.mxu0 0.0
        %5253 = vmatpush1.msra.mxu0 %v5202
        %5254 = vmatprep.subr.mxu0 0.0
        %5255 = vmatpush1.msra.mxu0 %v5201
        %5256 = vmatprep.subr.mxu0 0.0
        %5257 = vmatpush1.msra.mxu0 %v5200
        %5258 = vmatprep.subr.mxu0 0.0
        %5259 = vmatpush1.msra.mxu0 %v5199
        %5260 = vmatprep.subr.mxu0 0.0
        %5261 = vmatpush1.msra.mxu0 %v5198
        %5262 = vmatprep.subr.mxu0 0.0
        %5263 = vmatpush2.msra.mxu0 %v5229
        %5264 = vmatprep.subr.mxu0 0.0
        %5265 = vmatpush2.msra.mxu0 %v5228
        %5266 = vmatprep.subr.mxu0 0.0
        %5267 = vmatpush2.msra.mxu0 %v5227
        %5268 = vmatprep.subr.mxu0 0.0
        %5269 = vmatpush2.msra.mxu0 %v5226
        %5270 = vmatprep.subr.mxu0 0.0
        %5271 = vmatpush2.msra.mxu0 %v5225
        %5272 = vmatprep.subr.mxu0 0.0
        %5273 = vmatpush2.msra.mxu0 %v5224
        %5274 = vmatprep.subr.mxu0 0.0
        %5275 = vmatpush2.msra.mxu0 %v5223
        %5276 = vmatprep.subr.mxu0 0.0
        %5277 = vmatpush2.msra.mxu0 %v5222
        %5278 = vmatprep.subr.mxu0 0.0
        %5279 = vmatpush2.msra.mxu0 %v5221
        %5280 = vmatprep.subr.mxu0 0.0
        %5281 = vmatpush2.msra.mxu0 %v5220
        %5282 = vmatprep.subr.mxu0 0.0
        %5283 = vmatpush2.msra.mxu0 %v5219
        %5284 = vmatprep.subr.mxu0 0.0
        %5285 = vmatpush2.msra.mxu0 %v5218
        %5286 = vmatprep.subr.mxu0 0.0
        %5287 = vmatpush2.msra.mxu0 %v5217
        %5288 = vmatprep.subr.mxu0 0.0
        %5289 = vmatpush2.msra.mxu0 %v5216
        %5290 = vmatprep.subr.mxu0 0.0
        %5291 = vmatpush2.msra.mxu0 %v5215
        %5292 = vmatprep.subr.mxu0 0.0
        %5293 = vmatpush2.msra.mxu0 %v5214
        %5294 = vmatprep.mubr.f32.mxu0 %v251
        %5295 = vmatmul.mubr.f32.gmra.mxu0 %v250
        %v5296 = vpop.f32.mrf.mxu0
        %v5297 = vadd.f32 0.0, %v5296
        %v5298 = vpop.f32.mrf.mxu0
        %5299 = vmatprep.mubr.f32.mxu0 %v253
        %5300 = vmatmul.mubr.f32.gmra.mxu0 %v252
        %v5301 = vpop.f32.mrf.mxu0
        %v5302 = vadd.f32 0.0, %v5301
        %v5303 = vpop.f32.mrf.mxu0
        %5304 = vmatprep.mubr.f32.mxu0 %v255
        %5305 = vmatmul.mubr.f32.gmra.mxu0 %v254
        %v5306 = vpop.f32.mrf.mxu0
        %v5307 = vadd.f32 0.0, %v5306
        %v5308 = vpop.f32.mrf.mxu0
        %5309 = vmatprep.mubr.f32.mxu0 %v257
        %5310 = vmatmul.mubr.f32.gmra.mxu0 %v256
        %v5311 = vpop.f32.mrf.mxu0
        %v5312 = vadd.f32 0.0, %v5311
        %v5313 = vpop.f32.mrf.mxu0
        %5314 = vmatprep.mubr.f32.mxu0 %v259
        %5315 = vmatmul.mubr.f32.gmra.mxu0 %v258
        %v5316 = vpop.f32.mrf.mxu0
        %v5317 = vadd.f32 0.0, %v5316
        %v5318 = vpop.f32.mrf.mxu0
        %5319 = vmatprep.mubr.f32.mxu0 %v261
        %5320 = vmatmul.mubr.f32.gmra.mxu0 %v260
        %v5321 = vpop.f32.mrf.mxu0
        %v5322 = vadd.f32 0.0, %v5321
        %v5323 = vpop.f32.mrf.mxu0
        %5324 = vmatprep.mubr.f32.mxu0 %v263
        %5325 = vmatmul.mubr.f32.gmra.mxu0 %v262
        %v5326 = vpop.f32.mrf.mxu0
        %v5327 = vadd.f32 0.0, %v5326
        %v5328 = vpop.f32.mrf.mxu0
        %5329 = vmatprep.mubr.f32.mxu0 %v265
        %5330 = vmatmul.mubr.f32.gmra.mxu0 %v264
        %v5331 = vpop.f32.mrf.mxu0
        %v5332 = vadd.f32 0.0, %v5331
        %v5333 = vpop.f32.mrf.mxu0
        %5334 = vmatprep.mubr.f32.mxu0 %v267
        %5335 = vmatmul.mubr.f32.gmra.mxu0 %v266
        %v5336 = vpop.f32.mrf.mxu0
        %v5337 = vadd.f32 0.0, %v5336
        %v5338 = vpop.f32.mrf.mxu0
        %5339 = vmatprep.mubr.f32.mxu0 %v269
        %5340 = vmatmul.mubr.f32.gmra.mxu0 %v268
        %v5341 = vpop.f32.mrf.mxu0
        %v5342 = vadd.f32 0.0, %v5341
        %v5343 = vpop.f32.mrf.mxu0
        %5344 = vmatprep.mubr.f32.mxu0 %v271
        %5345 = vmatmul.mubr.f32.gmra.mxu0 %v270
        %v5346 = vpop.f32.mrf.mxu0
        %v5347 = vadd.f32 0.0, %v5346
        %v5348 = vpop.f32.mrf.mxu0
        %5349 = vmatprep.mubr.f32.mxu0 %v273
        %5350 = vmatmul.mubr.f32.gmra.mxu0 %v272
        %v5351 = vpop.f32.mrf.mxu0
        %v5352 = vadd.f32 0.0, %v5351
        %v5353 = vpop.f32.mrf.mxu0
        %5354 = vmatprep.mubr.f32.mxu0 %v275
        %5355 = vmatmul.mubr.f32.gmra.mxu0 %v274
        %v5356 = vpop.f32.mrf.mxu0
        %v5357 = vadd.f32 0.0, %v5356
        %v5358 = vpop.f32.mrf.mxu0
        %5359 = vmatprep.mubr.f32.mxu0 %v277
        %5360 = vmatmul.mubr.f32.gmra.mxu0 %v276
        %v5361 = vpop.f32.mrf.mxu0
        %v5362 = vadd.f32 0.0, %v5361
        %v5363 = vpop.f32.mrf.mxu0
        %5364 = vmatprep.mubr.f32.mxu0 %v279
        %5365 = vmatmul.mubr.f32.gmra.mxu0 %v278
        %v5366 = vpop.f32.mrf.mxu0
        %v5367 = vadd.f32 0.0, %v5366
        %v5368 = vpop.f32.mrf.mxu0
        %5369 = vmatprep.mubr.f32.mxu0 %v281
        %5370 = vmatmul.mubr.f32.gmra.mxu0 %v280
        %v5371 = vpop.f32.mrf.mxu0
        %v5372 = vadd.f32 0.0, %v5371
        %v5373 = vpop.f32.mrf.mxu0
        %5374 = vmatprep.mubr.f32.mxu0 %v283
        %5375 = vmatmul.mubr.f32.gmra.mxu0 %v282
        %v5376 = vpop.f32.mrf.mxu0
        %v5377 = vadd.f32 0.0, %v5376
        %v5378 = vpop.f32.mrf.mxu0
        %5379 = vmatprep.mubr.f32.mxu0 %v285
        %5380 = vmatmul.mubr.f32.gmra.mxu0 %v284
        %v5381 = vpop.f32.mrf.mxu0
        %v5382 = vadd.f32 0.0, %v5381
        %v5383 = vpop.f32.mrf.mxu0
        %5384 = vmatprep.mubr.f32.mxu0 %v287
        %5385 = vmatmul.mubr.f32.gmra.mxu0 %v286
        %v5386 = vpop.f32.mrf.mxu0
        %v5387 = vadd.f32 0.0, %v5386
        %v5388 = vpop.f32.mrf.mxu0
        %5389 = vmatprep.mubr.f32.mxu0 %v289
        %5390 = vmatmul.mubr.f32.gmra.mxu0 %v288
        %v5391 = vpop.f32.mrf.mxu0
        %v5392 = vadd.f32 0.0, %v5391
        %v5393 = vpop.f32.mrf.mxu0
        %5394 = vmatprep.mubr.f32.mxu0 %v291
        %5395 = vmatmul.mubr.f32.gmra.mxu0 %v290
        %v5396 = vpop.f32.mrf.mxu0
        %v5397 = vadd.f32 0.0, %v5396
        %v5398 = vpop.f32.mrf.mxu0
        %5399 = vmatprep.mubr.f32.mxu0 %v293
        %5400 = vmatmul.mubr.f32.gmra.mxu0 %v292
        %v5401 = vpop.f32.mrf.mxu0
        %v5402 = vadd.f32 0.0, %v5401
        %v5403 = vpop.f32.mrf.mxu0
        %5404 = vmatprep.mubr.f32.mxu0 %v295
        %5405 = vmatmul.mubr.f32.gmra.mxu0 %v294
        %v5406 = vpop.f32.mrf.mxu0
        %v5407 = vadd.f32 0.0, %v5406
        %v5408 = vpop.f32.mrf.mxu0
        %5409 = vmatprep.mubr.f32.mxu0 %v297
        %5410 = vmatmul.mubr.f32.gmra.mxu0 %v296
        %v5411 = vpop.f32.mrf.mxu0
        %v5412 = vadd.f32 0.0, %v5411
        %v5413 = vpop.f32.mrf.mxu0
        %5414 = vmatprep.mubr.f32.mxu0 %v299
        %5415 = vmatmul.mubr.f32.gmra.mxu0 %v298
        %v5416 = vpop.f32.mrf.mxu0
        %v5417 = vadd.f32 0.0, %v5416
        %v5418 = vpop.f32.mrf.mxu0
        %5419 = vmatprep.mubr.f32.mxu0 %v301
        %5420 = vmatmul.mubr.f32.gmra.mxu0 %v300
        %v5421 = vpop.f32.mrf.mxu0
        %v5422 = vadd.f32 0.0, %v5421
        %v5423 = vpop.f32.mrf.mxu0
        %5424 = vmatprep.mubr.f32.mxu0 %v303
        %5425 = vmatmul.mubr.f32.gmra.mxu0 %v302
        %v5426 = vpop.f32.mrf.mxu0
        %v5427 = vadd.f32 0.0, %v5426
        %v5428 = vpop.f32.mrf.mxu0
        %5429 = vmatprep.mubr.f32.mxu0 %v305
        %5430 = vmatmul.mubr.f32.gmra.mxu0 %v304
        %v5431 = vpop.f32.mrf.mxu0
        %v5432 = vadd.f32 0.0, %v5431
        %v5433 = vpop.f32.mrf.mxu0
        %5434 = vmatprep.mubr.f32.mxu0 %v307
        %5435 = vmatmul.mubr.f32.gmra.mxu0 %v306
        %v5436 = vpop.f32.mrf.mxu0
        %v5437 = vadd.f32 0.0, %v5436
        %v5438 = vpop.f32.mrf.mxu0
        %5439 = vmatprep.mubr.f32.mxu0 %v309
        %5440 = vmatmul.mubr.f32.gmra.mxu0 %v308
        %v5441 = vpop.f32.mrf.mxu0
        %v5442 = vadd.f32 0.0, %v5441
        %v5443 = vpop.f32.mrf.mxu0
        %5444 = vmatprep.mubr.f32.mxu0 %v311
        %5445 = vmatmul.mubr.f32.gmra.mxu0 %v310
        %v5446 = vpop.f32.mrf.mxu0
        %v5447 = vadd.f32 0.0, %v5446
        %v5448 = vpop.f32.mrf.mxu0
        %5449 = vmatprep.mubr.f32.mxu0 %v313
        %5450 = vmatmul.mubr.f32.gmra.mxu0 %v312
        %v5451 = vpop.f32.mrf.mxu0
        %v5452 = vadd.f32 0.0, %v5451
        %v5453 = vpop.f32.mrf.mxu0
        %5454 = vdwg.mxu0
        %s5455 = scalar_lea.vmem %s3, 512
        %v5456 = vld [vmem:[%s5455] sm:$0xff]
        %v5457 = vld [vmem:[%s5455 + $0x8] sm:$0xff]
        %v5458 = vld [vmem:[%s5455 + $0x10] sm:$0xff]
        %v5459 = vld [vmem:[%s5455 + $0x18] sm:$0xff]
        %v5460 = vld [vmem:[%s5455 + $0x20] sm:$0xff]
        %v5461 = vld [vmem:[%s5455 + $0x28] sm:$0xff]
        %v5462 = vld [vmem:[%s5455 + $0x30] sm:$0xff]
        %v5463 = vld [vmem:[%s5455 + $0x38] sm:$0xff]
        %v5464 = vld [vmem:[%s5455 + $0x40] sm:$0xff]
        %v5465 = vld [vmem:[%s5455 + $0x48] sm:$0xff]
        %v5466 = vld [vmem:[%s5455 + $0x50] sm:$0xff]
        %v5467 = vld [vmem:[%s5455 + $0x58] sm:$0xff]
        %v5468 = vld [vmem:[%s5455 + $0x60] sm:$0xff]
        %v5469 = vld [vmem:[%s5455 + $0x68] sm:$0xff]
        %v5470 = vld [vmem:[%s5455 + $0x70] sm:$0xff]
        %v5471 = vld [vmem:[%s5455 + $0x78] sm:$0xff]
        %v5472 = vld [vmem:[%s5455 + $0x80] sm:$0xff]
        %v5473 = vld [vmem:[%s5455 + $0x88] sm:$0xff]
        %v5474 = vld [vmem:[%s5455 + $0x90] sm:$0xff]
        %v5475 = vld [vmem:[%s5455 + $0x98] sm:$0xff]
        %v5476 = vld [vmem:[%s5455 + $0xa0] sm:$0xff]
        %v5477 = vld [vmem:[%s5455 + $0xa8] sm:$0xff]
        %v5478 = vld [vmem:[%s5455 + $0xb0] sm:$0xff]
        %v5479 = vld [vmem:[%s5455 + $0xb8] sm:$0xff]
        %v5480 = vld [vmem:[%s5455 + $0xc0] sm:$0xff]
        %v5481 = vld [vmem:[%s5455 + $0xc8] sm:$0xff]
        %v5482 = vld [vmem:[%s5455 + $0xd0] sm:$0xff]
        %v5483 = vld [vmem:[%s5455 + $0xd8] sm:$0xff]
        %v5484 = vld [vmem:[%s5455 + $0xe0] sm:$0xff]
        %v5485 = vld [vmem:[%s5455 + $0xe8] sm:$0xff]
        %v5486 = vld [vmem:[%s5455 + $0xf0] sm:$0xff]
        %v5487 = vld [vmem:[%s5455 + $0xf8] sm:$0xff]
        %5488 = vmatprep.subr.mxu0 0.0
        %5489 = vmatpush1.msra.mxu0 %v5471
        %5490 = vmatprep.subr.mxu0 0.0
        %5491 = vmatpush1.msra.mxu0 %v5470
        %5492 = vmatprep.subr.mxu0 0.0
        %5493 = vmatpush1.msra.mxu0 %v5469
        %5494 = vmatprep.subr.mxu0 0.0
        %5495 = vmatpush1.msra.mxu0 %v5468
        %5496 = vmatprep.subr.mxu0 0.0
        %5497 = vmatpush1.msra.mxu0 %v5467
        %5498 = vmatprep.subr.mxu0 0.0
        %5499 = vmatpush1.msra.mxu0 %v5466
        %5500 = vmatprep.subr.mxu0 0.0
        %5501 = vmatpush1.msra.mxu0 %v5465
        %5502 = vmatprep.subr.mxu0 0.0
        %5503 = vmatpush1.msra.mxu0 %v5464
        %5504 = vmatprep.subr.mxu0 0.0
        %5505 = vmatpush1.msra.mxu0 %v5463
        %5506 = vmatprep.subr.mxu0 0.0
        %5507 = vmatpush1.msra.mxu0 %v5462
        %5508 = vmatprep.subr.mxu0 0.0
        %5509 = vmatpush1.msra.mxu0 %v5461
        %5510 = vmatprep.subr.mxu0 0.0
        %5511 = vmatpush1.msra.mxu0 %v5460
        %5512 = vmatprep.subr.mxu0 0.0
        %5513 = vmatpush1.msra.mxu0 %v5459
        %5514 = vmatprep.subr.mxu0 0.0
        %5515 = vmatpush1.msra.mxu0 %v5458
        %5516 = vmatprep.subr.mxu0 0.0
        %5517 = vmatpush1.msra.mxu0 %v5457
        %5518 = vmatprep.subr.mxu0 0.0
        %5519 = vmatpush1.msra.mxu0 %v5456
        %5520 = vmatprep.subr.mxu0 0.0
        %5521 = vmatpush2.msra.mxu0 %v5487
        %5522 = vmatprep.subr.mxu0 0.0
        %5523 = vmatpush2.msra.mxu0 %v5486
        %5524 = vmatprep.subr.mxu0 0.0
        %5525 = vmatpush2.msra.mxu0 %v5485
        %5526 = vmatprep.subr.mxu0 0.0
        %5527 = vmatpush2.msra.mxu0 %v5484
        %5528 = vmatprep.subr.mxu0 0.0
        %5529 = vmatpush2.msra.mxu0 %v5483
        %5530 = vmatprep.subr.mxu0 0.0
        %5531 = vmatpush2.msra.mxu0 %v5482
        %5532 = vmatprep.subr.mxu0 0.0
        %5533 = vmatpush2.msra.mxu0 %v5481
        %5534 = vmatprep.subr.mxu0 0.0
        %5535 = vmatpush2.msra.mxu0 %v5480
        %5536 = vmatprep.subr.mxu0 0.0
        %5537 = vmatpush2.msra.mxu0 %v5479
        %5538 = vmatprep.subr.mxu0 0.0
        %5539 = vmatpush2.msra.mxu0 %v5478
        %5540 = vmatprep.subr.mxu0 0.0
        %5541 = vmatpush2.msra.mxu0 %v5477
        %5542 = vmatprep.subr.mxu0 0.0
        %5543 = vmatpush2.msra.mxu0 %v5476
        %5544 = vmatprep.subr.mxu0 0.0
        %5545 = vmatpush2.msra.mxu0 %v5475
        %5546 = vmatprep.subr.mxu0 0.0
        %5547 = vmatpush2.msra.mxu0 %v5474
        %5548 = vmatprep.subr.mxu0 0.0
        %5549 = vmatpush2.msra.mxu0 %v5473
        %5550 = vmatprep.subr.mxu0 0.0
        %5551 = vmatpush2.msra.mxu0 %v5472
        %5552 = vmatprep.mubr.f32.mxu0 %v251
        %5553 = vmatmul.mubr.f32.gmra.mxu0 %v250
        %v5554 = vpop.f32.mrf.mxu0
        %v5555 = vadd.f32 0.0, %v5554
        %v5556 = vpop.f32.mrf.mxu0
        %5557 = vmatprep.mubr.f32.mxu0 %v253
        %5558 = vmatmul.mubr.f32.gmra.mxu0 %v252
        %v5559 = vpop.f32.mrf.mxu0
        %v5560 = vadd.f32 0.0, %v5559
        %v5561 = vpop.f32.mrf.mxu0
        %5562 = vmatprep.mubr.f32.mxu0 %v255
        %5563 = vmatmul.mubr.f32.gmra.mxu0 %v254
        %v5564 = vpop.f32.mrf.mxu0
        %v5565 = vadd.f32 0.0, %v5564
        %v5566 = vpop.f32.mrf.mxu0
        %5567 = vmatprep.mubr.f32.mxu0 %v257
        %5568 = vmatmul.mubr.f32.gmra.mxu0 %v256
        %v5569 = vpop.f32.mrf.mxu0
        %v5570 = vadd.f32 0.0, %v5569
        %v5571 = vpop.f32.mrf.mxu0
        %5572 = vmatprep.mubr.f32.mxu0 %v259
        %5573 = vmatmul.mubr.f32.gmra.mxu0 %v258
        %v5574 = vpop.f32.mrf.mxu0
        %v5575 = vadd.f32 0.0, %v5574
        %v5576 = vpop.f32.mrf.mxu0
        %5577 = vmatprep.mubr.f32.mxu0 %v261
        %5578 = vmatmul.mubr.f32.gmra.mxu0 %v260
        %v5579 = vpop.f32.mrf.mxu0
        %v5580 = vadd.f32 0.0, %v5579
        %v5581 = vpop.f32.mrf.mxu0
        %5582 = vmatprep.mubr.f32.mxu0 %v263
        %5583 = vmatmul.mubr.f32.gmra.mxu0 %v262
        %v5584 = vpop.f32.mrf.mxu0
        %v5585 = vadd.f32 0.0, %v5584
        %v5586 = vpop.f32.mrf.mxu0
        %5587 = vmatprep.mubr.f32.mxu0 %v265
        %5588 = vmatmul.mubr.f32.gmra.mxu0 %v264
        %v5589 = vpop.f32.mrf.mxu0
        %v5590 = vadd.f32 0.0, %v5589
        %v5591 = vpop.f32.mrf.mxu0
        %5592 = vmatprep.mubr.f32.mxu0 %v267
        %5593 = vmatmul.mubr.f32.gmra.mxu0 %v266
        %v5594 = vpop.f32.mrf.mxu0
        %v5595 = vadd.f32 0.0, %v5594
        %v5596 = vpop.f32.mrf.mxu0
        %5597 = vmatprep.mubr.f32.mxu0 %v269
        %5598 = vmatmul.mubr.f32.gmra.mxu0 %v268
        %v5599 = vpop.f32.mrf.mxu0
        %v5600 = vadd.f32 0.0, %v5599
        %v5601 = vpop.f32.mrf.mxu0
        %5602 = vmatprep.mubr.f32.mxu0 %v271
        %5603 = vmatmul.mubr.f32.gmra.mxu0 %v270
        %v5604 = vpop.f32.mrf.mxu0
        %v5605 = vadd.f32 0.0, %v5604
        %v5606 = vpop.f32.mrf.mxu0
        %5607 = vmatprep.mubr.f32.mxu0 %v273
        %5608 = vmatmul.mubr.f32.gmra.mxu0 %v272
        %v5609 = vpop.f32.mrf.mxu0
        %v5610 = vadd.f32 0.0, %v5609
        %v5611 = vpop.f32.mrf.mxu0
        %5612 = vmatprep.mubr.f32.mxu0 %v275
        %5613 = vmatmul.mubr.f32.gmra.mxu0 %v274
        %v5614 = vpop.f32.mrf.mxu0
        %v5615 = vadd.f32 0.0, %v5614
        %v5616 = vpop.f32.mrf.mxu0
        %5617 = vmatprep.mubr.f32.mxu0 %v277
        %5618 = vmatmul.mubr.f32.gmra.mxu0 %v276
        %v5619 = vpop.f32.mrf.mxu0
        %v5620 = vadd.f32 0.0, %v5619
        %v5621 = vpop.f32.mrf.mxu0
        %5622 = vmatprep.mubr.f32.mxu0 %v279
        %5623 = vmatmul.mubr.f32.gmra.mxu0 %v278
        %v5624 = vpop.f32.mrf.mxu0
        %v5625 = vadd.f32 0.0, %v5624
        %v5626 = vpop.f32.mrf.mxu0
        %5627 = vmatprep.mubr.f32.mxu0 %v281
        %5628 = vmatmul.mubr.f32.gmra.mxu0 %v280
        %v5629 = vpop.f32.mrf.mxu0
        %v5630 = vadd.f32 0.0, %v5629
        %v5631 = vpop.f32.mrf.mxu0
        %5632 = vmatprep.mubr.f32.mxu0 %v283
        %5633 = vmatmul.mubr.f32.gmra.mxu0 %v282
        %v5634 = vpop.f32.mrf.mxu0
        %v5635 = vadd.f32 0.0, %v5634
        %v5636 = vpop.f32.mrf.mxu0
        %5637 = vmatprep.mubr.f32.mxu0 %v285
        %5638 = vmatmul.mubr.f32.gmra.mxu0 %v284
        %v5639 = vpop.f32.mrf.mxu0
        %v5640 = vadd.f32 0.0, %v5639
        %v5641 = vpop.f32.mrf.mxu0
        %5642 = vmatprep.mubr.f32.mxu0 %v287
        %5643 = vmatmul.mubr.f32.gmra.mxu0 %v286
        %v5644 = vpop.f32.mrf.mxu0
        %v5645 = vadd.f32 0.0, %v5644
        %v5646 = vpop.f32.mrf.mxu0
        %5647 = vmatprep.mubr.f32.mxu0 %v289
        %5648 = vmatmul.mubr.f32.gmra.mxu0 %v288
        %v5649 = vpop.f32.mrf.mxu0
        %v5650 = vadd.f32 0.0, %v5649
        %v5651 = vpop.f32.mrf.mxu0
        %5652 = vmatprep.mubr.f32.mxu0 %v291
        %5653 = vmatmul.mubr.f32.gmra.mxu0 %v290
        %v5654 = vpop.f32.mrf.mxu0
        %v5655 = vadd.f32 0.0, %v5654
        %v5656 = vpop.f32.mrf.mxu0
        %5657 = vmatprep.mubr.f32.mxu0 %v293
        %5658 = vmatmul.mubr.f32.gmra.mxu0 %v292
        %v5659 = vpop.f32.mrf.mxu0
        %v5660 = vadd.f32 0.0, %v5659
        %v5661 = vpop.f32.mrf.mxu0
        %5662 = vmatprep.mubr.f32.mxu0 %v295
        %5663 = vmatmul.mubr.f32.gmra.mxu0 %v294
        %v5664 = vpop.f32.mrf.mxu0
        %v5665 = vadd.f32 0.0, %v5664
        %v5666 = vpop.f32.mrf.mxu0
        %5667 = vmatprep.mubr.f32.mxu0 %v297
        %5668 = vmatmul.mubr.f32.gmra.mxu0 %v296
        %v5669 = vpop.f32.mrf.mxu0
        %v5670 = vadd.f32 0.0, %v5669
        %v5671 = vpop.f32.mrf.mxu0
        %5672 = vmatprep.mubr.f32.mxu0 %v299
        %5673 = vmatmul.mubr.f32.gmra.mxu0 %v298
        %v5674 = vpop.f32.mrf.mxu0
        %v5675 = vadd.f32 0.0, %v5674
        %v5676 = vpop.f32.mrf.mxu0
        %5677 = vmatprep.mubr.f32.mxu0 %v301
        %5678 = vmatmul.mubr.f32.gmra.mxu0 %v300
        %v5679 = vpop.f32.mrf.mxu0
        %v5680 = vadd.f32 0.0, %v5679
        %v5681 = vpop.f32.mrf.mxu0
        %5682 = vmatprep.mubr.f32.mxu0 %v303
        %5683 = vmatmul.mubr.f32.gmra.mxu0 %v302
        %v5684 = vpop.f32.mrf.mxu0
        %v5685 = vadd.f32 0.0, %v5684
        %v5686 = vpop.f32.mrf.mxu0
        %5687 = vmatprep.mubr.f32.mxu0 %v305
        %5688 = vmatmul.mubr.f32.gmra.mxu0 %v304
        %v5689 = vpop.f32.mrf.mxu0
        %v5690 = vadd.f32 0.0, %v5689
        %v5691 = vpop.f32.mrf.mxu0
        %5692 = vmatprep.mubr.f32.mxu0 %v307
        %5693 = vmatmul.mubr.f32.gmra.mxu0 %v306
        %v5694 = vpop.f32.mrf.mxu0
        %v5695 = vadd.f32 0.0, %v5694
        %v5696 = vpop.f32.mrf.mxu0
        %5697 = vmatprep.mubr.f32.mxu0 %v309
        %5698 = vmatmul.mubr.f32.gmra.mxu0 %v308
        %v5699 = vpop.f32.mrf.mxu0
        %v5700 = vadd.f32 0.0, %v5699
        %v5701 = vpop.f32.mrf.mxu0
        %5702 = vmatprep.mubr.f32.mxu0 %v311
        %5703 = vmatmul.mubr.f32.gmra.mxu0 %v310
        %v5704 = vpop.f32.mrf.mxu0
        %v5705 = vadd.f32 0.0, %v5704
        %v5706 = vpop.f32.mrf.mxu0
        %5707 = vmatprep.mubr.f32.mxu0 %v313
        %5708 = vmatmul.mubr.f32.gmra.mxu0 %v312
        %v5709 = vpop.f32.mrf.mxu0
        %v5710 = vadd.f32 0.0, %v5709
        %v5711 = vpop.f32.mrf.mxu0
        %5712 = vdwg.mxu0
        %v5714 = vsel %vm1117, %v5165, 0
        %v5717 = vsel %vm1117, %v5166, 0
        %v5720 = vsel %vm1117, %v5167, 0
        %v5723 = vsel %vm1117, %v5168, 0
        %v5726 = vsel %vm1117, %v5169, 0
        %v5729 = vsel %vm1117, %v5170, 0
        %v5732 = vsel %vm1117, %v5171, 0
        %v5735 = vsel %vm1117, %v5172, 0
        %v5738 = vsel %vm1117, %v5173, 0
        %v5741 = vsel %vm1117, %v5174, 0
        %v5744 = vsel %vm1117, %v5175, 0
        %v5747 = vsel %vm1117, %v5176, 0
        %v5750 = vsel %vm1117, %v5177, 0
        %v5753 = vsel %vm1117, %v5178, 0
        %v5756 = vsel %vm1117, %v5179, 0
        %v5759 = vsel %vm1117, %v5180, 0
        %v5762 = vsel %vm1117, %v5181, 0
        %v5765 = vsel %vm1117, %v5182, 0
        %v5768 = vsel %vm1117, %v5183, 0
        %v5771 = vsel %vm1117, %v5184, 0
        %v5774 = vsel %vm1117, %v5185, 0
        %v5777 = vsel %vm1117, %v5186, 0
        %v5780 = vsel %vm1117, %v5187, 0
        %v5783 = vsel %vm1117, %v5188, 0
        %v5786 = vsel %vm1117, %v5189, 0
        %v5789 = vsel %vm1117, %v5190, 0
        %v5792 = vsel %vm1117, %v5191, 0
        %v5795 = vsel %vm1117, %v5192, 0
        %v5798 = vsel %vm1117, %v5193, 0
        %v5801 = vsel %vm1117, %v5194, 0
        %v5804 = vsel %vm1117, %v5195, 0
        %v5807 = vsel %vm1117, %v5196, 0
        %v5810 = vsel %vm1117, %v5297, 0
        %v5813 = vsel %vm1117, %v5302, 0
        %v5816 = vsel %vm1117, %v5307, 0
        %v5819 = vsel %vm1117, %v5312, 0
        %v5822 = vsel %vm1117, %v5317, 0
        %v5825 = vsel %vm1117, %v5322, 0
        %v5828 = vsel %vm1117, %v5327, 0
        %v5831 = vsel %vm1117, %v5332, 0
        %v5834 = vsel %vm1117, %v5337, 0
        %v5837 = vsel %vm1117, %v5342, 0
        %v5840 = vsel %vm1117, %v5347, 0
        %v5843 = vsel %vm1117, %v5352, 0
        %v5846 = vsel %vm1117, %v5357, 0
        %v5849 = vsel %vm1117, %v5362, 0
        %v5852 = vsel %vm1117, %v5367, 0
        %v5855 = vsel %vm1117, %v5372, 0
        %v5858 = vsel %vm1117, %v5377, 0
        %v5861 = vsel %vm1117, %v5382, 0
        %v5864 = vsel %vm1117, %v5387, 0
        %v5867 = vsel %vm1117, %v5392, 0
        %v5870 = vsel %vm1117, %v5397, 0
        %v5873 = vsel %vm1117, %v5402, 0
        %v5876 = vsel %vm1117, %v5407, 0
        %v5879 = vsel %vm1117, %v5412, 0
        %v5882 = vsel %vm1117, %v5417, 0
        %v5885 = vsel %vm1117, %v5422, 0
        %v5888 = vsel %vm1117, %v5427, 0
        %v5891 = vsel %vm1117, %v5432, 0
        %v5894 = vsel %vm1117, %v5437, 0
        %v5897 = vsel %vm1117, %v5442, 0
        %v5900 = vsel %vm1117, %v5447, 0
        %v5903 = vsel %vm1117, %v5452, 0
        %5905 = vmatprep.subr.mxu0 0.0
        %5906 = vmatpush1.xpose.msra.mxu0 %v5855
        %5907 = vmatprep.subr.mxu0 0.0
        %5908 = vmatpush1.xpose.msra.mxu0 %v5852
        %5909 = vmatprep.subr.mxu0 0.0
        %5910 = vmatpush1.xpose.msra.mxu0 %v5849
        %5911 = vmatprep.subr.mxu0 0.0
        %5912 = vmatpush1.xpose.msra.mxu0 %v5846
        %5913 = vmatprep.subr.mxu0 0.0
        %5914 = vmatpush1.xpose.msra.mxu0 %v5843
        %5915 = vmatprep.subr.mxu0 0.0
        %5916 = vmatpush1.xpose.msra.mxu0 %v5840
        %5917 = vmatprep.subr.mxu0 0.0
        %5918 = vmatpush1.xpose.msra.mxu0 %v5837
        %5919 = vmatprep.subr.mxu0 0.0
        %5920 = vmatpush1.xpose.msra.mxu0 %v5834
        %5921 = vmatprep.subr.mxu0 0.0
        %5922 = vmatpush1.xpose.msra.mxu0 %v5831
        %5923 = vmatprep.subr.mxu0 0.0
        %5924 = vmatpush1.xpose.msra.mxu0 %v5828
        %5925 = vmatprep.subr.mxu0 0.0
        %5926 = vmatpush1.xpose.msra.mxu0 %v5825
        %5927 = vmatprep.subr.mxu0 0.0
        %5928 = vmatpush1.xpose.msra.mxu0 %v5822
        %5929 = vmatprep.subr.mxu0 0.0
        %5930 = vmatpush1.xpose.msra.mxu0 %v5819
        %5931 = vmatprep.subr.mxu0 0.0
        %5932 = vmatpush1.xpose.msra.mxu0 %v5816
        %5933 = vmatprep.subr.mxu0 0.0
        %5934 = vmatpush1.xpose.msra.mxu0 %v5813
        %5935 = vmatprep.subr.mxu0 0.0
        %5936 = vmatpush1.xpose.msra.mxu0 %v5810
        %5937 = vmatprep.subr.mxu0 0.0
        %5938 = vmatpush2.xpose.msra.mxu0 %v5903
        %5939 = vmatprep.subr.mxu0 0.0
        %5940 = vmatpush2.xpose.msra.mxu0 %v5900
        %5941 = vmatprep.subr.mxu0 0.0
        %5942 = vmatpush2.xpose.msra.mxu0 %v5897
        %5943 = vmatprep.subr.mxu0 0.0
        %5944 = vmatpush2.xpose.msra.mxu0 %v5894
        %5945 = vmatprep.subr.mxu0 0.0
        %5946 = vmatpush2.xpose.msra.mxu0 %v5891
        %5947 = vmatprep.subr.mxu0 0.0
        %5948 = vmatpush2.xpose.msra.mxu0 %v5888
        %5949 = vmatprep.subr.mxu0 0.0
        %5950 = vmatpush2.xpose.msra.mxu0 %v5885
        %5951 = vmatprep.subr.mxu0 0.0
        %5952 = vmatpush2.xpose.msra.mxu0 %v5882
        %5953 = vmatprep.subr.mxu0 0.0
        %5954 = vmatpush2.xpose.msra.mxu0 %v5879
        %5955 = vmatprep.subr.mxu0 0.0
        %5956 = vmatpush2.xpose.msra.mxu0 %v5876
        %5957 = vmatprep.subr.mxu0 0.0
        %5958 = vmatpush2.xpose.msra.mxu0 %v5873
        %5959 = vmatprep.subr.mxu0 0.0
        %5960 = vmatpush2.xpose.msra.mxu0 %v5870
        %5961 = vmatprep.subr.mxu0 0.0
        %5962 = vmatpush2.xpose.msra.mxu0 %v5867
        %5963 = vmatprep.subr.mxu0 0.0
        %5964 = vmatpush2.xpose.msra.mxu0 %v5864
        %5965 = vmatprep.subr.mxu0 0.0
        %5966 = vmatpush2.xpose.msra.mxu0 %v5861
        %5967 = vmatprep.subr.mxu0 0.0
        %5968 = vmatpush2.xpose.msra.mxu0 %v5858
        %5969 = vmatprep.mubr.f32.mxu0 0.0
        %5970 = vmatmul.mubr.f32.gmra.mxu0 %v5714
        %v5971 = vpop.f32.mrf.mxu0
        %v5972 = vadd.f32 0.0, %v5971
        %v5973 = vpop.f32.mrf.mxu0
        %v5974 = vadd.f32 0.0, %v5973
        %5975 = vmatprep.mubr.f32.mxu0 0.0
        %5976 = vmatmul.mubr.f32.gmra.mxu0 %v5717
        %v5977 = vpop.f32.mrf.mxu0
        %v5978 = vadd.f32 0.0, %v5977
        %v5979 = vpop.f32.mrf.mxu0
        %v5980 = vadd.f32 0.0, %v5979
        %5981 = vmatprep.mubr.f32.mxu0 0.0
        %5982 = vmatmul.mubr.f32.gmra.mxu0 %v5720
        %v5983 = vpop.f32.mrf.mxu0
        %v5984 = vadd.f32 0.0, %v5983
        %v5985 = vpop.f32.mrf.mxu0
        %v5986 = vadd.f32 0.0, %v5985
        %5987 = vmatprep.mubr.f32.mxu0 0.0
        %5988 = vmatmul.mubr.f32.gmra.mxu0 %v5723
        %v5989 = vpop.f32.mrf.mxu0
        %v5990 = vadd.f32 0.0, %v5989
        %v5991 = vpop.f32.mrf.mxu0
        %v5992 = vadd.f32 0.0, %v5991
        %5993 = vmatprep.mubr.f32.mxu0 0.0
        %5994 = vmatmul.mubr.f32.gmra.mxu0 %v5726
        %v5995 = vpop.f32.mrf.mxu0
        %v5996 = vadd.f32 0.0, %v5995
        %v5997 = vpop.f32.mrf.mxu0
        %v5998 = vadd.f32 0.0, %v5997
        %5999 = vmatprep.mubr.f32.mxu0 0.0
        %6000 = vmatmul.mubr.f32.gmra.mxu0 %v5729
        %v6001 = vpop.f32.mrf.mxu0
        %v6002 = vadd.f32 0.0, %v6001
        %v6003 = vpop.f32.mrf.mxu0
        %v6004 = vadd.f32 0.0, %v6003
        %6005 = vmatprep.mubr.f32.mxu0 0.0
        %6006 = vmatmul.mubr.f32.gmra.mxu0 %v5732
        %v6007 = vpop.f32.mrf.mxu0
        %v6008 = vadd.f32 0.0, %v6007
        %v6009 = vpop.f32.mrf.mxu0
        %v6010 = vadd.f32 0.0, %v6009
        %6011 = vmatprep.mubr.f32.mxu0 0.0
        %6012 = vmatmul.mubr.f32.gmra.mxu0 %v5735
        %v6013 = vpop.f32.mrf.mxu0
        %v6014 = vadd.f32 0.0, %v6013
        %v6015 = vpop.f32.mrf.mxu0
        %v6016 = vadd.f32 0.0, %v6015
        %6017 = vmatprep.mubr.f32.mxu0 0.0
        %6018 = vmatmul.mubr.f32.gmra.mxu0 %v5738
        %v6019 = vpop.f32.mrf.mxu0
        %v6020 = vadd.f32 0.0, %v6019
        %v6021 = vpop.f32.mrf.mxu0
        %v6022 = vadd.f32 0.0, %v6021
        %6023 = vmatprep.mubr.f32.mxu0 0.0
        %6024 = vmatmul.mubr.f32.gmra.mxu0 %v5741
        %v6025 = vpop.f32.mrf.mxu0
        %v6026 = vadd.f32 0.0, %v6025
        %v6027 = vpop.f32.mrf.mxu0
        %v6028 = vadd.f32 0.0, %v6027
        %6029 = vmatprep.mubr.f32.mxu0 0.0
        %6030 = vmatmul.mubr.f32.gmra.mxu0 %v5744
        %v6031 = vpop.f32.mrf.mxu0
        %v6032 = vadd.f32 0.0, %v6031
        %v6033 = vpop.f32.mrf.mxu0
        %v6034 = vadd.f32 0.0, %v6033
        %6035 = vmatprep.mubr.f32.mxu0 0.0
        %6036 = vmatmul.mubr.f32.gmra.mxu0 %v5747
        %v6037 = vpop.f32.mrf.mxu0
        %v6038 = vadd.f32 0.0, %v6037
        %v6039 = vpop.f32.mrf.mxu0
        %v6040 = vadd.f32 0.0, %v6039
        %6041 = vmatprep.mubr.f32.mxu0 0.0
        %6042 = vmatmul.mubr.f32.gmra.mxu0 %v5750
        %v6043 = vpop.f32.mrf.mxu0
        %v6044 = vadd.f32 0.0, %v6043
        %v6045 = vpop.f32.mrf.mxu0
        %v6046 = vadd.f32 0.0, %v6045
        %6047 = vmatprep.mubr.f32.mxu0 0.0
        %6048 = vmatmul.mubr.f32.gmra.mxu0 %v5753
        %v6049 = vpop.f32.mrf.mxu0
        %v6050 = vadd.f32 0.0, %v6049
        %v6051 = vpop.f32.mrf.mxu0
        %v6052 = vadd.f32 0.0, %v6051
        %6053 = vmatprep.mubr.f32.mxu0 0.0
        %6054 = vmatmul.mubr.f32.gmra.mxu0 %v5756
        %v6055 = vpop.f32.mrf.mxu0
        %v6056 = vadd.f32 0.0, %v6055
        %v6057 = vpop.f32.mrf.mxu0
        %v6058 = vadd.f32 0.0, %v6057
        %6059 = vmatprep.mubr.f32.mxu0 0.0
        %6060 = vmatmul.mubr.f32.gmra.mxu0 %v5759
        %v6061 = vpop.f32.mrf.mxu0
        %v6062 = vadd.f32 0.0, %v6061
        %v6063 = vpop.f32.mrf.mxu0
        %v6064 = vadd.f32 0.0, %v6063
        %6065 = vmatprep.mubr.f32.mxu0 0.0
        %6066 = vmatmul.mubr.f32.gmra.mxu0 %v5762
        %v6067 = vpop.f32.mrf.mxu0
        %v6068 = vadd.f32 0.0, %v6067
        %v6069 = vpop.f32.mrf.mxu0
        %v6070 = vadd.f32 0.0, %v6069
        %6071 = vmatprep.mubr.f32.mxu0 0.0
        %6072 = vmatmul.mubr.f32.gmra.mxu0 %v5765
        %v6073 = vpop.f32.mrf.mxu0
        %v6074 = vadd.f32 0.0, %v6073
        %v6075 = vpop.f32.mrf.mxu0
        %v6076 = vadd.f32 0.0, %v6075
        %6077 = vmatprep.mubr.f32.mxu0 0.0
        %6078 = vmatmul.mubr.f32.gmra.mxu0 %v5768
        %v6079 = vpop.f32.mrf.mxu0
        %v6080 = vadd.f32 0.0, %v6079
        %v6081 = vpop.f32.mrf.mxu0
        %v6082 = vadd.f32 0.0, %v6081
        %6083 = vmatprep.mubr.f32.mxu0 0.0
        %6084 = vmatmul.mubr.f32.gmra.mxu0 %v5771
        %v6085 = vpop.f32.mrf.mxu0
        %v6086 = vadd.f32 0.0, %v6085
        %v6087 = vpop.f32.mrf.mxu0
        %v6088 = vadd.f32 0.0, %v6087
        %6089 = vmatprep.mubr.f32.mxu0 0.0
        %6090 = vmatmul.mubr.f32.gmra.mxu0 %v5774
        %v6091 = vpop.f32.mrf.mxu0
        %v6092 = vadd.f32 0.0, %v6091
        %v6093 = vpop.f32.mrf.mxu0
        %v6094 = vadd.f32 0.0, %v6093
        %6095 = vmatprep.mubr.f32.mxu0 0.0
        %6096 = vmatmul.mubr.f32.gmra.mxu0 %v5777
        %v6097 = vpop.f32.mrf.mxu0
        %v6098 = vadd.f32 0.0, %v6097
        %v6099 = vpop.f32.mrf.mxu0
        %v6100 = vadd.f32 0.0, %v6099
        %6101 = vmatprep.mubr.f32.mxu0 0.0
        %6102 = vmatmul.mubr.f32.gmra.mxu0 %v5780
        %v6103 = vpop.f32.mrf.mxu0
        %v6104 = vadd.f32 0.0, %v6103
        %v6105 = vpop.f32.mrf.mxu0
        %v6106 = vadd.f32 0.0, %v6105
        %6107 = vmatprep.mubr.f32.mxu0 0.0
        %6108 = vmatmul.mubr.f32.gmra.mxu0 %v5783
        %v6109 = vpop.f32.mrf.mxu0
        %v6110 = vadd.f32 0.0, %v6109
        %v6111 = vpop.f32.mrf.mxu0
        %v6112 = vadd.f32 0.0, %v6111
        %6113 = vmatprep.mubr.f32.mxu0 0.0
        %6114 = vmatmul.mubr.f32.gmra.mxu0 %v5786
        %v6115 = vpop.f32.mrf.mxu0
        %v6116 = vadd.f32 0.0, %v6115
        %v6117 = vpop.f32.mrf.mxu0
        %v6118 = vadd.f32 0.0, %v6117
        %6119 = vmatprep.mubr.f32.mxu0 0.0
        %6120 = vmatmul.mubr.f32.gmra.mxu0 %v5789
        %v6121 = vpop.f32.mrf.mxu0
        %v6122 = vadd.f32 0.0, %v6121
        %v6123 = vpop.f32.mrf.mxu0
        %v6124 = vadd.f32 0.0, %v6123
        %6125 = vmatprep.mubr.f32.mxu0 0.0
        %6126 = vmatmul.mubr.f32.gmra.mxu0 %v5792
        %v6127 = vpop.f32.mrf.mxu0
        %v6128 = vadd.f32 0.0, %v6127
        %v6129 = vpop.f32.mrf.mxu0
        %v6130 = vadd.f32 0.0, %v6129
        %6131 = vmatprep.mubr.f32.mxu0 0.0
        %6132 = vmatmul.mubr.f32.gmra.mxu0 %v5795
        %v6133 = vpop.f32.mrf.mxu0
        %v6134 = vadd.f32 0.0, %v6133
        %v6135 = vpop.f32.mrf.mxu0
        %v6136 = vadd.f32 0.0, %v6135
        %6137 = vmatprep.mubr.f32.mxu0 0.0
        %6138 = vmatmul.mubr.f32.gmra.mxu0 %v5798
        %v6139 = vpop.f32.mrf.mxu0
        %v6140 = vadd.f32 0.0, %v6139
        %v6141 = vpop.f32.mrf.mxu0
        %v6142 = vadd.f32 0.0, %v6141
        %6143 = vmatprep.mubr.f32.mxu0 0.0
        %6144 = vmatmul.mubr.f32.gmra.mxu0 %v5801
        %v6145 = vpop.f32.mrf.mxu0
        %v6146 = vadd.f32 0.0, %v6145
        %v6147 = vpop.f32.mrf.mxu0
        %v6148 = vadd.f32 0.0, %v6147
        %6149 = vmatprep.mubr.f32.mxu0 0.0
        %6150 = vmatmul.mubr.f32.gmra.mxu0 %v5804
        %v6151 = vpop.f32.mrf.mxu0
        %v6152 = vadd.f32 0.0, %v6151
        %v6153 = vpop.f32.mrf.mxu0
        %v6154 = vadd.f32 0.0, %v6153
        %6155 = vmatprep.mubr.f32.mxu0 0.0
        %6156 = vmatmul.mubr.f32.gmra.mxu0 %v5807
        %v6157 = vpop.f32.mrf.mxu0
        %v6158 = vadd.f32 0.0, %v6157
        %v6159 = vpop.f32.mrf.mxu0
        %v6160 = vadd.f32 0.0, %v6159
        %6161 = vdwg.mxu0
        %v6162 = vmax.f32 %v5972, %v5974
        %6163 = vmax.xlane.f32.xlu0 %v6162
        %v6164 = vpop.xlane.xlu0 %6163
        %v6165 = vmax.f32 %v5978, %v5980
        %6166 = vmax.xlane.f32.xlu0 %v6165
        %v6167 = vpop.xlane.xlu0 %6166
        %v6168 = vmax.f32 %v5984, %v5986
        %6169 = vmax.xlane.f32.xlu0 %v6168
        %v6170 = vpop.xlane.xlu0 %6169
        %v6171 = vmax.f32 %v5990, %v5992
        %6172 = vmax.xlane.f32.xlu0 %v6171
        %v6173 = vpop.xlane.xlu0 %6172
        %v6174 = vmax.f32 %v5996, %v5998
        %6175 = vmax.xlane.f32.xlu0 %v6174
        %v6176 = vpop.xlane.xlu0 %6175
        %v6177 = vmax.f32 %v6002, %v6004
        %6178 = vmax.xlane.f32.xlu0 %v6177
        %v6179 = vpop.xlane.xlu0 %6178
        %v6180 = vmax.f32 %v6008, %v6010
        %6181 = vmax.xlane.f32.xlu0 %v6180
        %v6182 = vpop.xlane.xlu0 %6181
        %v6183 = vmax.f32 %v6014, %v6016
        %6184 = vmax.xlane.f32.xlu0 %v6183
        %v6185 = vpop.xlane.xlu0 %6184
        %v6186 = vmax.f32 %v6020, %v6022
        %6187 = vmax.xlane.f32.xlu0 %v6186
        %v6188 = vpop.xlane.xlu0 %6187
        %v6189 = vmax.f32 %v6026, %v6028
        %6190 = vmax.xlane.f32.xlu0 %v6189
        %v6191 = vpop.xlane.xlu0 %6190
        %v6192 = vmax.f32 %v6032, %v6034
        %6193 = vmax.xlane.f32.xlu0 %v6192
        %v6194 = vpop.xlane.xlu0 %6193
        %v6195 = vmax.f32 %v6038, %v6040
        %6196 = vmax.xlane.f32.xlu0 %v6195
        %v6197 = vpop.xlane.xlu0 %6196
        %v6198 = vmax.f32 %v6044, %v6046
        %6199 = vmax.xlane.f32.xlu0 %v6198
        %v6200 = vpop.xlane.xlu0 %6199
        %v6201 = vmax.f32 %v6050, %v6052
        %6202 = vmax.xlane.f32.xlu0 %v6201
        %v6203 = vpop.xlane.xlu0 %6202
        %v6204 = vmax.f32 %v6056, %v6058
        %6205 = vmax.xlane.f32.xlu0 %v6204
        %v6206 = vpop.xlane.xlu0 %6205
        %v6207 = vmax.f32 %v6062, %v6064
        %6208 = vmax.xlane.f32.xlu0 %v6207
        %v6209 = vpop.xlane.xlu0 %6208
        %v6210 = vmax.f32 %v6068, %v6070
        %6211 = vmax.xlane.f32.xlu0 %v6210
        %v6212 = vpop.xlane.xlu0 %6211
        %v6213 = vmax.f32 %v6074, %v6076
        %6214 = vmax.xlane.f32.xlu0 %v6213
        %v6215 = vpop.xlane.xlu0 %6214
        %v6216 = vmax.f32 %v6080, %v6082
        %6217 = vmax.xlane.f32.xlu0 %v6216
        %v6218 = vpop.xlane.xlu0 %6217
        %v6219 = vmax.f32 %v6086, %v6088
        %6220 = vmax.xlane.f32.xlu0 %v6219
        %v6221 = vpop.xlane.xlu0 %6220
        %v6222 = vmax.f32 %v6092, %v6094
        %6223 = vmax.xlane.f32.xlu0 %v6222
        %v6224 = vpop.xlane.xlu0 %6223
        %v6225 = vmax.f32 %v6098, %v6100
        %6226 = vmax.xlane.f32.xlu0 %v6225
        %v6227 = vpop.xlane.xlu0 %6226
        %v6228 = vmax.f32 %v6104, %v6106
        %6229 = vmax.xlane.f32.xlu0 %v6228
        %v6230 = vpop.xlane.xlu0 %6229
        %v6231 = vmax.f32 %v6110, %v6112
        %6232 = vmax.xlane.f32.xlu0 %v6231
        %v6233 = vpop.xlane.xlu0 %6232
        %v6234 = vmax.f32 %v6116, %v6118
        %6235 = vmax.xlane.f32.xlu0 %v6234
        %v6236 = vpop.xlane.xlu0 %6235
        %v6237 = vmax.f32 %v6122, %v6124
        %6238 = vmax.xlane.f32.xlu0 %v6237
        %v6239 = vpop.xlane.xlu0 %6238
        %v6240 = vmax.f32 %v6128, %v6130
        %6241 = vmax.xlane.f32.xlu0 %v6240
        %v6242 = vpop.xlane.xlu0 %6241
        %v6243 = vmax.f32 %v6134, %v6136
        %6244 = vmax.xlane.f32.xlu0 %v6243
        %v6245 = vpop.xlane.xlu0 %6244
        %v6246 = vmax.f32 %v6140, %v6142
        %6247 = vmax.xlane.f32.xlu0 %v6246
        %v6248 = vpop.xlane.xlu0 %6247
        %v6249 = vmax.f32 %v6146, %v6148
        %6250 = vmax.xlane.f32.xlu0 %v6249
        %v6251 = vpop.xlane.xlu0 %6250
        %v6252 = vmax.f32 %v6152, %v6154
        %6253 = vmax.xlane.f32.xlu0 %v6252
        %v6254 = vpop.xlane.xlu0 %6253
        %v6255 = vmax.f32 %v6158, %v6160
        %6256 = vmax.xlane.f32.xlu0 %v6255
        %v6257 = vpop.xlane.xlu0 %6256
        %v6258 = vsub.f32 %v5972, %v6164
        %v6259 = vsub.f32 %v5974, %v6164
        %v6260 = vsub.f32 %v5978, %v6167
        %v6261 = vsub.f32 %v5980, %v6167
        %v6262 = vsub.f32 %v5984, %v6170
        %v6263 = vsub.f32 %v5986, %v6170
        %v6264 = vsub.f32 %v5990, %v6173
        %v6265 = vsub.f32 %v5992, %v6173
        %v6266 = vsub.f32 %v5996, %v6176
        %v6267 = vsub.f32 %v5998, %v6176
        %v6268 = vsub.f32 %v6002, %v6179
        %v6269 = vsub.f32 %v6004, %v6179
        %v6270 = vsub.f32 %v6008, %v6182
        %v6271 = vsub.f32 %v6010, %v6182
        %v6272 = vsub.f32 %v6014, %v6185
        %v6273 = vsub.f32 %v6016, %v6185
        %v6274 = vsub.f32 %v6020, %v6188
        %v6275 = vsub.f32 %v6022, %v6188
        %v6276 = vsub.f32 %v6026, %v6191
        %v6277 = vsub.f32 %v6028, %v6191
        %v6278 = vsub.f32 %v6032, %v6194
        %v6279 = vsub.f32 %v6034, %v6194
        %v6280 = vsub.f32 %v6038, %v6197
        %v6281 = vsub.f32 %v6040, %v6197
        %v6282 = vsub.f32 %v6044, %v6200
        %v6283 = vsub.f32 %v6046, %v6200
        %v6284 = vsub.f32 %v6050, %v6203
        %v6285 = vsub.f32 %v6052, %v6203
        %v6286 = vsub.f32 %v6056, %v6206
        %v6287 = vsub.f32 %v6058, %v6206
        %v6288 = vsub.f32 %v6062, %v6209
        %v6289 = vsub.f32 %v6064, %v6209
        %v6290 = vsub.f32 %v6068, %v6212
        %v6291 = vsub.f32 %v6070, %v6212
        %v6292 = vsub.f32 %v6074, %v6215
        %v6293 = vsub.f32 %v6076, %v6215
        %v6294 = vsub.f32 %v6080, %v6218
        %v6295 = vsub.f32 %v6082, %v6218
        %v6296 = vsub.f32 %v6086, %v6221
        %v6297 = vsub.f32 %v6088, %v6221
        %v6298 = vsub.f32 %v6092, %v6224
        %v6299 = vsub.f32 %v6094, %v6224
        %v6300 = vsub.f32 %v6098, %v6227
        %v6301 = vsub.f32 %v6100, %v6227
        %v6302 = vsub.f32 %v6104, %v6230
        %v6303 = vsub.f32 %v6106, %v6230
        %v6304 = vsub.f32 %v6110, %v6233
        %v6305 = vsub.f32 %v6112, %v6233
        %v6306 = vsub.f32 %v6116, %v6236
        %v6307 = vsub.f32 %v6118, %v6236
        %v6308 = vsub.f32 %v6122, %v6239
        %v6309 = vsub.f32 %v6124, %v6239
        %v6310 = vsub.f32 %v6128, %v6242
        %v6311 = vsub.f32 %v6130, %v6242
        %v6312 = vsub.f32 %v6134, %v6245
        %v6313 = vsub.f32 %v6136, %v6245
        %v6314 = vsub.f32 %v6140, %v6248
        %v6315 = vsub.f32 %v6142, %v6248
        %v6316 = vsub.f32 %v6146, %v6251
        %v6317 = vsub.f32 %v6148, %v6251
        %v6318 = vsub.f32 %v6152, %v6254
        %v6319 = vsub.f32 %v6154, %v6254
        %v6320 = vsub.f32 %v6158, %v6257
        %v6321 = vsub.f32 %v6160, %v6257
        %v6322 = vmul.f32 %v6258, 1.442695
        %v6323 = vpow.pop %v6322
        %v6324 = vmul.f32 %v6259, 1.442695
        %v6325 = vpow.pop %v6324
        %v6326 = vmul.f32 %v6260, 1.442695
        %v6327 = vpow.pop %v6326
        %v6328 = vmul.f32 %v6261, 1.442695
        %v6329 = vpow.pop %v6328
        %v6330 = vmul.f32 %v6262, 1.442695
        %v6331 = vpow.pop %v6330
        %v6332 = vmul.f32 %v6263, 1.442695
        %v6333 = vpow.pop %v6332
        %v6334 = vmul.f32 %v6264, 1.442695
        %v6335 = vpow.pop %v6334
        %v6336 = vmul.f32 %v6265, 1.442695
        %v6337 = vpow.pop %v6336
        %v6338 = vmul.f32 %v6266, 1.442695
        %v6339 = vpow.pop %v6338
        %v6340 = vmul.f32 %v6267, 1.442695
        %v6341 = vpow.pop %v6340
        %v6342 = vmul.f32 %v6268, 1.442695
        %v6343 = vpow.pop %v6342
        %v6344 = vmul.f32 %v6269, 1.442695
        %v6345 = vpow.pop %v6344
        %v6346 = vmul.f32 %v6270, 1.442695
        %v6347 = vpow.pop %v6346
        %v6348 = vmul.f32 %v6271, 1.442695
        %v6349 = vpow.pop %v6348
        %v6350 = vmul.f32 %v6272, 1.442695
        %v6351 = vpow.pop %v6350
        %v6352 = vmul.f32 %v6273, 1.442695
        %v6353 = vpow.pop %v6352
        %v6354 = vmul.f32 %v6274, 1.442695
        %v6355 = vpow.pop %v6354
        %v6356 = vmul.f32 %v6275, 1.442695
        %v6357 = vpow.pop %v6356
        %v6358 = vmul.f32 %v6276, 1.442695
        %v6359 = vpow.pop %v6358
        %v6360 = vmul.f32 %v6277, 1.442695
        %v6361 = vpow.pop %v6360
        %v6362 = vmul.f32 %v6278, 1.442695
        %v6363 = vpow.pop %v6362
        %v6364 = vmul.f32 %v6279, 1.442695
        %v6365 = vpow.pop %v6364
        %v6366 = vmul.f32 %v6280, 1.442695
        %v6367 = vpow.pop %v6366
        %v6368 = vmul.f32 %v6281, 1.442695
        %v6369 = vpow.pop %v6368
        %v6370 = vmul.f32 %v6282, 1.442695
        %v6371 = vpow.pop %v6370
        %v6372 = vmul.f32 %v6283, 1.442695
        %v6373 = vpow.pop %v6372
        %v6374 = vmul.f32 %v6284, 1.442695
        %v6375 = vpow.pop %v6374
        %v6376 = vmul.f32 %v6285, 1.442695
        %v6377 = vpow.pop %v6376
        %v6378 = vmul.f32 %v6286, 1.442695
        %v6379 = vpow.pop %v6378
        %v6380 = vmul.f32 %v6287, 1.442695
        %v6381 = vpow.pop %v6380
        %v6382 = vmul.f32 %v6288, 1.442695
        %v6383 = vpow.pop %v6382
        %v6384 = vmul.f32 %v6289, 1.442695
        %v6385 = vpow.pop %v6384
        %v6386 = vmul.f32 %v6290, 1.442695
        %v6387 = vpow.pop %v6386
        %v6388 = vmul.f32 %v6291, 1.442695
        %v6389 = vpow.pop %v6388
        %v6390 = vmul.f32 %v6292, 1.442695
        %v6391 = vpow.pop %v6390
        %v6392 = vmul.f32 %v6293, 1.442695
        %v6393 = vpow.pop %v6392
        %v6394 = vmul.f32 %v6294, 1.442695
        %v6395 = vpow.pop %v6394
        %v6396 = vmul.f32 %v6295, 1.442695
        %v6397 = vpow.pop %v6396
        %v6398 = vmul.f32 %v6296, 1.442695
        %v6399 = vpow.pop %v6398
        %v6400 = vmul.f32 %v6297, 1.442695
        %v6401 = vpow.pop %v6400
        %v6402 = vmul.f32 %v6298, 1.442695
        %v6403 = vpow.pop %v6402
        %v6404 = vmul.f32 %v6299, 1.442695
        %v6405 = vpow.pop %v6404
        %v6406 = vmul.f32 %v6300, 1.442695
        %v6407 = vpow.pop %v6406
        %v6408 = vmul.f32 %v6301, 1.442695
        %v6409 = vpow.pop %v6408
        %v6410 = vmul.f32 %v6302, 1.442695
        %v6411 = vpow.pop %v6410
        %v6412 = vmul.f32 %v6303, 1.442695
        %v6413 = vpow.pop %v6412
        %v6414 = vmul.f32 %v6304, 1.442695
        %v6415 = vpow.pop %v6414
        %v6416 = vmul.f32 %v6305, 1.442695
        %v6417 = vpow.pop %v6416
        %v6418 = vmul.f32 %v6306, 1.442695
        %v6419 = vpow.pop %v6418
        %v6420 = vmul.f32 %v6307, 1.442695
        %v6421 = vpow.pop %v6420
        %v6422 = vmul.f32 %v6308, 1.442695
        %v6423 = vpow.pop %v6422
        %v6424 = vmul.f32 %v6309, 1.442695
        %v6425 = vpow.pop %v6424
        %v6426 = vmul.f32 %v6310, 1.442695
        %v6427 = vpow.pop %v6426
        %v6428 = vmul.f32 %v6311, 1.442695
        %v6429 = vpow.pop %v6428
        %v6430 = vmul.f32 %v6312, 1.442695
        %v6431 = vpow.pop %v6430
        %v6432 = vmul.f32 %v6313, 1.442695
        %v6433 = vpow.pop %v6432
        %v6434 = vmul.f32 %v6314, 1.442695
        %v6435 = vpow.pop %v6434
        %v6436 = vmul.f32 %v6315, 1.442695
        %v6437 = vpow.pop %v6436
        %v6438 = vmul.f32 %v6316, 1.442695
        %v6439 = vpow.pop %v6438
        %v6440 = vmul.f32 %v6317, 1.442695
        %v6441 = vpow.pop %v6440
        %v6442 = vmul.f32 %v6318, 1.442695
        %v6443 = vpow.pop %v6442
        %v6444 = vmul.f32 %v6319, 1.442695
        %v6445 = vpow.pop %v6444
        %v6446 = vmul.f32 %v6320, 1.442695
        %v6447 = vpow.pop %v6446
        %v6448 = vmul.f32 %v6321, 1.442695
        %v6449 = vpow.pop %v6448
        %v6450 = vadd.f32 %v6323, %v6325
        %6451 = vadd.xlane.f32.xlu0 %v6450
        %v6452 = vpop.xlane.xlu0 %6451
        %v6453 = vadd.f32 %v6327, %v6329
        %6454 = vadd.xlane.f32.xlu0 %v6453
        %v6455 = vpop.xlane.xlu0 %6454
        %v6456 = vadd.f32 %v6331, %v6333
        %6457 = vadd.xlane.f32.xlu0 %v6456
        %v6458 = vpop.xlane.xlu0 %6457
        %v6459 = vadd.f32 %v6335, %v6337
        %6460 = vadd.xlane.f32.xlu0 %v6459
        %v6461 = vpop.xlane.xlu0 %6460
        %v6462 = vadd.f32 %v6339, %v6341
        %6463 = vadd.xlane.f32.xlu0 %v6462
        %v6464 = vpop.xlane.xlu0 %6463
        %v6465 = vadd.f32 %v6343, %v6345
        %6466 = vadd.xlane.f32.xlu0 %v6465
        %v6467 = vpop.xlane.xlu0 %6466
        %v6468 = vadd.f32 %v6347, %v6349
        %6469 = vadd.xlane.f32.xlu0 %v6468
        %v6470 = vpop.xlane.xlu0 %6469
        %v6471 = vadd.f32 %v6351, %v6353
        %6472 = vadd.xlane.f32.xlu0 %v6471
        %v6473 = vpop.xlane.xlu0 %6472
        %v6474 = vadd.f32 %v6355, %v6357
        %6475 = vadd.xlane.f32.xlu0 %v6474
        %v6476 = vpop.xlane.xlu0 %6475
        %v6477 = vadd.f32 %v6359, %v6361
        %6478 = vadd.xlane.f32.xlu0 %v6477
        %v6479 = vpop.xlane.xlu0 %6478
        %v6480 = vadd.f32 %v6363, %v6365
        %6481 = vadd.xlane.f32.xlu0 %v6480
        %v6482 = vpop.xlane.xlu0 %6481
        %v6483 = vadd.f32 %v6367, %v6369
        %6484 = vadd.xlane.f32.xlu0 %v6483
        %v6485 = vpop.xlane.xlu0 %6484
        %v6486 = vadd.f32 %v6371, %v6373
        %6487 = vadd.xlane.f32.xlu0 %v6486
        %v6488 = vpop.xlane.xlu0 %6487
        %v6489 = vadd.f32 %v6375, %v6377
        %6490 = vadd.xlane.f32.xlu0 %v6489
        %v6491 = vpop.xlane.xlu0 %6490
        %v6492 = vadd.f32 %v6379, %v6381
        %6493 = vadd.xlane.f32.xlu0 %v6492
        %v6494 = vpop.xlane.xlu0 %6493
        %v6495 = vadd.f32 %v6383, %v6385
        %6496 = vadd.xlane.f32.xlu0 %v6495
        %v6497 = vpop.xlane.xlu0 %6496
        %v6498 = vadd.f32 %v6387, %v6389
        %6499 = vadd.xlane.f32.xlu0 %v6498
        %v6500 = vpop.xlane.xlu0 %6499
        %v6501 = vadd.f32 %v6391, %v6393
        %6502 = vadd.xlane.f32.xlu0 %v6501
        %v6503 = vpop.xlane.xlu0 %6502
        %v6504 = vadd.f32 %v6395, %v6397
        %6505 = vadd.xlane.f32.xlu0 %v6504
        %v6506 = vpop.xlane.xlu0 %6505
        %v6507 = vadd.f32 %v6399, %v6401
        %6508 = vadd.xlane.f32.xlu0 %v6507
        %v6509 = vpop.xlane.xlu0 %6508
        %v6510 = vadd.f32 %v6403, %v6405
        %6511 = vadd.xlane.f32.xlu0 %v6510
        %v6512 = vpop.xlane.xlu0 %6511
        %v6513 = vadd.f32 %v6407, %v6409
        %6514 = vadd.xlane.f32.xlu0 %v6513
        %v6515 = vpop.xlane.xlu0 %6514
        %v6516 = vadd.f32 %v6411, %v6413
        %6517 = vadd.xlane.f32.xlu0 %v6516
        %v6518 = vpop.xlane.xlu0 %6517
        %v6519 = vadd.f32 %v6415, %v6417
        %6520 = vadd.xlane.f32.xlu0 %v6519
        %v6521 = vpop.xlane.xlu0 %6520
        %v6522 = vadd.f32 %v6419, %v6421
        %6523 = vadd.xlane.f32.xlu0 %v6522
        %v6524 = vpop.xlane.xlu0 %6523
        %v6525 = vadd.f32 %v6423, %v6425
        %6526 = vadd.xlane.f32.xlu0 %v6525
        %v6527 = vpop.xlane.xlu0 %6526
        %v6528 = vadd.f32 %v6427, %v6429
        %6529 = vadd.xlane.f32.xlu0 %v6528
        %v6530 = vpop.xlane.xlu0 %6529
        %v6531 = vadd.f32 %v6431, %v6433
        %6532 = vadd.xlane.f32.xlu0 %v6531
        %v6533 = vpop.xlane.xlu0 %6532
        %v6534 = vadd.f32 %v6435, %v6437
        %6535 = vadd.xlane.f32.xlu0 %v6534
        %v6536 = vpop.xlane.xlu0 %6535
        %v6537 = vadd.f32 %v6439, %v6441
        %6538 = vadd.xlane.f32.xlu0 %v6537
        %v6539 = vpop.xlane.xlu0 %6538
        %v6540 = vadd.f32 %v6443, %v6445
        %6541 = vadd.xlane.f32.xlu0 %v6540
        %v6542 = vpop.xlane.xlu0 %6541
        %v6543 = vadd.f32 %v6447, %v6449
        %6544 = vadd.xlane.f32.xlu0 %v6543
        %v6545 = vpop.xlane.xlu0 %6544
        %6546 = vmatprep.subr.mxu0 0.0
        %6547 = vmatpush1.msra.mxu0 %v5630
        %6548 = vmatprep.subr.mxu0 0.0
        %6549 = vmatpush1.msra.mxu0 %v5625
        %6550 = vmatprep.subr.mxu0 0.0
        %6551 = vmatpush1.msra.mxu0 %v5620
        %6552 = vmatprep.subr.mxu0 0.0
        %6553 = vmatpush1.msra.mxu0 %v5615
        %6554 = vmatprep.subr.mxu0 0.0
        %6555 = vmatpush1.msra.mxu0 %v5610
        %6556 = vmatprep.subr.mxu0 0.0
        %6557 = vmatpush1.msra.mxu0 %v5605
        %6558 = vmatprep.subr.mxu0 0.0
        %6559 = vmatpush1.msra.mxu0 %v5600
        %6560 = vmatprep.subr.mxu0 0.0
        %6561 = vmatpush1.msra.mxu0 %v5595
        %6562 = vmatprep.subr.mxu0 0.0
        %6563 = vmatpush1.msra.mxu0 %v5590
        %6564 = vmatprep.subr.mxu0 0.0
        %6565 = vmatpush1.msra.mxu0 %v5585
        %6566 = vmatprep.subr.mxu0 0.0
        %6567 = vmatpush1.msra.mxu0 %v5580
        %6568 = vmatprep.subr.mxu0 0.0
        %6569 = vmatpush1.msra.mxu0 %v5575
        %6570 = vmatprep.subr.mxu0 0.0
        %6571 = vmatpush1.msra.mxu0 %v5570
        %6572 = vmatprep.subr.mxu0 0.0
        %6573 = vmatpush1.msra.mxu0 %v5565
        %6574 = vmatprep.subr.mxu0 0.0
        %6575 = vmatpush1.msra.mxu0 %v5560
        %6576 = vmatprep.subr.mxu0 0.0
        %6577 = vmatpush1.msra.mxu0 %v5555
        %6578 = vmatprep.subr.mxu0 0.0
        %6579 = vmatpush2.msra.mxu0 %v5710
        %6580 = vmatprep.subr.mxu0 0.0
        %6581 = vmatpush2.msra.mxu0 %v5705
        %6582 = vmatprep.subr.mxu0 0.0
        %6583 = vmatpush2.msra.mxu0 %v5700
        %6584 = vmatprep.subr.mxu0 0.0
        %6585 = vmatpush2.msra.mxu0 %v5695
        %6586 = vmatprep.subr.mxu0 0.0
        %6587 = vmatpush2.msra.mxu0 %v5690
        %6588 = vmatprep.subr.mxu0 0.0
        %6589 = vmatpush2.msra.mxu0 %v5685
        %6590 = vmatprep.subr.mxu0 0.0
        %6591 = vmatpush2.msra.mxu0 %v5680
        %6592 = vmatprep.subr.mxu0 0.0
        %6593 = vmatpush2.msra.mxu0 %v5675
        %6594 = vmatprep.subr.mxu0 0.0
        %6595 = vmatpush2.msra.mxu0 %v5670
        %6596 = vmatprep.subr.mxu0 0.0
        %6597 = vmatpush2.msra.mxu0 %v5665
        %6598 = vmatprep.subr.mxu0 0.0
        %6599 = vmatpush2.msra.mxu0 %v5660
        %6600 = vmatprep.subr.mxu0 0.0
        %6601 = vmatpush2.msra.mxu0 %v5655
        %6602 = vmatprep.subr.mxu0 0.0
        %6603 = vmatpush2.msra.mxu0 %v5650
        %6604 = vmatprep.subr.mxu0 0.0
        %6605 = vmatpush2.msra.mxu0 %v5645
        %6606 = vmatprep.subr.mxu0 0.0
        %6607 = vmatpush2.msra.mxu0 %v5640
        %6608 = vmatprep.subr.mxu0 0.0
        %6609 = vmatpush2.msra.mxu0 %v5635
        %6610 = vmatprep.mubr.f32.mxu0 %v6325
        %6611 = vmatmul.mubr.f32.gmra.mxu0 %v6323
        %v6612 = vpop.f32.mrf.mxu0
        %v6613 = vadd.f32 0.0, %v6612
        %v6614 = vpop.f32.mrf.mxu0
        %6615 = vmatprep.mubr.f32.mxu0 %v6329
        %6616 = vmatmul.mubr.f32.gmra.mxu0 %v6327
        %v6617 = vpop.f32.mrf.mxu0
        %v6618 = vadd.f32 0.0, %v6617
        %v6619 = vpop.f32.mrf.mxu0
        %6620 = vmatprep.mubr.f32.mxu0 %v6333
        %6621 = vmatmul.mubr.f32.gmra.mxu0 %v6331
        %v6622 = vpop.f32.mrf.mxu0
        %v6623 = vadd.f32 0.0, %v6622
        %v6624 = vpop.f32.mrf.mxu0
        %6625 = vmatprep.mubr.f32.mxu0 %v6337
        %6626 = vmatmul.mubr.f32.gmra.mxu0 %v6335
        %v6627 = vpop.f32.mrf.mxu0
        %v6628 = vadd.f32 0.0, %v6627
        %v6629 = vpop.f32.mrf.mxu0
        %6630 = vmatprep.mubr.f32.mxu0 %v6341
        %6631 = vmatmul.mubr.f32.gmra.mxu0 %v6339
        %v6632 = vpop.f32.mrf.mxu0
        %v6633 = vadd.f32 0.0, %v6632
        %v6634 = vpop.f32.mrf.mxu0
        %6635 = vmatprep.mubr.f32.mxu0 %v6345
        %6636 = vmatmul.mubr.f32.gmra.mxu0 %v6343
        %v6637 = vpop.f32.mrf.mxu0
        %v6638 = vadd.f32 0.0, %v6637
        %v6639 = vpop.f32.mrf.mxu0
        %6640 = vmatprep.mubr.f32.mxu0 %v6349
        %6641 = vmatmul.mubr.f32.gmra.mxu0 %v6347
        %v6642 = vpop.f32.mrf.mxu0
        %v6643 = vadd.f32 0.0, %v6642
        %v6644 = vpop.f32.mrf.mxu0
        %6645 = vmatprep.mubr.f32.mxu0 %v6353
        %6646 = vmatmul.mubr.f32.gmra.mxu0 %v6351
        %v6647 = vpop.f32.mrf.mxu0
        %v6648 = vadd.f32 0.0, %v6647
        %v6649 = vpop.f32.mrf.mxu0
        %6650 = vmatprep.mubr.f32.mxu0 %v6357
        %6651 = vmatmul.mubr.f32.gmra.mxu0 %v6355
        %v6652 = vpop.f32.mrf.mxu0
        %v6653 = vadd.f32 0.0, %v6652
        %v6654 = vpop.f32.mrf.mxu0
        %6655 = vmatprep.mubr.f32.mxu0 %v6361
        %6656 = vmatmul.mubr.f32.gmra.mxu0 %v6359
        %v6657 = vpop.f32.mrf.mxu0
        %v6658 = vadd.f32 0.0, %v6657
        %v6659 = vpop.f32.mrf.mxu0
        %6660 = vmatprep.mubr.f32.mxu0 %v6365
        %6661 = vmatmul.mubr.f32.gmra.mxu0 %v6363
        %v6662 = vpop.f32.mrf.mxu0
        %v6663 = vadd.f32 0.0, %v6662
        %v6664 = vpop.f32.mrf.mxu0
        %6665 = vmatprep.mubr.f32.mxu0 %v6369
        %6666 = vmatmul.mubr.f32.gmra.mxu0 %v6367
        %v6667 = vpop.f32.mrf.mxu0
        %v6668 = vadd.f32 0.0, %v6667
        %v6669 = vpop.f32.mrf.mxu0
        %6670 = vmatprep.mubr.f32.mxu0 %v6373
        %6671 = vmatmul.mubr.f32.gmra.mxu0 %v6371
        %v6672 = vpop.f32.mrf.mxu0
        %v6673 = vadd.f32 0.0, %v6672
        %v6674 = vpop.f32.mrf.mxu0
        %6675 = vmatprep.mubr.f32.mxu0 %v6377
        %6676 = vmatmul.mubr.f32.gmra.mxu0 %v6375
        %v6677 = vpop.f32.mrf.mxu0
        %v6678 = vadd.f32 0.0, %v6677
        %v6679 = vpop.f32.mrf.mxu0
        %6680 = vmatprep.mubr.f32.mxu0 %v6381
        %6681 = vmatmul.mubr.f32.gmra.mxu0 %v6379
        %v6682 = vpop.f32.mrf.mxu0
        %v6683 = vadd.f32 0.0, %v6682
        %v6684 = vpop.f32.mrf.mxu0
        %6685 = vmatprep.mubr.f32.mxu0 %v6385
        %6686 = vmatmul.mubr.f32.gmra.mxu0 %v6383
        %v6687 = vpop.f32.mrf.mxu0
        %v6688 = vadd.f32 0.0, %v6687
        %v6689 = vpop.f32.mrf.mxu0
        %6690 = vmatprep.mubr.f32.mxu0 %v6389
        %6691 = vmatmul.mubr.f32.gmra.mxu0 %v6387
        %v6692 = vpop.f32.mrf.mxu0
        %v6693 = vadd.f32 0.0, %v6692
        %v6694 = vpop.f32.mrf.mxu0
        %6695 = vmatprep.mubr.f32.mxu0 %v6393
        %6696 = vmatmul.mubr.f32.gmra.mxu0 %v6391
        %v6697 = vpop.f32.mrf.mxu0
        %v6698 = vadd.f32 0.0, %v6697
        %v6699 = vpop.f32.mrf.mxu0
        %6700 = vmatprep.mubr.f32.mxu0 %v6397
        %6701 = vmatmul.mubr.f32.gmra.mxu0 %v6395
        %v6702 = vpop.f32.mrf.mxu0
        %v6703 = vadd.f32 0.0, %v6702
        %v6704 = vpop.f32.mrf.mxu0
        %6705 = vmatprep.mubr.f32.mxu0 %v6401
        %6706 = vmatmul.mubr.f32.gmra.mxu0 %v6399
        %v6707 = vpop.f32.mrf.mxu0
        %v6708 = vadd.f32 0.0, %v6707
        %v6709 = vpop.f32.mrf.mxu0
        %6710 = vmatprep.mubr.f32.mxu0 %v6405
        %6711 = vmatmul.mubr.f32.gmra.mxu0 %v6403
        %v6712 = vpop.f32.mrf.mxu0
        %v6713 = vadd.f32 0.0, %v6712
        %v6714 = vpop.f32.mrf.mxu0
        %6715 = vmatprep.mubr.f32.mxu0 %v6409
        %6716 = vmatmul.mubr.f32.gmra.mxu0 %v6407
        %v6717 = vpop.f32.mrf.mxu0
        %v6718 = vadd.f32 0.0, %v6717
        %v6719 = vpop.f32.mrf.mxu0
        %6720 = vmatprep.mubr.f32.mxu0 %v6413
        %6721 = vmatmul.mubr.f32.gmra.mxu0 %v6411
        %v6722 = vpop.f32.mrf.mxu0
        %v6723 = vadd.f32 0.0, %v6722
        %v6724 = vpop.f32.mrf.mxu0
        %6725 = vmatprep.mubr.f32.mxu0 %v6417
        %6726 = vmatmul.mubr.f32.gmra.mxu0 %v6415
        %v6727 = vpop.f32.mrf.mxu0
        %v6728 = vadd.f32 0.0, %v6727
        %v6729 = vpop.f32.mrf.mxu0
        %6730 = vmatprep.mubr.f32.mxu0 %v6421
        %6731 = vmatmul.mubr.f32.gmra.mxu0 %v6419
        %v6732 = vpop.f32.mrf.mxu0
        %v6733 = vadd.f32 0.0, %v6732
        %v6734 = vpop.f32.mrf.mxu0
        %6735 = vmatprep.mubr.f32.mxu0 %v6425
        %6736 = vmatmul.mubr.f32.gmra.mxu0 %v6423
        %v6737 = vpop.f32.mrf.mxu0
        %v6738 = vadd.f32 0.0, %v6737
        %v6739 = vpop.f32.mrf.mxu0
        %6740 = vmatprep.mubr.f32.mxu0 %v6429
        %6741 = vmatmul.mubr.f32.gmra.mxu0 %v6427
        %v6742 = vpop.f32.mrf.mxu0
        %v6743 = vadd.f32 0.0, %v6742
        %v6744 = vpop.f32.mrf.mxu0
        %6745 = vmatprep.mubr.f32.mxu0 %v6433
        %6746 = vmatmul.mubr.f32.gmra.mxu0 %v6431
        %v6747 = vpop.f32.mrf.mxu0
        %v6748 = vadd.f32 0.0, %v6747
        %v6749 = vpop.f32.mrf.mxu0
        %6750 = vmatprep.mubr.f32.mxu0 %v6437
        %6751 = vmatmul.mubr.f32.gmra.mxu0 %v6435
        %v6752 = vpop.f32.mrf.mxu0
        %v6753 = vadd.f32 0.0, %v6752
        %v6754 = vpop.f32.mrf.mxu0
        %6755 = vmatprep.mubr.f32.mxu0 %v6441
        %6756 = vmatmul.mubr.f32.gmra.mxu0 %v6439
        %v6757 = vpop.f32.mrf.mxu0
        %v6758 = vadd.f32 0.0, %v6757
        %v6759 = vpop.f32.mrf.mxu0
        %6760 = vmatprep.mubr.f32.mxu0 %v6445
        %6761 = vmatmul.mubr.f32.gmra.mxu0 %v6443
        %v6762 = vpop.f32.mrf.mxu0
        %v6763 = vadd.f32 0.0, %v6762
        %v6764 = vpop.f32.mrf.mxu0
        %6765 = vmatprep.mubr.f32.mxu0 %v6449
        %6766 = vmatmul.mubr.f32.gmra.mxu0 %v6447
        %v6767 = vpop.f32.mrf.mxu0
        %v6768 = vadd.f32 0.0, %v6767
        %v6769 = vpop.f32.mrf.mxu0
        %6770 = vdwg.mxu0
        %v6771 = vrcp.pop %v6452
        %v6772 = vrcp.pop %v6455
        %v6773 = vrcp.pop %v6458
        %v6774 = vrcp.pop %v6461
        %v6775 = vrcp.pop %v6464
        %v6776 = vrcp.pop %v6467
        %v6777 = vrcp.pop %v6470
        %v6778 = vrcp.pop %v6473
        %v6779 = vrcp.pop %v6476
        %v6780 = vrcp.pop %v6479
        %v6781 = vrcp.pop %v6482
        %v6782 = vrcp.pop %v6485
        %v6783 = vrcp.pop %v6488
        %v6784 = vrcp.pop %v6491
        %v6785 = vrcp.pop %v6494
        %v6786 = vrcp.pop %v6497
        %v6787 = vrcp.pop %v6500
        %v6788 = vrcp.pop %v6503
        %v6789 = vrcp.pop %v6506
        %v6790 = vrcp.pop %v6509
        %v6791 = vrcp.pop %v6512
        %v6792 = vrcp.pop %v6515
        %v6793 = vrcp.pop %v6518
        %v6794 = vrcp.pop %v6521
        %v6795 = vrcp.pop %v6524
        %v6796 = vrcp.pop %v6527
        %v6797 = vrcp.pop %v6530
        %v6798 = vrcp.pop %v6533
        %v6799 = vrcp.pop %v6536
        %v6800 = vrcp.pop %v6539
        %v6801 = vrcp.pop %v6542
        %v6802 = vrcp.pop %v6545
        %v6803 = vmul.f32 %v6613, %v6771
        %v6804 = vmul.f32 %v6618, %v6772
        %v6805 = vmul.f32 %v6623, %v6773
        %v6806 = vmul.f32 %v6628, %v6774
        %v6807 = vmul.f32 %v6633, %v6775
        %v6808 = vmul.f32 %v6638, %v6776
        %v6809 = vmul.f32 %v6643, %v6777
        %v6810 = vmul.f32 %v6648, %v6778
        %v6811 = vmul.f32 %v6653, %v6779
        %v6812 = vmul.f32 %v6658, %v6780
        %v6813 = vmul.f32 %v6663, %v6781
        %v6814 = vmul.f32 %v6668, %v6782
        %v6815 = vmul.f32 %v6673, %v6783
        %v6816 = vmul.f32 %v6678, %v6784
        %v6817 = vmul.f32 %v6683, %v6785
        %v6818 = vmul.f32 %v6688, %v6786
        %v6819 = vmul.f32 %v6693, %v6787
        %v6820 = vmul.f32 %v6698, %v6788
        %v6821 = vmul.f32 %v6703, %v6789
        %v6822 = vmul.f32 %v6708, %v6790
        %v6823 = vmul.f32 %v6713, %v6791
        %v6824 = vmul.f32 %v6718, %v6792
        %v6825 = vmul.f32 %v6723, %v6793
        %v6826 = vmul.f32 %v6728, %v6794
        %v6827 = vmul.f32 %v6733, %v6795
        %v6828 = vmul.f32 %v6738, %v6796
        %v6829 = vmul.f32 %v6743, %v6797
        %v6830 = vmul.f32 %v6748, %v6798
        %v6831 = vmul.f32 %v6753, %v6799
        %v6832 = vmul.f32 %v6758, %v6800
        %v6833 = vmul.f32 %v6763, %v6801
        %v6834 = vmul.f32 %v6768, %v6802
        %s6835 = scalar_lea.vmem %s4, 256
        %v6836 = vld [vmem:[%s6835] sm:$0xff]
        %v6837 = vld [vmem:[%s6835 + $0x8] sm:$0xff]
        %v6838 = vld [vmem:[%s6835 + $0x10] sm:$0xff]
        %v6839 = vld [vmem:[%s6835 + $0x18] sm:$0xff]
        %v6840 = vld [vmem:[%s6835 + $0x20] sm:$0xff]
        %v6841 = vld [vmem:[%s6835 + $0x28] sm:$0xff]
        %v6842 = vld [vmem:[%s6835 + $0x30] sm:$0xff]
        %v6843 = vld [vmem:[%s6835 + $0x38] sm:$0xff]
        %v6844 = vld [vmem:[%s6835 + $0x40] sm:$0xff]
        %v6845 = vld [vmem:[%s6835 + $0x48] sm:$0xff]
        %v6846 = vld [vmem:[%s6835 + $0x50] sm:$0xff]
        %v6847 = vld [vmem:[%s6835 + $0x58] sm:$0xff]
        %v6848 = vld [vmem:[%s6835 + $0x60] sm:$0xff]
        %v6849 = vld [vmem:[%s6835 + $0x68] sm:$0xff]
        %v6850 = vld [vmem:[%s6835 + $0x70] sm:$0xff]
        %v6851 = vld [vmem:[%s6835 + $0x78] sm:$0xff]
        %v6853 = vsel %vm1117, %v6803, 0
        %v6856 = vsel %vm1117, %v6804, 0
        %v6859 = vsel %vm1117, %v6805, 0
        %v6862 = vsel %vm1117, %v6806, 0
        %v6865 = vsel %vm1117, %v6807, 0
        %v6868 = vsel %vm1117, %v6808, 0
        %v6871 = vsel %vm1117, %v6809, 0
        %v6874 = vsel %vm1117, %v6810, 0
        %v6877 = vsel %vm1117, %v6811, 0
        %v6880 = vsel %vm1117, %v6812, 0
        %v6883 = vsel %vm1117, %v6813, 0
        %v6886 = vsel %vm1117, %v6814, 0
        %v6889 = vsel %vm1117, %v6815, 0
        %v6892 = vsel %vm1117, %v6816, 0
        %v6895 = vsel %vm1117, %v6817, 0
        %v6898 = vsel %vm1117, %v6818, 0
        %v6901 = vsel %vm1117, %v6819, 0
        %v6904 = vsel %vm1117, %v6820, 0
        %v6907 = vsel %vm1117, %v6821, 0
        %v6910 = vsel %vm1117, %v6822, 0
        %v6913 = vsel %vm1117, %v6823, 0
        %v6916 = vsel %vm1117, %v6824, 0
        %v6919 = vsel %vm1117, %v6825, 0
        %v6922 = vsel %vm1117, %v6826, 0
        %v6925 = vsel %vm1117, %v6827, 0
        %v6928 = vsel %vm1117, %v6828, 0
        %v6931 = vsel %vm1117, %v6829, 0
        %v6934 = vsel %vm1117, %v6830, 0
        %v6937 = vsel %vm1117, %v6831, 0
        %v6940 = vsel %vm1117, %v6832, 0
        %v6943 = vsel %vm1117, %v6833, 0
        %v6946 = vsel %vm1117, %v6834, 0
        %6948 = vmatprep.subr.mxu0 0.0
        %6949 = vmatpush1.msra.mxu0 0.0
        %6950 = vmatprep.subr.mxu0 0.0
        %6951 = vmatpush1.msra.mxu0 0.0
        %6952 = vmatprep.subr.mxu0 0.0
        %6953 = vmatpush1.msra.mxu0 0.0
        %6954 = vmatprep.subr.mxu0 0.0
        %6955 = vmatpush1.msra.mxu0 0.0
        %6956 = vmatprep.subr.mxu0 0.0
        %6957 = vmatpush1.msra.mxu0 0.0
        %6958 = vmatprep.subr.mxu0 0.0
        %6959 = vmatpush1.msra.mxu0 0.0
        %6960 = vmatprep.subr.mxu0 0.0
        %6961 = vmatpush1.msra.mxu0 0.0
        %6962 = vmatprep.subr.mxu0 0.0
        %6963 = vmatpush1.msra.mxu0 0.0
        %6964 = vmatprep.subr.mxu0 %v6851
        %6965 = vmatpush1.msra.mxu0 %v6850
        %6966 = vmatprep.subr.mxu0 %v6849
        %6967 = vmatpush1.msra.mxu0 %v6848
        %6968 = vmatprep.subr.mxu0 %v6847
        %6969 = vmatpush1.msra.mxu0 %v6846
        %6970 = vmatprep.subr.mxu0 %v6845
        %6971 = vmatpush1.msra.mxu0 %v6844
        %6972 = vmatprep.subr.mxu0 %v6843
        %6973 = vmatpush1.msra.mxu0 %v6842
        %6974 = vmatprep.subr.mxu0 %v6841
        %6975 = vmatpush1.msra.mxu0 %v6840
        %6976 = vmatprep.subr.mxu0 %v6839
        %6977 = vmatpush1.msra.mxu0 %v6838
        %6978 = vmatprep.subr.mxu0 %v6837
        %6979 = vmatpush1.msra.mxu0 %v6836
        %6980 = vmatprep.subr.mxu0 0.0
        %6981 = vmatpush2.msra.mxu0 0.0
        %6982 = vmatprep.subr.mxu0 0.0
        %6983 = vmatpush2.msra.mxu0 0.0
        %6984 = vmatprep.subr.mxu0 0.0
        %6985 = vmatpush2.msra.mxu0 0.0
        %6986 = vmatprep.subr.mxu0 0.0
        %6987 = vmatpush2.msra.mxu0 0.0
        %6988 = vmatprep.subr.mxu0 0.0
        %6989 = vmatpush2.msra.mxu0 0.0
        %6990 = vmatprep.subr.mxu0 0.0
        %6991 = vmatpush2.msra.mxu0 0.0
        %6992 = vmatprep.subr.mxu0 0.0
        %6993 = vmatpush2.msra.mxu0 0.0
        %6994 = vmatprep.subr.mxu0 0.0
        %6995 = vmatpush2.msra.mxu0 0.0
        %6996 = vmatprep.subr.mxu0 0.0
        %6997 = vmatpush2.msra.mxu0 0.0
        %6998 = vmatprep.subr.mxu0 0.0
        %6999 = vmatpush2.msra.mxu0 0.0
        %7000 = vmatprep.subr.mxu0 0.0
        %7001 = vmatpush2.msra.mxu0 0.0
        %7002 = vmatprep.subr.mxu0 0.0
        %7003 = vmatpush2.msra.mxu0 0.0
        %7004 = vmatprep.subr.mxu0 0.0
        %7005 = vmatpush2.msra.mxu0 0.0
        %7006 = vmatprep.subr.mxu0 0.0
        %7007 = vmatpush2.msra.mxu0 0.0
        %7008 = vmatprep.subr.mxu0 0.0
        %7009 = vmatpush2.msra.mxu0 0.0
        %7010 = vmatprep.subr.mxu0 0.0
        %7011 = vmatpush2.msra.mxu0 0.0
        %7012 = vmatprep.mubr.f32.mxu0 0.0
        %7013 = vmatmul.mubr.f32.gmra.mxu0 %v6853
        %v7014 = vpop.f32.mrf.mxu0
        %v7015 = vadd.f32 0.0, %v7014
        %v7016 = vpop.f32.mrf.mxu0
        %v7017 = vadd.f32 0.0, %v7016
        %7018 = vmatprep.mubr.f32.mxu0 0.0
        %7019 = vmatmul.mubr.f32.gmra.mxu0 %v6856
        %v7020 = vpop.f32.mrf.mxu0
        %v7021 = vadd.f32 0.0, %v7020
        %v7022 = vpop.f32.mrf.mxu0
        %v7023 = vadd.f32 0.0, %v7022
        %7024 = vmatprep.mubr.f32.mxu0 0.0
        %7025 = vmatmul.mubr.f32.gmra.mxu0 %v6859
        %v7026 = vpop.f32.mrf.mxu0
        %v7027 = vadd.f32 0.0, %v7026
        %v7028 = vpop.f32.mrf.mxu0
        %v7029 = vadd.f32 0.0, %v7028
        %7030 = vmatprep.mubr.f32.mxu0 0.0
        %7031 = vmatmul.mubr.f32.gmra.mxu0 %v6862
        %v7032 = vpop.f32.mrf.mxu0
        %v7033 = vadd.f32 0.0, %v7032
        %v7034 = vpop.f32.mrf.mxu0
        %v7035 = vadd.f32 0.0, %v7034
        %7036 = vmatprep.mubr.f32.mxu0 0.0
        %7037 = vmatmul.mubr.f32.gmra.mxu0 %v6865
        %v7038 = vpop.f32.mrf.mxu0
        %v7039 = vadd.f32 0.0, %v7038
        %v7040 = vpop.f32.mrf.mxu0
        %v7041 = vadd.f32 0.0, %v7040
        %7042 = vmatprep.mubr.f32.mxu0 0.0
        %7043 = vmatmul.mubr.f32.gmra.mxu0 %v6868
        %v7044 = vpop.f32.mrf.mxu0
        %v7045 = vadd.f32 0.0, %v7044
        %v7046 = vpop.f32.mrf.mxu0
        %v7047 = vadd.f32 0.0, %v7046
        %7048 = vmatprep.mubr.f32.mxu0 0.0
        %7049 = vmatmul.mubr.f32.gmra.mxu0 %v6871
        %v7050 = vpop.f32.mrf.mxu0
        %v7051 = vadd.f32 0.0, %v7050
        %v7052 = vpop.f32.mrf.mxu0
        %v7053 = vadd.f32 0.0, %v7052
        %7054 = vmatprep.mubr.f32.mxu0 0.0
        %7055 = vmatmul.mubr.f32.gmra.mxu0 %v6874
        %v7056 = vpop.f32.mrf.mxu0
        %v7057 = vadd.f32 0.0, %v7056
        %v7058 = vpop.f32.mrf.mxu0
        %v7059 = vadd.f32 0.0, %v7058
        %7060 = vmatprep.mubr.f32.mxu0 0.0
        %7061 = vmatmul.mubr.f32.gmra.mxu0 %v6877
        %v7062 = vpop.f32.mrf.mxu0
        %v7063 = vadd.f32 0.0, %v7062
        %v7064 = vpop.f32.mrf.mxu0
        %v7065 = vadd.f32 0.0, %v7064
        %7066 = vmatprep.mubr.f32.mxu0 0.0
        %7067 = vmatmul.mubr.f32.gmra.mxu0 %v6880
        %v7068 = vpop.f32.mrf.mxu0
        %v7069 = vadd.f32 0.0, %v7068
        %v7070 = vpop.f32.mrf.mxu0
        %v7071 = vadd.f32 0.0, %v7070
        %7072 = vmatprep.mubr.f32.mxu0 0.0
        %7073 = vmatmul.mubr.f32.gmra.mxu0 %v6883
        %v7074 = vpop.f32.mrf.mxu0
        %v7075 = vadd.f32 0.0, %v7074
        %v7076 = vpop.f32.mrf.mxu0
        %v7077 = vadd.f32 0.0, %v7076
        %7078 = vmatprep.mubr.f32.mxu0 0.0
        %7079 = vmatmul.mubr.f32.gmra.mxu0 %v6886
        %v7080 = vpop.f32.mrf.mxu0
        %v7081 = vadd.f32 0.0, %v7080
        %v7082 = vpop.f32.mrf.mxu0
        %v7083 = vadd.f32 0.0, %v7082
        %7084 = vmatprep.mubr.f32.mxu0 0.0
        %7085 = vmatmul.mubr.f32.gmra.mxu0 %v6889
        %v7086 = vpop.f32.mrf.mxu0
        %v7087 = vadd.f32 0.0, %v7086
        %v7088 = vpop.f32.mrf.mxu0
        %v7089 = vadd.f32 0.0, %v7088
        %7090 = vmatprep.mubr.f32.mxu0 0.0
        %7091 = vmatmul.mubr.f32.gmra.mxu0 %v6892
        %v7092 = vpop.f32.mrf.mxu0
        %v7093 = vadd.f32 0.0, %v7092
        %v7094 = vpop.f32.mrf.mxu0
        %v7095 = vadd.f32 0.0, %v7094
        %7096 = vmatprep.mubr.f32.mxu0 0.0
        %7097 = vmatmul.mubr.f32.gmra.mxu0 %v6895
        %v7098 = vpop.f32.mrf.mxu0
        %v7099 = vadd.f32 0.0, %v7098
        %v7100 = vpop.f32.mrf.mxu0
        %v7101 = vadd.f32 0.0, %v7100
        %7102 = vmatprep.mubr.f32.mxu0 0.0
        %7103 = vmatmul.mubr.f32.gmra.mxu0 %v6898
        %v7104 = vpop.f32.mrf.mxu0
        %v7105 = vadd.f32 0.0, %v7104
        %v7106 = vpop.f32.mrf.mxu0
        %v7107 = vadd.f32 0.0, %v7106
        %7108 = vmatprep.mubr.f32.mxu0 0.0
        %7109 = vmatmul.mubr.f32.gmra.mxu0 %v6901
        %v7110 = vpop.f32.mrf.mxu0
        %v7111 = vadd.f32 0.0, %v7110
        %v7112 = vpop.f32.mrf.mxu0
        %v7113 = vadd.f32 0.0, %v7112
        %7114 = vmatprep.mubr.f32.mxu0 0.0
        %7115 = vmatmul.mubr.f32.gmra.mxu0 %v6904
        %v7116 = vpop.f32.mrf.mxu0
        %v7117 = vadd.f32 0.0, %v7116
        %v7118 = vpop.f32.mrf.mxu0
        %v7119 = vadd.f32 0.0, %v7118
        %7120 = vmatprep.mubr.f32.mxu0 0.0
        %7121 = vmatmul.mubr.f32.gmra.mxu0 %v6907
        %v7122 = vpop.f32.mrf.mxu0
        %v7123 = vadd.f32 0.0, %v7122
        %v7124 = vpop.f32.mrf.mxu0
        %v7125 = vadd.f32 0.0, %v7124
        %7126 = vmatprep.mubr.f32.mxu0 0.0
        %7127 = vmatmul.mubr.f32.gmra.mxu0 %v6910
        %v7128 = vpop.f32.mrf.mxu0
        %v7129 = vadd.f32 0.0, %v7128
        %v7130 = vpop.f32.mrf.mxu0
        %v7131 = vadd.f32 0.0, %v7130
        %7132 = vmatprep.mubr.f32.mxu0 0.0
        %7133 = vmatmul.mubr.f32.gmra.mxu0 %v6913
        %v7134 = vpop.f32.mrf.mxu0
        %v7135 = vadd.f32 0.0, %v7134
        %v7136 = vpop.f32.mrf.mxu0
        %v7137 = vadd.f32 0.0, %v7136
        %7138 = vmatprep.mubr.f32.mxu0 0.0
        %7139 = vmatmul.mubr.f32.gmra.mxu0 %v6916
        %v7140 = vpop.f32.mrf.mxu0
        %v7141 = vadd.f32 0.0, %v7140
        %v7142 = vpop.f32.mrf.mxu0
        %v7143 = vadd.f32 0.0, %v7142
        %7144 = vmatprep.mubr.f32.mxu0 0.0
        %7145 = vmatmul.mubr.f32.gmra.mxu0 %v6919
        %v7146 = vpop.f32.mrf.mxu0
        %v7147 = vadd.f32 0.0, %v7146
        %v7148 = vpop.f32.mrf.mxu0
        %v7149 = vadd.f32 0.0, %v7148
        %7150 = vmatprep.mubr.f32.mxu0 0.0
        %7151 = vmatmul.mubr.f32.gmra.mxu0 %v6922
        %v7152 = vpop.f32.mrf.mxu0
        %v7153 = vadd.f32 0.0, %v7152
        %v7154 = vpop.f32.mrf.mxu0
        %v7155 = vadd.f32 0.0, %v7154
        %7156 = vmatprep.mubr.f32.mxu0 0.0
        %7157 = vmatmul.mubr.f32.gmra.mxu0 %v6925
        %v7158 = vpop.f32.mrf.mxu0
        %v7159 = vadd.f32 0.0, %v7158
        %v7160 = vpop.f32.mrf.mxu0
        %v7161 = vadd.f32 0.0, %v7160
        %7162 = vmatprep.mubr.f32.mxu0 0.0
        %7163 = vmatmul.mubr.f32.gmra.mxu0 %v6928
        %v7164 = vpop.f32.mrf.mxu0
        %v7165 = vadd.f32 0.0, %v7164
        %v7166 = vpop.f32.mrf.mxu0
        %v7167 = vadd.f32 0.0, %v7166
        %7168 = vmatprep.mubr.f32.mxu0 0.0
        %7169 = vmatmul.mubr.f32.gmra.mxu0 %v6931
        %v7170 = vpop.f32.mrf.mxu0
        %v7171 = vadd.f32 0.0, %v7170
        %v7172 = vpop.f32.mrf.mxu0
        %v7173 = vadd.f32 0.0, %v7172
        %7174 = vmatprep.mubr.f32.mxu0 0.0
        %7175 = vmatmul.mubr.f32.gmra.mxu0 %v6934
        %v7176 = vpop.f32.mrf.mxu0
        %v7177 = vadd.f32 0.0, %v7176
        %v7178 = vpop.f32.mrf.mxu0
        %v7179 = vadd.f32 0.0, %v7178
        %7180 = vmatprep.mubr.f32.mxu0 0.0
        %7181 = vmatmul.mubr.f32.gmra.mxu0 %v6937
        %v7182 = vpop.f32.mrf.mxu0
        %v7183 = vadd.f32 0.0, %v7182
        %v7184 = vpop.f32.mrf.mxu0
        %v7185 = vadd.f32 0.0, %v7184
        %7186 = vmatprep.mubr.f32.mxu0 0.0
        %7187 = vmatmul.mubr.f32.gmra.mxu0 %v6940
        %v7188 = vpop.f32.mrf.mxu0
        %v7189 = vadd.f32 0.0, %v7188
        %v7190 = vpop.f32.mrf.mxu0
        %v7191 = vadd.f32 0.0, %v7190
        %7192 = vmatprep.mubr.f32.mxu0 0.0
        %7193 = vmatmul.mubr.f32.gmra.mxu0 %v6943
        %v7194 = vpop.f32.mrf.mxu0
        %v7195 = vadd.f32 0.0, %v7194
        %v7196 = vpop.f32.mrf.mxu0
        %v7197 = vadd.f32 0.0, %v7196
        %7198 = vmatprep.mubr.f32.mxu0 0.0
        %7199 = vmatmul.mubr.f32.gmra.mxu0 %v6946
        %v7200 = vpop.f32.mrf.mxu0
        %v7201 = vadd.f32 0.0, %v7200
        %v7202 = vpop.f32.mrf.mxu0
        %v7203 = vadd.f32 0.0, %v7202
        %7204 = vdwg.mxu0
        %v7205 = vadd.f32 %v4717, %v7015
        %v7206 = vadd.f32 %v4719, %v7017
        %v7207 = vadd.f32 %v4723, %v7021
        %v7208 = vadd.f32 %v4725, %v7023
        %v7209 = vadd.f32 %v4729, %v7027
        %v7210 = vadd.f32 %v4731, %v7029
        %v7211 = vadd.f32 %v4735, %v7033
        %v7212 = vadd.f32 %v4737, %v7035
        %v7213 = vadd.f32 %v4741, %v7039
        %v7214 = vadd.f32 %v4743, %v7041
        %v7215 = vadd.f32 %v4747, %v7045
        %v7216 = vadd.f32 %v4749, %v7047
        %v7217 = vadd.f32 %v4753, %v7051
        %v7218 = vadd.f32 %v4755, %v7053
        %v7219 = vadd.f32 %v4759, %v7057
        %v7220 = vadd.f32 %v4761, %v7059
        %v7221 = vadd.f32 %v4765, %v7063
        %v7222 = vadd.f32 %v4767, %v7065
        %v7223 = vadd.f32 %v4771, %v7069
        %v7224 = vadd.f32 %v4773, %v7071
        %v7225 = vadd.f32 %v4777, %v7075
        %v7226 = vadd.f32 %v4779, %v7077
        %v7227 = vadd.f32 %v4783, %v7081
        %v7228 = vadd.f32 %v4785, %v7083
        %v7229 = vadd.f32 %v4789, %v7087
        %v7230 = vadd.f32 %v4791, %v7089
        %v7231 = vadd.f32 %v4795, %v7093
        %v7232 = vadd.f32 %v4797, %v7095
        %v7233 = vadd.f32 %v4801, %v7099
        %v7234 = vadd.f32 %v4803, %v7101
        %v7235 = vadd.f32 %v4807, %v7105
        %v7236 = vadd.f32 %v4809, %v7107
        %v7237 = vadd.f32 %v4813, %v7111
        %v7238 = vadd.f32 %v4815, %v7113
        %v7239 = vadd.f32 %v4819, %v7117
        %v7240 = vadd.f32 %v4821, %v7119
        %v7241 = vadd.f32 %v4825, %v7123
        %v7242 = vadd.f32 %v4827, %v7125
        %v7243 = vadd.f32 %v4831, %v7129
        %v7244 = vadd.f32 %v4833, %v7131
        %v7245 = vadd.f32 %v4837, %v7135
        %v7246 = vadd.f32 %v4839, %v7137
        %v7247 = vadd.f32 %v4843, %v7141
        %v7248 = vadd.f32 %v4845, %v7143
        %v7249 = vadd.f32 %v4849, %v7147
        %v7250 = vadd.f32 %v4851, %v7149
        %v7251 = vadd.f32 %v4855, %v7153
        %v7252 = vadd.f32 %v4857, %v7155
        %v7253 = vadd.f32 %v4861, %v7159
        %v7254 = vadd.f32 %v4863, %v7161
        %v7255 = vadd.f32 %v4867, %v7165
        %v7256 = vadd.f32 %v4869, %v7167
        %v7257 = vadd.f32 %v4873, %v7171
        %v7258 = vadd.f32 %v4875, %v7173
        %v7259 = vadd.f32 %v4879, %v7177
        %v7260 = vadd.f32 %v4881, %v7179
        %v7261 = vadd.f32 %v4885, %v7183
        %v7262 = vadd.f32 %v4887, %v7185
        %v7263 = vadd.f32 %v4891, %v7189
        %v7264 = vadd.f32 %v4893, %v7191
        %v7265 = vadd.f32 %v4897, %v7195
        %v7266 = vadd.f32 %v4899, %v7197
        %v7267 = vadd.f32 %v4903, %v7201
        %v7268 = vadd.f32 %v4905, %v7203
        %s7269 = scalar_lea.vmem %s1, 768
        %v7270 = vld [vmem:[%s7269] sm:$0xff]
        %v7271 = vld [vmem:[%s7269 + $0x8] sm:$0xff]
        %v7272 = vld [vmem:[%s7269 + $0x10] sm:$0xff]
        %v7273 = vld [vmem:[%s7269 + $0x18] sm:$0xff]
        %v7274 = vld [vmem:[%s7269 + $0x20] sm:$0xff]
        %v7275 = vld [vmem:[%s7269 + $0x28] sm:$0xff]
        %v7276 = vld [vmem:[%s7269 + $0x30] sm:$0xff]
        %v7277 = vld [vmem:[%s7269 + $0x38] sm:$0xff]
        %v7278 = vld [vmem:[%s7269 + $0x40] sm:$0xff]
        %v7279 = vld [vmem:[%s7269 + $0x48] sm:$0xff]
        %v7280 = vld [vmem:[%s7269 + $0x50] sm:$0xff]
        %v7281 = vld [vmem:[%s7269 + $0x58] sm:$0xff]
        %v7282 = vld [vmem:[%s7269 + $0x60] sm:$0xff]
        %v7283 = vld [vmem:[%s7269 + $0x68] sm:$0xff]
        %v7284 = vld [vmem:[%s7269 + $0x70] sm:$0xff]
        %v7285 = vld [vmem:[%s7269 + $0x78] sm:$0xff]
        %v7286 = vld [vmem:[%s7269 + $0x80] sm:$0xff]
        %v7287 = vld [vmem:[%s7269 + $0x88] sm:$0xff]
        %v7288 = vld [vmem:[%s7269 + $0x90] sm:$0xff]
        %v7289 = vld [vmem:[%s7269 + $0x98] sm:$0xff]
        %v7290 = vld [vmem:[%s7269 + $0xa0] sm:$0xff]
        %v7291 = vld [vmem:[%s7269 + $0xa8] sm:$0xff]
        %v7292 = vld [vmem:[%s7269 + $0xb0] sm:$0xff]
        %v7293 = vld [vmem:[%s7269 + $0xb8] sm:$0xff]
        %v7294 = vld [vmem:[%s7269 + $0xc0] sm:$0xff]
        %v7295 = vld [vmem:[%s7269 + $0xc8] sm:$0xff]
        %v7296 = vld [vmem:[%s7269 + $0xd0] sm:$0xff]
        %v7297 = vld [vmem:[%s7269 + $0xd8] sm:$0xff]
        %v7298 = vld [vmem:[%s7269 + $0xe0] sm:$0xff]
        %v7299 = vld [vmem:[%s7269 + $0xe8] sm:$0xff]
        %v7300 = vld [vmem:[%s7269 + $0xf0] sm:$0xff]
        %v7301 = vld [vmem:[%s7269 + $0xf8] sm:$0xff]
        %7302 = vmatprep.subr.mxu0 0.0
        %7303 = vmatpush1.msra.mxu0 %v7285
        %7304 = vmatprep.subr.mxu0 0.0
        %7305 = vmatpush1.msra.mxu0 %v7284
        %7306 = vmatprep.subr.mxu0 0.0
        %7307 = vmatpush1.msra.mxu0 %v7283
        %7308 = vmatprep.subr.mxu0 0.0
        %7309 = vmatpush1.msra.mxu0 %v7282
        %7310 = vmatprep.subr.mxu0 0.0
        %7311 = vmatpush1.msra.mxu0 %v7281
        %7312 = vmatprep.subr.mxu0 0.0
        %7313 = vmatpush1.msra.mxu0 %v7280
        %7314 = vmatprep.subr.mxu0 0.0
        %7315 = vmatpush1.msra.mxu0 %v7279
        %7316 = vmatprep.subr.mxu0 0.0
        %7317 = vmatpush1.msra.mxu0 %v7278
        %7318 = vmatprep.subr.mxu0 0.0
        %7319 = vmatpush1.msra.mxu0 %v7277
        %7320 = vmatprep.subr.mxu0 0.0
        %7321 = vmatpush1.msra.mxu0 %v7276
        %7322 = vmatprep.subr.mxu0 0.0
        %7323 = vmatpush1.msra.mxu0 %v7275
        %7324 = vmatprep.subr.mxu0 0.0
        %7325 = vmatpush1.msra.mxu0 %v7274
        %7326 = vmatprep.subr.mxu0 0.0
        %7327 = vmatpush1.msra.mxu0 %v7273
        %7328 = vmatprep.subr.mxu0 0.0
        %7329 = vmatpush1.msra.mxu0 %v7272
        %7330 = vmatprep.subr.mxu0 0.0
        %7331 = vmatpush1.msra.mxu0 %v7271
        %7332 = vmatprep.subr.mxu0 0.0
        %7333 = vmatpush1.msra.mxu0 %v7270
        %7334 = vmatprep.subr.mxu0 0.0
        %7335 = vmatpush2.msra.mxu0 %v7301
        %7336 = vmatprep.subr.mxu0 0.0
        %7337 = vmatpush2.msra.mxu0 %v7300
        %7338 = vmatprep.subr.mxu0 0.0
        %7339 = vmatpush2.msra.mxu0 %v7299
        %7340 = vmatprep.subr.mxu0 0.0
        %7341 = vmatpush2.msra.mxu0 %v7298
        %7342 = vmatprep.subr.mxu0 0.0
        %7343 = vmatpush2.msra.mxu0 %v7297
        %7344 = vmatprep.subr.mxu0 0.0
        %7345 = vmatpush2.msra.mxu0 %v7296
        %7346 = vmatprep.subr.mxu0 0.0
        %7347 = vmatpush2.msra.mxu0 %v7295
        %7348 = vmatprep.subr.mxu0 0.0
        %7349 = vmatpush2.msra.mxu0 %v7294
        %7350 = vmatprep.subr.mxu0 0.0
        %7351 = vmatpush2.msra.mxu0 %v7293
        %7352 = vmatprep.subr.mxu0 0.0
        %7353 = vmatpush2.msra.mxu0 %v7292
        %7354 = vmatprep.subr.mxu0 0.0
        %7355 = vmatpush2.msra.mxu0 %v7291
        %7356 = vmatprep.subr.mxu0 0.0
        %7357 = vmatpush2.msra.mxu0 %v7290
        %7358 = vmatprep.subr.mxu0 0.0
        %7359 = vmatpush2.msra.mxu0 %v7289
        %7360 = vmatprep.subr.mxu0 0.0
        %7361 = vmatpush2.msra.mxu0 %v7288
        %7362 = vmatprep.subr.mxu0 0.0
        %7363 = vmatpush2.msra.mxu0 %v7287
        %7364 = vmatprep.subr.mxu0 0.0
        %7365 = vmatpush2.msra.mxu0 %v7286
        %7366 = vmatprep.mubr.f32.mxu0 %v251
        %7367 = vmatmul.mubr.f32.gmra.mxu0 %v250
        %v7368 = vpop.f32.mrf.mxu0
        %v7369 = vadd.f32 0.0, %v7368
        %v7370 = vpop.f32.mrf.mxu0
        %7371 = vmatprep.mubr.f32.mxu0 %v253
        %7372 = vmatmul.mubr.f32.gmra.mxu0 %v252
        %v7373 = vpop.f32.mrf.mxu0
        %v7374 = vadd.f32 0.0, %v7373
        %v7375 = vpop.f32.mrf.mxu0
        %7376 = vmatprep.mubr.f32.mxu0 %v255
        %7377 = vmatmul.mubr.f32.gmra.mxu0 %v254
        %v7378 = vpop.f32.mrf.mxu0
        %v7379 = vadd.f32 0.0, %v7378
        %v7380 = vpop.f32.mrf.mxu0
        %7381 = vmatprep.mubr.f32.mxu0 %v257
        %7382 = vmatmul.mubr.f32.gmra.mxu0 %v256
        %v7383 = vpop.f32.mrf.mxu0
        %v7384 = vadd.f32 0.0, %v7383
        %v7385 = vpop.f32.mrf.mxu0
        %7386 = vmatprep.mubr.f32.mxu0 %v259
        %7387 = vmatmul.mubr.f32.gmra.mxu0 %v258
        %v7388 = vpop.f32.mrf.mxu0
        %v7389 = vadd.f32 0.0, %v7388
        %v7390 = vpop.f32.mrf.mxu0
        %7391 = vmatprep.mubr.f32.mxu0 %v261
        %7392 = vmatmul.mubr.f32.gmra.mxu0 %v260
        %v7393 = vpop.f32.mrf.mxu0
        %v7394 = vadd.f32 0.0, %v7393
        %v7395 = vpop.f32.mrf.mxu0
        %7396 = vmatprep.mubr.f32.mxu0 %v263
        %7397 = vmatmul.mubr.f32.gmra.mxu0 %v262
        %v7398 = vpop.f32.mrf.mxu0
        %v7399 = vadd.f32 0.0, %v7398
        %v7400 = vpop.f32.mrf.mxu0
        %7401 = vmatprep.mubr.f32.mxu0 %v265
        %7402 = vmatmul.mubr.f32.gmra.mxu0 %v264
        %v7403 = vpop.f32.mrf.mxu0
        %v7404 = vadd.f32 0.0, %v7403
        %v7405 = vpop.f32.mrf.mxu0
        %7406 = vmatprep.mubr.f32.mxu0 %v267
        %7407 = vmatmul.mubr.f32.gmra.mxu0 %v266
        %v7408 = vpop.f32.mrf.mxu0
        %v7409 = vadd.f32 0.0, %v7408
        %v7410 = vpop.f32.mrf.mxu0
        %7411 = vmatprep.mubr.f32.mxu0 %v269
        %7412 = vmatmul.mubr.f32.gmra.mxu0 %v268
        %v7413 = vpop.f32.mrf.mxu0
        %v7414 = vadd.f32 0.0, %v7413
        %v7415 = vpop.f32.mrf.mxu0
        %7416 = vmatprep.mubr.f32.mxu0 %v271
        %7417 = vmatmul.mubr.f32.gmra.mxu0 %v270
        %v7418 = vpop.f32.mrf.mxu0
        %v7419 = vadd.f32 0.0, %v7418
        %v7420 = vpop.f32.mrf.mxu0
        %7421 = vmatprep.mubr.f32.mxu0 %v273
        %7422 = vmatmul.mubr.f32.gmra.mxu0 %v272
        %v7423 = vpop.f32.mrf.mxu0
        %v7424 = vadd.f32 0.0, %v7423
        %v7425 = vpop.f32.mrf.mxu0
        %7426 = vmatprep.mubr.f32.mxu0 %v275
        %7427 = vmatmul.mubr.f32.gmra.mxu0 %v274
        %v7428 = vpop.f32.mrf.mxu0
        %v7429 = vadd.f32 0.0, %v7428
        %v7430 = vpop.f32.mrf.mxu0
        %7431 = vmatprep.mubr.f32.mxu0 %v277
        %7432 = vmatmul.mubr.f32.gmra.mxu0 %v276
        %v7433 = vpop.f32.mrf.mxu0
        %v7434 = vadd.f32 0.0, %v7433
        %v7435 = vpop.f32.mrf.mxu0
        %7436 = vmatprep.mubr.f32.mxu0 %v279
        %7437 = vmatmul.mubr.f32.gmra.mxu0 %v278
        %v7438 = vpop.f32.mrf.mxu0
        %v7439 = vadd.f32 0.0, %v7438
        %v7440 = vpop.f32.mrf.mxu0
        %7441 = vmatprep.mubr.f32.mxu0 %v281
        %7442 = vmatmul.mubr.f32.gmra.mxu0 %v280
        %v7443 = vpop.f32.mrf.mxu0
        %v7444 = vadd.f32 0.0, %v7443
        %v7445 = vpop.f32.mrf.mxu0
        %7446 = vmatprep.mubr.f32.mxu0 %v283
        %7447 = vmatmul.mubr.f32.gmra.mxu0 %v282
        %v7448 = vpop.f32.mrf.mxu0
        %v7449 = vadd.f32 0.0, %v7448
        %v7450 = vpop.f32.mrf.mxu0
        %7451 = vmatprep.mubr.f32.mxu0 %v285
        %7452 = vmatmul.mubr.f32.gmra.mxu0 %v284
        %v7453 = vpop.f32.mrf.mxu0
        %v7454 = vadd.f32 0.0, %v7453
        %v7455 = vpop.f32.mrf.mxu0
        %7456 = vmatprep.mubr.f32.mxu0 %v287
        %7457 = vmatmul.mubr.f32.gmra.mxu0 %v286
        %v7458 = vpop.f32.mrf.mxu0
        %v7459 = vadd.f32 0.0, %v7458
        %v7460 = vpop.f32.mrf.mxu0
        %7461 = vmatprep.mubr.f32.mxu0 %v289
        %7462 = vmatmul.mubr.f32.gmra.mxu0 %v288
        %v7463 = vpop.f32.mrf.mxu0
        %v7464 = vadd.f32 0.0, %v7463
        %v7465 = vpop.f32.mrf.mxu0
        %7466 = vmatprep.mubr.f32.mxu0 %v291
        %7467 = vmatmul.mubr.f32.gmra.mxu0 %v290
        %v7468 = vpop.f32.mrf.mxu0
        %v7469 = vadd.f32 0.0, %v7468
        %v7470 = vpop.f32.mrf.mxu0
        %7471 = vmatprep.mubr.f32.mxu0 %v293
        %7472 = vmatmul.mubr.f32.gmra.mxu0 %v292
        %v7473 = vpop.f32.mrf.mxu0
        %v7474 = vadd.f32 0.0, %v7473
        %v7475 = vpop.f32.mrf.mxu0
        %7476 = vmatprep.mubr.f32.mxu0 %v295
        %7477 = vmatmul.mubr.f32.gmra.mxu0 %v294
        %v7478 = vpop.f32.mrf.mxu0
        %v7479 = vadd.f32 0.0, %v7478
        %v7480 = vpop.f32.mrf.mxu0
        %7481 = vmatprep.mubr.f32.mxu0 %v297
        %7482 = vmatmul.mubr.f32.gmra.mxu0 %v296
        %v7483 = vpop.f32.mrf.mxu0
        %v7484 = vadd.f32 0.0, %v7483
        %v7485 = vpop.f32.mrf.mxu0
        %7486 = vmatprep.mubr.f32.mxu0 %v299
        %7487 = vmatmul.mubr.f32.gmra.mxu0 %v298
        %v7488 = vpop.f32.mrf.mxu0
        %v7489 = vadd.f32 0.0, %v7488
        %v7490 = vpop.f32.mrf.mxu0
        %7491 = vmatprep.mubr.f32.mxu0 %v301
        %7492 = vmatmul.mubr.f32.gmra.mxu0 %v300
        %v7493 = vpop.f32.mrf.mxu0
        %v7494 = vadd.f32 0.0, %v7493
        %v7495 = vpop.f32.mrf.mxu0
        %7496 = vmatprep.mubr.f32.mxu0 %v303
        %7497 = vmatmul.mubr.f32.gmra.mxu0 %v302
        %v7498 = vpop.f32.mrf.mxu0
        %v7499 = vadd.f32 0.0, %v7498
        %v7500 = vpop.f32.mrf.mxu0
        %7501 = vmatprep.mubr.f32.mxu0 %v305
        %7502 = vmatmul.mubr.f32.gmra.mxu0 %v304
        %v7503 = vpop.f32.mrf.mxu0
        %v7504 = vadd.f32 0.0, %v7503
        %v7505 = vpop.f32.mrf.mxu0
        %7506 = vmatprep.mubr.f32.mxu0 %v307
        %7507 = vmatmul.mubr.f32.gmra.mxu0 %v306
        %v7508 = vpop.f32.mrf.mxu0
        %v7509 = vadd.f32 0.0, %v7508
        %v7510 = vpop.f32.mrf.mxu0
        %7511 = vmatprep.mubr.f32.mxu0 %v309
        %7512 = vmatmul.mubr.f32.gmra.mxu0 %v308
        %v7513 = vpop.f32.mrf.mxu0
        %v7514 = vadd.f32 0.0, %v7513
        %v7515 = vpop.f32.mrf.mxu0
        %7516 = vmatprep.mubr.f32.mxu0 %v311
        %7517 = vmatmul.mubr.f32.gmra.mxu0 %v310
        %v7518 = vpop.f32.mrf.mxu0
        %v7519 = vadd.f32 0.0, %v7518
        %v7520 = vpop.f32.mrf.mxu0
        %7521 = vmatprep.mubr.f32.mxu0 %v313
        %7522 = vmatmul.mubr.f32.gmra.mxu0 %v312
        %v7523 = vpop.f32.mrf.mxu0
        %v7524 = vadd.f32 0.0, %v7523
        %v7525 = vpop.f32.mrf.mxu0
        %7526 = vdwg.mxu0
        %v7527 = vmul.f32 %v7369, 0.125
        %v7528 = vmul.f32 %v7374, 0.125
        %v7529 = vmul.f32 %v7379, 0.125
        %v7530 = vmul.f32 %v7384, 0.125
        %v7531 = vmul.f32 %v7389, 0.125
        %v7532 = vmul.f32 %v7394, 0.125
        %v7533 = vmul.f32 %v7399, 0.125
        %v7534 = vmul.f32 %v7404, 0.125
        %v7535 = vmul.f32 %v7409, 0.125
        %v7536 = vmul.f32 %v7414, 0.125
        %v7537 = vmul.f32 %v7419, 0.125
        %v7538 = vmul.f32 %v7424, 0.125
        %v7539 = vmul.f32 %v7429, 0.125
        %v7540 = vmul.f32 %v7434, 0.125
        %v7541 = vmul.f32 %v7439, 0.125
        %v7542 = vmul.f32 %v7444, 0.125
        %v7543 = vmul.f32 %v7449, 0.125
        %v7544 = vmul.f32 %v7454, 0.125
        %v7545 = vmul.f32 %v7459, 0.125
        %v7546 = vmul.f32 %v7464, 0.125
        %v7547 = vmul.f32 %v7469, 0.125
        %v7548 = vmul.f32 %v7474, 0.125
        %v7549 = vmul.f32 %v7479, 0.125
        %v7550 = vmul.f32 %v7484, 0.125
        %v7551 = vmul.f32 %v7489, 0.125
        %v7552 = vmul.f32 %v7494, 0.125
        %v7553 = vmul.f32 %v7499, 0.125
        %v7554 = vmul.f32 %v7504, 0.125
        %v7555 = vmul.f32 %v7509, 0.125
        %v7556 = vmul.f32 %v7514, 0.125
        %v7557 = vmul.f32 %v7519, 0.125
        %v7558 = vmul.f32 %v7524, 0.125
        %s7559 = scalar_lea.vmem %s2, 768
        %v7560 = vld [vmem:[%s7559] sm:$0xff]
        %v7561 = vld [vmem:[%s7559 + $0x8] sm:$0xff]
        %v7562 = vld [vmem:[%s7559 + $0x10] sm:$0xff]
        %v7563 = vld [vmem:[%s7559 + $0x18] sm:$0xff]
        %v7564 = vld [vmem:[%s7559 + $0x20] sm:$0xff]
        %v7565 = vld [vmem:[%s7559 + $0x28] sm:$0xff]
        %v7566 = vld [vmem:[%s7559 + $0x30] sm:$0xff]
        %v7567 = vld [vmem:[%s7559 + $0x38] sm:$0xff]
        %v7568 = vld [vmem:[%s7559 + $0x40] sm:$0xff]
        %v7569 = vld [vmem:[%s7559 + $0x48] sm:$0xff]
        %v7570 = vld [vmem:[%s7559 + $0x50] sm:$0xff]
        %v7571 = vld [vmem:[%s7559 + $0x58] sm:$0xff]
        %v7572 = vld [vmem:[%s7559 + $0x60] sm:$0xff]
        %v7573 = vld [vmem:[%s7559 + $0x68] sm:$0xff]
        %v7574 = vld [vmem:[%s7559 + $0x70] sm:$0xff]
        %v7575 = vld [vmem:[%s7559 + $0x78] sm:$0xff]
        %v7576 = vld [vmem:[%s7559 + $0x80] sm:$0xff]
        %v7577 = vld [vmem:[%s7559 + $0x88] sm:$0xff]
        %v7578 = vld [vmem:[%s7559 + $0x90] sm:$0xff]
        %v7579 = vld [vmem:[%s7559 + $0x98] sm:$0xff]
        %v7580 = vld [vmem:[%s7559 + $0xa0] sm:$0xff]
        %v7581 = vld [vmem:[%s7559 + $0xa8] sm:$0xff]
        %v7582 = vld [vmem:[%s7559 + $0xb0] sm:$0xff]
        %v7583 = vld [vmem:[%s7559 + $0xb8] sm:$0xff]
        %v7584 = vld [vmem:[%s7559 + $0xc0] sm:$0xff]
        %v7585 = vld [vmem:[%s7559 + $0xc8] sm:$0xff]
        %v7586 = vld [vmem:[%s7559 + $0xd0] sm:$0xff]
        %v7587 = vld [vmem:[%s7559 + $0xd8] sm:$0xff]
        %v7588 = vld [vmem:[%s7559 + $0xe0] sm:$0xff]
        %v7589 = vld [vmem:[%s7559 + $0xe8] sm:$0xff]
        %v7590 = vld [vmem:[%s7559 + $0xf0] sm:$0xff]
        %v7591 = vld [vmem:[%s7559 + $0xf8] sm:$0xff]
        %7592 = vmatprep.subr.mxu0 0.0
        %7593 = vmatpush1.msra.mxu0 %v7575
        %7594 = vmatprep.subr.mxu0 0.0
        %7595 = vmatpush1.msra.mxu0 %v7574
        %7596 = vmatprep.subr.mxu0 0.0
        %7597 = vmatpush1.msra.mxu0 %v7573
        %7598 = vmatprep.subr.mxu0 0.0
        %7599 = vmatpush1.msra.mxu0 %v7572
        %7600 = vmatprep.subr.mxu0 0.0
        %7601 = vmatpush1.msra.mxu0 %v7571
        %7602 = vmatprep.subr.mxu0 0.0
        %7603 = vmatpush1.msra.mxu0 %v7570
        %7604 = vmatprep.subr.mxu0 0.0
        %7605 = vmatpush1.msra.mxu0 %v7569
        %7606 = vmatprep.subr.mxu0 0.0
        %7607 = vmatpush1.msra.mxu0 %v7568
        %7608 = vmatprep.subr.mxu0 0.0
        %7609 = vmatpush1.msra.mxu0 %v7567
        %7610 = vmatprep.subr.mxu0 0.0
        %7611 = vmatpush1.msra.mxu0 %v7566
        %7612 = vmatprep.subr.mxu0 0.0
        %7613 = vmatpush1.msra.mxu0 %v7565
        %7614 = vmatprep.subr.mxu0 0.0
        %7615 = vmatpush1.msra.mxu0 %v7564
        %7616 = vmatprep.subr.mxu0 0.0
        %7617 = vmatpush1.msra.mxu0 %v7563
        %7618 = vmatprep.subr.mxu0 0.0
        %7619 = vmatpush1.msra.mxu0 %v7562
        %7620 = vmatprep.subr.mxu0 0.0
        %7621 = vmatpush1.msra.mxu0 %v7561
        %7622 = vmatprep.subr.mxu0 0.0
        %7623 = vmatpush1.msra.mxu0 %v7560
        %7624 = vmatprep.subr.mxu0 0.0
        %7625 = vmatpush2.msra.mxu0 %v7591
        %7626 = vmatprep.subr.mxu0 0.0
        %7627 = vmatpush2.msra.mxu0 %v7590
        %7628 = vmatprep.subr.mxu0 0.0
        %7629 = vmatpush2.msra.mxu0 %v7589
        %7630 = vmatprep.subr.mxu0 0.0
        %7631 = vmatpush2.msra.mxu0 %v7588
        %7632 = vmatprep.subr.mxu0 0.0
        %7633 = vmatpush2.msra.mxu0 %v7587
        %7634 = vmatprep.subr.mxu0 0.0
        %7635 = vmatpush2.msra.mxu0 %v7586
        %7636 = vmatprep.subr.mxu0 0.0
        %7637 = vmatpush2.msra.mxu0 %v7585
        %7638 = vmatprep.subr.mxu0 0.0
        %7639 = vmatpush2.msra.mxu0 %v7584
        %7640 = vmatprep.subr.mxu0 0.0
        %7641 = vmatpush2.msra.mxu0 %v7583
        %7642 = vmatprep.subr.mxu0 0.0
        %7643 = vmatpush2.msra.mxu0 %v7582
        %7644 = vmatprep.subr.mxu0 0.0
        %7645 = vmatpush2.msra.mxu0 %v7581
        %7646 = vmatprep.subr.mxu0 0.0
        %7647 = vmatpush2.msra.mxu0 %v7580
        %7648 = vmatprep.subr.mxu0 0.0
        %7649 = vmatpush2.msra.mxu0 %v7579
        %7650 = vmatprep.subr.mxu0 0.0
        %7651 = vmatpush2.msra.mxu0 %v7578
        %7652 = vmatprep.subr.mxu0 0.0
        %7653 = vmatpush2.msra.mxu0 %v7577
        %7654 = vmatprep.subr.mxu0 0.0
        %7655 = vmatpush2.msra.mxu0 %v7576
        %7656 = vmatprep.mubr.f32.mxu0 %v251
        %7657 = vmatmul.mubr.f32.gmra.mxu0 %v250
        %v7658 = vpop.f32.mrf.mxu0
        %v7659 = vadd.f32 0.0, %v7658
        %v7660 = vpop.f32.mrf.mxu0
        %7661 = vmatprep.mubr.f32.mxu0 %v253
        %7662 = vmatmul.mubr.f32.gmra.mxu0 %v252
        %v7663 = vpop.f32.mrf.mxu0
        %v7664 = vadd.f32 0.0, %v7663
        %v7665 = vpop.f32.mrf.mxu0
        %7666 = vmatprep.mubr.f32.mxu0 %v255
        %7667 = vmatmul.mubr.f32.gmra.mxu0 %v254
        %v7668 = vpop.f32.mrf.mxu0
        %v7669 = vadd.f32 0.0, %v7668
        %v7670 = vpop.f32.mrf.mxu0
        %7671 = vmatprep.mubr.f32.mxu0 %v257
        %7672 = vmatmul.mubr.f32.gmra.mxu0 %v256
        %v7673 = vpop.f32.mrf.mxu0
        %v7674 = vadd.f32 0.0, %v7673
        %v7675 = vpop.f32.mrf.mxu0
        %7676 = vmatprep.mubr.f32.mxu0 %v259
        %7677 = vmatmul.mubr.f32.gmra.mxu0 %v258
        %v7678 = vpop.f32.mrf.mxu0
        %v7679 = vadd.f32 0.0, %v7678
        %v7680 = vpop.f32.mrf.mxu0
        %7681 = vmatprep.mubr.f32.mxu0 %v261
        %7682 = vmatmul.mubr.f32.gmra.mxu0 %v260
        %v7683 = vpop.f32.mrf.mxu0
        %v7684 = vadd.f32 0.0, %v7683
        %v7685 = vpop.f32.mrf.mxu0
        %7686 = vmatprep.mubr.f32.mxu0 %v263
        %7687 = vmatmul.mubr.f32.gmra.mxu0 %v262
        %v7688 = vpop.f32.mrf.mxu0
        %v7689 = vadd.f32 0.0, %v7688
        %v7690 = vpop.f32.mrf.mxu0
        %7691 = vmatprep.mubr.f32.mxu0 %v265
        %7692 = vmatmul.mubr.f32.gmra.mxu0 %v264
        %v7693 = vpop.f32.mrf.mxu0
        %v7694 = vadd.f32 0.0, %v7693
        %v7695 = vpop.f32.mrf.mxu0
        %7696 = vmatprep.mubr.f32.mxu0 %v267
        %7697 = vmatmul.mubr.f32.gmra.mxu0 %v266
        %v7698 = vpop.f32.mrf.mxu0
        %v7699 = vadd.f32 0.0, %v7698
        %v7700 = vpop.f32.mrf.mxu0
        %7701 = vmatprep.mubr.f32.mxu0 %v269
        %7702 = vmatmul.mubr.f32.gmra.mxu0 %v268
        %v7703 = vpop.f32.mrf.mxu0
        %v7704 = vadd.f32 0.0, %v7703
        %v7705 = vpop.f32.mrf.mxu0
        %7706 = vmatprep.mubr.f32.mxu0 %v271
        %7707 = vmatmul.mubr.f32.gmra.mxu0 %v270
        %v7708 = vpop.f32.mrf.mxu0
        %v7709 = vadd.f32 0.0, %v7708
        %v7710 = vpop.f32.mrf.mxu0
        %7711 = vmatprep.mubr.f32.mxu0 %v273
        %7712 = vmatmul.mubr.f32.gmra.mxu0 %v272
        %v7713 = vpop.f32.mrf.mxu0
        %v7714 = vadd.f32 0.0, %v7713
        %v7715 = vpop.f32.mrf.mxu0
        %7716 = vmatprep.mubr.f32.mxu0 %v275
        %7717 = vmatmul.mubr.f32.gmra.mxu0 %v274
        %v7718 = vpop.f32.mrf.mxu0
        %v7719 = vadd.f32 0.0, %v7718
        %v7720 = vpop.f32.mrf.mxu0
        %7721 = vmatprep.mubr.f32.mxu0 %v277
        %7722 = vmatmul.mubr.f32.gmra.mxu0 %v276
        %v7723 = vpop.f32.mrf.mxu0
        %v7724 = vadd.f32 0.0, %v7723
        %v7725 = vpop.f32.mrf.mxu0
        %7726 = vmatprep.mubr.f32.mxu0 %v279
        %7727 = vmatmul.mubr.f32.gmra.mxu0 %v278
        %v7728 = vpop.f32.mrf.mxu0
        %v7729 = vadd.f32 0.0, %v7728
        %v7730 = vpop.f32.mrf.mxu0
        %7731 = vmatprep.mubr.f32.mxu0 %v281
        %7732 = vmatmul.mubr.f32.gmra.mxu0 %v280
        %v7733 = vpop.f32.mrf.mxu0
        %v7734 = vadd.f32 0.0, %v7733
        %v7735 = vpop.f32.mrf.mxu0
        %7736 = vmatprep.mubr.f32.mxu0 %v283
        %7737 = vmatmul.mubr.f32.gmra.mxu0 %v282
        %v7738 = vpop.f32.mrf.mxu0
        %v7739 = vadd.f32 0.0, %v7738
        %v7740 = vpop.f32.mrf.mxu0
        %7741 = vmatprep.mubr.f32.mxu0 %v285
        %7742 = vmatmul.mubr.f32.gmra.mxu0 %v284
        %v7743 = vpop.f32.mrf.mxu0
        %v7744 = vadd.f32 0.0, %v7743
        %v7745 = vpop.f32.mrf.mxu0
        %7746 = vmatprep.mubr.f32.mxu0 %v287
        %7747 = vmatmul.mubr.f32.gmra.mxu0 %v286
        %v7748 = vpop.f32.mrf.mxu0
        %v7749 = vadd.f32 0.0, %v7748
        %v7750 = vpop.f32.mrf.mxu0
        %7751 = vmatprep.mubr.f32.mxu0 %v289
        %7752 = vmatmul.mubr.f32.gmra.mxu0 %v288
        %v7753 = vpop.f32.mrf.mxu0
        %v7754 = vadd.f32 0.0, %v7753
        %v7755 = vpop.f32.mrf.mxu0
        %7756 = vmatprep.mubr.f32.mxu0 %v291
        %7757 = vmatmul.mubr.f32.gmra.mxu0 %v290
        %v7758 = vpop.f32.mrf.mxu0
        %v7759 = vadd.f32 0.0, %v7758
        %v7760 = vpop.f32.mrf.mxu0
        %7761 = vmatprep.mubr.f32.mxu0 %v293
        %7762 = vmatmul.mubr.f32.gmra.mxu0 %v292
        %v7763 = vpop.f32.mrf.mxu0
        %v7764 = vadd.f32 0.0, %v7763
        %v7765 = vpop.f32.mrf.mxu0
        %7766 = vmatprep.mubr.f32.mxu0 %v295
        %7767 = vmatmul.mubr.f32.gmra.mxu0 %v294
        %v7768 = vpop.f32.mrf.mxu0
        %v7769 = vadd.f32 0.0, %v7768
        %v7770 = vpop.f32.mrf.mxu0
        %7771 = vmatprep.mubr.f32.mxu0 %v297
        %7772 = vmatmul.mubr.f32.gmra.mxu0 %v296
        %v7773 = vpop.f32.mrf.mxu0
        %v7774 = vadd.f32 0.0, %v7773
        %v7775 = vpop.f32.mrf.mxu0
        %7776 = vmatprep.mubr.f32.mxu0 %v299
        %7777 = vmatmul.mubr.f32.gmra.mxu0 %v298
        %v7778 = vpop.f32.mrf.mxu0
        %v7779 = vadd.f32 0.0, %v7778
        %v7780 = vpop.f32.mrf.mxu0
        %7781 = vmatprep.mubr.f32.mxu0 %v301
        %7782 = vmatmul.mubr.f32.gmra.mxu0 %v300
        %v7783 = vpop.f32.mrf.mxu0
        %v7784 = vadd.f32 0.0, %v7783
        %v7785 = vpop.f32.mrf.mxu0
        %7786 = vmatprep.mubr.f32.mxu0 %v303
        %7787 = vmatmul.mubr.f32.gmra.mxu0 %v302
        %v7788 = vpop.f32.mrf.mxu0
        %v7789 = vadd.f32 0.0, %v7788
        %v7790 = vpop.f32.mrf.mxu0
        %7791 = vmatprep.mubr.f32.mxu0 %v305
        %7792 = vmatmul.mubr.f32.gmra.mxu0 %v304
        %v7793 = vpop.f32.mrf.mxu0
        %v7794 = vadd.f32 0.0, %v7793
        %v7795 = vpop.f32.mrf.mxu0
        %7796 = vmatprep.mubr.f32.mxu0 %v307
        %7797 = vmatmul.mubr.f32.gmra.mxu0 %v306
        %v7798 = vpop.f32.mrf.mxu0
        %v7799 = vadd.f32 0.0, %v7798
        %v7800 = vpop.f32.mrf.mxu0
        %7801 = vmatprep.mubr.f32.mxu0 %v309
        %7802 = vmatmul.mubr.f32.gmra.mxu0 %v308
        %v7803 = vpop.f32.mrf.mxu0
        %v7804 = vadd.f32 0.0, %v7803
        %v7805 = vpop.f32.mrf.mxu0
        %7806 = vmatprep.mubr.f32.mxu0 %v311
        %7807 = vmatmul.mubr.f32.gmra.mxu0 %v310
        %v7808 = vpop.f32.mrf.mxu0
        %v7809 = vadd.f32 0.0, %v7808
        %v7810 = vpop.f32.mrf.mxu0
        %7811 = vmatprep.mubr.f32.mxu0 %v313
        %7812 = vmatmul.mubr.f32.gmra.mxu0 %v312
        %v7813 = vpop.f32.mrf.mxu0
        %v7814 = vadd.f32 0.0, %v7813
        %v7815 = vpop.f32.mrf.mxu0
        %7816 = vdwg.mxu0
        %s7817 = scalar_lea.vmem %s3, 768
        %v7818 = vld [vmem:[%s7817] sm:$0xff]
        %v7819 = vld [vmem:[%s7817 + $0x8] sm:$0xff]
        %v7820 = vld [vmem:[%s7817 + $0x10] sm:$0xff]
        %v7821 = vld [vmem:[%s7817 + $0x18] sm:$0xff]
        %v7822 = vld [vmem:[%s7817 + $0x20] sm:$0xff]
        %v7823 = vld [vmem:[%s7817 + $0x28] sm:$0xff]
        %v7824 = vld [vmem:[%s7817 + $0x30] sm:$0xff]
        %v7825 = vld [vmem:[%s7817 + $0x38] sm:$0xff]
        %v7826 = vld [vmem:[%s7817 + $0x40] sm:$0xff]
        %v7827 = vld [vmem:[%s7817 + $0x48] sm:$0xff]
        %v7828 = vld [vmem:[%s7817 + $0x50] sm:$0xff]
        %v7829 = vld [vmem:[%s7817 + $0x58] sm:$0xff]
        %v7830 = vld [vmem:[%s7817 + $0x60] sm:$0xff]
        %v7831 = vld [vmem:[%s7817 + $0x68] sm:$0xff]
        %v7832 = vld [vmem:[%s7817 + $0x70] sm:$0xff]
        %v7833 = vld [vmem:[%s7817 + $0x78] sm:$0xff]
        %v7834 = vld [vmem:[%s7817 + $0x80] sm:$0xff]
        %v7835 = vld [vmem:[%s7817 + $0x88] sm:$0xff]
        %v7836 = vld [vmem:[%s7817 + $0x90] sm:$0xff]
        %v7837 = vld [vmem:[%s7817 + $0x98] sm:$0xff]
        %v7838 = vld [vmem:[%s7817 + $0xa0] sm:$0xff]
        %v7839 = vld [vmem:[%s7817 + $0xa8] sm:$0xff]
        %v7840 = vld [vmem:[%s7817 + $0xb0] sm:$0xff]
        %v7841 = vld [vmem:[%s7817 + $0xb8] sm:$0xff]
        %v7842 = vld [vmem:[%s7817 + $0xc0] sm:$0xff]
        %v7843 = vld [vmem:[%s7817 + $0xc8] sm:$0xff]
        %v7844 = vld [vmem:[%s7817 + $0xd0] sm:$0xff]
        %v7845 = vld [vmem:[%s7817 + $0xd8] sm:$0xff]
        %v7846 = vld [vmem:[%s7817 + $0xe0] sm:$0xff]
        %v7847 = vld [vmem:[%s7817 + $0xe8] sm:$0xff]
        %v7848 = vld [vmem:[%s7817 + $0xf0] sm:$0xff]
        %v7849 = vld [vmem:[%s7817 + $0xf8] sm:$0xff]
        %7850 = vmatprep.subr.mxu0 0.0
        %7851 = vmatpush1.msra.mxu0 %v7833
        %7852 = vmatprep.subr.mxu0 0.0
        %7853 = vmatpush1.msra.mxu0 %v7832
        %7854 = vmatprep.subr.mxu0 0.0
        %7855 = vmatpush1.msra.mxu0 %v7831
        %7856 = vmatprep.subr.mxu0 0.0
        %7857 = vmatpush1.msra.mxu0 %v7830
        %7858 = vmatprep.subr.mxu0 0.0
        %7859 = vmatpush1.msra.mxu0 %v7829
        %7860 = vmatprep.subr.mxu0 0.0
        %7861 = vmatpush1.msra.mxu0 %v7828
        %7862 = vmatprep.subr.mxu0 0.0
        %7863 = vmatpush1.msra.mxu0 %v7827
        %7864 = vmatprep.subr.mxu0 0.0
        %7865 = vmatpush1.msra.mxu0 %v7826
        %7866 = vmatprep.subr.mxu0 0.0
        %7867 = vmatpush1.msra.mxu0 %v7825
        %7868 = vmatprep.subr.mxu0 0.0
        %7869 = vmatpush1.msra.mxu0 %v7824
        %7870 = vmatprep.subr.mxu0 0.0
        %7871 = vmatpush1.msra.mxu0 %v7823
        %7872 = vmatprep.subr.mxu0 0.0
        %7873 = vmatpush1.msra.mxu0 %v7822
        %7874 = vmatprep.subr.mxu0 0.0
        %7875 = vmatpush1.msra.mxu0 %v7821
        %7876 = vmatprep.subr.mxu0 0.0
        %7877 = vmatpush1.msra.mxu0 %v7820
        %7878 = vmatprep.subr.mxu0 0.0
        %7879 = vmatpush1.msra.mxu0 %v7819
        %7880 = vmatprep.subr.mxu0 0.0
        %7881 = vmatpush1.msra.mxu0 %v7818
        %7882 = vmatprep.subr.mxu0 0.0
        %7883 = vmatpush2.msra.mxu0 %v7849
        %7884 = vmatprep.subr.mxu0 0.0
        %7885 = vmatpush2.msra.mxu0 %v7848
        %7886 = vmatprep.subr.mxu0 0.0
        %7887 = vmatpush2.msra.mxu0 %v7847
        %7888 = vmatprep.subr.mxu0 0.0
        %7889 = vmatpush2.msra.mxu0 %v7846
        %7890 = vmatprep.subr.mxu0 0.0
        %7891 = vmatpush2.msra.mxu0 %v7845
        %7892 = vmatprep.subr.mxu0 0.0
        %7893 = vmatpush2.msra.mxu0 %v7844
        %7894 = vmatprep.subr.mxu0 0.0
        %7895 = vmatpush2.msra.mxu0 %v7843
        %7896 = vmatprep.subr.mxu0 0.0
        %7897 = vmatpush2.msra.mxu0 %v7842
        %7898 = vmatprep.subr.mxu0 0.0
        %7899 = vmatpush2.msra.mxu0 %v7841
        %7900 = vmatprep.subr.mxu0 0.0
        %7901 = vmatpush2.msra.mxu0 %v7840
        %7902 = vmatprep.subr.mxu0 0.0
        %7903 = vmatpush2.msra.mxu0 %v7839
        %7904 = vmatprep.subr.mxu0 0.0
        %7905 = vmatpush2.msra.mxu0 %v7838
        %7906 = vmatprep.subr.mxu0 0.0
        %7907 = vmatpush2.msra.mxu0 %v7837
        %7908 = vmatprep.subr.mxu0 0.0
        %7909 = vmatpush2.msra.mxu0 %v7836
        %7910 = vmatprep.subr.mxu0 0.0
        %7911 = vmatpush2.msra.mxu0 %v7835
        %7912 = vmatprep.subr.mxu0 0.0
        %7913 = vmatpush2.msra.mxu0 %v7834
        %7914 = vmatprep.mubr.f32.mxu0 %v251
        %7915 = vmatmul.mubr.f32.gmra.mxu0 %v250
        %v7916 = vpop.f32.mrf.mxu0
        %v7917 = vadd.f32 0.0, %v7916
        %v7918 = vpop.f32.mrf.mxu0
        %7919 = vmatprep.mubr.f32.mxu0 %v253
        %7920 = vmatmul.mubr.f32.gmra.mxu0 %v252
        %v7921 = vpop.f32.mrf.mxu0
        %v7922 = vadd.f32 0.0, %v7921
        %v7923 = vpop.f32.mrf.mxu0
        %7924 = vmatprep.mubr.f32.mxu0 %v255
        %7925 = vmatmul.mubr.f32.gmra.mxu0 %v254
        %v7926 = vpop.f32.mrf.mxu0
        %v7927 = vadd.f32 0.0, %v7926
        %v7928 = vpop.f32.mrf.mxu0
        %7929 = vmatprep.mubr.f32.mxu0 %v257
        %7930 = vmatmul.mubr.f32.gmra.mxu0 %v256
        %v7931 = vpop.f32.mrf.mxu0
        %v7932 = vadd.f32 0.0, %v7931
        %v7933 = vpop.f32.mrf.mxu0
        %7934 = vmatprep.mubr.f32.mxu0 %v259
        %7935 = vmatmul.mubr.f32.gmra.mxu0 %v258
        %v7936 = vpop.f32.mrf.mxu0
        %v7937 = vadd.f32 0.0, %v7936
        %v7938 = vpop.f32.mrf.mxu0
        %7939 = vmatprep.mubr.f32.mxu0 %v261
        %7940 = vmatmul.mubr.f32.gmra.mxu0 %v260
        %v7941 = vpop.f32.mrf.mxu0
        %v7942 = vadd.f32 0.0, %v7941
        %v7943 = vpop.f32.mrf.mxu0
        %7944 = vmatprep.mubr.f32.mxu0 %v263
        %7945 = vmatmul.mubr.f32.gmra.mxu0 %v262
        %v7946 = vpop.f32.mrf.mxu0
        %v7947 = vadd.f32 0.0, %v7946
        %v7948 = vpop.f32.mrf.mxu0
        %7949 = vmatprep.mubr.f32.mxu0 %v265
        %7950 = vmatmul.mubr.f32.gmra.mxu0 %v264
        %v7951 = vpop.f32.mrf.mxu0
        %v7952 = vadd.f32 0.0, %v7951
        %v7953 = vpop.f32.mrf.mxu0
        %7954 = vmatprep.mubr.f32.mxu0 %v267
        %7955 = vmatmul.mubr.f32.gmra.mxu0 %v266
        %v7956 = vpop.f32.mrf.mxu0
        %v7957 = vadd.f32 0.0, %v7956
        %v7958 = vpop.f32.mrf.mxu0
        %7959 = vmatprep.mubr.f32.mxu0 %v269
        %7960 = vmatmul.mubr.f32.gmra.mxu0 %v268
        %v7961 = vpop.f32.mrf.mxu0
        %v7962 = vadd.f32 0.0, %v7961
        %v7963 = vpop.f32.mrf.mxu0
        %7964 = vmatprep.mubr.f32.mxu0 %v271
        %7965 = vmatmul.mubr.f32.gmra.mxu0 %v270
        %v7966 = vpop.f32.mrf.mxu0
        %v7967 = vadd.f32 0.0, %v7966
        %v7968 = vpop.f32.mrf.mxu0
        %7969 = vmatprep.mubr.f32.mxu0 %v273
        %7970 = vmatmul.mubr.f32.gmra.mxu0 %v272
        %v7971 = vpop.f32.mrf.mxu0
        %v7972 = vadd.f32 0.0, %v7971
        %v7973 = vpop.f32.mrf.mxu0
        %7974 = vmatprep.mubr.f32.mxu0 %v275
        %7975 = vmatmul.mubr.f32.gmra.mxu0 %v274
        %v7976 = vpop.f32.mrf.mxu0
        %v7977 = vadd.f32 0.0, %v7976
        %v7978 = vpop.f32.mrf.mxu0
        %7979 = vmatprep.mubr.f32.mxu0 %v277
        %7980 = vmatmul.mubr.f32.gmra.mxu0 %v276
        %v7981 = vpop.f32.mrf.mxu0
        %v7982 = vadd.f32 0.0, %v7981
        %v7983 = vpop.f32.mrf.mxu0
        %7984 = vmatprep.mubr.f32.mxu0 %v279
        %7985 = vmatmul.mubr.f32.gmra.mxu0 %v278
        %v7986 = vpop.f32.mrf.mxu0
        %v7987 = vadd.f32 0.0, %v7986
        %v7988 = vpop.f32.mrf.mxu0
        %7989 = vmatprep.mubr.f32.mxu0 %v281
        %7990 = vmatmul.mubr.f32.gmra.mxu0 %v280
        %v7991 = vpop.f32.mrf.mxu0
        %v7992 = vadd.f32 0.0, %v7991
        %v7993 = vpop.f32.mrf.mxu0
        %7994 = vmatprep.mubr.f32.mxu0 %v283
        %7995 = vmatmul.mubr.f32.gmra.mxu0 %v282
        %v7996 = vpop.f32.mrf.mxu0
        %v7997 = vadd.f32 0.0, %v7996
        %v7998 = vpop.f32.mrf.mxu0
        %7999 = vmatprep.mubr.f32.mxu0 %v285
        %8000 = vmatmul.mubr.f32.gmra.mxu0 %v284
        %v8001 = vpop.f32.mrf.mxu0
        %v8002 = vadd.f32 0.0, %v8001
        %v8003 = vpop.f32.mrf.mxu0
        %8004 = vmatprep.mubr.f32.mxu0 %v287
        %8005 = vmatmul.mubr.f32.gmra.mxu0 %v286
        %v8006 = vpop.f32.mrf.mxu0
        %v8007 = vadd.f32 0.0, %v8006
        %v8008 = vpop.f32.mrf.mxu0
        %8009 = vmatprep.mubr.f32.mxu0 %v289
        %8010 = vmatmul.mubr.f32.gmra.mxu0 %v288
        %v8011 = vpop.f32.mrf.mxu0
        %v8012 = vadd.f32 0.0, %v8011
        %v8013 = vpop.f32.mrf.mxu0
        %8014 = vmatprep.mubr.f32.mxu0 %v291
        %8015 = vmatmul.mubr.f32.gmra.mxu0 %v290
        %v8016 = vpop.f32.mrf.mxu0
        %v8017 = vadd.f32 0.0, %v8016
        %v8018 = vpop.f32.mrf.mxu0
        %8019 = vmatprep.mubr.f32.mxu0 %v293
        %8020 = vmatmul.mubr.f32.gmra.mxu0 %v292
        %v8021 = vpop.f32.mrf.mxu0
        %v8022 = vadd.f32 0.0, %v8021
        %v8023 = vpop.f32.mrf.mxu0
        %8024 = vmatprep.mubr.f32.mxu0 %v295
        %8025 = vmatmul.mubr.f32.gmra.mxu0 %v294
        %v8026 = vpop.f32.mrf.mxu0
        %v8027 = vadd.f32 0.0, %v8026
        %v8028 = vpop.f32.mrf.mxu0
        %8029 = vmatprep.mubr.f32.mxu0 %v297
        %8030 = vmatmul.mubr.f32.gmra.mxu0 %v296
        %v8031 = vpop.f32.mrf.mxu0
        %v8032 = vadd.f32 0.0, %v8031
        %v8033 = vpop.f32.mrf.mxu0
        %8034 = vmatprep.mubr.f32.mxu0 %v299
        %8035 = vmatmul.mubr.f32.gmra.mxu0 %v298
        %v8036 = vpop.f32.mrf.mxu0
        %v8037 = vadd.f32 0.0, %v8036
        %v8038 = vpop.f32.mrf.mxu0
        %8039 = vmatprep.mubr.f32.mxu0 %v301
        %8040 = vmatmul.mubr.f32.gmra.mxu0 %v300
        %v8041 = vpop.f32.mrf.mxu0
        %v8042 = vadd.f32 0.0, %v8041
        %v8043 = vpop.f32.mrf.mxu0
        %8044 = vmatprep.mubr.f32.mxu0 %v303
        %8045 = vmatmul.mubr.f32.gmra.mxu0 %v302
        %v8046 = vpop.f32.mrf.mxu0
        %v8047 = vadd.f32 0.0, %v8046
        %v8048 = vpop.f32.mrf.mxu0
        %8049 = vmatprep.mubr.f32.mxu0 %v305
        %8050 = vmatmul.mubr.f32.gmra.mxu0 %v304
        %v8051 = vpop.f32.mrf.mxu0
        %v8052 = vadd.f32 0.0, %v8051
        %v8053 = vpop.f32.mrf.mxu0
        %8054 = vmatprep.mubr.f32.mxu0 %v307
        %8055 = vmatmul.mubr.f32.gmra.mxu0 %v306
        %v8056 = vpop.f32.mrf.mxu0
        %v8057 = vadd.f32 0.0, %v8056
        %v8058 = vpop.f32.mrf.mxu0
        %8059 = vmatprep.mubr.f32.mxu0 %v309
        %8060 = vmatmul.mubr.f32.gmra.mxu0 %v308
        %v8061 = vpop.f32.mrf.mxu0
        %v8062 = vadd.f32 0.0, %v8061
        %v8063 = vpop.f32.mrf.mxu0
        %8064 = vmatprep.mubr.f32.mxu0 %v311
        %8065 = vmatmul.mubr.f32.gmra.mxu0 %v310
        %v8066 = vpop.f32.mrf.mxu0
        %v8067 = vadd.f32 0.0, %v8066
        %v8068 = vpop.f32.mrf.mxu0
        %8069 = vmatprep.mubr.f32.mxu0 %v313
        %8070 = vmatmul.mubr.f32.gmra.mxu0 %v312
        %v8071 = vpop.f32.mrf.mxu0
        %v8072 = vadd.f32 0.0, %v8071
        %v8073 = vpop.f32.mrf.mxu0
        %8074 = vdwg.mxu0
        %v8076 = vsel %vm1117, %v7527, 0
        %v8079 = vsel %vm1117, %v7528, 0
        %v8082 = vsel %vm1117, %v7529, 0
        %v8085 = vsel %vm1117, %v7530, 0
        %v8088 = vsel %vm1117, %v7531, 0
        %v8091 = vsel %vm1117, %v7532, 0
        %v8094 = vsel %vm1117, %v7533, 0
        %v8097 = vsel %vm1117, %v7534, 0
        %v8100 = vsel %vm1117, %v7535, 0
        %v8103 = vsel %vm1117, %v7536, 0
        %v8106 = vsel %vm1117, %v7537, 0
        %v8109 = vsel %vm1117, %v7538, 0
        %v8112 = vsel %vm1117, %v7539, 0
        %v8115 = vsel %vm1117, %v7540, 0
        %v8118 = vsel %vm1117, %v7541, 0
        %v8121 = vsel %vm1117, %v7542, 0
        %v8124 = vsel %vm1117, %v7543, 0
        %v8127 = vsel %vm1117, %v7544, 0
        %v8130 = vsel %vm1117, %v7545, 0
        %v8133 = vsel %vm1117, %v7546, 0
        %v8136 = vsel %vm1117, %v7547, 0
        %v8139 = vsel %vm1117, %v7548, 0
        %v8142 = vsel %vm1117, %v7549, 0
        %v8145 = vsel %vm1117, %v7550, 0
        %v8148 = vsel %vm1117, %v7551, 0
        %v8151 = vsel %vm1117, %v7552, 0
        %v8154 = vsel %vm1117, %v7553, 0
        %v8157 = vsel %vm1117, %v7554, 0
        %v8160 = vsel %vm1117, %v7555, 0
        %v8163 = vsel %vm1117, %v7556, 0
        %v8166 = vsel %vm1117, %v7557, 0
        %v8169 = vsel %vm1117, %v7558, 0
        %v8172 = vsel %vm1117, %v7659, 0
        %v8175 = vsel %vm1117, %v7664, 0
        %v8178 = vsel %vm1117, %v7669, 0
        %v8181 = vsel %vm1117, %v7674, 0
        %v8184 = vsel %vm1117, %v7679, 0
        %v8187 = vsel %vm1117, %v7684, 0
        %v8190 = vsel %vm1117, %v7689, 0
        %v8193 = vsel %vm1117, %v7694, 0
        %v8196 = vsel %vm1117, %v7699, 0
        %v8199 = vsel %vm1117, %v7704, 0
        %v8202 = vsel %vm1117, %v7709, 0
        %v8205 = vsel %vm1117, %v7714, 0
        %v8208 = vsel %vm1117, %v7719, 0
        %v8211 = vsel %vm1117, %v7724, 0
        %v8214 = vsel %vm1117, %v7729, 0
        %v8217 = vsel %vm1117, %v7734, 0
        %v8220 = vsel %vm1117, %v7739, 0
        %v8223 = vsel %vm1117, %v7744, 0
        %v8226 = vsel %vm1117, %v7749, 0
        %v8229 = vsel %vm1117, %v7754, 0
        %v8232 = vsel %vm1117, %v7759, 0
        %v8235 = vsel %vm1117, %v7764, 0
        %v8238 = vsel %vm1117, %v7769, 0
        %v8241 = vsel %vm1117, %v7774, 0
        %v8244 = vsel %vm1117, %v7779, 0
        %v8247 = vsel %vm1117, %v7784, 0
        %v8250 = vsel %vm1117, %v7789, 0
        %v8253 = vsel %vm1117, %v7794, 0
        %v8256 = vsel %vm1117, %v7799, 0
        %v8259 = vsel %vm1117, %v7804, 0
        %v8262 = vsel %vm1117, %v7809, 0
        %v8265 = vsel %vm1117, %v7814, 0
        %8267 = vmatprep.subr.mxu0 0.0
        %8268 = vmatpush1.xpose.msra.mxu0 %v8217
        %8269 = vmatprep.subr.mxu0 0.0
        %8270 = vmatpush1.xpose.msra.mxu0 %v8214
        %8271 = vmatprep.subr.mxu0 0.0
        %8272 = vmatpush1.xpose.msra.mxu0 %v8211
        %8273 = vmatprep.subr.mxu0 0.0
        %8274 = vmatpush1.xpose.msra.mxu0 %v8208
        %8275 = vmatprep.subr.mxu0 0.0
        %8276 = vmatpush1.xpose.msra.mxu0 %v8205
        %8277 = vmatprep.subr.mxu0 0.0
        %8278 = vmatpush1.xpose.msra.mxu0 %v8202
        %8279 = vmatprep.subr.mxu0 0.0
        %8280 = vmatpush1.xpose.msra.mxu0 %v8199
        %8281 = vmatprep.subr.mxu0 0.0
        %8282 = vmatpush1.xpose.msra.mxu0 %v8196
        %8283 = vmatprep.subr.mxu0 0.0
        %8284 = vmatpush1.xpose.msra.mxu0 %v8193
        %8285 = vmatprep.subr.mxu0 0.0
        %8286 = vmatpush1.xpose.msra.mxu0 %v8190
        %8287 = vmatprep.subr.mxu0 0.0
        %8288 = vmatpush1.xpose.msra.mxu0 %v8187
        %8289 = vmatprep.subr.mxu0 0.0
        %8290 = vmatpush1.xpose.msra.mxu0 %v8184
        %8291 = vmatprep.subr.mxu0 0.0
        %8292 = vmatpush1.xpose.msra.mxu0 %v8181
        %8293 = vmatprep.subr.mxu0 0.0
        %8294 = vmatpush1.xpose.msra.mxu0 %v8178
        %8295 = vmatprep.subr.mxu0 0.0
        %8296 = vmatpush1.xpose.msra.mxu0 %v8175
        %8297 = vmatprep.subr.mxu0 0.0
        %8298 = vmatpush1.xpose.msra.mxu0 %v8172
        %8299 = vmatprep.subr.mxu0 0.0
        %8300 = vmatpush2.xpose.msra.mxu0 %v8265
        %8301 = vmatprep.subr.mxu0 0.0
        %8302 = vmatpush2.xpose.msra.mxu0 %v8262
        %8303 = vmatprep.subr.mxu0 0.0
        %8304 = vmatpush2.xpose.msra.mxu0 %v8259
        %8305 = vmatprep.subr.mxu0 0.0
        %8306 = vmatpush2.xpose.msra.mxu0 %v8256
        %8307 = vmatprep.subr.mxu0 0.0
        %8308 = vmatpush2.xpose.msra.mxu0 %v8253
        %8309 = vmatprep.subr.mxu0 0.0
        %8310 = vmatpush2.xpose.msra.mxu0 %v8250
        %8311 = vmatprep.subr.mxu0 0.0
        %8312 = vmatpush2.xpose.msra.mxu0 %v8247
        %8313 = vmatprep.subr.mxu0 0.0
        %8314 = vmatpush2.xpose.msra.mxu0 %v8244
        %8315 = vmatprep.subr.mxu0 0.0
        %8316 = vmatpush2.xpose.msra.mxu0 %v8241
        %8317 = vmatprep.subr.mxu0 0.0
        %8318 = vmatpush2.xpose.msra.mxu0 %v8238
        %8319 = vmatprep.subr.mxu0 0.0
        %8320 = vmatpush2.xpose.msra.mxu0 %v8235
        %8321 = vmatprep.subr.mxu0 0.0
        %8322 = vmatpush2.xpose.msra.mxu0 %v8232
        %8323 = vmatprep.subr.mxu0 0.0
        %8324 = vmatpush2.xpose.msra.mxu0 %v8229
        %8325 = vmatprep.subr.mxu0 0.0
        %8326 = vmatpush2.xpose.msra.mxu0 %v8226
        %8327 = vmatprep.subr.mxu0 0.0
        %8328 = vmatpush2.xpose.msra.mxu0 %v8223
        %8329 = vmatprep.subr.mxu0 0.0
        %8330 = vmatpush2.xpose.msra.mxu0 %v8220
        %8331 = vmatprep.mubr.f32.mxu0 0.0
        %8332 = vmatmul.mubr.f32.gmra.mxu0 %v8076
        %v8333 = vpop.f32.mrf.mxu0
        %v8334 = vadd.f32 0.0, %v8333
        %v8335 = vpop.f32.mrf.mxu0
        %v8336 = vadd.f32 0.0, %v8335
        %8337 = vmatprep.mubr.f32.mxu0 0.0
        %8338 = vmatmul.mubr.f32.gmra.mxu0 %v8079
        %v8339 = vpop.f32.mrf.mxu0
        %v8340 = vadd.f32 0.0, %v8339
        %v8341 = vpop.f32.mrf.mxu0
        %v8342 = vadd.f32 0.0, %v8341
        %8343 = vmatprep.mubr.f32.mxu0 0.0
        %8344 = vmatmul.mubr.f32.gmra.mxu0 %v8082
        %v8345 = vpop.f32.mrf.mxu0
        %v8346 = vadd.f32 0.0, %v8345
        %v8347 = vpop.f32.mrf.mxu0
        %v8348 = vadd.f32 0.0, %v8347
        %8349 = vmatprep.mubr.f32.mxu0 0.0
        %8350 = vmatmul.mubr.f32.gmra.mxu0 %v8085
        %v8351 = vpop.f32.mrf.mxu0
        %v8352 = vadd.f32 0.0, %v8351
        %v8353 = vpop.f32.mrf.mxu0
        %v8354 = vadd.f32 0.0, %v8353
        %8355 = vmatprep.mubr.f32.mxu0 0.0
        %8356 = vmatmul.mubr.f32.gmra.mxu0 %v8088
        %v8357 = vpop.f32.mrf.mxu0
        %v8358 = vadd.f32 0.0, %v8357
        %v8359 = vpop.f32.mrf.mxu0
        %v8360 = vadd.f32 0.0, %v8359
        %8361 = vmatprep.mubr.f32.mxu0 0.0
        %8362 = vmatmul.mubr.f32.gmra.mxu0 %v8091
        %v8363 = vpop.f32.mrf.mxu0
        %v8364 = vadd.f32 0.0, %v8363
        %v8365 = vpop.f32.mrf.mxu0
        %v8366 = vadd.f32 0.0, %v8365
        %8367 = vmatprep.mubr.f32.mxu0 0.0
        %8368 = vmatmul.mubr.f32.gmra.mxu0 %v8094
        %v8369 = vpop.f32.mrf.mxu0
        %v8370 = vadd.f32 0.0, %v8369
        %v8371 = vpop.f32.mrf.mxu0
        %v8372 = vadd.f32 0.0, %v8371
        %8373 = vmatprep.mubr.f32.mxu0 0.0
        %8374 = vmatmul.mubr.f32.gmra.mxu0 %v8097
        %v8375 = vpop.f32.mrf.mxu0
        %v8376 = vadd.f32 0.0, %v8375
        %v8377 = vpop.f32.mrf.mxu0
        %v8378 = vadd.f32 0.0, %v8377
        %8379 = vmatprep.mubr.f32.mxu0 0.0
        %8380 = vmatmul.mubr.f32.gmra.mxu0 %v8100
        %v8381 = vpop.f32.mrf.mxu0
        %v8382 = vadd.f32 0.0, %v8381
        %v8383 = vpop.f32.mrf.mxu0
        %v8384 = vadd.f32 0.0, %v8383
        %8385 = vmatprep.mubr.f32.mxu0 0.0
        %8386 = vmatmul.mubr.f32.gmra.mxu0 %v8103
        %v8387 = vpop.f32.mrf.mxu0
        %v8388 = vadd.f32 0.0, %v8387
        %v8389 = vpop.f32.mrf.mxu0
        %v8390 = vadd.f32 0.0, %v8389
        %8391 = vmatprep.mubr.f32.mxu0 0.0
        %8392 = vmatmul.mubr.f32.gmra.mxu0 %v8106
        %v8393 = vpop.f32.mrf.mxu0
        %v8394 = vadd.f32 0.0, %v8393
        %v8395 = vpop.f32.mrf.mxu0
        %v8396 = vadd.f32 0.0, %v8395
        %8397 = vmatprep.mubr.f32.mxu0 0.0
        %8398 = vmatmul.mubr.f32.gmra.mxu0 %v8109
        %v8399 = vpop.f32.mrf.mxu0
        %v8400 = vadd.f32 0.0, %v8399
        %v8401 = vpop.f32.mrf.mxu0
        %v8402 = vadd.f32 0.0, %v8401
        %8403 = vmatprep.mubr.f32.mxu0 0.0
        %8404 = vmatmul.mubr.f32.gmra.mxu0 %v8112
        %v8405 = vpop.f32.mrf.mxu0
        %v8406 = vadd.f32 0.0, %v8405
        %v8407 = vpop.f32.mrf.mxu0
        %v8408 = vadd.f32 0.0, %v8407
        %8409 = vmatprep.mubr.f32.mxu0 0.0
        %8410 = vmatmul.mubr.f32.gmra.mxu0 %v8115
        %v8411 = vpop.f32.mrf.mxu0
        %v8412 = vadd.f32 0.0, %v8411
        %v8413 = vpop.f32.mrf.mxu0
        %v8414 = vadd.f32 0.0, %v8413
        %8415 = vmatprep.mubr.f32.mxu0 0.0
        %8416 = vmatmul.mubr.f32.gmra.mxu0 %v8118
        %v8417 = vpop.f32.mrf.mxu0
        %v8418 = vadd.f32 0.0, %v8417
        %v8419 = vpop.f32.mrf.mxu0
        %v8420 = vadd.f32 0.0, %v8419
        %8421 = vmatprep.mubr.f32.mxu0 0.0
        %8422 = vmatmul.mubr.f32.gmra.mxu0 %v8121
        %v8423 = vpop.f32.mrf.mxu0
        %v8424 = vadd.f32 0.0, %v8423
        %v8425 = vpop.f32.mrf.mxu0
        %v8426 = vadd.f32 0.0, %v8425
        %8427 = vmatprep.mubr.f32.mxu0 0.0
        %8428 = vmatmul.mubr.f32.gmra.mxu0 %v8124
        %v8429 = vpop.f32.mrf.mxu0
        %v8430 = vadd.f32 0.0, %v8429
        %v8431 = vpop.f32.mrf.mxu0
        %v8432 = vadd.f32 0.0, %v8431
        %8433 = vmatprep.mubr.f32.mxu0 0.0
        %8434 = vmatmul.mubr.f32.gmra.mxu0 %v8127
        %v8435 = vpop.f32.mrf.mxu0
        %v8436 = vadd.f32 0.0, %v8435
        %v8437 = vpop.f32.mrf.mxu0
        %v8438 = vadd.f32 0.0, %v8437
        %8439 = vmatprep.mubr.f32.mxu0 0.0
        %8440 = vmatmul.mubr.f32.gmra.mxu0 %v8130
        %v8441 = vpop.f32.mrf.mxu0
        %v8442 = vadd.f32 0.0, %v8441
        %v8443 = vpop.f32.mrf.mxu0
        %v8444 = vadd.f32 0.0, %v8443
        %8445 = vmatprep.mubr.f32.mxu0 0.0
        %8446 = vmatmul.mubr.f32.gmra.mxu0 %v8133
        %v8447 = vpop.f32.mrf.mxu0
        %v8448 = vadd.f32 0.0, %v8447
        %v8449 = vpop.f32.mrf.mxu0
        %v8450 = vadd.f32 0.0, %v8449
        %8451 = vmatprep.mubr.f32.mxu0 0.0
        %8452 = vmatmul.mubr.f32.gmra.mxu0 %v8136
        %v8453 = vpop.f32.mrf.mxu0
        %v8454 = vadd.f32 0.0, %v8453
        %v8455 = vpop.f32.mrf.mxu0
        %v8456 = vadd.f32 0.0, %v8455
        %8457 = vmatprep.mubr.f32.mxu0 0.0
        %8458 = vmatmul.mubr.f32.gmra.mxu0 %v8139
        %v8459 = vpop.f32.mrf.mxu0
        %v8460 = vadd.f32 0.0, %v8459
        %v8461 = vpop.f32.mrf.mxu0
        %v8462 = vadd.f32 0.0, %v8461
        %8463 = vmatprep.mubr.f32.mxu0 0.0
        %8464 = vmatmul.mubr.f32.gmra.mxu0 %v8142
        %v8465 = vpop.f32.mrf.mxu0
        %v8466 = vadd.f32 0.0, %v8465
        %v8467 = vpop.f32.mrf.mxu0
        %v8468 = vadd.f32 0.0, %v8467
        %8469 = vmatprep.mubr.f32.mxu0 0.0
        %8470 = vmatmul.mubr.f32.gmra.mxu0 %v8145
        %v8471 = vpop.f32.mrf.mxu0
        %v8472 = vadd.f32 0.0, %v8471
        %v8473 = vpop.f32.mrf.mxu0
        %v8474 = vadd.f32 0.0, %v8473
        %8475 = vmatprep.mubr.f32.mxu0 0.0
        %8476 = vmatmul.mubr.f32.gmra.mxu0 %v8148
        %v8477 = vpop.f32.mrf.mxu0
        %v8478 = vadd.f32 0.0, %v8477
        %v8479 = vpop.f32.mrf.mxu0
        %v8480 = vadd.f32 0.0, %v8479
        %8481 = vmatprep.mubr.f32.mxu0 0.0
        %8482 = vmatmul.mubr.f32.gmra.mxu0 %v8151
        %v8483 = vpop.f32.mrf.mxu0
        %v8484 = vadd.f32 0.0, %v8483
        %v8485 = vpop.f32.mrf.mxu0
        %v8486 = vadd.f32 0.0, %v8485
        %8487 = vmatprep.mubr.f32.mxu0 0.0
        %8488 = vmatmul.mubr.f32.gmra.mxu0 %v8154
        %v8489 = vpop.f32.mrf.mxu0
        %v8490 = vadd.f32 0.0, %v8489
        %v8491 = vpop.f32.mrf.mxu0
        %v8492 = vadd.f32 0.0, %v8491
        %8493 = vmatprep.mubr.f32.mxu0 0.0
        %8494 = vmatmul.mubr.f32.gmra.mxu0 %v8157
        %v8495 = vpop.f32.mrf.mxu0
        %v8496 = vadd.f32 0.0, %v8495
        %v8497 = vpop.f32.mrf.mxu0
        %v8498 = vadd.f32 0.0, %v8497
        %8499 = vmatprep.mubr.f32.mxu0 0.0
        %8500 = vmatmul.mubr.f32.gmra.mxu0 %v8160
        %v8501 = vpop.f32.mrf.mxu0
        %v8502 = vadd.f32 0.0, %v8501
        %v8503 = vpop.f32.mrf.mxu0
        %v8504 = vadd.f32 0.0, %v8503
        %8505 = vmatprep.mubr.f32.mxu0 0.0
        %8506 = vmatmul.mubr.f32.gmra.mxu0 %v8163
        %v8507 = vpop.f32.mrf.mxu0
        %v8508 = vadd.f32 0.0, %v8507
        %v8509 = vpop.f32.mrf.mxu0
        %v8510 = vadd.f32 0.0, %v8509
        %8511 = vmatprep.mubr.f32.mxu0 0.0
        %8512 = vmatmul.mubr.f32.gmra.mxu0 %v8166
        %v8513 = vpop.f32.mrf.mxu0
        %v8514 = vadd.f32 0.0, %v8513
        %v8515 = vpop.f32.mrf.mxu0
        %v8516 = vadd.f32 0.0, %v8515
        %8517 = vmatprep.mubr.f32.mxu0 0.0
        %8518 = vmatmul.mubr.f32.gmra.mxu0 %v8169
        %v8519 = vpop.f32.mrf.mxu0
        %v8520 = vadd.f32 0.0, %v8519
        %v8521 = vpop.f32.mrf.mxu0
        %v8522 = vadd.f32 0.0, %v8521
        %8523 = vdwg.mxu0
        %v8524 = vmax.f32 %v8334, %v8336
        %8525 = vmax.xlane.f32.xlu0 %v8524
        %v8526 = vpop.xlane.xlu0 %8525
        %v8527 = vmax.f32 %v8340, %v8342
        %8528 = vmax.xlane.f32.xlu0 %v8527
        %v8529 = vpop.xlane.xlu0 %8528
        %v8530 = vmax.f32 %v8346, %v8348
        %8531 = vmax.xlane.f32.xlu0 %v8530
        %v8532 = vpop.xlane.xlu0 %8531
        %v8533 = vmax.f32 %v8352, %v8354
        %8534 = vmax.xlane.f32.xlu0 %v8533
        %v8535 = vpop.xlane.xlu0 %8534
        %v8536 = vmax.f32 %v8358, %v8360
        %8537 = vmax.xlane.f32.xlu0 %v8536
        %v8538 = vpop.xlane.xlu0 %8537
        %v8539 = vmax.f32 %v8364, %v8366
        %8540 = vmax.xlane.f32.xlu0 %v8539
        %v8541 = vpop.xlane.xlu0 %8540
        %v8542 = vmax.f32 %v8370, %v8372
        %8543 = vmax.xlane.f32.xlu0 %v8542
        %v8544 = vpop.xlane.xlu0 %8543
        %v8545 = vmax.f32 %v8376, %v8378
        %8546 = vmax.xlane.f32.xlu0 %v8545
        %v8547 = vpop.xlane.xlu0 %8546
        %v8548 = vmax.f32 %v8382, %v8384
        %8549 = vmax.xlane.f32.xlu0 %v8548
        %v8550 = vpop.xlane.xlu0 %8549
        %v8551 = vmax.f32 %v8388, %v8390
        %8552 = vmax.xlane.f32.xlu0 %v8551
        %v8553 = vpop.xlane.xlu0 %8552
        %v8554 = vmax.f32 %v8394, %v8396
        %8555 = vmax.xlane.f32.xlu0 %v8554
        %v8556 = vpop.xlane.xlu0 %8555
        %v8557 = vmax.f32 %v8400, %v8402
        %8558 = vmax.xlane.f32.xlu0 %v8557
        %v8559 = vpop.xlane.xlu0 %8558
        %v8560 = vmax.f32 %v8406, %v8408
        %8561 = vmax.xlane.f32.xlu0 %v8560
        %v8562 = vpop.xlane.xlu0 %8561
        %v8563 = vmax.f32 %v8412, %v8414
        %8564 = vmax.xlane.f32.xlu0 %v8563
        %v8565 = vpop.xlane.xlu0 %8564
        %v8566 = vmax.f32 %v8418, %v8420
        %8567 = vmax.xlane.f32.xlu0 %v8566
        %v8568 = vpop.xlane.xlu0 %8567
        %v8569 = vmax.f32 %v8424, %v8426
        %8570 = vmax.xlane.f32.xlu0 %v8569
        %v8571 = vpop.xlane.xlu0 %8570
        %v8572 = vmax.f32 %v8430, %v8432
        %8573 = vmax.xlane.f32.xlu0 %v8572
        %v8574 = vpop.xlane.xlu0 %8573
        %v8575 = vmax.f32 %v8436, %v8438
        %8576 = vmax.xlane.f32.xlu0 %v8575
        %v8577 = vpop.xlane.xlu0 %8576
        %v8578 = vmax.f32 %v8442, %v8444
        %8579 = vmax.xlane.f32.xlu0 %v8578
        %v8580 = vpop.xlane.xlu0 %8579
        %v8581 = vmax.f32 %v8448, %v8450
        %8582 = vmax.xlane.f32.xlu0 %v8581
        %v8583 = vpop.xlane.xlu0 %8582
        %v8584 = vmax.f32 %v8454, %v8456
        %8585 = vmax.xlane.f32.xlu0 %v8584
        %v8586 = vpop.xlane.xlu0 %8585
        %v8587 = vmax.f32 %v8460, %v8462
        %8588 = vmax.xlane.f32.xlu0 %v8587
        %v8589 = vpop.xlane.xlu0 %8588
        %v8590 = vmax.f32 %v8466, %v8468
        %8591 = vmax.xlane.f32.xlu0 %v8590
        %v8592 = vpop.xlane.xlu0 %8591
        %v8593 = vmax.f32 %v8472, %v8474
        %8594 = vmax.xlane.f32.xlu0 %v8593
        %v8595 = vpop.xlane.xlu0 %8594
        %v8596 = vmax.f32 %v8478, %v8480
        %8597 = vmax.xlane.f32.xlu0 %v8596
        %v8598 = vpop.xlane.xlu0 %8597
        %v8599 = vmax.f32 %v8484, %v8486
        %8600 = vmax.xlane.f32.xlu0 %v8599
        %v8601 = vpop.xlane.xlu0 %8600
        %v8602 = vmax.f32 %v8490, %v8492
        %8603 = vmax.xlane.f32.xlu0 %v8602
        %v8604 = vpop.xlane.xlu0 %8603
        %v8605 = vmax.f32 %v8496, %v8498
        %8606 = vmax.xlane.f32.xlu0 %v8605
        %v8607 = vpop.xlane.xlu0 %8606
        %v8608 = vmax.f32 %v8502, %v8504
        %8609 = vmax.xlane.f32.xlu0 %v8608
        %v8610 = vpop.xlane.xlu0 %8609
        %v8611 = vmax.f32 %v8508, %v8510
        %8612 = vmax.xlane.f32.xlu0 %v8611
        %v8613 = vpop.xlane.xlu0 %8612
        %v8614 = vmax.f32 %v8514, %v8516
        %8615 = vmax.xlane.f32.xlu0 %v8614
        %v8616 = vpop.xlane.xlu0 %8615
        %v8617 = vmax.f32 %v8520, %v8522
        %8618 = vmax.xlane.f32.xlu0 %v8617
        %v8619 = vpop.xlane.xlu0 %8618
        %v8620 = vsub.f32 %v8334, %v8526
        %v8621 = vsub.f32 %v8336, %v8526
        %v8622 = vsub.f32 %v8340, %v8529
        %v8623 = vsub.f32 %v8342, %v8529
        %v8624 = vsub.f32 %v8346, %v8532
        %v8625 = vsub.f32 %v8348, %v8532
        %v8626 = vsub.f32 %v8352, %v8535
        %v8627 = vsub.f32 %v8354, %v8535
        %v8628 = vsub.f32 %v8358, %v8538
        %v8629 = vsub.f32 %v8360, %v8538
        %v8630 = vsub.f32 %v8364, %v8541
        %v8631 = vsub.f32 %v8366, %v8541
        %v8632 = vsub.f32 %v8370, %v8544
        %v8633 = vsub.f32 %v8372, %v8544
        %v8634 = vsub.f32 %v8376, %v8547
        %v8635 = vsub.f32 %v8378, %v8547
        %v8636 = vsub.f32 %v8382, %v8550
        %v8637 = vsub.f32 %v8384, %v8550
        %v8638 = vsub.f32 %v8388, %v8553
        %v8639 = vsub.f32 %v8390, %v8553
        %v8640 = vsub.f32 %v8394, %v8556
        %v8641 = vsub.f32 %v8396, %v8556
        %v8642 = vsub.f32 %v8400, %v8559
        %v8643 = vsub.f32 %v8402, %v8559
        %v8644 = vsub.f32 %v8406, %v8562
        %v8645 = vsub.f32 %v8408, %v8562
        %v8646 = vsub.f32 %v8412, %v8565
        %v8647 = vsub.f32 %v8414, %v8565
        %v8648 = vsub.f32 %v8418, %v8568
        %v8649 = vsub.f32 %v8420, %v8568
        %v8650 = vsub.f32 %v8424, %v8571
        %v8651 = vsub.f32 %v8426, %v8571
        %v8652 = vsub.f32 %v8430, %v8574
        %v8653 = vsub.f32 %v8432, %v8574
        %v8654 = vsub.f32 %v8436, %v8577
        %v8655 = vsub.f32 %v8438, %v8577
        %v8656 = vsub.f32 %v8442, %v8580
        %v8657 = vsub.f32 %v8444, %v8580
        %v8658 = vsub.f32 %v8448, %v8583
        %v8659 = vsub.f32 %v8450, %v8583
        %v8660 = vsub.f32 %v8454, %v8586
        %v8661 = vsub.f32 %v8456, %v8586
        %v8662 = vsub.f32 %v8460, %v8589
        %v8663 = vsub.f32 %v8462, %v8589
        %v8664 = vsub.f32 %v8466, %v8592
        %v8665 = vsub.f32 %v8468, %v8592
        %v8666 = vsub.f32 %v8472, %v8595
        %v8667 = vsub.f32 %v8474, %v8595
        %v8668 = vsub.f32 %v8478, %v8598
        %v8669 = vsub.f32 %v8480, %v8598
        %v8670 = vsub.f32 %v8484, %v8601
        %v8671 = vsub.f32 %v8486, %v8601
        %v8672 = vsub.f32 %v8490, %v8604
        %v8673 = vsub.f32 %v8492, %v8604
        %v8674 = vsub.f32 %v8496, %v8607
        %v8675 = vsub.f32 %v8498, %v8607
        %v8676 = vsub.f32 %v8502, %v8610
        %v8677 = vsub.f32 %v8504, %v8610
        %v8678 = vsub.f32 %v8508, %v8613
        %v8679 = vsub.f32 %v8510, %v8613
        %v8680 = vsub.f32 %v8514, %v8616
        %v8681 = vsub.f32 %v8516, %v8616
        %v8682 = vsub.f32 %v8520, %v8619
        %v8683 = vsub.f32 %v8522, %v8619
        %v8684 = vmul.f32 %v8620, 1.442695
        %v8685 = vpow.pop %v8684
        %v8686 = vmul.f32 %v8621, 1.442695
        %v8687 = vpow.pop %v8686
        %v8688 = vmul.f32 %v8622, 1.442695
        %v8689 = vpow.pop %v8688
        %v8690 = vmul.f32 %v8623, 1.442695
        %v8691 = vpow.pop %v8690
        %v8692 = vmul.f32 %v8624, 1.442695
        %v8693 = vpow.pop %v8692
        %v8694 = vmul.f32 %v8625, 1.442695
        %v8695 = vpow.pop %v8694
        %v8696 = vmul.f32 %v8626, 1.442695
        %v8697 = vpow.pop %v8696
        %v8698 = vmul.f32 %v8627, 1.442695
        %v8699 = vpow.pop %v8698
        %v8700 = vmul.f32 %v8628, 1.442695
        %v8701 = vpow.pop %v8700
        %v8702 = vmul.f32 %v8629, 1.442695
        %v8703 = vpow.pop %v8702
        %v8704 = vmul.f32 %v8630, 1.442695
        %v8705 = vpow.pop %v8704
        %v8706 = vmul.f32 %v8631, 1.442695
        %v8707 = vpow.pop %v8706
        %v8708 = vmul.f32 %v8632, 1.442695
        %v8709 = vpow.pop %v8708
        %v8710 = vmul.f32 %v8633, 1.442695
        %v8711 = vpow.pop %v8710
        %v8712 = vmul.f32 %v8634, 1.442695
        %v8713 = vpow.pop %v8712
        %v8714 = vmul.f32 %v8635, 1.442695
        %v8715 = vpow.pop %v8714
        %v8716 = vmul.f32 %v8636, 1.442695
        %v8717 = vpow.pop %v8716
        %v8718 = vmul.f32 %v8637, 1.442695
        %v8719 = vpow.pop %v8718
        %v8720 = vmul.f32 %v8638, 1.442695
        %v8721 = vpow.pop %v8720
        %v8722 = vmul.f32 %v8639, 1.442695
        %v8723 = vpow.pop %v8722
        %v8724 = vmul.f32 %v8640, 1.442695
        %v8725 = vpow.pop %v8724
        %v8726 = vmul.f32 %v8641, 1.442695
        %v8727 = vpow.pop %v8726
        %v8728 = vmul.f32 %v8642, 1.442695
        %v8729 = vpow.pop %v8728
        %v8730 = vmul.f32 %v8643, 1.442695
        %v8731 = vpow.pop %v8730
        %v8732 = vmul.f32 %v8644, 1.442695
        %v8733 = vpow.pop %v8732
        %v8734 = vmul.f32 %v8645, 1.442695
        %v8735 = vpow.pop %v8734
        %v8736 = vmul.f32 %v8646, 1.442695
        %v8737 = vpow.pop %v8736
        %v8738 = vmul.f32 %v8647, 1.442695
        %v8739 = vpow.pop %v8738
        %v8740 = vmul.f32 %v8648, 1.442695
        %v8741 = vpow.pop %v8740
        %v8742 = vmul.f32 %v8649, 1.442695
        %v8743 = vpow.pop %v8742
        %v8744 = vmul.f32 %v8650, 1.442695
        %v8745 = vpow.pop %v8744
        %v8746 = vmul.f32 %v8651, 1.442695
        %v8747 = vpow.pop %v8746
        %v8748 = vmul.f32 %v8652, 1.442695
        %v8749 = vpow.pop %v8748
        %v8750 = vmul.f32 %v8653, 1.442695
        %v8751 = vpow.pop %v8750
        %v8752 = vmul.f32 %v8654, 1.442695
        %v8753 = vpow.pop %v8752
        %v8754 = vmul.f32 %v8655, 1.442695
        %v8755 = vpow.pop %v8754
        %v8756 = vmul.f32 %v8656, 1.442695
        %v8757 = vpow.pop %v8756
        %v8758 = vmul.f32 %v8657, 1.442695
        %v8759 = vpow.pop %v8758
        %v8760 = vmul.f32 %v8658, 1.442695
        %v8761 = vpow.pop %v8760
        %v8762 = vmul.f32 %v8659, 1.442695
        %v8763 = vpow.pop %v8762
        %v8764 = vmul.f32 %v8660, 1.442695
        %v8765 = vpow.pop %v8764
        %v8766 = vmul.f32 %v8661, 1.442695
        %v8767 = vpow.pop %v8766
        %v8768 = vmul.f32 %v8662, 1.442695
        %v8769 = vpow.pop %v8768
        %v8770 = vmul.f32 %v8663, 1.442695
        %v8771 = vpow.pop %v8770
        %v8772 = vmul.f32 %v8664, 1.442695
        %v8773 = vpow.pop %v8772
        %v8774 = vmul.f32 %v8665, 1.442695
        %v8775 = vpow.pop %v8774
        %v8776 = vmul.f32 %v8666, 1.442695
        %v8777 = vpow.pop %v8776
        %v8778 = vmul.f32 %v8667, 1.442695
        %v8779 = vpow.pop %v8778
        %v8780 = vmul.f32 %v8668, 1.442695
        %v8781 = vpow.pop %v8780
        %v8782 = vmul.f32 %v8669, 1.442695
        %v8783 = vpow.pop %v8782
        %v8784 = vmul.f32 %v8670, 1.442695
        %v8785 = vpow.pop %v8784
        %v8786 = vmul.f32 %v8671, 1.442695
        %v8787 = vpow.pop %v8786
        %v8788 = vmul.f32 %v8672, 1.442695
        %v8789 = vpow.pop %v8788
        %v8790 = vmul.f32 %v8673, 1.442695
        %v8791 = vpow.pop %v8790
        %v8792 = vmul.f32 %v8674, 1.442695
        %v8793 = vpow.pop %v8792
        %v8794 = vmul.f32 %v8675, 1.442695
        %v8795 = vpow.pop %v8794
        %v8796 = vmul.f32 %v8676, 1.442695
        %v8797 = vpow.pop %v8796
        %v8798 = vmul.f32 %v8677, 1.442695
        %v8799 = vpow.pop %v8798
        %v8800 = vmul.f32 %v8678, 1.442695
        %v8801 = vpow.pop %v8800
        %v8802 = vmul.f32 %v8679, 1.442695
        %v8803 = vpow.pop %v8802
        %v8804 = vmul.f32 %v8680, 1.442695
        %v8805 = vpow.pop %v8804
        %v8806 = vmul.f32 %v8681, 1.442695
        %v8807 = vpow.pop %v8806
        %v8808 = vmul.f32 %v8682, 1.442695
        %v8809 = vpow.pop %v8808
        %v8810 = vmul.f32 %v8683, 1.442695
        %v8811 = vpow.pop %v8810
        %v8812 = vadd.f32 %v8685, %v8687
        %8813 = vadd.xlane.f32.xlu0 %v8812
        %v8814 = vpop.xlane.xlu0 %8813
        %v8815 = vadd.f32 %v8689, %v8691
        %8816 = vadd.xlane.f32.xlu0 %v8815
        %v8817 = vpop.xlane.xlu0 %8816
        %v8818 = vadd.f32 %v8693, %v8695
        %8819 = vadd.xlane.f32.xlu0 %v8818
        %v8820 = vpop.xlane.xlu0 %8819
        %v8821 = vadd.f32 %v8697, %v8699
        %8822 = vadd.xlane.f32.xlu0 %v8821
        %v8823 = vpop.xlane.xlu0 %8822
        %v8824 = vadd.f32 %v8701, %v8703
        %8825 = vadd.xlane.f32.xlu0 %v8824
        %v8826 = vpop.xlane.xlu0 %8825
        %v8827 = vadd.f32 %v8705, %v8707
        %8828 = vadd.xlane.f32.xlu0 %v8827
        %v8829 = vpop.xlane.xlu0 %8828
        %v8830 = vadd.f32 %v8709, %v8711
        %8831 = vadd.xlane.f32.xlu0 %v8830
        %v8832 = vpop.xlane.xlu0 %8831
        %v8833 = vadd.f32 %v8713, %v8715
        %8834 = vadd.xlane.f32.xlu0 %v8833
        %v8835 = vpop.xlane.xlu0 %8834
        %v8836 = vadd.f32 %v8717, %v8719
        %8837 = vadd.xlane.f32.xlu0 %v8836
        %v8838 = vpop.xlane.xlu0 %8837
        %v8839 = vadd.f32 %v8721, %v8723
        %8840 = vadd.xlane.f32.xlu0 %v8839
        %v8841 = vpop.xlane.xlu0 %8840
        %v8842 = vadd.f32 %v8725, %v8727
        %8843 = vadd.xlane.f32.xlu0 %v8842
        %v8844 = vpop.xlane.xlu0 %8843
        %v8845 = vadd.f32 %v8729, %v8731
        %8846 = vadd.xlane.f32.xlu0 %v8845
        %v8847 = vpop.xlane.xlu0 %8846
        %v8848 = vadd.f32 %v8733, %v8735
        %8849 = vadd.xlane.f32.xlu0 %v8848
        %v8850 = vpop.xlane.xlu0 %8849
        %v8851 = vadd.f32 %v8737, %v8739
        %8852 = vadd.xlane.f32.xlu0 %v8851
        %v8853 = vpop.xlane.xlu0 %8852
        %v8854 = vadd.f32 %v8741, %v8743
        %8855 = vadd.xlane.f32.xlu0 %v8854
        %v8856 = vpop.xlane.xlu0 %8855
        %v8857 = vadd.f32 %v8745, %v8747
        %8858 = vadd.xlane.f32.xlu0 %v8857
        %v8859 = vpop.xlane.xlu0 %8858
        %v8860 = vadd.f32 %v8749, %v8751
        %8861 = vadd.xlane.f32.xlu0 %v8860
        %v8862 = vpop.xlane.xlu0 %8861
        %v8863 = vadd.f32 %v8753, %v8755
        %8864 = vadd.xlane.f32.xlu0 %v8863
        %v8865 = vpop.xlane.xlu0 %8864
        %v8866 = vadd.f32 %v8757, %v8759
        %8867 = vadd.xlane.f32.xlu0 %v8866
        %v8868 = vpop.xlane.xlu0 %8867
        %v8869 = vadd.f32 %v8761, %v8763
        %8870 = vadd.xlane.f32.xlu0 %v8869
        %v8871 = vpop.xlane.xlu0 %8870
        %v8872 = vadd.f32 %v8765, %v8767
        %8873 = vadd.xlane.f32.xlu0 %v8872
        %v8874 = vpop.xlane.xlu0 %8873
        %v8875 = vadd.f32 %v8769, %v8771
        %8876 = vadd.xlane.f32.xlu0 %v8875
        %v8877 = vpop.xlane.xlu0 %8876
        %v8878 = vadd.f32 %v8773, %v8775
        %8879 = vadd.xlane.f32.xlu0 %v8878
        %v8880 = vpop.xlane.xlu0 %8879
        %v8881 = vadd.f32 %v8777, %v8779
        %8882 = vadd.xlane.f32.xlu0 %v8881
        %v8883 = vpop.xlane.xlu0 %8882
        %v8884 = vadd.f32 %v8781, %v8783
        %8885 = vadd.xlane.f32.xlu0 %v8884
        %v8886 = vpop.xlane.xlu0 %8885
        %v8887 = vadd.f32 %v8785, %v8787
        %8888 = vadd.xlane.f32.xlu0 %v8887
        %v8889 = vpop.xlane.xlu0 %8888
        %v8890 = vadd.f32 %v8789, %v8791
        %8891 = vadd.xlane.f32.xlu0 %v8890
        %v8892 = vpop.xlane.xlu0 %8891
        %v8893 = vadd.f32 %v8793, %v8795
        %8894 = vadd.xlane.f32.xlu0 %v8893
        %v8895 = vpop.xlane.xlu0 %8894
        %v8896 = vadd.f32 %v8797, %v8799
        %8897 = vadd.xlane.f32.xlu0 %v8896
        %v8898 = vpop.xlane.xlu0 %8897
        %v8899 = vadd.f32 %v8801, %v8803
        %8900 = vadd.xlane.f32.xlu0 %v8899
        %v8901 = vpop.xlane.xlu0 %8900
        %v8902 = vadd.f32 %v8805, %v8807
        %8903 = vadd.xlane.f32.xlu0 %v8902
        %v8904 = vpop.xlane.xlu0 %8903
        %v8905 = vadd.f32 %v8809, %v8811
        %8906 = vadd.xlane.f32.xlu0 %v8905
        %v8907 = vpop.xlane.xlu0 %8906
        %8908 = vmatprep.subr.mxu0 0.0
        %8909 = vmatpush1.msra.mxu0 %v7992
        %8910 = vmatprep.subr.mxu0 0.0
        %8911 = vmatpush1.msra.mxu0 %v7987
        %8912 = vmatprep.subr.mxu0 0.0
        %8913 = vmatpush1.msra.mxu0 %v7982
        %8914 = vmatprep.subr.mxu0 0.0
        %8915 = vmatpush1.msra.mxu0 %v7977
        %8916 = vmatprep.subr.mxu0 0.0
        %8917 = vmatpush1.msra.mxu0 %v7972
        %8918 = vmatprep.subr.mxu0 0.0
        %8919 = vmatpush1.msra.mxu0 %v7967
        %8920 = vmatprep.subr.mxu0 0.0
        %8921 = vmatpush1.msra.mxu0 %v7962
        %8922 = vmatprep.subr.mxu0 0.0
        %8923 = vmatpush1.msra.mxu0 %v7957
        %8924 = vmatprep.subr.mxu0 0.0
        %8925 = vmatpush1.msra.mxu0 %v7952
        %8926 = vmatprep.subr.mxu0 0.0
        %8927 = vmatpush1.msra.mxu0 %v7947
        %8928 = vmatprep.subr.mxu0 0.0
        %8929 = vmatpush1.msra.mxu0 %v7942
        %8930 = vmatprep.subr.mxu0 0.0
        %8931 = vmatpush1.msra.mxu0 %v7937
        %8932 = vmatprep.subr.mxu0 0.0
        %8933 = vmatpush1.msra.mxu0 %v7932
        %8934 = vmatprep.subr.mxu0 0.0
        %8935 = vmatpush1.msra.mxu0 %v7927
        %8936 = vmatprep.subr.mxu0 0.0
        %8937 = vmatpush1.msra.mxu0 %v7922
        %8938 = vmatprep.subr.mxu0 0.0
        %8939 = vmatpush1.msra.mxu0 %v7917
        %8940 = vmatprep.subr.mxu0 0.0
        %8941 = vmatpush2.msra.mxu0 %v8072
        %8942 = vmatprep.subr.mxu0 0.0
        %8943 = vmatpush2.msra.mxu0 %v8067
        %8944 = vmatprep.subr.mxu0 0.0
        %8945 = vmatpush2.msra.mxu0 %v8062
        %8946 = vmatprep.subr.mxu0 0.0
        %8947 = vmatpush2.msra.mxu0 %v8057
        %8948 = vmatprep.subr.mxu0 0.0
        %8949 = vmatpush2.msra.mxu0 %v8052
        %8950 = vmatprep.subr.mxu0 0.0
        %8951 = vmatpush2.msra.mxu0 %v8047
        %8952 = vmatprep.subr.mxu0 0.0
        %8953 = vmatpush2.msra.mxu0 %v8042
        %8954 = vmatprep.subr.mxu0 0.0
        %8955 = vmatpush2.msra.mxu0 %v8037
        %8956 = vmatprep.subr.mxu0 0.0
        %8957 = vmatpush2.msra.mxu0 %v8032
        %8958 = vmatprep.subr.mxu0 0.0
        %8959 = vmatpush2.msra.mxu0 %v8027
        %8960 = vmatprep.subr.mxu0 0.0
        %8961 = vmatpush2.msra.mxu0 %v8022
        %8962 = vmatprep.subr.mxu0 0.0
        %8963 = vmatpush2.msra.mxu0 %v8017
        %8964 = vmatprep.subr.mxu0 0.0
        %8965 = vmatpush2.msra.mxu0 %v8012
        %8966 = vmatprep.subr.mxu0 0.0
        %8967 = vmatpush2.msra.mxu0 %v8007
        %8968 = vmatprep.subr.mxu0 0.0
        %8969 = vmatpush2.msra.mxu0 %v8002
        %8970 = vmatprep.subr.mxu0 0.0
        %8971 = vmatpush2.msra.mxu0 %v7997
        %8972 = vmatprep.mubr.f32.mxu0 %v8687
        %8973 = vmatmul.mubr.f32.gmra.mxu0 %v8685
        %v8974 = vpop.f32.mrf.mxu0
        %v8975 = vadd.f32 0.0, %v8974
        %v8976 = vpop.f32.mrf.mxu0
        %8977 = vmatprep.mubr.f32.mxu0 %v8691
        %8978 = vmatmul.mubr.f32.gmra.mxu0 %v8689
        %v8979 = vpop.f32.mrf.mxu0
        %v8980 = vadd.f32 0.0, %v8979
        %v8981 = vpop.f32.mrf.mxu0
        %8982 = vmatprep.mubr.f32.mxu0 %v8695
        %8983 = vmatmul.mubr.f32.gmra.mxu0 %v8693
        %v8984 = vpop.f32.mrf.mxu0
        %v8985 = vadd.f32 0.0, %v8984
        %v8986 = vpop.f32.mrf.mxu0
        %8987 = vmatprep.mubr.f32.mxu0 %v8699
        %8988 = vmatmul.mubr.f32.gmra.mxu0 %v8697
        %v8989 = vpop.f32.mrf.mxu0
        %v8990 = vadd.f32 0.0, %v8989
        %v8991 = vpop.f32.mrf.mxu0
        %8992 = vmatprep.mubr.f32.mxu0 %v8703
        %8993 = vmatmul.mubr.f32.gmra.mxu0 %v8701
        %v8994 = vpop.f32.mrf.mxu0
        %v8995 = vadd.f32 0.0, %v8994
        %v8996 = vpop.f32.mrf.mxu0
        %8997 = vmatprep.mubr.f32.mxu0 %v8707
        %8998 = vmatmul.mubr.f32.gmra.mxu0 %v8705
        %v8999 = vpop.f32.mrf.mxu0
        %v9000 = vadd.f32 0.0, %v8999
        %v9001 = vpop.f32.mrf.mxu0
        %9002 = vmatprep.mubr.f32.mxu0 %v8711
        %9003 = vmatmul.mubr.f32.gmra.mxu0 %v8709
        %v9004 = vpop.f32.mrf.mxu0
        %v9005 = vadd.f32 0.0, %v9004
        %v9006 = vpop.f32.mrf.mxu0
        %9007 = vmatprep.mubr.f32.mxu0 %v8715
        %9008 = vmatmul.mubr.f32.gmra.mxu0 %v8713
        %v9009 = vpop.f32.mrf.mxu0
        %v9010 = vadd.f32 0.0, %v9009
        %v9011 = vpop.f32.mrf.mxu0
        %9012 = vmatprep.mubr.f32.mxu0 %v8719
        %9013 = vmatmul.mubr.f32.gmra.mxu0 %v8717
        %v9014 = vpop.f32.mrf.mxu0
        %v9015 = vadd.f32 0.0, %v9014
        %v9016 = vpop.f32.mrf.mxu0
        %9017 = vmatprep.mubr.f32.mxu0 %v8723
        %9018 = vmatmul.mubr.f32.gmra.mxu0 %v8721
        %v9019 = vpop.f32.mrf.mxu0
        %v9020 = vadd.f32 0.0, %v9019
        %v9021 = vpop.f32.mrf.mxu0
        %9022 = vmatprep.mubr.f32.mxu0 %v8727
        %9023 = vmatmul.mubr.f32.gmra.mxu0 %v8725
        %v9024 = vpop.f32.mrf.mxu0
        %v9025 = vadd.f32 0.0, %v9024
        %v9026 = vpop.f32.mrf.mxu0
        %9027 = vmatprep.mubr.f32.mxu0 %v8731
        %9028 = vmatmul.mubr.f32.gmra.mxu0 %v8729
        %v9029 = vpop.f32.mrf.mxu0
        %v9030 = vadd.f32 0.0, %v9029
        %v9031 = vpop.f32.mrf.mxu0
        %9032 = vmatprep.mubr.f32.mxu0 %v8735
        %9033 = vmatmul.mubr.f32.gmra.mxu0 %v8733
        %v9034 = vpop.f32.mrf.mxu0
        %v9035 = vadd.f32 0.0, %v9034
        %v9036 = vpop.f32.mrf.mxu0
        %9037 = vmatprep.mubr.f32.mxu0 %v8739
        %9038 = vmatmul.mubr.f32.gmra.mxu0 %v8737
        %v9039 = vpop.f32.mrf.mxu0
        %v9040 = vadd.f32 0.0, %v9039
        %v9041 = vpop.f32.mrf.mxu0
        %9042 = vmatprep.mubr.f32.mxu0 %v8743
        %9043 = vmatmul.mubr.f32.gmra.mxu0 %v8741
        %v9044 = vpop.f32.mrf.mxu0
        %v9045 = vadd.f32 0.0, %v9044
        %v9046 = vpop.f32.mrf.mxu0
        %9047 = vmatprep.mubr.f32.mxu0 %v8747
        %9048 = vmatmul.mubr.f32.gmra.mxu0 %v8745
        %v9049 = vpop.f32.mrf.mxu0
        %v9050 = vadd.f32 0.0, %v9049
        %v9051 = vpop.f32.mrf.mxu0
        %9052 = vmatprep.mubr.f32.mxu0 %v8751
        %9053 = vmatmul.mubr.f32.gmra.mxu0 %v8749
        %v9054 = vpop.f32.mrf.mxu0
        %v9055 = vadd.f32 0.0, %v9054
        %v9056 = vpop.f32.mrf.mxu0
        %9057 = vmatprep.mubr.f32.mxu0 %v8755
        %9058 = vmatmul.mubr.f32.gmra.mxu0 %v8753
        %v9059 = vpop.f32.mrf.mxu0
        %v9060 = vadd.f32 0.0, %v9059
        %v9061 = vpop.f32.mrf.mxu0
        %9062 = vmatprep.mubr.f32.mxu0 %v8759
        %9063 = vmatmul.mubr.f32.gmra.mxu0 %v8757
        %v9064 = vpop.f32.mrf.mxu0
        %v9065 = vadd.f32 0.0, %v9064
        %v9066 = vpop.f32.mrf.mxu0
        %9067 = vmatprep.mubr.f32.mxu0 %v8763
        %9068 = vmatmul.mubr.f32.gmra.mxu0 %v8761
        %v9069 = vpop.f32.mrf.mxu0
        %v9070 = vadd.f32 0.0, %v9069
        %v9071 = vpop.f32.mrf.mxu0
        %9072 = vmatprep.mubr.f32.mxu0 %v8767
        %9073 = vmatmul.mubr.f32.gmra.mxu0 %v8765
        %v9074 = vpop.f32.mrf.mxu0
        %v9075 = vadd.f32 0.0, %v9074
        %v9076 = vpop.f32.mrf.mxu0
        %9077 = vmatprep.mubr.f32.mxu0 %v8771
        %9078 = vmatmul.mubr.f32.gmra.mxu0 %v8769
        %v9079 = vpop.f32.mrf.mxu0
        %v9080 = vadd.f32 0.0, %v9079
        %v9081 = vpop.f32.mrf.mxu0
        %9082 = vmatprep.mubr.f32.mxu0 %v8775
        %9083 = vmatmul.mubr.f32.gmra.mxu0 %v8773
        %v9084 = vpop.f32.mrf.mxu0
        %v9085 = vadd.f32 0.0, %v9084
        %v9086 = vpop.f32.mrf.mxu0
        %9087 = vmatprep.mubr.f32.mxu0 %v8779
        %9088 = vmatmul.mubr.f32.gmra.mxu0 %v8777
        %v9089 = vpop.f32.mrf.mxu0
        %v9090 = vadd.f32 0.0, %v9089
        %v9091 = vpop.f32.mrf.mxu0
        %9092 = vmatprep.mubr.f32.mxu0 %v8783
        %9093 = vmatmul.mubr.f32.gmra.mxu0 %v8781
        %v9094 = vpop.f32.mrf.mxu0
        %v9095 = vadd.f32 0.0, %v9094
        %v9096 = vpop.f32.mrf.mxu0
        %9097 = vmatprep.mubr.f32.mxu0 %v8787
        %9098 = vmatmul.mubr.f32.gmra.mxu0 %v8785
        %v9099 = vpop.f32.mrf.mxu0
        %v9100 = vadd.f32 0.0, %v9099
        %v9101 = vpop.f32.mrf.mxu0
        %9102 = vmatprep.mubr.f32.mxu0 %v8791
        %9103 = vmatmul.mubr.f32.gmra.mxu0 %v8789
        %v9104 = vpop.f32.mrf.mxu0
        %v9105 = vadd.f32 0.0, %v9104
        %v9106 = vpop.f32.mrf.mxu0
        %9107 = vmatprep.mubr.f32.mxu0 %v8795
        %9108 = vmatmul.mubr.f32.gmra.mxu0 %v8793
        %v9109 = vpop.f32.mrf.mxu0
        %v9110 = vadd.f32 0.0, %v9109
        %v9111 = vpop.f32.mrf.mxu0
        %9112 = vmatprep.mubr.f32.mxu0 %v8799
        %9113 = vmatmul.mubr.f32.gmra.mxu0 %v8797
        %v9114 = vpop.f32.mrf.mxu0
        %v9115 = vadd.f32 0.0, %v9114
        %v9116 = vpop.f32.mrf.mxu0
        %9117 = vmatprep.mubr.f32.mxu0 %v8803
        %9118 = vmatmul.mubr.f32.gmra.mxu0 %v8801
        %v9119 = vpop.f32.mrf.mxu0
        %v9120 = vadd.f32 0.0, %v9119
        %v9121 = vpop.f32.mrf.mxu0
        %9122 = vmatprep.mubr.f32.mxu0 %v8807
        %9123 = vmatmul.mubr.f32.gmra.mxu0 %v8805
        %v9124 = vpop.f32.mrf.mxu0
        %v9125 = vadd.f32 0.0, %v9124
        %v9126 = vpop.f32.mrf.mxu0
        %9127 = vmatprep.mubr.f32.mxu0 %v8811
        %9128 = vmatmul.mubr.f32.gmra.mxu0 %v8809
        %v9129 = vpop.f32.mrf.mxu0
        %v9130 = vadd.f32 0.0, %v9129
        %v9131 = vpop.f32.mrf.mxu0
        %9132 = vdwg.mxu0
        %v9133 = vrcp.pop %v8814
        %v9134 = vrcp.pop %v8817
        %v9135 = vrcp.pop %v8820
        %v9136 = vrcp.pop %v8823
        %v9137 = vrcp.pop %v8826
        %v9138 = vrcp.pop %v8829
        %v9139 = vrcp.pop %v8832
        %v9140 = vrcp.pop %v8835
        %v9141 = vrcp.pop %v8838
        %v9142 = vrcp.pop %v8841
        %v9143 = vrcp.pop %v8844
        %v9144 = vrcp.pop %v8847
        %v9145 = vrcp.pop %v8850
        %v9146 = vrcp.pop %v8853
        %v9147 = vrcp.pop %v8856
        %v9148 = vrcp.pop %v8859
        %v9149 = vrcp.pop %v8862
        %v9150 = vrcp.pop %v8865
        %v9151 = vrcp.pop %v8868
        %v9152 = vrcp.pop %v8871
        %v9153 = vrcp.pop %v8874
        %v9154 = vrcp.pop %v8877
        %v9155 = vrcp.pop %v8880
        %v9156 = vrcp.pop %v8883
        %v9157 = vrcp.pop %v8886
        %v9158 = vrcp.pop %v8889
        %v9159 = vrcp.pop %v8892
        %v9160 = vrcp.pop %v8895
        %v9161 = vrcp.pop %v8898
        %v9162 = vrcp.pop %v8901
        %v9163 = vrcp.pop %v8904
        %v9164 = vrcp.pop %v8907
        %v9165 = vmul.f32 %v8975, %v9133
        %v9166 = vmul.f32 %v8980, %v9134
        %v9167 = vmul.f32 %v8985, %v9135
        %v9168 = vmul.f32 %v8990, %v9136
        %v9169 = vmul.f32 %v8995, %v9137
        %v9170 = vmul.f32 %v9000, %v9138
        %v9171 = vmul.f32 %v9005, %v9139
        %v9172 = vmul.f32 %v9010, %v9140
        %v9173 = vmul.f32 %v9015, %v9141
        %v9174 = vmul.f32 %v9020, %v9142
        %v9175 = vmul.f32 %v9025, %v9143
        %v9176 = vmul.f32 %v9030, %v9144
        %v9177 = vmul.f32 %v9035, %v9145
        %v9178 = vmul.f32 %v9040, %v9146
        %v9179 = vmul.f32 %v9045, %v9147
        %v9180 = vmul.f32 %v9050, %v9148
        %v9181 = vmul.f32 %v9055, %v9149
        %v9182 = vmul.f32 %v9060, %v9150
        %v9183 = vmul.f32 %v9065, %v9151
        %v9184 = vmul.f32 %v9070, %v9152
        %v9185 = vmul.f32 %v9075, %v9153
        %v9186 = vmul.f32 %v9080, %v9154
        %v9187 = vmul.f32 %v9085, %v9155
        %v9188 = vmul.f32 %v9090, %v9156
        %v9189 = vmul.f32 %v9095, %v9157
        %v9190 = vmul.f32 %v9100, %v9158
        %v9191 = vmul.f32 %v9105, %v9159
        %v9192 = vmul.f32 %v9110, %v9160
        %v9193 = vmul.f32 %v9115, %v9161
        %v9194 = vmul.f32 %v9120, %v9162
        %v9195 = vmul.f32 %v9125, %v9163
        %v9196 = vmul.f32 %v9130, %v9164
        %s9197 = scalar_lea.vmem %s4, 384
        %v9198 = vld [vmem:[%s9197] sm:$0xff]
        %v9199 = vld [vmem:[%s9197 + $0x8] sm:$0xff]
        %v9200 = vld [vmem:[%s9197 + $0x10] sm:$0xff]
        %v9201 = vld [vmem:[%s9197 + $0x18] sm:$0xff]
        %v9202 = vld [vmem:[%s9197 + $0x20] sm:$0xff]
        %v9203 = vld [vmem:[%s9197 + $0x28] sm:$0xff]
        %v9204 = vld [vmem:[%s9197 + $0x30] sm:$0xff]
        %v9205 = vld [vmem:[%s9197 + $0x38] sm:$0xff]
        %v9206 = vld [vmem:[%s9197 + $0x40] sm:$0xff]
        %v9207 = vld [vmem:[%s9197 + $0x48] sm:$0xff]
        %v9208 = vld [vmem:[%s9197 + $0x50] sm:$0xff]
        %v9209 = vld [vmem:[%s9197 + $0x58] sm:$0xff]
        %v9210 = vld [vmem:[%s9197 + $0x60] sm:$0xff]
        %v9211 = vld [vmem:[%s9197 + $0x68] sm:$0xff]
        %v9212 = vld [vmem:[%s9197 + $0x70] sm:$0xff]
        %v9213 = vld [vmem:[%s9197 + $0x78] sm:$0xff]
        %v9215 = vsel %vm1117, %v9165, 0
        %v9218 = vsel %vm1117, %v9166, 0
        %v9221 = vsel %vm1117, %v9167, 0
        %v9224 = vsel %vm1117, %v9168, 0
        %v9227 = vsel %vm1117, %v9169, 0
        %v9230 = vsel %vm1117, %v9170, 0
        %v9233 = vsel %vm1117, %v9171, 0
        %v9236 = vsel %vm1117, %v9172, 0
        %v9239 = vsel %vm1117, %v9173, 0
        %v9242 = vsel %vm1117, %v9174, 0
        %v9245 = vsel %vm1117, %v9175, 0
        %v9248 = vsel %vm1117, %v9176, 0
        %v9251 = vsel %vm1117, %v9177, 0
        %v9254 = vsel %vm1117, %v9178, 0
        %v9257 = vsel %vm1117, %v9179, 0
        %v9260 = vsel %vm1117, %v9180, 0
        %v9263 = vsel %vm1117, %v9181, 0
        %v9266 = vsel %vm1117, %v9182, 0
        %v9269 = vsel %vm1117, %v9183, 0
        %v9272 = vsel %vm1117, %v9184, 0
        %v9275 = vsel %vm1117, %v9185, 0
        %v9278 = vsel %vm1117, %v9186, 0
        %v9281 = vsel %vm1117, %v9187, 0
        %v9284 = vsel %vm1117, %v9188, 0
        %v9287 = vsel %vm1117, %v9189, 0
        %v9290 = vsel %vm1117, %v9190, 0
        %v9293 = vsel %vm1117, %v9191, 0
        %v9296 = vsel %vm1117, %v9192, 0
        %v9299 = vsel %vm1117, %v9193, 0
        %v9302 = vsel %vm1117, %v9194, 0
        %v9305 = vsel %vm1117, %v9195, 0
        %v9308 = vsel %vm1117, %v9196, 0
        %9310 = vmatprep.subr.mxu0 0.0
        %9311 = vmatpush1.msra.mxu0 0.0
        %9312 = vmatprep.subr.mxu0 0.0
        %9313 = vmatpush1.msra.mxu0 0.0
        %9314 = vmatprep.subr.mxu0 0.0
        %9315 = vmatpush1.msra.mxu0 0.0
        %9316 = vmatprep.subr.mxu0 0.0
        %9317 = vmatpush1.msra.mxu0 0.0
        %9318 = vmatprep.subr.mxu0 0.0
        %9319 = vmatpush1.msra.mxu0 0.0
        %9320 = vmatprep.subr.mxu0 0.0
        %9321 = vmatpush1.msra.mxu0 0.0
        %9322 = vmatprep.subr.mxu0 0.0
        %9323 = vmatpush1.msra.mxu0 0.0
        %9324 = vmatprep.subr.mxu0 0.0
        %9325 = vmatpush1.msra.mxu0 0.0
        %9326 = vmatprep.subr.mxu0 %v9213
        %9327 = vmatpush1.msra.mxu0 %v9212
        %9328 = vmatprep.subr.mxu0 %v9211
        %9329 = vmatpush1.msra.mxu0 %v9210
        %9330 = vmatprep.subr.mxu0 %v9209
        %9331 = vmatpush1.msra.mxu0 %v9208
        %9332 = vmatprep.subr.mxu0 %v9207
        %9333 = vmatpush1.msra.mxu0 %v9206
        %9334 = vmatprep.subr.mxu0 %v9205
        %9335 = vmatpush1.msra.mxu0 %v9204
        %9336 = vmatprep.subr.mxu0 %v9203
        %9337 = vmatpush1.msra.mxu0 %v9202
        %9338 = vmatprep.subr.mxu0 %v9201
        %9339 = vmatpush1.msra.mxu0 %v9200
        %9340 = vmatprep.subr.mxu0 %v9199
        %9341 = vmatpush1.msra.mxu0 %v9198
        %9342 = vmatprep.subr.mxu0 0.0
        %9343 = vmatpush2.msra.mxu0 0.0
        %9344 = vmatprep.subr.mxu0 0.0
        %9345 = vmatpush2.msra.mxu0 0.0
        %9346 = vmatprep.subr.mxu0 0.0
        %9347 = vmatpush2.msra.mxu0 0.0
        %9348 = vmatprep.subr.mxu0 0.0
        %9349 = vmatpush2.msra.mxu0 0.0
        %9350 = vmatprep.subr.mxu0 0.0
        %9351 = vmatpush2.msra.mxu0 0.0
        %9352 = vmatprep.subr.mxu0 0.0
        %9353 = vmatpush2.msra.mxu0 0.0
        %9354 = vmatprep.subr.mxu0 0.0
        %9355 = vmatpush2.msra.mxu0 0.0
        %9356 = vmatprep.subr.mxu0 0.0
        %9357 = vmatpush2.msra.mxu0 0.0
        %9358 = vmatprep.subr.mxu0 0.0
        %9359 = vmatpush2.msra.mxu0 0.0
        %9360 = vmatprep.subr.mxu0 0.0
        %9361 = vmatpush2.msra.mxu0 0.0
        %9362 = vmatprep.subr.mxu0 0.0
        %9363 = vmatpush2.msra.mxu0 0.0
        %9364 = vmatprep.subr.mxu0 0.0
        %9365 = vmatpush2.msra.mxu0 0.0
        %9366 = vmatprep.subr.mxu0 0.0
        %9367 = vmatpush2.msra.mxu0 0.0
        %9368 = vmatprep.subr.mxu0 0.0
        %9369 = vmatpush2.msra.mxu0 0.0
        %9370 = vmatprep.subr.mxu0 0.0
        %9371 = vmatpush2.msra.mxu0 0.0
        %9372 = vmatprep.subr.mxu0 0.0
        %9373 = vmatpush2.msra.mxu0 0.0
        %9374 = vmatprep.mubr.f32.mxu0 0.0
        %9375 = vmatmul.mubr.f32.gmra.mxu0 %v9215
        %v9376 = vpop.f32.mrf.mxu0
        %v9377 = vadd.f32 0.0, %v9376
        %v9378 = vpop.f32.mrf.mxu0
        %v9379 = vadd.f32 0.0, %v9378
        %9380 = vmatprep.mubr.f32.mxu0 0.0
        %9381 = vmatmul.mubr.f32.gmra.mxu0 %v9218
        %v9382 = vpop.f32.mrf.mxu0
        %v9383 = vadd.f32 0.0, %v9382
        %v9384 = vpop.f32.mrf.mxu0
        %v9385 = vadd.f32 0.0, %v9384
        %9386 = vmatprep.mubr.f32.mxu0 0.0
        %9387 = vmatmul.mubr.f32.gmra.mxu0 %v9221
        %v9388 = vpop.f32.mrf.mxu0
        %v9389 = vadd.f32 0.0, %v9388
        %v9390 = vpop.f32.mrf.mxu0
        %v9391 = vadd.f32 0.0, %v9390
        %9392 = vmatprep.mubr.f32.mxu0 0.0
        %9393 = vmatmul.mubr.f32.gmra.mxu0 %v9224
        %v9394 = vpop.f32.mrf.mxu0
        %v9395 = vadd.f32 0.0, %v9394
        %v9396 = vpop.f32.mrf.mxu0
        %v9397 = vadd.f32 0.0, %v9396
        %9398 = vmatprep.mubr.f32.mxu0 0.0
        %9399 = vmatmul.mubr.f32.gmra.mxu0 %v9227
        %v9400 = vpop.f32.mrf.mxu0
        %v9401 = vadd.f32 0.0, %v9400
        %v9402 = vpop.f32.mrf.mxu0
        %v9403 = vadd.f32 0.0, %v9402
        %9404 = vmatprep.mubr.f32.mxu0 0.0
        %9405 = vmatmul.mubr.f32.gmra.mxu0 %v9230
        %v9406 = vpop.f32.mrf.mxu0
        %v9407 = vadd.f32 0.0, %v9406
        %v9408 = vpop.f32.mrf.mxu0
        %v9409 = vadd.f32 0.0, %v9408
        %9410 = vmatprep.mubr.f32.mxu0 0.0
        %9411 = vmatmul.mubr.f32.gmra.mxu0 %v9233
        %v9412 = vpop.f32.mrf.mxu0
        %v9413 = vadd.f32 0.0, %v9412
        %v9414 = vpop.f32.mrf.mxu0
        %v9415 = vadd.f32 0.0, %v9414
        %9416 = vmatprep.mubr.f32.mxu0 0.0
        %9417 = vmatmul.mubr.f32.gmra.mxu0 %v9236
        %v9418 = vpop.f32.mrf.mxu0
        %v9419 = vadd.f32 0.0, %v9418
        %v9420 = vpop.f32.mrf.mxu0
        %v9421 = vadd.f32 0.0, %v9420
        %9422 = vmatprep.mubr.f32.mxu0 0.0
        %9423 = vmatmul.mubr.f32.gmra.mxu0 %v9239
        %v9424 = vpop.f32.mrf.mxu0
        %v9425 = vadd.f32 0.0, %v9424
        %v9426 = vpop.f32.mrf.mxu0
        %v9427 = vadd.f32 0.0, %v9426
        %9428 = vmatprep.mubr.f32.mxu0 0.0
        %9429 = vmatmul.mubr.f32.gmra.mxu0 %v9242
        %v9430 = vpop.f32.mrf.mxu0
        %v9431 = vadd.f32 0.0, %v9430
        %v9432 = vpop.f32.mrf.mxu0
        %v9433 = vadd.f32 0.0, %v9432
        %9434 = vmatprep.mubr.f32.mxu0 0.0
        %9435 = vmatmul.mubr.f32.gmra.mxu0 %v9245
        %v9436 = vpop.f32.mrf.mxu0
        %v9437 = vadd.f32 0.0, %v9436
        %v9438 = vpop.f32.mrf.mxu0
        %v9439 = vadd.f32 0.0, %v9438
        %9440 = vmatprep.mubr.f32.mxu0 0.0
        %9441 = vmatmul.mubr.f32.gmra.mxu0 %v9248
        %v9442 = vpop.f32.mrf.mxu0
        %v9443 = vadd.f32 0.0, %v9442
        %v9444 = vpop.f32.mrf.mxu0
        %v9445 = vadd.f32 0.0, %v9444
        %9446 = vmatprep.mubr.f32.mxu0 0.0
        %9447 = vmatmul.mubr.f32.gmra.mxu0 %v9251
        %v9448 = vpop.f32.mrf.mxu0
        %v9449 = vadd.f32 0.0, %v9448
        %v9450 = vpop.f32.mrf.mxu0
        %v9451 = vadd.f32 0.0, %v9450
        %9452 = vmatprep.mubr.f32.mxu0 0.0
        %9453 = vmatmul.mubr.f32.gmra.mxu0 %v9254
        %v9454 = vpop.f32.mrf.mxu0
        %v9455 = vadd.f32 0.0, %v9454
        %v9456 = vpop.f32.mrf.mxu0
        %v9457 = vadd.f32 0.0, %v9456
        %9458 = vmatprep.mubr.f32.mxu0 0.0
        %9459 = vmatmul.mubr.f32.gmra.mxu0 %v9257
        %v9460 = vpop.f32.mrf.mxu0
        %v9461 = vadd.f32 0.0, %v9460
        %v9462 = vpop.f32.mrf.mxu0
        %v9463 = vadd.f32 0.0, %v9462
        %9464 = vmatprep.mubr.f32.mxu0 0.0
        %9465 = vmatmul.mubr.f32.gmra.mxu0 %v9260
        %v9466 = vpop.f32.mrf.mxu0
        %v9467 = vadd.f32 0.0, %v9466
        %v9468 = vpop.f32.mrf.mxu0
        %v9469 = vadd.f32 0.0, %v9468
        %9470 = vmatprep.mubr.f32.mxu0 0.0
        %9471 = vmatmul.mubr.f32.gmra.mxu0 %v9263
        %v9472 = vpop.f32.mrf.mxu0
        %v9473 = vadd.f32 0.0, %v9472
        %v9474 = vpop.f32.mrf.mxu0
        %v9475 = vadd.f32 0.0, %v9474
        %9476 = vmatprep.mubr.f32.mxu0 0.0
        %9477 = vmatmul.mubr.f32.gmra.mxu0 %v9266
        %v9478 = vpop.f32.mrf.mxu0
        %v9479 = vadd.f32 0.0, %v9478
        %v9480 = vpop.f32.mrf.mxu0
        %v9481 = vadd.f32 0.0, %v9480
        %9482 = vmatprep.mubr.f32.mxu0 0.0
        %9483 = vmatmul.mubr.f32.gmra.mxu0 %v9269
        %v9484 = vpop.f32.mrf.mxu0
        %v9485 = vadd.f32 0.0, %v9484
        %v9486 = vpop.f32.mrf.mxu0
        %v9487 = vadd.f32 0.0, %v9486
        %9488 = vmatprep.mubr.f32.mxu0 0.0
        %9489 = vmatmul.mubr.f32.gmra.mxu0 %v9272
        %v9490 = vpop.f32.mrf.mxu0
        %v9491 = vadd.f32 0.0, %v9490
        %v9492 = vpop.f32.mrf.mxu0
        %v9493 = vadd.f32 0.0, %v9492
        %9494 = vmatprep.mubr.f32.mxu0 0.0
        %9495 = vmatmul.mubr.f32.gmra.mxu0 %v9275
        %v9496 = vpop.f32.mrf.mxu0
        %v9497 = vadd.f32 0.0, %v9496
        %v9498 = vpop.f32.mrf.mxu0
        %v9499 = vadd.f32 0.0, %v9498
        %9500 = vmatprep.mubr.f32.mxu0 0.0
        %9501 = vmatmul.mubr.f32.gmra.mxu0 %v9278
        %v9502 = vpop.f32.mrf.mxu0
        %v9503 = vadd.f32 0.0, %v9502
        %v9504 = vpop.f32.mrf.mxu0
        %v9505 = vadd.f32 0.0, %v9504
        %9506 = vmatprep.mubr.f32.mxu0 0.0
        %9507 = vmatmul.mubr.f32.gmra.mxu0 %v9281
        %v9508 = vpop.f32.mrf.mxu0
        %v9509 = vadd.f32 0.0, %v9508
        %v9510 = vpop.f32.mrf.mxu0
        %v9511 = vadd.f32 0.0, %v9510
        %9512 = vmatprep.mubr.f32.mxu0 0.0
        %9513 = vmatmul.mubr.f32.gmra.mxu0 %v9284
        %v9514 = vpop.f32.mrf.mxu0
        %v9515 = vadd.f32 0.0, %v9514
        %v9516 = vpop.f32.mrf.mxu0
        %v9517 = vadd.f32 0.0, %v9516
        %9518 = vmatprep.mubr.f32.mxu0 0.0
        %9519 = vmatmul.mubr.f32.gmra.mxu0 %v9287
        %v9520 = vpop.f32.mrf.mxu0
        %v9521 = vadd.f32 0.0, %v9520
        %v9522 = vpop.f32.mrf.mxu0
        %v9523 = vadd.f32 0.0, %v9522
        %9524 = vmatprep.mubr.f32.mxu0 0.0
        %9525 = vmatmul.mubr.f32.gmra.mxu0 %v9290
        %v9526 = vpop.f32.mrf.mxu0
        %v9527 = vadd.f32 0.0, %v9526
        %v9528 = vpop.f32.mrf.mxu0
        %v9529 = vadd.f32 0.0, %v9528
        %9530 = vmatprep.mubr.f32.mxu0 0.0
        %9531 = vmatmul.mubr.f32.gmra.mxu0 %v9293
        %v9532 = vpop.f32.mrf.mxu0
        %v9533 = vadd.f32 0.0, %v9532
        %v9534 = vpop.f32.mrf.mxu0
        %v9535 = vadd.f32 0.0, %v9534
        %9536 = vmatprep.mubr.f32.mxu0 0.0
        %9537 = vmatmul.mubr.f32.gmra.mxu0 %v9296
        %v9538 = vpop.f32.mrf.mxu0
        %v9539 = vadd.f32 0.0, %v9538
        %v9540 = vpop.f32.mrf.mxu0
        %v9541 = vadd.f32 0.0, %v9540
        %9542 = vmatprep.mubr.f32.mxu0 0.0
        %9543 = vmatmul.mubr.f32.gmra.mxu0 %v9299
        %v9544 = vpop.f32.mrf.mxu0
        %v9545 = vadd.f32 0.0, %v9544
        %v9546 = vpop.f32.mrf.mxu0
        %v9547 = vadd.f32 0.0, %v9546
        %9548 = vmatprep.mubr.f32.mxu0 0.0
        %9549 = vmatmul.mubr.f32.gmra.mxu0 %v9302
        %v9550 = vpop.f32.mrf.mxu0
        %v9551 = vadd.f32 0.0, %v9550
        %v9552 = vpop.f32.mrf.mxu0
        %v9553 = vadd.f32 0.0, %v9552
        %9554 = vmatprep.mubr.f32.mxu0 0.0
        %9555 = vmatmul.mubr.f32.gmra.mxu0 %v9305
        %v9556 = vpop.f32.mrf.mxu0
        %v9557 = vadd.f32 0.0, %v9556
        %v9558 = vpop.f32.mrf.mxu0
        %v9559 = vadd.f32 0.0, %v9558
        %9560 = vmatprep.mubr.f32.mxu0 0.0
        %9561 = vmatmul.mubr.f32.gmra.mxu0 %v9308
        %v9562 = vpop.f32.mrf.mxu0
        %v9563 = vadd.f32 0.0, %v9562
        %v9564 = vpop.f32.mrf.mxu0
        %v9565 = vadd.f32 0.0, %v9564
        %9566 = vdwg.mxu0
        %v9567 = vadd.f32 %v7205, %v9377
        %v9568 = vadd.f32 %v7206, %v9379
        %v9569 = vadd.f32 %v7207, %v9383
        %v9570 = vadd.f32 %v7208, %v9385
        %v9571 = vadd.f32 %v7209, %v9389
        %v9572 = vadd.f32 %v7210, %v9391
        %v9573 = vadd.f32 %v7211, %v9395
        %v9574 = vadd.f32 %v7212, %v9397
        %v9575 = vadd.f32 %v7213, %v9401
        %v9576 = vadd.f32 %v7214, %v9403
        %v9577 = vadd.f32 %v7215, %v9407
        %v9578 = vadd.f32 %v7216, %v9409
        %v9579 = vadd.f32 %v7217, %v9413
        %v9580 = vadd.f32 %v7218, %v9415
        %v9581 = vadd.f32 %v7219, %v9419
        %v9582 = vadd.f32 %v7220, %v9421
        %v9583 = vadd.f32 %v7221, %v9425
        %v9584 = vadd.f32 %v7222, %v9427
        %v9585 = vadd.f32 %v7223, %v9431
        %v9586 = vadd.f32 %v7224, %v9433
        %v9587 = vadd.f32 %v7225, %v9437
        %v9588 = vadd.f32 %v7226, %v9439
        %v9589 = vadd.f32 %v7227, %v9443
        %v9590 = vadd.f32 %v7228, %v9445
        %v9591 = vadd.f32 %v7229, %v9449
        %v9592 = vadd.f32 %v7230, %v9451
        %v9593 = vadd.f32 %v7231, %v9455
        %v9594 = vadd.f32 %v7232, %v9457
        %v9595 = vadd.f32 %v7233, %v9461
        %v9596 = vadd.f32 %v7234, %v9463
        %v9597 = vadd.f32 %v7235, %v9467
        %v9598 = vadd.f32 %v7236, %v9469
        %v9599 = vadd.f32 %v7237, %v9473
        %v9600 = vadd.f32 %v7238, %v9475
        %v9601 = vadd.f32 %v7239, %v9479
        %v9602 = vadd.f32 %v7240, %v9481
        %v9603 = vadd.f32 %v7241, %v9485
        %v9604 = vadd.f32 %v7242, %v9487
        %v9605 = vadd.f32 %v7243, %v9491
        %v9606 = vadd.f32 %v7244, %v9493
        %v9607 = vadd.f32 %v7245, %v9497
        %v9608 = vadd.f32 %v7246, %v9499
        %v9609 = vadd.f32 %v7247, %v9503
        %v9610 = vadd.f32 %v7248, %v9505
        %v9611 = vadd.f32 %v7249, %v9509
        %v9612 = vadd.f32 %v7250, %v9511
        %v9613 = vadd.f32 %v7251, %v9515
        %v9614 = vadd.f32 %v7252, %v9517
        %v9615 = vadd.f32 %v7253, %v9521
        %v9616 = vadd.f32 %v7254, %v9523
        %v9617 = vadd.f32 %v7255, %v9527
        %v9618 = vadd.f32 %v7256, %v9529
        %v9619 = vadd.f32 %v7257, %v9533
        %v9620 = vadd.f32 %v7258, %v9535
        %v9621 = vadd.f32 %v7259, %v9539
        %v9622 = vadd.f32 %v7260, %v9541
        %v9623 = vadd.f32 %v7261, %v9545
        %v9624 = vadd.f32 %v7262, %v9547
        %v9625 = vadd.f32 %v7263, %v9551
        %v9626 = vadd.f32 %v7264, %v9553
        %v9627 = vadd.f32 %v7265, %v9557
        %v9628 = vadd.f32 %v7266, %v9559
        %v9629 = vadd.f32 %v7267, %v9563
        %v9630 = vadd.f32 %v7268, %v9565
        %v9631 = vld [vmem:[%s5] sm:$0x3]
        %v9633 = vlaneseq
        %v9634 = vshrl.u32 %v9633, 7
        %v9635 = vsub.s32 0, %v9634
        %v9636 = vrot.slane %v9631, %v9635
        %v9637 = vlaneseq
        %v9638 = vshrl.u32 %v9637, 7
        %v9639 = vsub.s32 1, %v9638
        %v9640 = vrot.slane %v9631, %v9639
        %v9643 = vadd.f32 %v9567, %v9636
        %v9644 = vadd.f32 %v9568, %v9640
        %v9645 = vadd.f32 %v9569, %v9636
        %v9646 = vadd.f32 %v9570, %v9640
        %v9647 = vadd.f32 %v9571, %v9636
        %v9648 = vadd.f32 %v9572, %v9640
        %v9649 = vadd.f32 %v9573, %v9636
        %v9650 = vadd.f32 %v9574, %v9640
        %v9651 = vadd.f32 %v9575, %v9636
        %v9652 = vadd.f32 %v9576, %v9640
        %v9653 = vadd.f32 %v9577, %v9636
        %v9654 = vadd.f32 %v9578, %v9640
        %v9655 = vadd.f32 %v9579, %v9636
        %v9656 = vadd.f32 %v9580, %v9640
        %v9657 = vadd.f32 %v9581, %v9636
        %v9658 = vadd.f32 %v9582, %v9640
        %v9659 = vadd.f32 %v9583, %v9636
        %v9660 = vadd.f32 %v9584, %v9640
        %v9661 = vadd.f32 %v9585, %v9636
        %v9662 = vadd.f32 %v9586, %v9640
        %v9663 = vadd.f32 %v9587, %v9636
        %v9664 = vadd.f32 %v9588, %v9640
        %v9665 = vadd.f32 %v9589, %v9636
        %v9666 = vadd.f32 %v9590, %v9640
        %v9667 = vadd.f32 %v9591, %v9636
        %v9668 = vadd.f32 %v9592, %v9640
        %v9669 = vadd.f32 %v9593, %v9636
        %v9670 = vadd.f32 %v9594, %v9640
        %v9671 = vadd.f32 %v9595, %v9636
        %v9672 = vadd.f32 %v9596, %v9640
        %v9673 = vadd.f32 %v9597, %v9636
        %v9674 = vadd.f32 %v9598, %v9640
        %v9675 = vadd.f32 %v9599, %v9636
        %v9676 = vadd.f32 %v9600, %v9640
        %v9677 = vadd.f32 %v9601, %v9636
        %v9678 = vadd.f32 %v9602, %v9640
        %v9679 = vadd.f32 %v9603, %v9636
        %v9680 = vadd.f32 %v9604, %v9640
        %v9681 = vadd.f32 %v9605, %v9636
        %v9682 = vadd.f32 %v9606, %v9640
        %v9683 = vadd.f32 %v9607, %v9636
        %v9684 = vadd.f32 %v9608, %v9640
        %v9685 = vadd.f32 %v9609, %v9636
        %v9686 = vadd.f32 %v9610, %v9640
        %v9687 = vadd.f32 %v9611, %v9636
        %v9688 = vadd.f32 %v9612, %v9640
        %v9689 = vadd.f32 %v9613, %v9636
        %v9690 = vadd.f32 %v9614, %v9640
        %v9691 = vadd.f32 %v9615, %v9636
        %v9692 = vadd.f32 %v9616, %v9640
        %v9693 = vadd.f32 %v9617, %v9636
        %v9694 = vadd.f32 %v9618, %v9640
        %v9695 = vadd.f32 %v9619, %v9636
        %v9696 = vadd.f32 %v9620, %v9640
        %v9697 = vadd.f32 %v9621, %v9636
        %v9698 = vadd.f32 %v9622, %v9640
        %v9699 = vadd.f32 %v9623, %v9636
        %v9700 = vadd.f32 %v9624, %v9640
        %v9701 = vadd.f32 %v9625, %v9636
        %v9702 = vadd.f32 %v9626, %v9640
        %v9703 = vadd.f32 %v9627, %v9636
        %v9704 = vadd.f32 %v9628, %v9640
        %v9705 = vadd.f32 %v9629, %v9636
        %v9706 = vadd.f32 %v9630, %v9640
        %9707 = vst [vmem:[%s244] sm:$0xff] %v9643
        %9708 = vst [vmem:[%s244 + $0x8] sm:$0xff] %v9644
        %9709 = vst [vmem:[%s244 + $0x10] sm:$0xff] %v9645
        %9710 = vst [vmem:[%s244 + $0x18] sm:$0xff] %v9646
        %9711 = vst [vmem:[%s244 + $0x20] sm:$0xff] %v9647
        %9712 = vst [vmem:[%s244 + $0x28] sm:$0xff] %v9648
        %9713 = vst [vmem:[%s244 + $0x30] sm:$0xff] %v9649
        %9714 = vst [vmem:[%s244 + $0x38] sm:$0xff] %v9650
        %9715 = vst [vmem:[%s244 + $0x40] sm:$0xff] %v9651
        %9716 = vst [vmem:[%s244 + $0x48] sm:$0xff] %v9652
        %9717 = vst [vmem:[%s244 + $0x50] sm:$0xff] %v9653
        %9718 = vst [vmem:[%s244 + $0x58] sm:$0xff] %v9654
        %9719 = vst [vmem:[%s244 + $0x60] sm:$0xff] %v9655
        %9720 = vst [vmem:[%s244 + $0x68] sm:$0xff] %v9656
        %9721 = vst [vmem:[%s244 + $0x70] sm:$0xff] %v9657
        %9722 = vst [vmem:[%s244 + $0x78] sm:$0xff] %v9658
        %9723 = vst [vmem:[%s244 + $0x80] sm:$0xff] %v9659
        %9724 = vst [vmem:[%s244 + $0x88] sm:$0xff] %v9660
        %9725 = vst [vmem:[%s244 + $0x90] sm:$0xff] %v9661
        %9726 = vst [vmem:[%s244 + $0x98] sm:$0xff] %v9662
        %9727 = vst [vmem:[%s244 + $0xa0] sm:$0xff] %v9663
        %9728 = vst [vmem:[%s244 + $0xa8] sm:$0xff] %v9664
        %9729 = vst [vmem:[%s244 + $0xb0] sm:$0xff] %v9665
        %9730 = vst [vmem:[%s244 + $0xb8] sm:$0xff] %v9666
        %9731 = vst [vmem:[%s244 + $0xc0] sm:$0xff] %v9667
        %9732 = vst [vmem:[%s244 + $0xc8] sm:$0xff] %v9668
        %9733 = vst [vmem:[%s244 + $0xd0] sm:$0xff] %v9669
        %9734 = vst [vmem:[%s244 + $0xd8] sm:$0xff] %v9670
        %9735 = vst [vmem:[%s244 + $0xe0] sm:$0xff] %v9671
        %9736 = vst [vmem:[%s244 + $0xe8] sm:$0xff] %v9672
        %9737 = vst [vmem:[%s244 + $0xf0] sm:$0xff] %v9673
        %9738 = vst [vmem:[%s244 + $0xf8] sm:$0xff] %v9674
        %9739 = vst [vmem:[%s244 + $0x100] sm:$0xff] %v9675
        %9740 = vst [vmem:[%s244 + $0x108] sm:$0xff] %v9676
        %9741 = vst [vmem:[%s244 + $0x110] sm:$0xff] %v9677
        %9742 = vst [vmem:[%s244 + $0x118] sm:$0xff] %v9678
        %9743 = vst [vmem:[%s244 + $0x120] sm:$0xff] %v9679
        %9744 = vst [vmem:[%s244 + $0x128] sm:$0xff] %v9680
        %9745 = vst [vmem:[%s244 + $0x130] sm:$0xff] %v9681
        %9746 = vst [vmem:[%s244 + $0x138] sm:$0xff] %v9682
        %9747 = vst [vmem:[%s244 + $0x140] sm:$0xff] %v9683
        %9748 = vst [vmem:[%s244 + $0x148] sm:$0xff] %v9684
        %9749 = vst [vmem:[%s244 + $0x150] sm:$0xff] %v9685
        %9750 = vst [vmem:[%s244 + $0x158] sm:$0xff] %v9686
        %9751 = vst [vmem:[%s244 + $0x160] sm:$0xff] %v9687
        %9752 = vst [vmem:[%s244 + $0x168] sm:$0xff] %v9688
        %9753 = vst [vmem:[%s244 + $0x170] sm:$0xff] %v9689
        %9754 = vst [vmem:[%s244 + $0x178] sm:$0xff] %v9690
        %9755 = vst [vmem:[%s244 + $0x180] sm:$0xff] %v9691
        %9756 = vst [vmem:[%s244 + $0x188] sm:$0xff] %v9692
        %9757 = vst [vmem:[%s244 + $0x190] sm:$0xff] %v9693
        %9758 = vst [vmem:[%s244 + $0x198] sm:$0xff] %v9694
        %9759 = vst [vmem:[%s244 + $0x1a0] sm:$0xff] %v9695
        %9760 = vst [vmem:[%s244 + $0x1a8] sm:$0xff] %v9696
        %9761 = vst [vmem:[%s244 + $0x1b0] sm:$0xff] %v9697
        %9762 = vst [vmem:[%s244 + $0x1b8] sm:$0xff] %v9698
        %9763 = vst [vmem:[%s244 + $0x1c0] sm:$0xff] %v9699
        %9764 = vst [vmem:[%s244 + $0x1c8] sm:$0xff] %v9700
        %9765 = vst [vmem:[%s244 + $0x1d0] sm:$0xff] %v9701
        %9766 = vst [vmem:[%s244 + $0x1d8] sm:$0xff] %v9702
        %9767 = vst [vmem:[%s244 + $0x1e0] sm:$0xff] %v9703
        %9768 = vst [vmem:[%s244 + $0x1e8] sm:$0xff] %v9704
        %9769 = vst [vmem:[%s244 + $0x1f0] sm:$0xff] %v9705
        %9770 = vst [vmem:[%s244 + $0x1f8] sm:$0xff] %v9706
        %s9771 = sand.u32 %s159, 1
        %s9772 = scalar_lea.sflag [#allocation3], %s9771
        %s9773 = sand.u32 %s159, 1
        %s9774 = smul.addr %s9773, 512
        %s9775 = scalar_lea.vmem [#allocation2], %s9774
        // Predicated region
        $region45: #{tpu_custom_call.1} parent=43 // pred_check
          %p9776 = pneg %p169
        $region46: #{tpu_custom_call.1} parent=43 // pred_check_branch
          %9778 = sbr.rel (%p9776) target = $region48
        $region47: #{tpu_custom_call.1} parent=43 // pred_region
          %s9780 = ssub.s32 8192, 8192
          %9781 = vsyncadd %s9772, %s9780
          %s9782 = smul.addr %s20, 64
          %s9783 = smul.addr %s9782, 128
          %s9784 = scalar_lea.hbm %s6, %s9783
          %s9785 = sshll.u32 %s9775, 4
          %s9786 = int_to_ptr.vmem [resolvable:$true] %s9785
          %9791 = dma.vmem_to_hbm [thread:$0]  %s9786, 8192, %s9784, %s9772, 256, 256, 16
        $region48: #{tpu_custom_call.1} parent=43 // pred_fallthru
          _
      $region44: #{tpu_custom_call.1} parent=5 // pred_fallthru
        _
      %p9792 = scmp.le.s32.totalorder 2, %s15
      // Predicated region
      $region49: #{tpu_custom_call.1} parent=5 // pred_check
        %p9793 = pneg %p9792
      $region50: #{tpu_custom_call.1} parent=5 // pred_check_branch
        %9795 = sbr.rel (%p9793) target = $region52
      $region51: #{tpu_custom_call.1} parent=5 // pred_region
        %s9796 = ssub.s32 %s15, 2
        // Predicated region
        $region53: #{tpu_custom_call.1} parent=51 // pred_check
          %p9797 = pneg %p175
        $region54: #{tpu_custom_call.1} parent=51 // pred_check_branch
          %9799 = sbr.rel (%p9797) target = $region56
        $region55: #{tpu_custom_call.1} parent=51 // pred_region
          %s9800 = sand.u32 %s160, 1
          %s9801 = scalar_lea.sflag [#allocation3], %s9800
          %s9802 = sand.u32 %s160, 1
          %s9803 = smul.addr %s9802, 512
          %s9804 = scalar_lea.vmem [#allocation2], %s9803
          %9805 = dma.done %s9801, 8192
        $region56: #{tpu_custom_call.1} parent=51 // pred_fallthru
          _
      $region52: #{tpu_custom_call.1} parent=5 // pred_fallthru
        _
    $region6: #{tpu_custom_call.1} parent=1 // loop_footer
      %s19 = sadd.s32 1, %s15
    $region7: #{tpu_custom_call.1} parent=1 // loop_footer_branch
      %14 = sbr.rel target = $region3
    $region8: #{tpu_custom_call.1} parent=1 // loop_exit
      _
    %9806 = vsyncpa [#allocation3], 1
    %s9807 = scalar_lea.sflag [#allocation3], 1
    %9808 = vsyncpa %s9807, 1

</llo_original>
